<compile_context>
chip_gen: v7x
topology: tpu7x:2x2x1
jax: 0.10.0
libtpu: 0.0.40
codegen_flags: <defaults>
</compile_context>

<pallas_src>
import functools

import jax
import jax.numpy as jnp
from jax import lax
from jax.experimental import pallas as pl
from jax.experimental.pallas import tpu as pltpu

EPS = 1e-5
CPAD = 128    # lane-dense channel padding (all channel counts here are <= 24)
MARGIN = 24   # zero rows above/below the flat padded-spatial buffer (mult of 8)


def _round_up(x, m):
    return (x + m - 1) // m * m


# ---------------------------------------------------------------------------
# Fused kernel
# ---------------------------------------------------------------------------
def make_dense_block_kernel(num_layers, H, W, RP):
    P = W + 2  # padded row pitch in the flattened spatial layout

    def kernel(*refs):
        x_ref, mask_ref = refs[0], refs[1]
        pos = 2
        layers = []
        for _ in range(num_layers):
            layers.append(refs[pos:pos + 6])
            pos += 6
        wf_ref, bf_ref = refs[pos], refs[pos + 1]
        o_ref = refs[pos + 2]
        mid_ref = refs[pos + 3]

        # Zero the shifted-conv buffer (establishes zero margins every step).
        mid_ref[...] = jnp.zeros_like(mid_ref)

        mask = mask_ref[...]          # [RP, CPAD]; 1.0 on valid (interior) pixels
        slab = x_ref[0]               # [RP, CPAD]; growing concatenated features

        for (s1_ref, t1_ref, w1_ref, b1_ref, w2_ref, b2_ref) in layers:
            # relu(bn1(x))  ->  1x1 conv (bn2 folded into w1/b1)  ->  relu
            h = jnp.maximum(slab * s1_ref[...] + t1_ref[...], 0.0)
            y = jnp.dot(h, w1_ref[...],
                        preferred_element_type=jnp.float32) + b1_ref[...]
            # Zero-padded intermediate for the 3x3 conv (mask kills border rows).
            mid_ref[pl.ds(MARGIN, RP), :] = jnp.maximum(y, 0.0) * mask

            # 3x3 'same' conv = 9 row-shifted matmuls on the flat layout.
            # Tap weights are embedded at this layer's output-channel offset,
            # so `acc` adds directly into the slab (implements torch.cat).
            acc = jnp.zeros((RP, CPAD), jnp.float32)
            for dy in range(3):
                for dx in range(3):
                    shift = (dy - 1) * P + (dx - 1)
                    patch = mid_ref[pl.ds(MARGIN + shift, RP), :]
                    acc = acc + jnp.dot(patch, w2_ref[dy * 3 + dx],
                                        preferred_element_type=jnp.float32)
            slab = slab + acc + b2_ref[...]

        # Final 1x1 conv (final bn folded) + relu.
        yf = jnp.dot(slab, wf_ref[...],
                     preferred_element_type=jnp.float32) + bf_ref[...]
        o_ref[0] = jnp.maximum(yf, 0.0)

    return kernel


def _const_spec(shape):
    nd = len(shape)
    return pl.BlockSpec(shape, lambda n, _nd=nd: (0,) * _nd)


# ---------------------------------------------------------------------------
# Parameter initialization (deterministic, synthetic; eval-mode BN stats)
# ---------------------------------------------------------------------------
def _bn_params(key, c):
    k1, k2, k3, k4 = jax.random.split(key, 4)
    return dict(
        gamma=(1.0 + 0.1 * jax.random.normal(k1, (1, c))).astype(jnp.float32),
        beta=(0.1 * jax.random.normal(k2, (1, c))).astype(jnp.float32),
        mean=(0.1 * jax.random.normal(k3, (1, c))).astype(jnp.float32),
        var=(0.5 + jnp.abs(jax.random.normal(k4, (1, c)))).astype(jnp.float32),
    )


def init_dense_block(key, num_layers, in_channels, growth_rate, out_channels):
    params = {"layers": []}
    c = in_channels
    for _ in range(num_layers):
        key, kb1, kw1, kbi1, kb2, kw2, kbi2 = jax.random.split(key, 7)
        c4 = 4 * growth_rate
        layer = dict(
            bn1=_bn_params(kb1, c),
            w1=(0.1 * jax.random.normal(kw1, (c, c4))).astype(jnp.float32),
            b1=(0.1 * jax.random.normal(kbi1, (1, c4))).astype(jnp.float32),
            bn2=_bn_params(kb2, c4),
            w2=(0.1 * jax.random.normal(kw2, (3, 3, c4, growth_rate))).astype(jnp.float32),
            b2=(0.1 * jax.random.normal(kbi2, (1, growth_rate))).astype(jnp.float32),
        )
        params["layers"].append(layer)
        c += growth_rate
    key, kw, kb, kbn = jax.random.split(key, 4)
    params["w1x1"] = (0.1 * jax.random.normal(kw, (c, out_channels))).astype(jnp.float32)
    params["b1x1"] = (0.1 * jax.random.normal(kb, (1, out_channels))).astype(jnp.float32)
    params["bn"] = _bn_params(kbn, out_channels)
    return params


# ---------------------------------------------------------------------------
# Host-side BN folding + lane/channel padding of weights
# ---------------------------------------------------------------------------
def _bn_affine(bn):
    s = bn["gamma"] * lax.rsqrt(bn["var"] + EPS)
    return s, bn["beta"] - bn["mean"] * s


def _prepare_params(params, in_channels, growth_rate, out_channels):
    layers = []
    c = in_channels
    c4 = 4 * growth_rate
    for lp in params["layers"]:
        s1, t1 = _bn_affine(lp["bn1"])                  # [1, c]
        s2, t2 = _bn_affine(lp["bn2"])                  # [1, c4]
        w1f = lp["w1"] * s2                             # fold bn2 into conv1
        b1f = lp["b1"] * s2 + t2
        s1p = jnp.zeros((1, CPAD), jnp.float32).at[:, :c].set(s1)
        t1p = jnp.zeros((1, CPAD), jnp.float32).at[:, :c].set(t1)
        w1p = jnp.zeros((CPAD, CPAD), jnp.float32).at[:c, :c4].set(w1f)
        b1p = jnp.zeros((1, CPAD), jnp.float32).at[:, :c4].set(b1f)
        # 3x3 weights, embedded at this layer's output-channel offset c.
        w2 = lp["w2"].reshape(9, c4, growth_rate)
        w2p = jnp.zeros((9, CPAD, CPAD), jnp.float32)
        w2p = w2p.at[:, :c4, c:c + growth_rate].set(w2)
        b2p = jnp.zeros((1, CPAD), jnp.float32).at[:, c:c + growth_rate].set(lp["b2"])
        layers.append((s1p, t1p, w1p, b1p, w2p, b2p))
        c += growth_rate
    sf, tf = _bn_affine(params["bn"])                   # fold final bn into conv1x1
    wfp = jnp.zeros((CPAD, CPAD), jnp.float32).at[:c, :out_channels].set(
        params["w1x1"] * sf)
    bfp = jnp.zeros((1, CPAD), jnp.float32).at[:, :out_channels].set(
        params["b1x1"] * sf + tf)
    return layers, wfp, bfp


# ---------------------------------------------------------------------------
# Forward (single fused pallas_call) and pure-JAX reference
# ---------------------------------------------------------------------------
def dense_block_forward(params, x_nchw, *, growth_rate, out_channels):
    N, Cin, H, W = x_nchw.shape
    num_layers = len(params["layers"])
    P = W + 2
    R = (H + 2) * P
    RP = _round_up(R, 8)
    c_total = Cin + num_layers * growth_rate
    assert max(c_total, 4 * growth_rate, out_channels) <= CPAD

    prep_layers, wfp, bfp = _prepare_params(params, Cin, growth_rate, out_channels)

    # Layout prep: NCHW -> NHWC -> spatial zero-pad -> channel pad to 128
    #              -> flattened padded-spatial rows [N, RP, 128].
    x = jnp.transpose(x_nchw, (0, 2, 3, 1)).astype(jnp.float32)
    x = jnp.pad(x, ((0, 0), (1, 1), (1, 1), (0, CPAD - Cin)))
    x = x.reshape(N, R, CPAD)
    x = jnp.pad(x, ((0, 0), (0, RP - R), (0, 0)))

    # Validity mask over flat padded-spatial rows (1.0 on interior pixels).
    r = jnp.arange(RP)
    pi, pj = r // P, r % P
    valid = (r < R) & (pi >= 1) & (pi <= H) & (pj >= 1) & (pj <= W)
    mask = jnp.tile(valid.astype(jnp.float32)[:, None], (1, CPAD))

    flat_inputs = [x, mask]
    in_specs = [pl.BlockSpec((1, RP, CPAD), lambda n: (n, 0, 0)),
                _const_spec((RP, CPAD))]
    for layer in prep_layers:
        for a in layer:
            flat_inputs.append(a)
            in_specs.append(_const_spec(a.shape))
    flat_inputs += [wfp, bfp]
    in_specs += [_const_spec(wfp.shape), _const_spec(bfp.shape)]

    out = pl.pallas_call(
        make_dense_block_kernel(num_layers, H, W, RP),
        out_shape=jax.ShapeDtypeStruct((N, RP, CPAD), jnp.float32),
        grid=(N,),
        in_specs=in_specs,
        out_specs=pl.BlockSpec((1, RP, CPAD), lambda n: (n, 0, 0)),
        scratch_shapes=[pltpu.VMEM((RP + 2 * MARGIN, CPAD), jnp.float32)],
        compiler_params=pltpu.CompilerParams(dimension_semantics=("parallel",)),
    )(*flat_inputs)

    y = out[:, :R, :].reshape(N, H + 2, W + 2, CPAD)[:, 1:H + 1, 1:W + 1, :out_channels]
    return jnp.transpose(y, (0, 3, 1, 2))  # back to NCHW


def _bn_ref(x, p):
    return (x - p["mean"]) * (p["gamma"] * lax.rsqrt(p["var"] + EPS)) + p["beta"]


def dense_block_reference(params, x_nchw):
    x = jnp.transpose(x_nchw, (0, 2, 3, 1)).astype(jnp.float32)
    dn = ("NHWC", "HWIO", "NHWC")
    for lp in params["layers"]:
        h = jax.nn.relu(_bn_ref(x, lp["bn1"]))
        h = lax.conv_general_dilated(h, lp["w1"][None, None], (1, 1), "VALID",
                                     dimension_numbers=dn) + lp["b1"]
        h = jax.nn.relu(_bn_ref(h, lp["bn2"]))
        h = lax.conv_general_dilated(h, lp["w2"], (1, 1), "SAME",
                                     dimension_numbers=dn) + lp["b2"]
        x = jnp.concatenate([x, h], axis=-1)
    y = lax.conv_general_dilated(x, params["w1x1"][None, None], (1, 1), "VALID",
                                 dimension_numbers=dn) + params["b1x1"]
    y = jax.nn.relu(_bn_ref(y, params["bn"]))
    return jnp.transpose(y, (0, 3, 1, 2))


# ---------------------------------------------------------------------------
if __name__ == "__main__":
    key = jax.random.PRNGKey(0)
    k_params, k_x = jax.random.split(key)

    num_layers, in_channels, growth_rate, out_channels = 2, 4, 4, 8
    params = init_dense_block(k_params, num_layers, in_channels, growth_rate,
                              out_channels)

    x = jax.random.normal(k_x, (2, in_channels, 16, 16), dtype=jnp.float32)  # NCHW

    fwd = jax.jit(functools.partial(dense_block_forward,
                                    growth_rate=growth_rate,
                                    out_channels=out_channels))
    out = jax.block_until_ready(fwd(params, x))
    ref = jax.block_until_ready(dense_block_reference(params, x))

    assert out.shape == (2, out_channels, 16, 16), out.shape
    assert jnp.allclose(out, ref, atol=5e-4, rtol=5e-4), \
        float(jnp.max(jnp.abs(out - ref)))

    print("KERNEL_OK")
</pallas_src>

<mosaic_0001>
module attributes {stable_mosaic.version = 11 : i64} {
  func.func @kernel(%arg0: i32, %arg1: memref<1x328x128xf32, #tpu.memory_space<vmem>>, %arg2: memref<328x128xf32, #tpu.memory_space<vmem>>, %arg3: memref<1x128xf32, #tpu.memory_space<vmem>>, %arg4: memref<1x128xf32, #tpu.memory_space<vmem>>, %arg5: memref<128x128xf32, #tpu.memory_space<vmem>>, %arg6: memref<1x128xf32, #tpu.memory_space<vmem>>, %arg7: memref<9x128x128xf32, #tpu.memory_space<vmem>>, %arg8: memref<1x128xf32, #tpu.memory_space<vmem>>, %arg9: memref<1x128xf32, #tpu.memory_space<vmem>>, %arg10: memref<1x128xf32, #tpu.memory_space<vmem>>, %arg11: memref<128x128xf32, #tpu.memory_space<vmem>>, %arg12: memref<1x128xf32, #tpu.memory_space<vmem>>, %arg13: memref<9x128x128xf32, #tpu.memory_space<vmem>>, %arg14: memref<1x128xf32, #tpu.memory_space<vmem>>, %arg15: memref<128x128xf32, #tpu.memory_space<vmem>>, %arg16: memref<1x128xf32, #tpu.memory_space<vmem>>, %arg17: memref<1x328x128xf32, #tpu.memory_space<vmem>>, %arg18: memref<376x128xf32, #tpu.memory_space<vmem>>) attributes {dimension_semantics = [#tpu.dimension_semantics<parallel>], iteration_bounds = array<i64: 2>, scalar_prefetch = 0 : i64, scratch_operands = 1 : i64, tpu.core_type = #tpu.core_type<tc>, window_params = [{transform_indices = @transform_0, window_bounds = array<i64: 1, 328, 128>}, {pipeline_mode = #tpu.pipeline_mode<synchronous>, transform_indices = @transform_1, window_bounds = array<i64: 328, 128>}, {pipeline_mode = #tpu.pipeline_mode<synchronous>, transform_indices = @transform_2, window_bounds = array<i64: 1, 128>}, {pipeline_mode = #tpu.pipeline_mode<synchronous>, transform_indices = @transform_3, window_bounds = array<i64: 1, 128>}, {pipeline_mode = #tpu.pipeline_mode<synchronous>, transform_indices = @transform_4, window_bounds = array<i64: 128, 128>}, {pipeline_mode = #tpu.pipeline_mode<synchronous>, transform_indices = @transform_5, window_bounds = array<i64: 1, 128>}, {pipeline_mode = #tpu.pipeline_mode<synchronous>, transform_indices = @transform_6, window_bounds = array<i64: 9, 128, 128>}, {pipeline_mode = #tpu.pipeline_mode<synchronous>, transform_indices = @transform_7, window_bounds = array<i64: 1, 128>}, {pipeline_mode = #tpu.pipeline_mode<synchronous>, transform_indices = @transform_8, window_bounds = array<i64: 1, 128>}, {pipeline_mode = #tpu.pipeline_mode<synchronous>, transform_indices = @transform_9, window_bounds = array<i64: 1, 128>}, {pipeline_mode = #tpu.pipeline_mode<synchronous>, transform_indices = @transform_10, window_bounds = array<i64: 128, 128>}, {pipeline_mode = #tpu.pipeline_mode<synchronous>, transform_indices = @transform_11, window_bounds = array<i64: 1, 128>}, {pipeline_mode = #tpu.pipeline_mode<synchronous>, transform_indices = @transform_12, window_bounds = array<i64: 9, 128, 128>}, {pipeline_mode = #tpu.pipeline_mode<synchronous>, transform_indices = @transform_13, window_bounds = array<i64: 1, 128>}, {pipeline_mode = #tpu.pipeline_mode<synchronous>, transform_indices = @transform_14, window_bounds = array<i64: 128, 128>}, {pipeline_mode = #tpu.pipeline_mode<synchronous>, transform_indices = @transform_15, window_bounds = array<i64: 1, 128>}, {transform_indices = @transform_16, window_bounds = array<i64: 1, 328, 128>}]} {
    %cst = arith.constant 0.000000e+00 : f32
    %0 = vector.broadcast %cst : f32 to vector<376x128xf32>
    %c0 = arith.constant 0 : index
    %c0_0 = arith.constant 0 : index
    %1 = vector.load %arg18[%c0, %c0_0] : memref<376x128xf32, #tpu.memory_space<vmem>>, vector<376x128xf32>
    tpu.vector_store %arg18[%c0, %c0_0], %0 {strides = array<i32>} : memref<376x128xf32, #tpu.memory_space<vmem>>, vector<376x128xf32>,
    %c0_1 = arith.constant 0 : index
    %c0_2 = arith.constant 0 : index
    %2 = vector.load %arg2[%c0_1, %c0_2] : memref<328x128xf32, #tpu.memory_space<vmem>>, vector<328x128xf32>
    %c0_3 = arith.constant 0 : index
    %c0_4 = arith.constant 0 : index
    %c0_5 = arith.constant 0 : index
    %3 = vector.load %arg1[%c0_3, %c0_4, %c0_5] : memref<1x328x128xf32, #tpu.memory_space<vmem>>, vector<1x328x128xf32>
    %4 = vector.shape_cast %3 : vector<1x328x128xf32> to vector<328x128xf32>
    %c0_6 = arith.constant 0 : index
    %c0_7 = arith.constant 0 : index
    %5 = vector.load %arg3[%c0_6, %c0_7] : memref<1x128xf32, #tpu.memory_space<vmem>>, vector<1x128xf32>
    %6 = vector.broadcast %5 : vector<1x128xf32> to vector<328x128xf32>
    %7 = arith.mulf %4, %6 : vector<328x128xf32>
    %c0_8 = arith.constant 0 : index
    %c0_9 = arith.constant 0 : index
    %8 = vector.load %arg4[%c0_8, %c0_9] : memref<1x128xf32, #tpu.memory_space<vmem>>, vector<1x128xf32>
    %9 = vector.broadcast %8 : vector<1x128xf32> to vector<328x128xf32>
    %10 = arith.addf %7, %9 : vector<328x128xf32>
    %cst_10 = arith.constant 0.000000e+00 : f32
    %11 = vector.broadcast %cst_10 : f32 to vector<328x128xf32>
    %12 = arith.maximumf %10, %11 : vector<328x128xf32>
    %c0_11 = arith.constant 0 : index
    %c0_12 = arith.constant 0 : index
    %13 = vector.load %arg5[%c0_11, %c0_12] : memref<128x128xf32, #tpu.memory_space<vmem>>, vector<128x128xf32>
    %cst_13 = arith.constant dense<0.000000e+00> : vector<328x128xf32>
    %14 = tpu.matmul %12, %13, %cst_13 {dimension_numbers = #tpu.dot_dimension_numbers<[1], [0], [0], [1], [0, 0, 1, 1], [], []>} : vector<328x128xf32>, vector<128x128xf32>, vector<328x128xf32> -> vector<328x128xf32>
    %c0_14 = arith.constant 0 : index
    %c0_15 = arith.constant 0 : index
    %15 = vector.load %arg6[%c0_14, %c0_15] : memref<1x128xf32, #tpu.memory_space<vmem>>, vector<1x128xf32>
    %16 = vector.broadcast %15 : vector<1x128xf32> to vector<328x128xf32>
    %17 = arith.addf %14, %16 : vector<328x128xf32>
    %cst_16 = arith.constant 0.000000e+00 : f32
    %18 = vector.broadcast %cst_16 : f32 to vector<328x128xf32>
    %19 = arith.maximumf %17, %18 : vector<328x128xf32>
    %20 = arith.mulf %19, %2 : vector<328x128xf32>
    %c24 = arith.constant 24 : index
    %c0_17 = arith.constant 0 : index
    %21 = vector.load %arg18[%c24, %c0_17] : memref<376x128xf32, #tpu.memory_space<vmem>>, vector<328x128xf32>
    tpu.vector_store %arg18[%c24, %c0_17], %20 {strides = array<i32>} : memref<376x128xf32, #tpu.memory_space<vmem>>, vector<328x128xf32>,
    %cst_18 = arith.constant 0.000000e+00 : f32
    %22 = vector.broadcast %cst_18 : f32 to vector<328x128xf32>
    %c5 = arith.constant 5 : index
    %c0_19 = arith.constant 0 : index
    %23 = vector.load %arg18[%c5, %c0_19] : memref<376x128xf32, #tpu.memory_space<vmem>>, vector<328x128xf32>
    %c0_20 = arith.constant 0 : index
    %c0_21 = arith.constant 0 : index
    %c0_22 = arith.constant 0 : index
    %24 = vector.load %arg7[%c0_20, %c0_21, %c0_22] : memref<9x128x128xf32, #tpu.memory_space<vmem>>, vector<1x128x128xf32>
    %25 = vector.shape_cast %24 : vector<1x128x128xf32> to vector<128x128xf32>
    %cst_23 = arith.constant dense<0.000000e+00> : vector<328x128xf32>
    %26 = tpu.matmul %23, %25, %cst_23 {dimension_numbers = #tpu.dot_dimension_numbers<[1], [0], [0], [1], [0, 0, 1, 1], [], []>} : vector<328x128xf32>, vector<128x128xf32>, vector<328x128xf32> -> vector<328x128xf32>
    %27 = arith.addf %22, %26 : vector<328x128xf32>
    %c6 = arith.constant 6 : index
    %c0_24 = arith.constant 0 : index
    %28 = vector.load %arg18[%c6, %c0_24] : memref<376x128xf32, #tpu.memory_space<vmem>>, vector<328x128xf32>
    %c1 = arith.constant 1 : index
    %c0_25 = arith.constant 0 : index
    %c0_26 = arith.constant 0 : index
    %29 = vector.load %arg7[%c1, %c0_25, %c0_26] : memref<9x128x128xf32, #tpu.memory_space<vmem>>, vector<1x128x128xf32>
    %30 = vector.shape_cast %29 : vector<1x128x128xf32> to vector<128x128xf32>
    %cst_27 = arith.constant dense<0.000000e+00> : vector<328x128xf32>
    %31 = tpu.matmul %28, %30, %cst_27 {dimension_numbers = #tpu.dot_dimension_numbers<[1], [0], [0], [1], [0, 0, 1, 1], [], []>} : vector<328x128xf32>, vector<128x128xf32>, vector<328x128xf32> -> vector<328x128xf32>
    %32 = arith.addf %27, %31 : vector<328x128xf32>
    %c7 = arith.constant 7 : index
    %c0_28 = arith.constant 0 : index
    %33 = vector.load %arg18[%c7, %c0_28] : memref<376x128xf32, #tpu.memory_space<vmem>>, vector<328x128xf32>
    %c2 = arith.constant 2 : index
    %c0_29 = arith.constant 0 : index
    %c0_30 = arith.constant 0 : index
    %34 = vector.load %arg7[%c2, %c0_29, %c0_30] : memref<9x128x128xf32, #tpu.memory_space<vmem>>, vector<1x128x128xf32>
    %35 = vector.shape_cast %34 : vector<1x128x128xf32> to vector<128x128xf32>
    %cst_31 = arith.constant dense<0.000000e+00> : vector<328x128xf32>
    %36 = tpu.matmul %33, %35, %cst_31 {dimension_numbers = #tpu.dot_dimension_numbers<[1], [0], [0], [1], [0, 0, 1, 1], [], []>} : vector<328x128xf32>, vector<128x128xf32>, vector<328x128xf32> -> vector<328x128xf32>
    %37 = arith.addf %32, %36 : vector<328x128xf32>
    %c23 = arith.constant 23 : index
    %c0_32 = arith.constant 0 : index
    %38 = vector.load %arg18[%c23, %c0_32] : memref<376x128xf32, #tpu.memory_space<vmem>>, vector<328x128xf32>
    %c3 = arith.constant 3 : index
    %c0_33 = arith.constant 0 : index
    %c0_34 = arith.constant 0 : index
    %39 = vector.load %arg7[%c3, %c0_33, %c0_34] : memref<9x128x128xf32, #tpu.memory_space<vmem>>, vector<1x128x128xf32>
    %40 = vector.shape_cast %39 : vector<1x128x128xf32> to vector<128x128xf32>
    %cst_35 = arith.constant dense<0.000000e+00> : vector<328x128xf32>
    %41 = tpu.matmul %38, %40, %cst_35 {dimension_numbers = #tpu.dot_dimension_numbers<[1], [0], [0], [1], [0, 0, 1, 1], [], []>} : vector<328x128xf32>, vector<128x128xf32>, vector<328x128xf32> -> vector<328x128xf32>
    %42 = arith.addf %37, %41 : vector<328x128xf32>
    %c24_36 = arith.constant 24 : index
    %c0_37 = arith.constant 0 : index
    %43 = vector.load %arg18[%c24_36, %c0_37] : memref<376x128xf32, #tpu.memory_space<vmem>>, vector<328x128xf32>
    %c4 = arith.constant 4 : index
    %c0_38 = arith.constant 0 : index
    %c0_39 = arith.constant 0 : index
    %44 = vector.load %arg7[%c4, %c0_38, %c0_39] : memref<9x128x128xf32, #tpu.memory_space<vmem>>, vector<1x128x128xf32>
    %45 = vector.shape_cast %44 : vector<1x128x128xf32> to vector<128x128xf32>
    %cst_40 = arith.constant dense<0.000000e+00> : vector<328x128xf32>
    %46 = tpu.matmul %43, %45, %cst_40 {dimension_numbers = #tpu.dot_dimension_numbers<[1], [0], [0], [1], [0, 0, 1, 1], [], []>} : vector<328x128xf32>, vector<128x128xf32>, vector<328x128xf32> -> vector<328x128xf32>
    %47 = arith.addf %42, %46 : vector<328x128xf32>
    %c25 = arith.constant 25 : index
    %c0_41 = arith.constant 0 : index
    %48 = vector.load %arg18[%c25, %c0_41] : memref<376x128xf32, #tpu.memory_space<vmem>>, vector<328x128xf32>
    %c5_42 = arith.constant 5 : index
    %c0_43 = arith.constant 0 : index
    %c0_44 = arith.constant 0 : index
    %49 = vector.load %arg7[%c5_42, %c0_43, %c0_44] : memref<9x128x128xf32, #tpu.memory_space<vmem>>, vector<1x128x128xf32>
    %50 = vector.shape_cast %49 : vector<1x128x128xf32> to vector<128x128xf32>
    %cst_45 = arith.constant dense<0.000000e+00> : vector<328x128xf32>
    %51 = tpu.matmul %48, %50, %cst_45 {dimension_numbers = #tpu.dot_dimension_numbers<[1], [0], [0], [1], [0, 0, 1, 1], [], []>} : vector<328x128xf32>, vector<128x128xf32>, vector<328x128xf32> -> vector<328x128xf32>
    %52 = arith.addf %47, %51 : vector<328x128xf32>
    %c41 = arith.constant 41 : index
    %c0_46 = arith.constant 0 : index
    %53 = vector.load %arg18[%c41, %c0_46] : memref<376x128xf32, #tpu.memory_space<vmem>>, vector<328x128xf32>
    %c6_47 = arith.constant 6 : index
    %c0_48 = arith.constant 0 : index
    %c0_49 = arith.constant 0 : index
    %54 = vector.load %arg7[%c6_47, %c0_48, %c0_49] : memref<9x128x128xf32, #tpu.memory_space<vmem>>, vector<1x128x128xf32>
    %55 = vector.shape_cast %54 : vector<1x128x128xf32> to vector<128x128xf32>
    %cst_50 = arith.constant dense<0.000000e+00> : vector<328x128xf32>
    %56 = tpu.matmul %53, %55, %cst_50 {dimension_numbers = #tpu.dot_dimension_numbers<[1], [0], [0], [1], [0, 0, 1, 1], [], []>} : vector<328x128xf32>, vector<128x128xf32>, vector<328x128xf32> -> vector<328x128xf32>
    %57 = arith.addf %52, %56 : vector<328x128xf32>
    %c42 = arith.constant 42 : index
    %c0_51 = arith.constant 0 : index
    %58 = vector.load %arg18[%c42, %c0_51] : memref<376x128xf32, #tpu.memory_space<vmem>>, vector<328x128xf32>
    %c7_52 = arith.constant 7 : index
    %c0_53 = arith.constant 0 : index
    %c0_54 = arith.constant 0 : index
    %59 = vector.load %arg7[%c7_52, %c0_53, %c0_54] : memref<9x128x128xf32, #tpu.memory_space<vmem>>, vector<1x128x128xf32>
    %60 = vector.shape_cast %59 : vector<1x128x128xf32> to vector<128x128xf32>
    %cst_55 = arith.constant dense<0.000000e+00> : vector<328x128xf32>
    %61 = tpu.matmul %58, %60, %cst_55 {dimension_numbers = #tpu.dot_dimension_numbers<[1], [0], [0], [1], [0, 0, 1, 1], [], []>} : vector<328x128xf32>, vector<128x128xf32>, vector<328x128xf32> -> vector<328x128xf32>
    %62 = arith.addf %57, %61 : vector<328x128xf32>
    %c43 = arith.constant 43 : index
    %c0_56 = arith.constant 0 : index
    %63 = vector.load %arg18[%c43, %c0_56] : memref<376x128xf32, #tpu.memory_space<vmem>>, vector<328x128xf32>
    %c8 = arith.constant 8 : index
    %c0_57 = arith.constant 0 : index
    %c0_58 = arith.constant 0 : index
    %64 = vector.load %arg7[%c8, %c0_57, %c0_58] : memref<9x128x128xf32, #tpu.memory_space<vmem>>, vector<1x128x128xf32>
    %65 = vector.shape_cast %64 : vector<1x128x128xf32> to vector<128x128xf32>
    %cst_59 = arith.constant dense<0.000000e+00> : vector<328x128xf32>
    %66 = tpu.matmul %63, %65, %cst_59 {dimension_numbers = #tpu.dot_dimension_numbers<[1], [0], [0], [1], [0, 0, 1, 1], [], []>} : vector<328x128xf32>, vector<128x128xf32>, vector<328x128xf32> -> vector<328x128xf32>
    %67 = arith.addf %62, %66 : vector<328x128xf32>
    %68 = arith.addf %4, %67 : vector<328x128xf32>
    %c0_60 = arith.constant 0 : index
    %c0_61 = arith.constant 0 : index
    %69 = vector.load %arg8[%c0_60, %c0_61] : memref<1x128xf32, #tpu.memory_space<vmem>>, vector<1x128xf32>
    %70 = vector.broadcast %69 : vector<1x128xf32> to vector<328x128xf32>
    %71 = arith.addf %68, %70 : vector<328x128xf32>
    %c0_62 = arith.constant 0 : index
    %c0_63 = arith.constant 0 : index
    %72 = vector.load %arg9[%c0_62, %c0_63] : memref<1x128xf32, #tpu.memory_space<vmem>>, vector<1x128xf32>
    %73 = vector.broadcast %72 : vector<1x128xf32> to vector<328x128xf32>
    %74 = arith.mulf %71, %73 : vector<328x128xf32>
    %c0_64 = arith.constant 0 : index
    %c0_65 = arith.constant 0 : index
    %75 = vector.load %arg10[%c0_64, %c0_65] : memref<1x128xf32, #tpu.memory_space<vmem>>, vector<1x128xf32>
    %76 = vector.broadcast %75 : vector<1x128xf32> to vector<328x128xf32>
    %77 = arith.addf %74, %76 : vector<328x128xf32>
    %cst_66 = arith.constant 0.000000e+00 : f32
    %78 = vector.broadcast %cst_66 : f32 to vector<328x128xf32>
    %79 = arith.maximumf %77, %78 : vector<328x128xf32>
    %c0_67 = arith.constant 0 : index
    %c0_68 = arith.constant 0 : index
    %80 = vector.load %arg11[%c0_67, %c0_68] : memref<128x128xf32, #tpu.memory_space<vmem>>, vector<128x128xf32>
    %cst_69 = arith.constant dense<0.000000e+00> : vector<328x128xf32>
    %81 = tpu.matmul %79, %80, %cst_69 {dimension_numbers = #tpu.dot_dimension_numbers<[1], [0], [0], [1], [0, 0, 1, 1], [], []>} : vector<328x128xf32>, vector<128x128xf32>, vector<328x128xf32> -> vector<328x128xf32>
    %c0_70 = arith.constant 0 : index
    %c0_71 = arith.constant 0 : index
    %82 = vector.load %arg12[%c0_70, %c0_71] : memref<1x128xf32, #tpu.memory_space<vmem>>, vector<1x128xf32>
    %83 = vector.broadcast %82 : vector<1x128xf32> to vector<328x128xf32>
    %84 = arith.addf %81, %83 : vector<328x128xf32>
    %cst_72 = arith.constant 0.000000e+00 : f32
    %85 = vector.broadcast %cst_72 : f32 to vector<328x128xf32>
    %86 = arith.maximumf %84, %85 : vector<328x128xf32>
    %87 = arith.mulf %86, %2 : vector<328x128xf32>
    %c24_73 = arith.constant 24 : index
    %c0_74 = arith.constant 0 : index
    %88 = vector.load %arg18[%c24_73, %c0_74] : memref<376x128xf32, #tpu.memory_space<vmem>>, vector<328x128xf32>
    tpu.vector_store %arg18[%c24_73, %c0_74], %87 {strides = array<i32>} : memref<376x128xf32, #tpu.memory_space<vmem>>, vector<328x128xf32>,
    %cst_75 = arith.constant 0.000000e+00 : f32
    %89 = vector.broadcast %cst_75 : f32 to vector<328x128xf32>
    %c5_76 = arith.constant 5 : index
    %c0_77 = arith.constant 0 : index
    %90 = vector.load %arg18[%c5_76, %c0_77] : memref<376x128xf32, #tpu.memory_space<vmem>>, vector<328x128xf32>
    %c0_78 = arith.constant 0 : index
    %c0_79 = arith.constant 0 : index
    %c0_80 = arith.constant 0 : index
    %91 = vector.load %arg13[%c0_78, %c0_79, %c0_80] : memref<9x128x128xf32, #tpu.memory_space<vmem>>, vector<1x128x128xf32>
    %92 = vector.shape_cast %91 : vector<1x128x128xf32> to vector<128x128xf32>
    %cst_81 = arith.constant dense<0.000000e+00> : vector<328x128xf32>
    %93 = tpu.matmul %90, %92, %cst_81 {dimension_numbers = #tpu.dot_dimension_numbers<[1], [0], [0], [1], [0, 0, 1, 1], [], []>} : vector<328x128xf32>, vector<128x128xf32>, vector<328x128xf32> -> vector<328x128xf32>
    %94 = arith.addf %89, %93 : vector<328x128xf32>
    %c6_82 = arith.constant 6 : index
    %c0_83 = arith.constant 0 : index
    %95 = vector.load %arg18[%c6_82, %c0_83] : memref<376x128xf32, #tpu.memory_space<vmem>>, vector<328x128xf32>
    %c1_84 = arith.constant 1 : index
    %c0_85 = arith.constant 0 : index
    %c0_86 = arith.constant 0 : index
    %96 = vector.load %arg13[%c1_84, %c0_85, %c0_86] : memref<9x128x128xf32, #tpu.memory_space<vmem>>, vector<1x128x128xf32>
    %97 = vector.shape_cast %96 : vector<1x128x128xf32> to vector<128x128xf32>
    %cst_87 = arith.constant dense<0.000000e+00> : vector<328x128xf32>
    %98 = tpu.matmul %95, %97, %cst_87 {dimension_numbers = #tpu.dot_dimension_numbers<[1], [0], [0], [1], [0, 0, 1, 1], [], []>} : vector<328x128xf32>, vector<128x128xf32>, vector<328x128xf32> -> vector<328x128xf32>
    %99 = arith.addf %94, %98 : vector<328x128xf32>
    %c7_88 = arith.constant 7 : index
    %c0_89 = arith.constant 0 : index
    %100 = vector.load %arg18[%c7_88, %c0_89] : memref<376x128xf32, #tpu.memory_space<vmem>>, vector<328x128xf32>
    %c2_90 = arith.constant 2 : index
    %c0_91 = arith.constant 0 : index
    %c0_92 = arith.constant 0 : index
    %101 = vector.load %arg13[%c2_90, %c0_91, %c0_92] : memref<9x128x128xf32, #tpu.memory_space<vmem>>, vector<1x128x128xf32>
    %102 = vector.shape_cast %101 : vector<1x128x128xf32> to vector<128x128xf32>
    %cst_93 = arith.constant dense<0.000000e+00> : vector<328x128xf32>
    %103 = tpu.matmul %100, %102, %cst_93 {dimension_numbers = #tpu.dot_dimension_numbers<[1], [0], [0], [1], [0, 0, 1, 1], [], []>} : vector<328x128xf32>, vector<128x128xf32>, vector<328x128xf32> -> vector<328x128xf32>
    %104 = arith.addf %99, %103 : vector<328x128xf32>
    %c23_94 = arith.constant 23 : index
    %c0_95 = arith.constant 0 : index
    %105 = vector.load %arg18[%c23_94, %c0_95] : memref<376x128xf32, #tpu.memory_space<vmem>>, vector<328x128xf32>
    %c3_96 = arith.constant 3 : index
    %c0_97 = arith.constant 0 : index
    %c0_98 = arith.constant 0 : index
    %106 = vector.load %arg13[%c3_96, %c0_97, %c0_98] : memref<9x128x128xf32, #tpu.memory_space<vmem>>, vector<1x128x128xf32>
    %107 = vector.shape_cast %106 : vector<1x128x128xf32> to vector<128x128xf32>
    %cst_99 = arith.constant dense<0.000000e+00> : vector<328x128xf32>
    %108 = tpu.matmul %105, %107, %cst_99 {dimension_numbers = #tpu.dot_dimension_numbers<[1], [0], [0], [1], [0, 0, 1, 1], [], []>} : vector<328x128xf32>, vector<128x128xf32>, vector<328x128xf32> -> vector<328x128xf32>
    %109 = arith.addf %104, %108 : vector<328x128xf32>
    %c24_100 = arith.constant 24 : index
    %c0_101 = arith.constant 0 : index
    %110 = vector.load %arg18[%c24_100, %c0_101] : memref<376x128xf32, #tpu.memory_space<vmem>>, vector<328x128xf32>
    %c4_102 = arith.constant 4 : index
    %c0_103 = arith.constant 0 : index
    %c0_104 = arith.constant 0 : index
    %111 = vector.load %arg13[%c4_102, %c0_103, %c0_104] : memref<9x128x128xf32, #tpu.memory_space<vmem>>, vector<1x128x128xf32>
    %112 = vector.shape_cast %111 : vector<1x128x128xf32> to vector<128x128xf32>
    %cst_105 = arith.constant dense<0.000000e+00> : vector<328x128xf32>
    %113 = tpu.matmul %110, %112, %cst_105 {dimension_numbers = #tpu.dot_dimension_numbers<[1], [0], [0], [1], [0, 0, 1, 1], [], []>} : vector<328x128xf32>, vector<128x128xf32>, vector<328x128xf32> -> vector<328x128xf32>
    %114 = arith.addf %109, %113 : vector<328x128xf32>
    %c25_106 = arith.constant 25 : index
    %c0_107 = arith.constant 0 : index
    %115 = vector.load %arg18[%c25_106, %c0_107] : memref<376x128xf32, #tpu.memory_space<vmem>>, vector<328x128xf32>
    %c5_108 = arith.constant 5 : index
    %c0_109 = arith.constant 0 : index
    %c0_110 = arith.constant 0 : index
    %116 = vector.load %arg13[%c5_108, %c0_109, %c0_110] : memref<9x128x128xf32, #tpu.memory_space<vmem>>, vector<1x128x128xf32>
    %117 = vector.shape_cast %116 : vector<1x128x128xf32> to vector<128x128xf32>
    %cst_111 = arith.constant dense<0.000000e+00> : vector<328x128xf32>
    %118 = tpu.matmul %115, %117, %cst_111 {dimension_numbers = #tpu.dot_dimension_numbers<[1], [0], [0], [1], [0, 0, 1, 1], [], []>} : vector<328x128xf32>, vector<128x128xf32>, vector<328x128xf32> -> vector<328x128xf32>
    %119 = arith.addf %114, %118 : vector<328x128xf32>
    %c41_112 = arith.constant 41 : index
    %c0_113 = arith.constant 0 : index
    %120 = vector.load %arg18[%c41_112, %c0_113] : memref<376x128xf32, #tpu.memory_space<vmem>>, vector<328x128xf32>
    %c6_114 = arith.constant 6 : index
    %c0_115 = arith.constant 0 : index
    %c0_116 = arith.constant 0 : index
    %121 = vector.load %arg13[%c6_114, %c0_115, %c0_116] : memref<9x128x128xf32, #tpu.memory_space<vmem>>, vector<1x128x128xf32>
    %122 = vector.shape_cast %121 : vector<1x128x128xf32> to vector<128x128xf32>
    %cst_117 = arith.constant dense<0.000000e+00> : vector<328x128xf32>
    %123 = tpu.matmul %120, %122, %cst_117 {dimension_numbers = #tpu.dot_dimension_numbers<[1], [0], [0], [1], [0, 0, 1, 1], [], []>} : vector<328x128xf32>, vector<128x128xf32>, vector<328x128xf32> -> vector<328x128xf32>
    %124 = arith.addf %119, %123 : vector<328x128xf32>
    %c42_118 = arith.constant 42 : index
    %c0_119 = arith.constant 0 : index
    %125 = vector.load %arg18[%c42_118, %c0_119] : memref<376x128xf32, #tpu.memory_space<vmem>>, vector<328x128xf32>
    %c7_120 = arith.constant 7 : index
    %c0_121 = arith.constant 0 : index
    %c0_122 = arith.constant 0 : index
    %126 = vector.load %arg13[%c7_120, %c0_121, %c0_122] : memref<9x128x128xf32, #tpu.memory_space<vmem>>, vector<1x128x128xf32>
    %127 = vector.shape_cast %126 : vector<1x128x128xf32> to vector<128x128xf32>
    %cst_123 = arith.constant dense<0.000000e+00> : vector<328x128xf32>
    %128 = tpu.matmul %125, %127, %cst_123 {dimension_numbers = #tpu.dot_dimension_numbers<[1], [0], [0], [1], [0, 0, 1, 1], [], []>} : vector<328x128xf32>, vector<128x128xf32>, vector<328x128xf32> -> vector<328x128xf32>
    %129 = arith.addf %124, %128 : vector<328x128xf32>
    %c43_124 = arith.constant 43 : index
    %c0_125 = arith.constant 0 : index
    %130 = vector.load %arg18[%c43_124, %c0_125] : memref<376x128xf32, #tpu.memory_space<vmem>>, vector<328x128xf32>
    %c8_126 = arith.constant 8 : index
    %c0_127 = arith.constant 0 : index
    %c0_128 = arith.constant 0 : index
    %131 = vector.load %arg13[%c8_126, %c0_127, %c0_128] : memref<9x128x128xf32, #tpu.memory_space<vmem>>, vector<1x128x128xf32>
    %132 = vector.shape_cast %131 : vector<1x128x128xf32> to vector<128x128xf32>
    %cst_129 = arith.constant dense<0.000000e+00> : vector<328x128xf32>
    %133 = tpu.matmul %130, %132, %cst_129 {dimension_numbers = #tpu.dot_dimension_numbers<[1], [0], [0], [1], [0, 0, 1, 1], [], []>} : vector<328x128xf32>, vector<128x128xf32>, vector<328x128xf32> -> vector<328x128xf32>
    %134 = arith.addf %129, %133 : vector<328x128xf32>
    %135 = arith.addf %71, %134 : vector<328x128xf32>
    %c0_130 = arith.constant 0 : index
    %c0_131 = arith.constant 0 : index
    %136 = vector.load %arg14[%c0_130, %c0_131] : memref<1x128xf32, #tpu.memory_space<vmem>>, vector<1x128xf32>
    %137 = vector.broadcast %136 : vector<1x128xf32> to vector<328x128xf32>
    %138 = arith.addf %135, %137 : vector<328x128xf32>
    %c0_132 = arith.constant 0 : index
    %c0_133 = arith.constant 0 : index
    %139 = vector.load %arg15[%c0_132, %c0_133] : memref<128x128xf32, #tpu.memory_space<vmem>>, vector<128x128xf32>
    %cst_134 = arith.constant dense<0.000000e+00> : vector<328x128xf32>
    %140 = tpu.matmul %138, %139, %cst_134 {dimension_numbers = #tpu.dot_dimension_numbers<[1], [0], [0], [1], [0, 0, 1, 1], [], []>} : vector<328x128xf32>, vector<128x128xf32>, vector<328x128xf32> -> vector<328x128xf32>
    %c0_135 = arith.constant 0 : index
    %c0_136 = arith.constant 0 : index
    %141 = vector.load %arg16[%c0_135, %c0_136] : memref<1x128xf32, #tpu.memory_space<vmem>>, vector<1x128xf32>
    %142 = vector.broadcast %141 : vector<1x128xf32> to vector<328x128xf32>
    %143 = arith.addf %140, %142 : vector<328x128xf32>
    %cst_137 = arith.constant 0.000000e+00 : f32
    %144 = vector.broadcast %cst_137 : f32 to vector<328x128xf32>
    %145 = arith.maximumf %143, %144 : vector<328x128xf32>
    %c0_138 = arith.constant 0 : index
    %c0_139 = arith.constant 0 : index
    %c0_140 = arith.constant 0 : index
    %146 = vector.load %arg17[%c0_138, %c0_139, %c0_140] : memref<1x328x128xf32, #tpu.memory_space<vmem>>, vector<1x328x128xf32>
    %147 = vector.shape_cast %146 : vector<1x328x128xf32> to vector<328x128xf32>
    %148 = vector.shape_cast %145 : vector<328x128xf32> to vector<1x328x128xf32>
    tpu.vector_store %arg17[%c0_138, %c0_139, %c0_140], %148 {strides = array<i32>} : memref<1x328x128xf32, #tpu.memory_space<vmem>>, vector<1x328x128xf32>,
    return
  }
  func.func @transform_0(%arg0: i32) -> (i32, i32, i32) {
    %c0_i32 = arith.constant 0 : i32
    %c0_i32_0 = arith.constant 0 : i32
    %c0_i32_1 = arith.constant 0 : i32
    return %arg0, %c0_i32, %c0_i32_0 : i32, i32, i32
  }
  func.func @transform_1(%arg0: i32) -> (i32, i32) {
    %c0_i32 = arith.constant 0 : i32
    %c0_i32_0 = arith.constant 0 : i32
    %c0_i32_1 = arith.constant 0 : i32
    return %c0_i32, %c0_i32_0 : i32, i32
  }
  func.func @transform_2(%arg0: i32) -> (i32, i32) {
    %c0_i32 = arith.constant 0 : i32
    %c0_i32_0 = arith.constant 0 : i32
    %c0_i32_1 = arith.constant 0 : i32
    return %c0_i32, %c0_i32_0 : i32, i32
  }
  func.func @transform_3(%arg0: i32) -> (i32, i32) {
    %c0_i32 = arith.constant 0 : i32
    %c0_i32_0 = arith.constant 0 : i32
    %c0_i32_1 = arith.constant 0 : i32
    return %c0_i32, %c0_i32_0 : i32, i32
  }
  func.func @transform_4(%arg0: i32) -> (i32, i32) {
    %c0_i32 = arith.constant 0 : i32
    %c0_i32_0 = arith.constant 0 : i32
    %c0_i32_1 = arith.constant 0 : i32
    return %c0_i32, %c0_i32_0 : i32, i32
  }
  func.func @transform_5(%arg0: i32) -> (i32, i32) {
    %c0_i32 = arith.constant 0 : i32
    %c0_i32_0 = arith.constant 0 : i32
    %c0_i32_1 = arith.constant 0 : i32
    return %c0_i32, %c0_i32_0 : i32, i32
  }
  func.func @transform_6(%arg0: i32) -> (i32, i32, i32) {
    %c0_i32 = arith.constant 0 : i32
    %c0_i32_0 = arith.constant 0 : i32
    %c0_i32_1 = arith.constant 0 : i32
    %c0_i32_2 = arith.constant 0 : i32
    return %c0_i32, %c0_i32_0, %c0_i32_1 : i32, i32, i32
  }
  func.func @transform_7(%arg0: i32) -> (i32, i32) {
    %c0_i32 = arith.constant 0 : i32
    %c0_i32_0 = arith.constant 0 : i32
    %c0_i32_1 = arith.constant 0 : i32
    return %c0_i32, %c0_i32_0 : i32, i32
  }
  func.func @transform_8(%arg0: i32) -> (i32, i32) {
    %c0_i32 = arith.constant 0 : i32
    %c0_i32_0 = arith.constant 0 : i32
    %c0_i32_1 = arith.constant 0 : i32
    return %c0_i32, %c0_i32_0 : i32, i32
  }
  func.func @transform_9(%arg0: i32) -> (i32, i32) {
    %c0_i32 = arith.constant 0 : i32
    %c0_i32_0 = arith.constant 0 : i32
    %c0_i32_1 = arith.constant 0 : i32
    return %c0_i32, %c0_i32_0 : i32, i32
  }
  func.func @transform_10(%arg0: i32) -> (i32, i32) {
    %c0_i32 = arith.constant 0 : i32
    %c0_i32_0 = arith.constant 0 : i32
    %c0_i32_1 = arith.constant 0 : i32
    return %c0_i32, %c0_i32_0 : i32, i32
  }
  func.func @transform_11(%arg0: i32) -> (i32, i32) {
    %c0_i32 = arith.constant 0 : i32
    %c0_i32_0 = arith.constant 0 : i32
    %c0_i32_1 = arith.constant 0 : i32
    return %c0_i32, %c0_i32_0 : i32, i32
  }
  func.func @transform_12(%arg0: i32) -> (i32, i32, i32) {
    %c0_i32 = arith.constant 0 : i32
    %c0_i32_0 = arith.constant 0 : i32
    %c0_i32_1 = arith.constant 0 : i32
    %c0_i32_2 = arith.constant 0 : i32
    return %c0_i32, %c0_i32_0, %c0_i32_1 : i32, i32, i32
  }
  func.func @transform_13(%arg0: i32) -> (i32, i32) {
    %c0_i32 = arith.constant 0 : i32
    %c0_i32_0 = arith.constant 0 : i32
    %c0_i32_1 = arith.constant 0 : i32
    return %c0_i32, %c0_i32_0 : i32, i32
  }
  func.func @transform_14(%arg0: i32) -> (i32, i32) {
    %c0_i32 = arith.constant 0 : i32
    %c0_i32_0 = arith.constant 0 : i32
    %c0_i32_1 = arith.constant 0 : i32
    return %c0_i32, %c0_i32_0 : i32, i32
  }
  func.func @transform_15(%arg0: i32) -> (i32, i32) {
    %c0_i32 = arith.constant 0 : i32
    %c0_i32_0 = arith.constant 0 : i32
    %c0_i32_1 = arith.constant 0 : i32
    return %c0_i32, %c0_i32_0 : i32, i32
  }
  func.func @transform_16(%arg0: i32) -> (i32, i32, i32) {
    %c0_i32 = arith.constant 0 : i32
    %c0_i32_0 = arith.constant 0 : i32
    %c0_i32_1 = arith.constant 0 : i32
    return %arg0, %c0_i32, %c0_i32_0 : i32, i32, i32
  }
}

</mosaic_0001>

<llo_original>
// kernel: dense_block_forward.1
$region0: #{dense_block_forward.1}
  #allocation0 [shape = 'u32[]', space=smem, size = 0x4, offset = 0x4, fixed_abs, tag = 'smem constant byte address 0x4 - core index']
  #allocation1 [shape = 'u32[144,128]{1,0:T(1,128)}', space=vmem, size = 0x12000, scoped, tag = 'internal scratch']
  #allocation2 [shape = 'f32[376,128]{1,0:T(8,128)}', space=vmem, size = 0x2f000, scoped, tag = 'scratch operand']
  %s0 = inlined_call_operand.vmem [shape: f32[2,328,128], index: 0, kind: input, shape index: {}]
  %s1 = inlined_call_operand.vmem [shape: f32[328,128], index: 1, kind: input, shape index: {}]
  %s2 = inlined_call_operand.vmem [shape: f32[1,128], index: 2, kind: input, shape index: {}]
  %s3 = inlined_call_operand.vmem [shape: f32[1,128], index: 3, kind: input, shape index: {}]
  %s4 = inlined_call_operand.vmem [shape: f32[128,128], index: 4, kind: input, shape index: {}]
  %s5 = inlined_call_operand.vmem [shape: f32[1,128], index: 5, kind: input, shape index: {}]
  %s6 = inlined_call_operand.vmem [shape: f32[9,128,128], index: 6, kind: input, shape index: {}]
  %s7 = inlined_call_operand.vmem [shape: f32[1,128], index: 7, kind: input, shape index: {}]
  %s8 = inlined_call_operand.vmem [shape: f32[1,128], index: 8, kind: input, shape index: {}]
  %s9 = inlined_call_operand.vmem [shape: f32[1,128], index: 9, kind: input, shape index: {}]
  %s10 = inlined_call_operand.vmem [shape: f32[128,128], index: 10, kind: input, shape index: {}]
  %s11 = inlined_call_operand.vmem [shape: f32[1,128], index: 11, kind: input, shape index: {}]
  %s12 = inlined_call_operand.vmem [shape: f32[9,128,128], index: 12, kind: input, shape index: {}]
  %s13 = inlined_call_operand.vmem [shape: f32[1,128], index: 13, kind: input, shape index: {}]
  %s14 = inlined_call_operand.vmem [shape: f32[128,128], index: 14, kind: input, shape index: {}]
  %s15 = inlined_call_operand.vmem [shape: f32[1,128], index: 15, kind: input, shape index: {}]
  %s16 = inlined_call_operand.vmem [shape: f32[2,328,128], index: 16, kind: output, shape index: {}]
  %s17 = sld [smem:[#allocation0]]
  $region97: #{dense_block_forward.1} parent=0
    _
  %s19 = ssub.s32 1, %s17
  %s20 = scalar_select 0, %s19, %s17
  loop: start=0, step=1, limit=4
  $region2: #{dense_block_forward.1} parent=0 // loop_pre_header
    _
  $region3: #{dense_block_forward.1} parent=0 // loop_header
    %s22 = sphi 0, %s26
    %p23 = scmp.ge.s32.totalorder %s22, 4
    %s32 = sphi 0, %s34
    %s35 = sphi 0, %s32
    %s36 = sphi 0, %s35
    %s52 = sphi 0, %s36
    %s56 = sphi 0, %s56
    %s58 = sphi 0, %s56
    %s59 = sphi 0, %s58
    %s73 = sphi 0, %s59
    %s77 = sphi 0, %s77
    %s79 = sphi 0, %s77
    %s80 = sphi 0, %s79
    %s94 = sphi 0, %s80
    %s98 = sphi 0, %s98
    %s100 = sphi 0, %s98
    %s101 = sphi 0, %s100
    %s115 = sphi 0, %s101
    %s119 = sphi 0, %s119
    %s121 = sphi 0, %s119
    %s122 = sphi 0, %s121
    %s136 = sphi 0, %s122
    %s140 = sphi 0, %s140
    %s142 = sphi 0, %s140
    %s143 = sphi 0, %s142
    %s157 = sphi 0, %s143
    %s161 = sphi 0, %s161
    %s163 = sphi 0, %s161
    %s164 = sphi 0, %s163
    %s178 = sphi 0, %s164
    %s182 = sphi 0, %s182
    %s184 = sphi 0, %s182
    %s185 = sphi 0, %s184
    %s199 = sphi 0, %s185
    %s203 = sphi 0, %s203
    %s205 = sphi 0, %s203
    %s206 = sphi 0, %s205
    %s220 = sphi 0, %s206
    %s224 = sphi 0, %s224
    %s226 = sphi 0, %s224
    %s227 = sphi 0, %s226
    %s241 = sphi 0, %s227
    %s245 = sphi 0, %s245
    %s247 = sphi 0, %s245
    %s248 = sphi 0, %s247
    %s262 = sphi 0, %s248
    %s266 = sphi 0, %s266
    %s268 = sphi 0, %s266
    %s269 = sphi 0, %s268
    %s283 = sphi 0, %s269
    %s287 = sphi 0, %s287
    %s289 = sphi 0, %s287
    %s290 = sphi 0, %s289
    %s304 = sphi 0, %s290
    %s308 = sphi 0, %s308
    %s310 = sphi 0, %s308
    %s311 = sphi 0, %s310
    %s325 = sphi 0, %s311
    %s329 = sphi 0, %s329
    %s331 = sphi 0, %s329
    %s332 = sphi 0, %s331
    %s346 = sphi 0, %s332
    %s350 = sphi 0, %s350
    %s352 = sphi 0, %s350
    %s353 = sphi 0, %s352
    %s367 = sphi 0, %s353
    %s373 = sphi 0, %s375
    %s376 = sphi 0, %s373
    %s377 = sphi 0, %s376
    %s393 = sphi 0, %s377
  $region4: #{dense_block_forward.1} parent=0 // loop_header_branch
    %25 = sbr.rel (%p23) target = $region8
  $region5: #{dense_block_forward.1} parent=0 // loop_body
    %s27 = ssub.s32 %s22, 1
    %s28 = ssub.s32 %s22, 2
    %s29 = sadd.s32 %s22, 1
    %s30 = ssub.s32 %s22, %s29
    %p31 = scmp.eq.s32.totalorder %s30, 0
    %s33 = sadd.s32 %s32, 1
    %s34 = scalar_select %p31, %s32, %s33
    %p37 = pneg %p31
    %p38 = scmp.eq.s32.totalorder %s22, 1
    %p39 = por %p37, %p38
    %p40 = scmp.ne.s32.totalorder %s32, %s35
    %p41 = scmp.eq.s32.totalorder %s22, 0
    %p42 = por %p40, %p41
    %p43 = scmp.ne.s32.totalorder %s32, %s35
    %p44 = scmp.eq.s32.totalorder %s27, 1
    %p45 = por %p43, %p44
    %p46 = scmp.ne.s32.totalorder %s35, %s36
    %p47 = scmp.eq.s32.totalorder %s27, 0
    %p48 = por %p46, %p47
    %p49 = scmp.ne.s32.totalorder %s35, %s36
    %p50 = scmp.eq.s32.totalorder %s28, 1
    %p51 = por %p49, %p50
    %p53 = scmp.ne.s32.totalorder %s36, %s52
    %p54 = scmp.eq.s32.totalorder %s28, 0
    %p55 = por %p53, %p54
    %s57 = sadd.s32 %s56, 1
    %p60 = scmp.eq.s32.totalorder %s22, 1
    %p61 = scmp.ne.s32.totalorder %s56, %s58
    %p62 = scmp.eq.s32.totalorder %s22, 0
    %p63 = por %p61, %p62
    %p64 = scmp.ne.s32.totalorder %s56, %s58
    %p65 = scmp.eq.s32.totalorder %s27, 1
    %p66 = por %p64, %p65
    %p67 = scmp.ne.s32.totalorder %s58, %s59
    %p68 = scmp.eq.s32.totalorder %s27, 0
    %p69 = por %p67, %p68
    %p70 = scmp.ne.s32.totalorder %s58, %s59
    %p71 = scmp.eq.s32.totalorder %s28, 1
    %p72 = por %p70, %p71
    %p74 = scmp.ne.s32.totalorder %s59, %s73
    %p75 = scmp.eq.s32.totalorder %s28, 0
    %p76 = por %p74, %p75
    %s78 = sadd.s32 %s77, 1
    %p81 = scmp.eq.s32.totalorder %s22, 1
    %p82 = scmp.ne.s32.totalorder %s77, %s79
    %p83 = scmp.eq.s32.totalorder %s22, 0
    %p84 = por %p82, %p83
    %p85 = scmp.ne.s32.totalorder %s77, %s79
    %p86 = scmp.eq.s32.totalorder %s27, 1
    %p87 = por %p85, %p86
    %p88 = scmp.ne.s32.totalorder %s79, %s80
    %p89 = scmp.eq.s32.totalorder %s27, 0
    %p90 = por %p88, %p89
    %p91 = scmp.ne.s32.totalorder %s79, %s80
    %p92 = scmp.eq.s32.totalorder %s28, 1
    %p93 = por %p91, %p92
    %p95 = scmp.ne.s32.totalorder %s80, %s94
    %p96 = scmp.eq.s32.totalorder %s28, 0
    %p97 = por %p95, %p96
    %s99 = sadd.s32 %s98, 1
    %p102 = scmp.eq.s32.totalorder %s22, 1
    %p103 = scmp.ne.s32.totalorder %s98, %s100
    %p104 = scmp.eq.s32.totalorder %s22, 0
    %p105 = por %p103, %p104
    %p106 = scmp.ne.s32.totalorder %s98, %s100
    %p107 = scmp.eq.s32.totalorder %s27, 1
    %p108 = por %p106, %p107
    %p109 = scmp.ne.s32.totalorder %s100, %s101
    %p110 = scmp.eq.s32.totalorder %s27, 0
    %p111 = por %p109, %p110
    %p112 = scmp.ne.s32.totalorder %s100, %s101
    %p113 = scmp.eq.s32.totalorder %s28, 1
    %p114 = por %p112, %p113
    %p116 = scmp.ne.s32.totalorder %s101, %s115
    %p117 = scmp.eq.s32.totalorder %s28, 0
    %p118 = por %p116, %p117
    %s120 = sadd.s32 %s119, 1
    %p123 = scmp.eq.s32.totalorder %s22, 1
    %p124 = scmp.ne.s32.totalorder %s119, %s121
    %p125 = scmp.eq.s32.totalorder %s22, 0
    %p126 = por %p124, %p125
    %p127 = scmp.ne.s32.totalorder %s119, %s121
    %p128 = scmp.eq.s32.totalorder %s27, 1
    %p129 = por %p127, %p128
    %p130 = scmp.ne.s32.totalorder %s121, %s122
    %p131 = scmp.eq.s32.totalorder %s27, 0
    %p132 = por %p130, %p131
    %p133 = scmp.ne.s32.totalorder %s121, %s122
    %p134 = scmp.eq.s32.totalorder %s28, 1
    %p135 = por %p133, %p134
    %p137 = scmp.ne.s32.totalorder %s122, %s136
    %p138 = scmp.eq.s32.totalorder %s28, 0
    %p139 = por %p137, %p138
    %s141 = sadd.s32 %s140, 1
    %p144 = scmp.eq.s32.totalorder %s22, 1
    %p145 = scmp.ne.s32.totalorder %s140, %s142
    %p146 = scmp.eq.s32.totalorder %s22, 0
    %p147 = por %p145, %p146
    %p148 = scmp.ne.s32.totalorder %s140, %s142
    %p149 = scmp.eq.s32.totalorder %s27, 1
    %p150 = por %p148, %p149
    %p151 = scmp.ne.s32.totalorder %s142, %s143
    %p152 = scmp.eq.s32.totalorder %s27, 0
    %p153 = por %p151, %p152
    %p154 = scmp.ne.s32.totalorder %s142, %s143
    %p155 = scmp.eq.s32.totalorder %s28, 1
    %p156 = por %p154, %p155
    %p158 = scmp.ne.s32.totalorder %s143, %s157
    %p159 = scmp.eq.s32.totalorder %s28, 0
    %p160 = por %p158, %p159
    %s162 = sadd.s32 %s161, 1
    %p165 = scmp.eq.s32.totalorder %s22, 1
    %p166 = scmp.ne.s32.totalorder %s161, %s163
    %p167 = scmp.eq.s32.totalorder %s22, 0
    %p168 = por %p166, %p167
    %p169 = scmp.ne.s32.totalorder %s161, %s163
    %p170 = scmp.eq.s32.totalorder %s27, 1
    %p171 = por %p169, %p170
    %p172 = scmp.ne.s32.totalorder %s163, %s164
    %p173 = scmp.eq.s32.totalorder %s27, 0
    %p174 = por %p172, %p173
    %p175 = scmp.ne.s32.totalorder %s163, %s164
    %p176 = scmp.eq.s32.totalorder %s28, 1
    %p177 = por %p175, %p176
    %p179 = scmp.ne.s32.totalorder %s164, %s178
    %p180 = scmp.eq.s32.totalorder %s28, 0
    %p181 = por %p179, %p180
    %s183 = sadd.s32 %s182, 1
    %p186 = scmp.eq.s32.totalorder %s22, 1
    %p187 = scmp.ne.s32.totalorder %s182, %s184
    %p188 = scmp.eq.s32.totalorder %s22, 0
    %p189 = por %p187, %p188
    %p190 = scmp.ne.s32.totalorder %s182, %s184
    %p191 = scmp.eq.s32.totalorder %s27, 1
    %p192 = por %p190, %p191
    %p193 = scmp.ne.s32.totalorder %s184, %s185
    %p194 = scmp.eq.s32.totalorder %s27, 0
    %p195 = por %p193, %p194
    %p196 = scmp.ne.s32.totalorder %s184, %s185
    %p197 = scmp.eq.s32.totalorder %s28, 1
    %p198 = por %p196, %p197
    %p200 = scmp.ne.s32.totalorder %s185, %s199
    %p201 = scmp.eq.s32.totalorder %s28, 0
    %p202 = por %p200, %p201
    %s204 = sadd.s32 %s203, 1
    %p207 = scmp.eq.s32.totalorder %s22, 1
    %p208 = scmp.ne.s32.totalorder %s203, %s205
    %p209 = scmp.eq.s32.totalorder %s22, 0
    %p210 = por %p208, %p209
    %p211 = scmp.ne.s32.totalorder %s203, %s205
    %p212 = scmp.eq.s32.totalorder %s27, 1
    %p213 = por %p211, %p212
    %p214 = scmp.ne.s32.totalorder %s205, %s206
    %p215 = scmp.eq.s32.totalorder %s27, 0
    %p216 = por %p214, %p215
    %p217 = scmp.ne.s32.totalorder %s205, %s206
    %p218 = scmp.eq.s32.totalorder %s28, 1
    %p219 = por %p217, %p218
    %p221 = scmp.ne.s32.totalorder %s206, %s220
    %p222 = scmp.eq.s32.totalorder %s28, 0
    %p223 = por %p221, %p222
    %s225 = sadd.s32 %s224, 1
    %p228 = scmp.eq.s32.totalorder %s22, 1
    %p229 = scmp.ne.s32.totalorder %s224, %s226
    %p230 = scmp.eq.s32.totalorder %s22, 0
    %p231 = por %p229, %p230
    %p232 = scmp.ne.s32.totalorder %s224, %s226
    %p233 = scmp.eq.s32.totalorder %s27, 1
    %p234 = por %p232, %p233
    %p235 = scmp.ne.s32.totalorder %s226, %s227
    %p236 = scmp.eq.s32.totalorder %s27, 0
    %p237 = por %p235, %p236
    %p238 = scmp.ne.s32.totalorder %s226, %s227
    %p239 = scmp.eq.s32.totalorder %s28, 1
    %p240 = por %p238, %p239
    %p242 = scmp.ne.s32.totalorder %s227, %s241
    %p243 = scmp.eq.s32.totalorder %s28, 0
    %p244 = por %p242, %p243
    %s246 = sadd.s32 %s245, 1
    %p249 = scmp.eq.s32.totalorder %s22, 1
    %p250 = scmp.ne.s32.totalorder %s245, %s247
    %p251 = scmp.eq.s32.totalorder %s22, 0
    %p252 = por %p250, %p251
    %p253 = scmp.ne.s32.totalorder %s245, %s247
    %p254 = scmp.eq.s32.totalorder %s27, 1
    %p255 = por %p253, %p254
    %p256 = scmp.ne.s32.totalorder %s247, %s248
    %p257 = scmp.eq.s32.totalorder %s27, 0
    %p258 = por %p256, %p257
    %p259 = scmp.ne.s32.totalorder %s247, %s248
    %p260 = scmp.eq.s32.totalorder %s28, 1
    %p261 = por %p259, %p260
    %p263 = scmp.ne.s32.totalorder %s248, %s262
    %p264 = scmp.eq.s32.totalorder %s28, 0
    %p265 = por %p263, %p264
    %s267 = sadd.s32 %s266, 1
    %p270 = scmp.eq.s32.totalorder %s22, 1
    %p271 = scmp.ne.s32.totalorder %s266, %s268
    %p272 = scmp.eq.s32.totalorder %s22, 0
    %p273 = por %p271, %p272
    %p274 = scmp.ne.s32.totalorder %s266, %s268
    %p275 = scmp.eq.s32.totalorder %s27, 1
    %p276 = por %p274, %p275
    %p277 = scmp.ne.s32.totalorder %s268, %s269
    %p278 = scmp.eq.s32.totalorder %s27, 0
    %p279 = por %p277, %p278
    %p280 = scmp.ne.s32.totalorder %s268, %s269
    %p281 = scmp.eq.s32.totalorder %s28, 1
    %p282 = por %p280, %p281
    %p284 = scmp.ne.s32.totalorder %s269, %s283
    %p285 = scmp.eq.s32.totalorder %s28, 0
    %p286 = por %p284, %p285
    %s288 = sadd.s32 %s287, 1
    %p291 = scmp.eq.s32.totalorder %s22, 1
    %p292 = scmp.ne.s32.totalorder %s287, %s289
    %p293 = scmp.eq.s32.totalorder %s22, 0
    %p294 = por %p292, %p293
    %p295 = scmp.ne.s32.totalorder %s287, %s289
    %p296 = scmp.eq.s32.totalorder %s27, 1
    %p297 = por %p295, %p296
    %p298 = scmp.ne.s32.totalorder %s289, %s290
    %p299 = scmp.eq.s32.totalorder %s27, 0
    %p300 = por %p298, %p299
    %p301 = scmp.ne.s32.totalorder %s289, %s290
    %p302 = scmp.eq.s32.totalorder %s28, 1
    %p303 = por %p301, %p302
    %p305 = scmp.ne.s32.totalorder %s290, %s304
    %p306 = scmp.eq.s32.totalorder %s28, 0
    %p307 = por %p305, %p306
    %s309 = sadd.s32 %s308, 1
    %p312 = scmp.eq.s32.totalorder %s22, 1
    %p313 = scmp.ne.s32.totalorder %s308, %s310
    %p314 = scmp.eq.s32.totalorder %s22, 0
    %p315 = por %p313, %p314
    %p316 = scmp.ne.s32.totalorder %s308, %s310
    %p317 = scmp.eq.s32.totalorder %s27, 1
    %p318 = por %p316, %p317
    %p319 = scmp.ne.s32.totalorder %s310, %s311
    %p320 = scmp.eq.s32.totalorder %s27, 0
    %p321 = por %p319, %p320
    %p322 = scmp.ne.s32.totalorder %s310, %s311
    %p323 = scmp.eq.s32.totalorder %s28, 1
    %p324 = por %p322, %p323
    %p326 = scmp.ne.s32.totalorder %s311, %s325
    %p327 = scmp.eq.s32.totalorder %s28, 0
    %p328 = por %p326, %p327
    %s330 = sadd.s32 %s329, 1
    %p333 = scmp.eq.s32.totalorder %s22, 1
    %p334 = scmp.ne.s32.totalorder %s329, %s331
    %p335 = scmp.eq.s32.totalorder %s22, 0
    %p336 = por %p334, %p335
    %p337 = scmp.ne.s32.totalorder %s329, %s331
    %p338 = scmp.eq.s32.totalorder %s27, 1
    %p339 = por %p337, %p338
    %p340 = scmp.ne.s32.totalorder %s331, %s332
    %p341 = scmp.eq.s32.totalorder %s27, 0
    %p342 = por %p340, %p341
    %p343 = scmp.ne.s32.totalorder %s331, %s332
    %p344 = scmp.eq.s32.totalorder %s28, 1
    %p345 = por %p343, %p344
    %p347 = scmp.ne.s32.totalorder %s332, %s346
    %p348 = scmp.eq.s32.totalorder %s28, 0
    %p349 = por %p347, %p348
    %s351 = sadd.s32 %s350, 1
    %p354 = scmp.eq.s32.totalorder %s22, 1
    %p355 = scmp.ne.s32.totalorder %s350, %s352
    %p356 = scmp.eq.s32.totalorder %s22, 0
    %p357 = por %p355, %p356
    %p358 = scmp.ne.s32.totalorder %s350, %s352
    %p359 = scmp.eq.s32.totalorder %s27, 1
    %p360 = por %p358, %p359
    %p361 = scmp.ne.s32.totalorder %s352, %s353
    %p362 = scmp.eq.s32.totalorder %s27, 0
    %p363 = por %p361, %p362
    %p364 = scmp.ne.s32.totalorder %s352, %s353
    %p365 = scmp.eq.s32.totalorder %s28, 1
    %p366 = por %p364, %p365
    %p368 = scmp.ne.s32.totalorder %s353, %s367
    %p369 = scmp.eq.s32.totalorder %s28, 0
    %p370 = por %p368, %p369
    %s371 = ssub.s32 %s22, %s29
    %p372 = scmp.eq.s32.totalorder %s371, 0
    %s374 = sadd.s32 %s373, 1
    %s375 = scalar_select %p372, %s373, %s374
    %p378 = pneg %p372
    %p379 = scmp.eq.s32.totalorder %s22, 1
    %p380 = por %p378, %p379
    %p381 = scmp.ne.s32.totalorder %s373, %s376
    %p382 = scmp.eq.s32.totalorder %s22, 0
    %p383 = por %p381, %p382
    %p384 = scmp.ne.s32.totalorder %s373, %s376
    %p385 = scmp.eq.s32.totalorder %s27, 1
    %p386 = por %p384, %p385
    %p387 = scmp.ne.s32.totalorder %s376, %s377
    %p388 = scmp.eq.s32.totalorder %s27, 0
    %p389 = por %p387, %p388
    %p390 = scmp.ne.s32.totalorder %s376, %s377
    %p391 = scmp.eq.s32.totalorder %s28, 1
    %p392 = por %p390, %p391
    %p394 = scmp.ne.s32.totalorder %s377, %s393
    %p395 = scmp.eq.s32.totalorder %s28, 0
    %p396 = por %p394, %p395
    %p397 = scmp.le.s32.totalorder 1, %s22
    %p398 = scmp.lt.s32.totalorder %s22, 3
    %p399 = pnand %p397, %p398
    %p400 = pneg %p399
    // Predicated region
    $region9: #{dense_block_forward.1} parent=5 // pred_check
      _
    $region10: #{dense_block_forward.1} parent=5 // pred_check_branch
      %402 = sbr.rel (%p399) target = $region12
    $region11: #{dense_block_forward.1} parent=5 // pred_region
      %s403 = ssub.s32 %s22, 1
      // Predicated region
      $region13: #{dense_block_forward.1} parent=11 // pred_check
        %p404 = pneg %p69
      $region14: #{dense_block_forward.1} parent=11 // pred_check_branch
        %406 = sbr.rel (%p404) target = $region16
      $region15: #{dense_block_forward.1} parent=11 // pred_region
        _
      $region16: #{dense_block_forward.1} parent=11 // pred_fallthru
        _
      // Predicated region
      $region17: #{dense_block_forward.1} parent=11 // pred_check
        %p407 = pneg %p90
      $region18: #{dense_block_forward.1} parent=11 // pred_check_branch
        %409 = sbr.rel (%p407) target = $region20
      $region19: #{dense_block_forward.1} parent=11 // pred_region
        _
      $region20: #{dense_block_forward.1} parent=11 // pred_fallthru
        _
      // Predicated region
      $region21: #{dense_block_forward.1} parent=11 // pred_check
        %p410 = pneg %p111
      $region22: #{dense_block_forward.1} parent=11 // pred_check_branch
        %412 = sbr.rel (%p410) target = $region24
      $region23: #{dense_block_forward.1} parent=11 // pred_region
        _
      $region24: #{dense_block_forward.1} parent=11 // pred_fallthru
        _
      // Predicated region
      $region25: #{dense_block_forward.1} parent=11 // pred_check
        %p413 = pneg %p132
      $region26: #{dense_block_forward.1} parent=11 // pred_check_branch
        %415 = sbr.rel (%p413) target = $region28
      $region27: #{dense_block_forward.1} parent=11 // pred_region
        _
      $region28: #{dense_block_forward.1} parent=11 // pred_fallthru
        _
      // Predicated region
      $region29: #{dense_block_forward.1} parent=11 // pred_check
        %p416 = pneg %p153
      $region30: #{dense_block_forward.1} parent=11 // pred_check_branch
        %418 = sbr.rel (%p416) target = $region32
      $region31: #{dense_block_forward.1} parent=11 // pred_region
        _
      $region32: #{dense_block_forward.1} parent=11 // pred_fallthru
        _
      // Predicated region
      $region33: #{dense_block_forward.1} parent=11 // pred_check
        %p419 = pneg %p174
      $region34: #{dense_block_forward.1} parent=11 // pred_check_branch
        %421 = sbr.rel (%p419) target = $region36
      $region35: #{dense_block_forward.1} parent=11 // pred_region
        _
      $region36: #{dense_block_forward.1} parent=11 // pred_fallthru
        _
      // Predicated region
      $region37: #{dense_block_forward.1} parent=11 // pred_check
        %p422 = pneg %p195
      $region38: #{dense_block_forward.1} parent=11 // pred_check_branch
        %424 = sbr.rel (%p422) target = $region40
      $region39: #{dense_block_forward.1} parent=11 // pred_region
        _
      $region40: #{dense_block_forward.1} parent=11 // pred_fallthru
        _
      // Predicated region
      $region41: #{dense_block_forward.1} parent=11 // pred_check
        %p425 = pneg %p216
      $region42: #{dense_block_forward.1} parent=11 // pred_check_branch
        %427 = sbr.rel (%p425) target = $region44
      $region43: #{dense_block_forward.1} parent=11 // pred_region
        _
      $region44: #{dense_block_forward.1} parent=11 // pred_fallthru
        _
      // Predicated region
      $region45: #{dense_block_forward.1} parent=11 // pred_check
        %p428 = pneg %p237
      $region46: #{dense_block_forward.1} parent=11 // pred_check_branch
        %430 = sbr.rel (%p428) target = $region48
      $region47: #{dense_block_forward.1} parent=11 // pred_region
        _
      $region48: #{dense_block_forward.1} parent=11 // pred_fallthru
        _
      // Predicated region
      $region49: #{dense_block_forward.1} parent=11 // pred_check
        %p431 = pneg %p258
      $region50: #{dense_block_forward.1} parent=11 // pred_check_branch
        %433 = sbr.rel (%p431) target = $region52
      $region51: #{dense_block_forward.1} parent=11 // pred_region
        _
      $region52: #{dense_block_forward.1} parent=11 // pred_fallthru
        _
      // Predicated region
      $region53: #{dense_block_forward.1} parent=11 // pred_check
        %p434 = pneg %p279
      $region54: #{dense_block_forward.1} parent=11 // pred_check_branch
        %436 = sbr.rel (%p434) target = $region56
      $region55: #{dense_block_forward.1} parent=11 // pred_region
        _
      $region56: #{dense_block_forward.1} parent=11 // pred_fallthru
        _
      // Predicated region
      $region57: #{dense_block_forward.1} parent=11 // pred_check
        %p437 = pneg %p300
      $region58: #{dense_block_forward.1} parent=11 // pred_check_branch
        %439 = sbr.rel (%p437) target = $region60
      $region59: #{dense_block_forward.1} parent=11 // pred_region
        _
      $region60: #{dense_block_forward.1} parent=11 // pred_fallthru
        _
      // Predicated region
      $region61: #{dense_block_forward.1} parent=11 // pred_check
        %p440 = pneg %p321
      $region62: #{dense_block_forward.1} parent=11 // pred_check_branch
        %442 = sbr.rel (%p440) target = $region64
      $region63: #{dense_block_forward.1} parent=11 // pred_region
        _
      $region64: #{dense_block_forward.1} parent=11 // pred_fallthru
        _
      // Predicated region
      $region65: #{dense_block_forward.1} parent=11 // pred_check
        %p443 = pneg %p342
      $region66: #{dense_block_forward.1} parent=11 // pred_check_branch
        %445 = sbr.rel (%p443) target = $region68
      $region67: #{dense_block_forward.1} parent=11 // pred_region
        _
      $region68: #{dense_block_forward.1} parent=11 // pred_fallthru
        _
      // Predicated region
      $region69: #{dense_block_forward.1} parent=11 // pred_check
        %p446 = pneg %p363
      $region70: #{dense_block_forward.1} parent=11 // pred_check_branch
        %448 = sbr.rel (%p446) target = $region72
      $region71: #{dense_block_forward.1} parent=11 // pred_region
        _
      $region72: #{dense_block_forward.1} parent=11 // pred_fallthru
        _
    $region12: #{dense_block_forward.1} parent=5 // pred_fallthru
      _
    %p449 = scmp.lt.s32.totalorder %s22, 2
    // Predicated region
    $region73: #{dense_block_forward.1} parent=5 // pred_check
      %p450 = pneg %p449
    $region74: #{dense_block_forward.1} parent=5 // pred_check_branch
      %452 = sbr.rel (%p450) target = $region76
    $region75: #{dense_block_forward.1} parent=5 // pred_region
      // Predicated region
      $region77: #{dense_block_forward.1} parent=75 // pred_check
        %p453 = pneg %p42
      $region78: #{dense_block_forward.1} parent=75 // pred_check_branch
        %455 = sbr.rel (%p453) target = $region80
      $region79: #{dense_block_forward.1} parent=75 // pred_region
        %p456 = scmp.lt.s32.totalorder %s22, 1
        %s457 = scalar_select %p456, %s22, 1
        %s458 = smul.addr %s457, 41
        %s459 = smul.addr %s458, 8
        %s460 = scalar_lea.vmem %s0, %s459
      $region80: #{dense_block_forward.1} parent=75 // pred_fallthru
        _
    $region76: #{dense_block_forward.1} parent=5 // pred_fallthru
      _
    %p461 = scmp.le.s32.totalorder 1, %s22
    %p462 = scmp.lt.s32.totalorder %s22, 3
    %p463 = pnand %p461, %p462
    %p464 = pneg %p463
    // Predicated region
    $region81: #{dense_block_forward.1} parent=5 // pred_check
      _
    $region82: #{dense_block_forward.1} parent=5 // pred_check_branch
      %466 = sbr.rel (%p463) target = $region84
    $region83: #{dense_block_forward.1} parent=5 // pred_region
      %s467 = ssub.s32 %s22, 1
      %p468 = scmp.lt.s32.totalorder %s27, 1
      %s469 = scalar_select %p468, %s27, 1
      %s470 = smul.addr %s469, 41
      %s471 = smul.addr %s470, 8
      %s472 = scalar_lea.vmem %s0, %s471
      %p473 = pneg %p48
      %p474 = pneg %p45
      %p475 = pneg %p69
      %p476 = pneg %p66
      %p477 = pneg %p90
      %p478 = pneg %p87
      %p479 = pneg %p111
      %p480 = pneg %p108
      %p481 = pneg %p132
      %p482 = pneg %p129
      %p483 = pneg %p153
      %p484 = pneg %p150
      %p485 = pneg %p174
      %p486 = pneg %p171
      %p487 = pneg %p195
      %p488 = pneg %p192
      %p489 = pneg %p216
      %p490 = pneg %p213
      %p491 = pneg %p237
      %p492 = pneg %p234
      %p493 = pneg %p258
      %p494 = pneg %p255
      %p495 = pneg %p279
      %p496 = pneg %p276
      %p497 = pneg %p300
      %p498 = pneg %p297
      %p499 = pneg %p321
      %p500 = pneg %p318
      %p501 = pneg %p342
      %p502 = pneg %p339
      %p503 = pneg %p363
      %p504 = pneg %p360
      %p505 = pneg %p389
      %p506 = pneg %p386
      %p507 = scmp.lt.s32.totalorder %s27, 1
      %s508 = scalar_select %p507, %s27, 1
      %s509 = smul.addr %s508, 41
      %s510 = smul.addr %s509, 8
      %s511 = scalar_lea.vmem %s16, %s510
      %p512 = scmp.lt.s32.totalorder %s27, 1
      %s513 = scalar_select %p512, %s27, 1
      %s514 = smul.addr %s513, 41
      %s515 = smul.addr %s514, 8
      %s516 = scalar_lea.vmem %s0, %s515
      %p517 = scmp.lt.s32.totalorder %s27, 1
      %s518 = scalar_select %p517, %s27, 1
      %s519 = smul.addr %s518, 41
      %s520 = smul.addr %s519, 8
      %s521 = scalar_lea.vmem %s16, %s520
      %522 = vst [vmem:[#allocation2] sm:$0xff] 0.0
      %523 = vst [vmem:[#allocation2 + $0x8] sm:$0xff] 0.0
      %524 = vst [vmem:[#allocation2 + $0x10] sm:$0xff] 0.0
      %525 = vst [vmem:[#allocation2 + $0x18] sm:$0xff] 0.0
      %526 = vst [vmem:[#allocation2 + $0x20] sm:$0xff] 0.0
      %527 = vst [vmem:[#allocation2 + $0x28] sm:$0xff] 0.0
      %528 = vst [vmem:[#allocation2 + $0x30] sm:$0xff] 0.0
      %529 = vst [vmem:[#allocation2 + $0x38] sm:$0xff] 0.0
      %530 = vst [vmem:[#allocation2 + $0x40] sm:$0xff] 0.0
      %531 = vst [vmem:[#allocation2 + $0x48] sm:$0xff] 0.0
      %532 = vst [vmem:[#allocation2 + $0x50] sm:$0xff] 0.0
      %533 = vst [vmem:[#allocation2 + $0x58] sm:$0xff] 0.0
      %534 = vst [vmem:[#allocation2 + $0x60] sm:$0xff] 0.0
      %535 = vst [vmem:[#allocation2 + $0x68] sm:$0xff] 0.0
      %536 = vst [vmem:[#allocation2 + $0x70] sm:$0xff] 0.0
      %537 = vst [vmem:[#allocation2 + $0x78] sm:$0xff] 0.0
      %538 = vst [vmem:[#allocation2 + $0x80] sm:$0xff] 0.0
      %539 = vst [vmem:[#allocation2 + $0x88] sm:$0xff] 0.0
      %540 = vst [vmem:[#allocation2 + $0x90] sm:$0xff] 0.0
      %541 = vst [vmem:[#allocation2 + $0x98] sm:$0xff] 0.0
      %542 = vst [vmem:[#allocation2 + $0xa0] sm:$0xff] 0.0
      %543 = vst [vmem:[#allocation2 + $0xa8] sm:$0xff] 0.0
      %544 = vst [vmem:[#allocation2 + $0xb0] sm:$0xff] 0.0
      %545 = vst [vmem:[#allocation2 + $0xb8] sm:$0xff] 0.0
      %546 = vst [vmem:[#allocation2 + $0xc0] sm:$0xff] 0.0
      %547 = vst [vmem:[#allocation2 + $0xc8] sm:$0xff] 0.0
      %548 = vst [vmem:[#allocation2 + $0xd0] sm:$0xff] 0.0
      %549 = vst [vmem:[#allocation2 + $0xd8] sm:$0xff] 0.0
      %550 = vst [vmem:[#allocation2 + $0xe0] sm:$0xff] 0.0
      %551 = vst [vmem:[#allocation2 + $0xe8] sm:$0xff] 0.0
      %552 = vst [vmem:[#allocation2 + $0xf0] sm:$0xff] 0.0
      %553 = vst [vmem:[#allocation2 + $0xf8] sm:$0xff] 0.0
      %554 = vst [vmem:[#allocation2 + $0x100] sm:$0xff] 0.0
      %555 = vst [vmem:[#allocation2 + $0x108] sm:$0xff] 0.0
      %556 = vst [vmem:[#allocation2 + $0x110] sm:$0xff] 0.0
      %557 = vst [vmem:[#allocation2 + $0x118] sm:$0xff] 0.0
      %558 = vst [vmem:[#allocation2 + $0x120] sm:$0xff] 0.0
      %559 = vst [vmem:[#allocation2 + $0x128] sm:$0xff] 0.0
      %560 = vst [vmem:[#allocation2 + $0x130] sm:$0xff] 0.0
      %561 = vst [vmem:[#allocation2 + $0x138] sm:$0xff] 0.0
      %562 = vst [vmem:[#allocation2 + $0x140] sm:$0xff] 0.0
      %563 = vst [vmem:[#allocation2 + $0x148] sm:$0xff] 0.0
      %564 = vst [vmem:[#allocation2 + $0x150] sm:$0xff] 0.0
      %565 = vst [vmem:[#allocation2 + $0x158] sm:$0xff] 0.0
      %566 = vst [vmem:[#allocation2 + $0x160] sm:$0xff] 0.0
      %567 = vst [vmem:[#allocation2 + $0x168] sm:$0xff] 0.0
      %568 = vst [vmem:[#allocation2 + $0x170] sm:$0xff] 0.0
      %v569 = vld [vmem:[%s1] sm:$0xff]
      %v570 = vld [vmem:[%s1 + $0x8] sm:$0xff]
      %v571 = vld [vmem:[%s1 + $0x10] sm:$0xff]
      %v572 = vld [vmem:[%s1 + $0x18] sm:$0xff]
      %v573 = vld [vmem:[%s1 + $0x20] sm:$0xff]
      %v574 = vld [vmem:[%s1 + $0x28] sm:$0xff]
      %v575 = vld [vmem:[%s1 + $0x30] sm:$0xff]
      %v576 = vld [vmem:[%s1 + $0x38] sm:$0xff]
      %v577 = vld [vmem:[%s1 + $0x40] sm:$0xff]
      %v578 = vld [vmem:[%s1 + $0x48] sm:$0xff]
      %v579 = vld [vmem:[%s1 + $0x50] sm:$0xff]
      %v580 = vld [vmem:[%s1 + $0x58] sm:$0xff]
      %v581 = vld [vmem:[%s1 + $0x60] sm:$0xff]
      %v582 = vld [vmem:[%s1 + $0x68] sm:$0xff]
      %v583 = vld [vmem:[%s1 + $0x70] sm:$0xff]
      %v584 = vld [vmem:[%s1 + $0x78] sm:$0xff]
      %v585 = vld [vmem:[%s1 + $0x80] sm:$0xff]
      %v586 = vld [vmem:[%s1 + $0x88] sm:$0xff]
      %v587 = vld [vmem:[%s1 + $0x90] sm:$0xff]
      %v588 = vld [vmem:[%s1 + $0x98] sm:$0xff]
      %v589 = vld [vmem:[%s1 + $0xa0] sm:$0xff]
      %v590 = vld [vmem:[%s1 + $0xa8] sm:$0xff]
      %v591 = vld [vmem:[%s1 + $0xb0] sm:$0xff]
      %v592 = vld [vmem:[%s1 + $0xb8] sm:$0xff]
      %v593 = vld [vmem:[%s1 + $0xc0] sm:$0xff]
      %v594 = vld [vmem:[%s1 + $0xc8] sm:$0xff]
      %v595 = vld [vmem:[%s1 + $0xd0] sm:$0xff]
      %v596 = vld [vmem:[%s1 + $0xd8] sm:$0xff]
      %v597 = vld [vmem:[%s1 + $0xe0] sm:$0xff]
      %v598 = vld [vmem:[%s1 + $0xe8] sm:$0xff]
      %v599 = vld [vmem:[%s1 + $0xf0] sm:$0xff]
      %v600 = vld [vmem:[%s1 + $0xf8] sm:$0xff]
      %v601 = vld [vmem:[%s1 + $0x100] sm:$0xff]
      %v602 = vld [vmem:[%s1 + $0x108] sm:$0xff]
      %v603 = vld [vmem:[%s1 + $0x110] sm:$0xff]
      %v604 = vld [vmem:[%s1 + $0x118] sm:$0xff]
      %v605 = vld [vmem:[%s1 + $0x120] sm:$0xff]
      %v606 = vld [vmem:[%s1 + $0x128] sm:$0xff]
      %v607 = vld [vmem:[%s1 + $0x130] sm:$0xff]
      %v608 = vld [vmem:[%s1 + $0x138] sm:$0xff]
      %v609 = vld [vmem:[%s1 + $0x140] sm:$0xff]
      %v610 = vld [vmem:[%s516] sm:$0xff]
      %v611 = vld [vmem:[%s516 + $0x8] sm:$0xff]
      %v612 = vld [vmem:[%s516 + $0x10] sm:$0xff]
      %v613 = vld [vmem:[%s516 + $0x18] sm:$0xff]
      %v614 = vld [vmem:[%s516 + $0x20] sm:$0xff]
      %v615 = vld [vmem:[%s516 + $0x28] sm:$0xff]
      %v616 = vld [vmem:[%s516 + $0x30] sm:$0xff]
      %v617 = vld [vmem:[%s516 + $0x38] sm:$0xff]
      %v618 = vld [vmem:[%s516 + $0x40] sm:$0xff]
      %v619 = vld [vmem:[%s516 + $0x48] sm:$0xff]
      %v620 = vld [vmem:[%s516 + $0x50] sm:$0xff]
      %v621 = vld [vmem:[%s516 + $0x58] sm:$0xff]
      %v622 = vld [vmem:[%s516 + $0x60] sm:$0xff]
      %v623 = vld [vmem:[%s516 + $0x68] sm:$0xff]
      %v624 = vld [vmem:[%s516 + $0x70] sm:$0xff]
      %v625 = vld [vmem:[%s516 + $0x78] sm:$0xff]
      %v626 = vld [vmem:[%s516 + $0x80] sm:$0xff]
      %v627 = vld [vmem:[%s516 + $0x88] sm:$0xff]
      %v628 = vld [vmem:[%s516 + $0x90] sm:$0xff]
      %v629 = vld [vmem:[%s516 + $0x98] sm:$0xff]
      %v630 = vld [vmem:[%s516 + $0xa0] sm:$0xff]
      %v631 = vld [vmem:[%s516 + $0xa8] sm:$0xff]
      %v632 = vld [vmem:[%s516 + $0xb0] sm:$0xff]
      %v633 = vld [vmem:[%s516 + $0xb8] sm:$0xff]
      %v634 = vld [vmem:[%s516 + $0xc0] sm:$0xff]
      %v635 = vld [vmem:[%s516 + $0xc8] sm:$0xff]
      %v636 = vld [vmem:[%s516 + $0xd0] sm:$0xff]
      %v637 = vld [vmem:[%s516 + $0xd8] sm:$0xff]
      %v638 = vld [vmem:[%s516 + $0xe0] sm:$0xff]
      %v639 = vld [vmem:[%s516 + $0xe8] sm:$0xff]
      %v640 = vld [vmem:[%s516 + $0xf0] sm:$0xff]
      %v641 = vld [vmem:[%s516 + $0xf8] sm:$0xff]
      %v642 = vld [vmem:[%s516 + $0x100] sm:$0xff]
      %v643 = vld [vmem:[%s516 + $0x108] sm:$0xff]
      %v644 = vld [vmem:[%s516 + $0x110] sm:$0xff]
      %v645 = vld [vmem:[%s516 + $0x118] sm:$0xff]
      %v646 = vld [vmem:[%s516 + $0x120] sm:$0xff]
      %v647 = vld [vmem:[%s516 + $0x128] sm:$0xff]
      %v648 = vld [vmem:[%s516 + $0x130] sm:$0xff]
      %v649 = vld [vmem:[%s516 + $0x138] sm:$0xff]
      %v650 = vld [vmem:[%s516 + $0x140] sm:$0xff]
      %v651 = vld [vmem:[%s2] sm:$0x1]
      %v653 = vlaneseq
      %v654 = vshrl.u32 %v653, 7
      %v655 = vsub.s32 0, %v654
      %v656 = vrot.slane %v651, %v655
      %v658 = vmul.f32 %v610, %v656
      %v659 = vmul.f32 %v611, %v656
      %v660 = vmul.f32 %v612, %v656
      %v661 = vmul.f32 %v613, %v656
      %v662 = vmul.f32 %v614, %v656
      %v663 = vmul.f32 %v615, %v656
      %v664 = vmul.f32 %v616, %v656
      %v665 = vmul.f32 %v617, %v656
      %v666 = vmul.f32 %v618, %v656
      %v667 = vmul.f32 %v619, %v656
      %v668 = vmul.f32 %v620, %v656
      %v669 = vmul.f32 %v621, %v656
      %v670 = vmul.f32 %v622, %v656
      %v671 = vmul.f32 %v623, %v656
      %v672 = vmul.f32 %v624, %v656
      %v673 = vmul.f32 %v625, %v656
      %v674 = vmul.f32 %v626, %v656
      %v675 = vmul.f32 %v627, %v656
      %v676 = vmul.f32 %v628, %v656
      %v677 = vmul.f32 %v629, %v656
      %v678 = vmul.f32 %v630, %v656
      %v679 = vmul.f32 %v631, %v656
      %v680 = vmul.f32 %v632, %v656
      %v681 = vmul.f32 %v633, %v656
      %v682 = vmul.f32 %v634, %v656
      %v683 = vmul.f32 %v635, %v656
      %v684 = vmul.f32 %v636, %v656
      %v685 = vmul.f32 %v637, %v656
      %v686 = vmul.f32 %v638, %v656
      %v687 = vmul.f32 %v639, %v656
      %v688 = vmul.f32 %v640, %v656
      %v689 = vmul.f32 %v641, %v656
      %v690 = vmul.f32 %v642, %v656
      %v691 = vmul.f32 %v643, %v656
      %v692 = vmul.f32 %v644, %v656
      %v693 = vmul.f32 %v645, %v656
      %v694 = vmul.f32 %v646, %v656
      %v695 = vmul.f32 %v647, %v656
      %v696 = vmul.f32 %v648, %v656
      %v697 = vmul.f32 %v649, %v656
      %v698 = vmul.f32 %v650, %v656
      %v699 = vld [vmem:[%s3] sm:$0x1]
      %v701 = vlaneseq
      %v702 = vshrl.u32 %v701, 7
      %v703 = vsub.s32 0, %v702
      %v704 = vrot.slane %v699, %v703
      %v706 = vadd.f32 %v658, %v704
      %v707 = vadd.f32 %v659, %v704
      %v708 = vadd.f32 %v660, %v704
      %v709 = vadd.f32 %v661, %v704
      %v710 = vadd.f32 %v662, %v704
      %v711 = vadd.f32 %v663, %v704
      %v712 = vadd.f32 %v664, %v704
      %v713 = vadd.f32 %v665, %v704
      %v714 = vadd.f32 %v666, %v704
      %v715 = vadd.f32 %v667, %v704
      %v716 = vadd.f32 %v668, %v704
      %v717 = vadd.f32 %v669, %v704
      %v718 = vadd.f32 %v670, %v704
      %v719 = vadd.f32 %v671, %v704
      %v720 = vadd.f32 %v672, %v704
      %v721 = vadd.f32 %v673, %v704
      %v722 = vadd.f32 %v674, %v704
      %v723 = vadd.f32 %v675, %v704
      %v724 = vadd.f32 %v676, %v704
      %v725 = vadd.f32 %v677, %v704
      %v726 = vadd.f32 %v678, %v704
      %v727 = vadd.f32 %v679, %v704
      %v728 = vadd.f32 %v680, %v704
      %v729 = vadd.f32 %v681, %v704
      %v730 = vadd.f32 %v682, %v704
      %v731 = vadd.f32 %v683, %v704
      %v732 = vadd.f32 %v684, %v704
      %v733 = vadd.f32 %v685, %v704
      %v734 = vadd.f32 %v686, %v704
      %v735 = vadd.f32 %v687, %v704
      %v736 = vadd.f32 %v688, %v704
      %v737 = vadd.f32 %v689, %v704
      %v738 = vadd.f32 %v690, %v704
      %v739 = vadd.f32 %v691, %v704
      %v740 = vadd.f32 %v692, %v704
      %v741 = vadd.f32 %v693, %v704
      %v742 = vadd.f32 %v694, %v704
      %v743 = vadd.f32 %v695, %v704
      %v744 = vadd.f32 %v696, %v704
      %v745 = vadd.f32 %v697, %v704
      %v746 = vadd.f32 %v698, %v704
      %v747 = vmax.f32 %v706, 0.0
      %v748 = vmax.f32 %v707, 0.0
      %v749 = vmax.f32 %v708, 0.0
      %v750 = vmax.f32 %v709, 0.0
      %v751 = vmax.f32 %v710, 0.0
      %v752 = vmax.f32 %v711, 0.0
      %v753 = vmax.f32 %v712, 0.0
      %v754 = vmax.f32 %v713, 0.0
      %v755 = vmax.f32 %v714, 0.0
      %v756 = vmax.f32 %v715, 0.0
      %v757 = vmax.f32 %v716, 0.0
      %v758 = vmax.f32 %v717, 0.0
      %v759 = vmax.f32 %v718, 0.0
      %v760 = vmax.f32 %v719, 0.0
      %v761 = vmax.f32 %v720, 0.0
      %v762 = vmax.f32 %v721, 0.0
      %v763 = vmax.f32 %v722, 0.0
      %v764 = vmax.f32 %v723, 0.0
      %v765 = vmax.f32 %v724, 0.0
      %v766 = vmax.f32 %v725, 0.0
      %v767 = vmax.f32 %v726, 0.0
      %v768 = vmax.f32 %v727, 0.0
      %v769 = vmax.f32 %v728, 0.0
      %v770 = vmax.f32 %v729, 0.0
      %v771 = vmax.f32 %v730, 0.0
      %v772 = vmax.f32 %v731, 0.0
      %v773 = vmax.f32 %v732, 0.0
      %v774 = vmax.f32 %v733, 0.0
      %v775 = vmax.f32 %v734, 0.0
      %v776 = vmax.f32 %v735, 0.0
      %v777 = vmax.f32 %v736, 0.0
      %v778 = vmax.f32 %v737, 0.0
      %v779 = vmax.f32 %v738, 0.0
      %v780 = vmax.f32 %v739, 0.0
      %v781 = vmax.f32 %v740, 0.0
      %v782 = vmax.f32 %v741, 0.0
      %v783 = vmax.f32 %v742, 0.0
      %v784 = vmax.f32 %v743, 0.0
      %v785 = vmax.f32 %v744, 0.0
      %v786 = vmax.f32 %v745, 0.0
      %v787 = vmax.f32 %v746, 0.0
      %v788 = vld [vmem:[%s4] sm:$0xff]
      %v789 = vld [vmem:[%s4 + $0x8] sm:$0xff]
      %v790 = vld [vmem:[%s4 + $0x10] sm:$0xff]
      %v791 = vld [vmem:[%s4 + $0x18] sm:$0xff]
      %v792 = vld [vmem:[%s4 + $0x20] sm:$0xff]
      %v793 = vld [vmem:[%s4 + $0x28] sm:$0xff]
      %v794 = vld [vmem:[%s4 + $0x30] sm:$0xff]
      %v795 = vld [vmem:[%s4 + $0x38] sm:$0xff]
      %v796 = vld [vmem:[%s4 + $0x40] sm:$0xff]
      %v797 = vld [vmem:[%s4 + $0x48] sm:$0xff]
      %v798 = vld [vmem:[%s4 + $0x50] sm:$0xff]
      %v799 = vld [vmem:[%s4 + $0x58] sm:$0xff]
      %v800 = vld [vmem:[%s4 + $0x60] sm:$0xff]
      %v801 = vld [vmem:[%s4 + $0x68] sm:$0xff]
      %v802 = vld [vmem:[%s4 + $0x70] sm:$0xff]
      %v803 = vld [vmem:[%s4 + $0x78] sm:$0xff]
      %v804 = vld [vmem:[%s5] sm:$0x1]
      %v806 = vlaneseq
      %v807 = vshrl.u32 %v806, 7
      %v808 = vsub.s32 0, %v807
      %v809 = vrot.slane %v804, %v808
      %811 = vmatprep.subr.mxu0 0.0
      %812 = vmatpush1.msra.mxu0 %v788
      %813 = vmatprep.subr.mxu0 0.0
      %814 = vmatpush1.msra.mxu0 %v789
      %815 = vmatprep.subr.mxu0 0.0
      %816 = vmatpush1.msra.mxu0 %v790
      %817 = vmatprep.subr.mxu0 0.0
      %818 = vmatpush1.msra.mxu0 %v791
      %819 = vmatprep.subr.mxu0 0.0
      %820 = vmatpush1.msra.mxu0 %v792
      %821 = vmatprep.subr.mxu0 0.0
      %822 = vmatpush1.msra.mxu0 %v793
      %823 = vmatprep.subr.mxu0 0.0
      %824 = vmatpush1.msra.mxu0 %v794
      %825 = vmatprep.subr.mxu0 0.0
      %826 = vmatpush1.msra.mxu0 %v795
      %827 = vmatprep.subr.mxu0 0.0
      %828 = vmatpush1.msra.mxu0 %v796
      %829 = vmatprep.subr.mxu0 0.0
      %830 = vmatpush1.msra.mxu0 %v797
      %831 = vmatprep.subr.mxu0 0.0
      %832 = vmatpush1.msra.mxu0 %v798
      %833 = vmatprep.subr.mxu0 0.0
      %834 = vmatpush1.msra.mxu0 %v799
      %835 = vmatprep.subr.mxu0 0.0
      %836 = vmatpush1.msra.mxu0 %v800
      %837 = vmatprep.subr.mxu0 0.0
      %838 = vmatpush1.msra.mxu0 %v801
      %839 = vmatprep.subr.mxu0 0.0
      %840 = vmatpush1.msra.mxu0 %v802
      %841 = vmatprep.subr.mxu0 0.0
      %842 = vmatpush1.msra.mxu0 %v803
      %843 = vmatprep.subr.mxu0 0.0
      %844 = vmatpush1.msra.mxu0 0.0
      %845 = vmatprep.subr.mxu0 0.0
      %846 = vmatpush1.msra.mxu0 0.0
      %847 = vmatprep.subr.mxu0 0.0
      %848 = vmatpush1.msra.mxu0 0.0
      %849 = vmatprep.subr.mxu0 0.0
      %850 = vmatpush1.msra.mxu0 0.0
      %851 = vmatprep.subr.mxu0 0.0
      %852 = vmatpush1.msra.mxu0 0.0
      %853 = vmatprep.subr.mxu0 0.0
      %854 = vmatpush1.msra.mxu0 0.0
      %855 = vmatprep.subr.mxu0 0.0
      %856 = vmatpush1.msra.mxu0 0.0
      %857 = vmatprep.subr.mxu0 0.0
      %858 = vmatpush1.msra.mxu0 0.0
      %859 = vmatprep.subr.mxu0 0.0
      %860 = vmatpush1.msra.mxu0 0.0
      %861 = vmatprep.subr.mxu0 0.0
      %862 = vmatpush1.msra.mxu0 0.0
      %863 = vmatprep.subr.mxu0 0.0
      %864 = vmatpush1.msra.mxu0 0.0
      %865 = vmatprep.subr.mxu0 0.0
      %866 = vmatpush1.msra.mxu0 0.0
      %867 = vmatprep.subr.mxu0 0.0
      %868 = vmatpush1.msra.mxu0 0.0
      %869 = vmatprep.subr.mxu0 0.0
      %870 = vmatpush1.msra.mxu0 0.0
      %871 = vmatprep.subr.mxu0 0.0
      %872 = vmatpush1.msra.mxu0 0.0
      %873 = vmatprep.subr.mxu0 0.0
      %874 = vmatpush1.msra.mxu0 0.0
      %875 = vmatprep.mubr.f32.mxu0 0.0
      %876 = vmatmul.mubr.f32.gmra.mrb[0].mxu0 %v747
      %v877 = vpop.f32.mrb[0].mxu0
      %v878 = vadd.f32 %v809, %v877
      %v879 = vpop.f32.mrb[0].mxu0
      %880 = vmatprep.mubr.f32.mxu0 0.0
      %881 = vmatmul.mubr.f32.gmra.mrb[0].mxu0 %v748
      %v882 = vpop.f32.mrb[0].mxu0
      %v883 = vadd.f32 %v809, %v882
      %v884 = vpop.f32.mrb[0].mxu0
      %885 = vmatprep.mubr.f32.mxu0 0.0
      %886 = vmatmul.mubr.f32.gmra.mrb[0].mxu0 %v749
      %v887 = vpop.f32.mrb[0].mxu0
      %v888 = vadd.f32 %v809, %v887
      %v889 = vpop.f32.mrb[0].mxu0
      %890 = vmatprep.mubr.f32.mxu0 0.0
      %891 = vmatmul.mubr.f32.gmra.mrb[0].mxu0 %v750
      %v892 = vpop.f32.mrb[0].mxu0
      %v893 = vadd.f32 %v809, %v892
      %v894 = vpop.f32.mrb[0].mxu0
      %895 = vmatprep.mubr.f32.mxu0 0.0
      %896 = vmatmul.mubr.f32.gmra.mrb[0].mxu0 %v751
      %v897 = vpop.f32.mrb[0].mxu0
      %v898 = vadd.f32 %v809, %v897
      %v899 = vpop.f32.mrb[0].mxu0
      %900 = vmatprep.mubr.f32.mxu0 0.0
      %901 = vmatmul.mubr.f32.gmra.mrb[0].mxu0 %v752
      %v902 = vpop.f32.mrb[0].mxu0
      %v903 = vadd.f32 %v809, %v902
      %v904 = vpop.f32.mrb[0].mxu0
      %905 = vmatprep.mubr.f32.mxu0 0.0
      %906 = vmatmul.mubr.f32.gmra.mrb[0].mxu0 %v753
      %v907 = vpop.f32.mrb[0].mxu0
      %v908 = vadd.f32 %v809, %v907
      %v909 = vpop.f32.mrb[0].mxu0
      %910 = vmatprep.mubr.f32.mxu0 0.0
      %911 = vmatmul.mubr.f32.gmra.mrb[0].mxu0 %v754
      %v912 = vpop.f32.mrb[0].mxu0
      %v913 = vadd.f32 %v809, %v912
      %v914 = vpop.f32.mrb[0].mxu0
      %915 = vmatprep.mubr.f32.mxu0 0.0
      %916 = vmatmul.mubr.f32.gmra.mrb[0].mxu0 %v755
      %v917 = vpop.f32.mrb[0].mxu0
      %v918 = vadd.f32 %v809, %v917
      %v919 = vpop.f32.mrb[0].mxu0
      %920 = vmatprep.mubr.f32.mxu0 0.0
      %921 = vmatmul.mubr.f32.gmra.mrb[0].mxu0 %v756
      %v922 = vpop.f32.mrb[0].mxu0
      %v923 = vadd.f32 %v809, %v922
      %v924 = vpop.f32.mrb[0].mxu0
      %925 = vmatprep.mubr.f32.mxu0 0.0
      %926 = vmatmul.mubr.f32.gmra.mrb[0].mxu0 %v757
      %v927 = vpop.f32.mrb[0].mxu0
      %v928 = vadd.f32 %v809, %v927
      %v929 = vpop.f32.mrb[0].mxu0
      %930 = vmatprep.mubr.f32.mxu0 0.0
      %931 = vmatmul.mubr.f32.gmra.mrb[0].mxu0 %v758
      %v932 = vpop.f32.mrb[0].mxu0
      %v933 = vadd.f32 %v809, %v932
      %v934 = vpop.f32.mrb[0].mxu0
      %935 = vmatprep.mubr.f32.mxu0 0.0
      %936 = vmatmul.mubr.f32.gmra.mrb[0].mxu0 %v759
      %v937 = vpop.f32.mrb[0].mxu0
      %v938 = vadd.f32 %v809, %v937
      %v939 = vpop.f32.mrb[0].mxu0
      %940 = vmatprep.mubr.f32.mxu0 0.0
      %941 = vmatmul.mubr.f32.gmra.mrb[0].mxu0 %v760
      %v942 = vpop.f32.mrb[0].mxu0
      %v943 = vadd.f32 %v809, %v942
      %v944 = vpop.f32.mrb[0].mxu0
      %945 = vmatprep.mubr.f32.mxu0 0.0
      %946 = vmatmul.mubr.f32.gmra.mrb[0].mxu0 %v761
      %v947 = vpop.f32.mrb[0].mxu0
      %v948 = vadd.f32 %v809, %v947
      %v949 = vpop.f32.mrb[0].mxu0
      %950 = vmatprep.mubr.f32.mxu0 0.0
      %951 = vmatmul.mubr.f32.gmra.mrb[0].mxu0 %v762
      %v952 = vpop.f32.mrb[0].mxu0
      %v953 = vadd.f32 %v809, %v952
      %v954 = vpop.f32.mrb[0].mxu0
      %955 = vmatprep.mubr.f32.mxu0 0.0
      %956 = vmatmul.mubr.f32.gmra.mrb[0].mxu0 %v763
      %v957 = vpop.f32.mrb[0].mxu0
      %v958 = vadd.f32 %v809, %v957
      %v959 = vpop.f32.mrb[0].mxu0
      %960 = vmatprep.mubr.f32.mxu0 0.0
      %961 = vmatmul.mubr.f32.gmra.mrb[0].mxu0 %v764
      %v962 = vpop.f32.mrb[0].mxu0
      %v963 = vadd.f32 %v809, %v962
      %v964 = vpop.f32.mrb[0].mxu0
      %965 = vmatprep.mubr.f32.mxu0 0.0
      %966 = vmatmul.mubr.f32.gmra.mrb[0].mxu0 %v765
      %v967 = vpop.f32.mrb[0].mxu0
      %v968 = vadd.f32 %v809, %v967
      %v969 = vpop.f32.mrb[0].mxu0
      %970 = vmatprep.mubr.f32.mxu0 0.0
      %971 = vmatmul.mubr.f32.gmra.mrb[0].mxu0 %v766
      %v972 = vpop.f32.mrb[0].mxu0
      %v973 = vadd.f32 %v809, %v972
      %v974 = vpop.f32.mrb[0].mxu0
      %975 = vmatprep.mubr.f32.mxu0 0.0
      %976 = vmatmul.mubr.f32.gmra.mrb[0].mxu0 %v767
      %v977 = vpop.f32.mrb[0].mxu0
      %v978 = vadd.f32 %v809, %v977
      %v979 = vpop.f32.mrb[0].mxu0
      %980 = vmatprep.mubr.f32.mxu0 0.0
      %981 = vmatmul.mubr.f32.gmra.mrb[0].mxu0 %v768
      %v982 = vpop.f32.mrb[0].mxu0
      %v983 = vadd.f32 %v809, %v982
      %v984 = vpop.f32.mrb[0].mxu0
      %985 = vmatprep.mubr.f32.mxu0 0.0
      %986 = vmatmul.mubr.f32.gmra.mrb[0].mxu0 %v769
      %v987 = vpop.f32.mrb[0].mxu0
      %v988 = vadd.f32 %v809, %v987
      %v989 = vpop.f32.mrb[0].mxu0
      %990 = vmatprep.mubr.f32.mxu0 0.0
      %991 = vmatmul.mubr.f32.gmra.mrb[0].mxu0 %v770
      %v992 = vpop.f32.mrb[0].mxu0
      %v993 = vadd.f32 %v809, %v992
      %v994 = vpop.f32.mrb[0].mxu0
      %995 = vmatprep.mubr.f32.mxu0 0.0
      %996 = vmatmul.mubr.f32.gmra.mrb[0].mxu0 %v771
      %v997 = vpop.f32.mrb[0].mxu0
      %v998 = vadd.f32 %v809, %v997
      %v999 = vpop.f32.mrb[0].mxu0
      %1000 = vmatprep.mubr.f32.mxu0 0.0
      %1001 = vmatmul.mubr.f32.gmra.mrb[0].mxu0 %v772
      %v1002 = vpop.f32.mrb[0].mxu0
      %v1003 = vadd.f32 %v809, %v1002
      %v1004 = vpop.f32.mrb[0].mxu0
      %1005 = vmatprep.mubr.f32.mxu0 0.0
      %1006 = vmatmul.mubr.f32.gmra.mrb[0].mxu0 %v773
      %v1007 = vpop.f32.mrb[0].mxu0
      %v1008 = vadd.f32 %v809, %v1007
      %v1009 = vpop.f32.mrb[0].mxu0
      %1010 = vmatprep.mubr.f32.mxu0 0.0
      %1011 = vmatmul.mubr.f32.gmra.mrb[0].mxu0 %v774
      %v1012 = vpop.f32.mrb[0].mxu0
      %v1013 = vadd.f32 %v809, %v1012
      %v1014 = vpop.f32.mrb[0].mxu0
      %1015 = vmatprep.mubr.f32.mxu0 0.0
      %1016 = vmatmul.mubr.f32.gmra.mrb[0].mxu0 %v775
      %v1017 = vpop.f32.mrb[0].mxu0
      %v1018 = vadd.f32 %v809, %v1017
      %v1019 = vpop.f32.mrb[0].mxu0
      %1020 = vmatprep.mubr.f32.mxu0 0.0
      %1021 = vmatmul.mubr.f32.gmra.mrb[0].mxu0 %v776
      %v1022 = vpop.f32.mrb[0].mxu0
      %v1023 = vadd.f32 %v809, %v1022
      %v1024 = vpop.f32.mrb[0].mxu0
      %1025 = vmatprep.mubr.f32.mxu0 0.0
      %1026 = vmatmul.mubr.f32.gmra.mrb[0].mxu0 %v777
      %v1027 = vpop.f32.mrb[0].mxu0
      %v1028 = vadd.f32 %v809, %v1027
      %v1029 = vpop.f32.mrb[0].mxu0
      %1030 = vmatprep.mubr.f32.mxu0 0.0
      %1031 = vmatmul.mubr.f32.gmra.mrb[0].mxu0 %v778
      %v1032 = vpop.f32.mrb[0].mxu0
      %v1033 = vadd.f32 %v809, %v1032
      %v1034 = vpop.f32.mrb[0].mxu0
      %1035 = vmatprep.mubr.f32.mxu0 0.0
      %1036 = vmatmul.mubr.f32.gmra.mrb[0].mxu0 %v779
      %v1037 = vpop.f32.mrb[0].mxu0
      %v1038 = vadd.f32 %v809, %v1037
      %v1039 = vpop.f32.mrb[0].mxu0
      %1040 = vmatprep.mubr.f32.mxu0 0.0
      %1041 = vmatmul.mubr.f32.gmra.mrb[0].mxu0 %v780
      %v1042 = vpop.f32.mrb[0].mxu0
      %v1043 = vadd.f32 %v809, %v1042
      %v1044 = vpop.f32.mrb[0].mxu0
      %1045 = vmatprep.mubr.f32.mxu0 0.0
      %1046 = vmatmul.mubr.f32.gmra.mrb[0].mxu0 %v781
      %v1047 = vpop.f32.mrb[0].mxu0
      %v1048 = vadd.f32 %v809, %v1047
      %v1049 = vpop.f32.mrb[0].mxu0
      %1050 = vmatprep.mubr.f32.mxu0 0.0
      %1051 = vmatmul.mubr.f32.gmra.mrb[0].mxu0 %v782
      %v1052 = vpop.f32.mrb[0].mxu0
      %v1053 = vadd.f32 %v809, %v1052
      %v1054 = vpop.f32.mrb[0].mxu0
      %1055 = vmatprep.mubr.f32.mxu0 0.0
      %1056 = vmatmul.mubr.f32.gmra.mrb[0].mxu0 %v783
      %v1057 = vpop.f32.mrb[0].mxu0
      %v1058 = vadd.f32 %v809, %v1057
      %v1059 = vpop.f32.mrb[0].mxu0
      %1060 = vmatprep.mubr.f32.mxu0 0.0
      %1061 = vmatmul.mubr.f32.gmra.mrb[0].mxu0 %v784
      %v1062 = vpop.f32.mrb[0].mxu0
      %v1063 = vadd.f32 %v809, %v1062
      %v1064 = vpop.f32.mrb[0].mxu0
      %1065 = vmatprep.mubr.f32.mxu0 0.0
      %1066 = vmatmul.mubr.f32.gmra.mrb[0].mxu0 %v785
      %v1067 = vpop.f32.mrb[0].mxu0
      %v1068 = vadd.f32 %v809, %v1067
      %v1069 = vpop.f32.mrb[0].mxu0
      %1070 = vmatprep.mubr.f32.mxu0 0.0
      %1071 = vmatmul.mubr.f32.gmra.mrb[0].mxu0 %v786
      %v1072 = vpop.f32.mrb[0].mxu0
      %v1073 = vadd.f32 %v809, %v1072
      %v1074 = vpop.f32.mrb[0].mxu0
      %1075 = vmatprep.mubr.f32.mxu0 0.0
      %1076 = vmatmul.mubr.f32.gmra.mrb[0].mxu0 %v787
      %v1077 = vpop.f32.mrb[0].mxu0
      %v1078 = vadd.f32 %v809, %v1077
      %v1079 = vpop.f32.mrb[0].mxu0
      %1080 = vdwg.mxu0
      %v1081 = vmax.f32 %v878, 0.0
      %v1082 = vmax.f32 %v883, 0.0
      %v1083 = vmax.f32 %v888, 0.0
      %v1084 = vmax.f32 %v893, 0.0
      %v1085 = vmax.f32 %v898, 0.0
      %v1086 = vmax.f32 %v903, 0.0
      %v1087 = vmax.f32 %v908, 0.0
      %v1088 = vmax.f32 %v913, 0.0
      %v1089 = vmax.f32 %v918, 0.0
      %v1090 = vmax.f32 %v923, 0.0
      %v1091 = vmax.f32 %v928, 0.0
      %v1092 = vmax.f32 %v933, 0.0
      %v1093 = vmax.f32 %v938, 0.0
      %v1094 = vmax.f32 %v943, 0.0
      %v1095 = vmax.f32 %v948, 0.0
      %v1096 = vmax.f32 %v953, 0.0
      %v1097 = vmax.f32 %v958, 0.0
      %v1098 = vmax.f32 %v963, 0.0
      %v1099 = vmax.f32 %v968, 0.0
      %v1100 = vmax.f32 %v973, 0.0
      %v1101 = vmax.f32 %v978, 0.0
      %v1102 = vmax.f32 %v983, 0.0
      %v1103 = vmax.f32 %v988, 0.0
      %v1104 = vmax.f32 %v993, 0.0
      %v1105 = vmax.f32 %v998, 0.0
      %v1106 = vmax.f32 %v1003, 0.0
      %v1107 = vmax.f32 %v1008, 0.0
      %v1108 = vmax.f32 %v1013, 0.0
      %v1109 = vmax.f32 %v1018, 0.0
      %v1110 = vmax.f32 %v1023, 0.0
      %v1111 = vmax.f32 %v1028, 0.0
      %v1112 = vmax.f32 %v1033, 0.0
      %v1113 = vmax.f32 %v1038, 0.0
      %v1114 = vmax.f32 %v1043, 0.0
      %v1115 = vmax.f32 %v1048, 0.0
      %v1116 = vmax.f32 %v1053, 0.0
      %v1117 = vmax.f32 %v1058, 0.0
      %v1118 = vmax.f32 %v1063, 0.0
      %v1119 = vmax.f32 %v1068, 0.0
      %v1120 = vmax.f32 %v1073, 0.0
      %v1121 = vmax.f32 %v1078, 0.0
      %v1122 = vmul.f32 %v1081, %v569
      %v1123 = vmul.f32 %v1082, %v570
      %v1124 = vmul.f32 %v1083, %v571
      %v1125 = vmul.f32 %v1084, %v572
      %v1126 = vmul.f32 %v1085, %v573
      %v1127 = vmul.f32 %v1086, %v574
      %v1128 = vmul.f32 %v1087, %v575
      %v1129 = vmul.f32 %v1088, %v576
      %v1130 = vmul.f32 %v1089, %v577
      %v1131 = vmul.f32 %v1090, %v578
      %v1132 = vmul.f32 %v1091, %v579
      %v1133 = vmul.f32 %v1092, %v580
      %v1134 = vmul.f32 %v1093, %v581
      %v1135 = vmul.f32 %v1094, %v582
      %v1136 = vmul.f32 %v1095, %v583
      %v1137 = vmul.f32 %v1096, %v584
      %v1138 = vmul.f32 %v1097, %v585
      %v1139 = vmul.f32 %v1098, %v586
      %v1140 = vmul.f32 %v1099, %v587
      %v1141 = vmul.f32 %v1100, %v588
      %v1142 = vmul.f32 %v1101, %v589
      %v1143 = vmul.f32 %v1102, %v590
      %v1144 = vmul.f32 %v1103, %v591
      %v1145 = vmul.f32 %v1104, %v592
      %v1146 = vmul.f32 %v1105, %v593
      %v1147 = vmul.f32 %v1106, %v594
      %v1148 = vmul.f32 %v1107, %v595
      %v1149 = vmul.f32 %v1108, %v596
      %v1150 = vmul.f32 %v1109, %v597
      %v1151 = vmul.f32 %v1110, %v598
      %v1152 = vmul.f32 %v1111, %v599
      %v1153 = vmul.f32 %v1112, %v600
      %v1154 = vmul.f32 %v1113, %v601
      %v1155 = vmul.f32 %v1114, %v602
      %v1156 = vmul.f32 %v1115, %v603
      %v1157 = vmul.f32 %v1116, %v604
      %v1158 = vmul.f32 %v1117, %v605
      %v1159 = vmul.f32 %v1118, %v606
      %v1160 = vmul.f32 %v1119, %v607
      %v1161 = vmul.f32 %v1120, %v608
      %v1162 = vmul.f32 %v1121, %v609
      %1163 = vst [vmem:[#allocation2 + $0x18] sm:$0xff] %v1122
      %1164 = vst [vmem:[#allocation2 + $0x20] sm:$0xff] %v1123
      %1165 = vst [vmem:[#allocation2 + $0x28] sm:$0xff] %v1124
      %1166 = vst [vmem:[#allocation2 + $0x30] sm:$0xff] %v1125
      %1167 = vst [vmem:[#allocation2 + $0x38] sm:$0xff] %v1126
      %1168 = vst [vmem:[#allocation2 + $0x40] sm:$0xff] %v1127
      %1169 = vst [vmem:[#allocation2 + $0x48] sm:$0xff] %v1128
      %1170 = vst [vmem:[#allocation2 + $0x50] sm:$0xff] %v1129
      %1171 = vst [vmem:[#allocation2 + $0x58] sm:$0xff] %v1130
      %1172 = vst [vmem:[#allocation2 + $0x60] sm:$0xff] %v1131
      %1173 = vst [vmem:[#allocation2 + $0x68] sm:$0xff] %v1132
      %1174 = vst [vmem:[#allocation2 + $0x70] sm:$0xff] %v1133
      %1175 = vst [vmem:[#allocation2 + $0x78] sm:$0xff] %v1134
      %1176 = vst [vmem:[#allocation2 + $0x80] sm:$0xff] %v1135
      %1177 = vst [vmem:[#allocation2 + $0x88] sm:$0xff] %v1136
      %1178 = vst [vmem:[#allocation2 + $0x90] sm:$0xff] %v1137
      %1179 = vst [vmem:[#allocation2 + $0x98] sm:$0xff] %v1138
      %1180 = vst [vmem:[#allocation2 + $0xa0] sm:$0xff] %v1139
      %1181 = vst [vmem:[#allocation2 + $0xa8] sm:$0xff] %v1140
      %1182 = vst [vmem:[#allocation2 + $0xb0] sm:$0xff] %v1141
      %1183 = vst [vmem:[#allocation2 + $0xb8] sm:$0xff] %v1142
      %1184 = vst [vmem:[#allocation2 + $0xc0] sm:$0xff] %v1143
      %1185 = vst [vmem:[#allocation2 + $0xc8] sm:$0xff] %v1144
      %1186 = vst [vmem:[#allocation2 + $0xd0] sm:$0xff] %v1145
      %1187 = vst [vmem:[#allocation2 + $0xd8] sm:$0xff] %v1146
      %1188 = vst [vmem:[#allocation2 + $0xe0] sm:$0xff] %v1147
      %1189 = vst [vmem:[#allocation2 + $0xe8] sm:$0xff] %v1148
      %1190 = vst [vmem:[#allocation2 + $0xf0] sm:$0xff] %v1149
      %1191 = vst [vmem:[#allocation2 + $0xf8] sm:$0xff] %v1150
      %1192 = vst [vmem:[#allocation2 + $0x100] sm:$0xff] %v1151
      %1193 = vst [vmem:[#allocation2 + $0x108] sm:$0xff] %v1152
      %1194 = vst [vmem:[#allocation2 + $0x110] sm:$0xff] %v1153
      %1195 = vst [vmem:[#allocation2 + $0x118] sm:$0xff] %v1154
      %1196 = vst [vmem:[#allocation2 + $0x120] sm:$0xff] %v1155
      %1197 = vst [vmem:[#allocation2 + $0x128] sm:$0xff] %v1156
      %1198 = vst [vmem:[#allocation2 + $0x130] sm:$0xff] %v1157
      %1199 = vst [vmem:[#allocation2 + $0x138] sm:$0xff] %v1158
      %1200 = vst [vmem:[#allocation2 + $0x140] sm:$0xff] %v1159
      %1201 = vst [vmem:[#allocation2 + $0x148] sm:$0xff] %v1160
      %1202 = vst [vmem:[#allocation2 + $0x150] sm:$0xff] %v1161
      %1203 = vst [vmem:[#allocation2 + $0x158] sm:$0xff] %v1162
      %v1204 = vld [vmem:[#allocation2 + $0x5] sm:$0xff]
      %v1205 = vld [vmem:[#allocation2 + $0xd] sm:$0xff]
      %v1206 = vld [vmem:[#allocation2 + $0x15] sm:$0xff]
      %v1207 = vld [vmem:[#allocation2 + $0x1d] sm:$0xff]
      %v1208 = vld [vmem:[#allocation2 + $0x25] sm:$0xff]
      %v1209 = vld [vmem:[#allocation2 + $0x2d] sm:$0xff]
      %v1210 = vld [vmem:[#allocation2 + $0x35] sm:$0xff]
      %v1211 = vld [vmem:[#allocation2 + $0x3d] sm:$0xff]
      %v1212 = vld [vmem:[#allocation2 + $0x45] sm:$0xff]
      %v1213 = vld [vmem:[#allocation2 + $0x4d] sm:$0xff]
      %v1214 = vld [vmem:[#allocation2 + $0x55] sm:$0xff]
      %v1215 = vld [vmem:[#allocation2 + $0x5d] sm:$0xff]
      %v1216 = vld [vmem:[#allocation2 + $0x65] sm:$0xff]
      %v1217 = vld [vmem:[#allocation2 + $0x6d] sm:$0xff]
      %v1218 = vld [vmem:[#allocation2 + $0x75] sm:$0xff]
      %v1219 = vld [vmem:[#allocation2 + $0x7d] sm:$0xff]
      %v1220 = vld [vmem:[#allocation2 + $0x85] sm:$0xff]
      %v1221 = vld [vmem:[#allocation2 + $0x8d] sm:$0xff]
      %v1222 = vld [vmem:[#allocation2 + $0x95] sm:$0xff]
      %v1223 = vld [vmem:[#allocation2 + $0x9d] sm:$0xff]
      %v1224 = vld [vmem:[#allocation2 + $0xa5] sm:$0xff]
      %v1225 = vld [vmem:[#allocation2 + $0xad] sm:$0xff]
      %v1226 = vld [vmem:[#allocation2 + $0xb5] sm:$0xff]
      %v1227 = vld [vmem:[#allocation2 + $0xbd] sm:$0xff]
      %v1228 = vld [vmem:[#allocation2 + $0xc5] sm:$0xff]
      %v1229 = vld [vmem:[#allocation2 + $0xcd] sm:$0xff]
      %v1230 = vld [vmem:[#allocation2 + $0xd5] sm:$0xff]
      %v1231 = vld [vmem:[#allocation2 + $0xdd] sm:$0xff]
      %v1232 = vld [vmem:[#allocation2 + $0xe5] sm:$0xff]
      %v1233 = vld [vmem:[#allocation2 + $0xed] sm:$0xff]
      %v1234 = vld [vmem:[#allocation2 + $0xf5] sm:$0xff]
      %v1235 = vld [vmem:[#allocation2 + $0xfd] sm:$0xff]
      %v1236 = vld [vmem:[#allocation2 + $0x105] sm:$0xff]
      %v1237 = vld [vmem:[#allocation2 + $0x10d] sm:$0xff]
      %v1238 = vld [vmem:[#allocation2 + $0x115] sm:$0xff]
      %v1239 = vld [vmem:[#allocation2 + $0x11d] sm:$0xff]
      %v1240 = vld [vmem:[#allocation2 + $0x125] sm:$0xff]
      %v1241 = vld [vmem:[#allocation2 + $0x12d] sm:$0xff]
      %v1242 = vld [vmem:[#allocation2 + $0x135] sm:$0xff]
      %v1243 = vld [vmem:[#allocation2 + $0x13d] sm:$0xff]
      %v1244 = vld [vmem:[#allocation2 + $0x145] sm:$0xff]
      %v1245 = vld [vmem:[%s6] sm:$0xff]
      %v1246 = vld [vmem:[%s6 + $0x8] sm:$0xff]
      %v1247 = vld [vmem:[%s6 + $0x10] sm:$0xff]
      %v1248 = vld [vmem:[%s6 + $0x18] sm:$0xff]
      %v1249 = vld [vmem:[%s6 + $0x20] sm:$0xff]
      %v1250 = vld [vmem:[%s6 + $0x28] sm:$0xff]
      %v1251 = vld [vmem:[%s6 + $0x30] sm:$0xff]
      %v1252 = vld [vmem:[%s6 + $0x38] sm:$0xff]
      %v1253 = vld [vmem:[%s6 + $0x40] sm:$0xff]
      %v1254 = vld [vmem:[%s6 + $0x48] sm:$0xff]
      %v1255 = vld [vmem:[%s6 + $0x50] sm:$0xff]
      %v1256 = vld [vmem:[%s6 + $0x58] sm:$0xff]
      %v1257 = vld [vmem:[%s6 + $0x60] sm:$0xff]
      %v1258 = vld [vmem:[%s6 + $0x68] sm:$0xff]
      %v1259 = vld [vmem:[%s6 + $0x70] sm:$0xff]
      %v1260 = vld [vmem:[%s6 + $0x78] sm:$0xff]
      %v1261 = vld [vmem:[#allocation2 + $0x6] sm:$0xff]
      %v1262 = vld [vmem:[#allocation2 + $0xe] sm:$0xff]
      %v1263 = vld [vmem:[#allocation2 + $0x16] sm:$0xff]
      %v1264 = vld [vmem:[#allocation2 + $0x1e] sm:$0xff]
      %v1265 = vld [vmem:[#allocation2 + $0x26] sm:$0xff]
      %v1266 = vld [vmem:[#allocation2 + $0x2e] sm:$0xff]
      %v1267 = vld [vmem:[#allocation2 + $0x36] sm:$0xff]
      %v1268 = vld [vmem:[#allocation2 + $0x3e] sm:$0xff]
      %v1269 = vld [vmem:[#allocation2 + $0x46] sm:$0xff]
      %v1270 = vld [vmem:[#allocation2 + $0x4e] sm:$0xff]
      %v1271 = vld [vmem:[#allocation2 + $0x56] sm:$0xff]
      %v1272 = vld [vmem:[#allocation2 + $0x5e] sm:$0xff]
      %v1273 = vld [vmem:[#allocation2 + $0x66] sm:$0xff]
      %v1274 = vld [vmem:[#allocation2 + $0x6e] sm:$0xff]
      %v1275 = vld [vmem:[#allocation2 + $0x76] sm:$0xff]
      %v1276 = vld [vmem:[#allocation2 + $0x7e] sm:$0xff]
      %v1277 = vld [vmem:[#allocation2 + $0x86] sm:$0xff]
      %v1278 = vld [vmem:[#allocation2 + $0x8e] sm:$0xff]
      %v1279 = vld [vmem:[#allocation2 + $0x96] sm:$0xff]
      %v1280 = vld [vmem:[#allocation2 + $0x9e] sm:$0xff]
      %v1281 = vld [vmem:[#allocation2 + $0xa6] sm:$0xff]
      %v1282 = vld [vmem:[#allocation2 + $0xae] sm:$0xff]
      %v1283 = vld [vmem:[#allocation2 + $0xb6] sm:$0xff]
      %v1284 = vld [vmem:[#allocation2 + $0xbe] sm:$0xff]
      %v1285 = vld [vmem:[#allocation2 + $0xc6] sm:$0xff]
      %v1286 = vld [vmem:[#allocation2 + $0xce] sm:$0xff]
      %v1287 = vld [vmem:[#allocation2 + $0xd6] sm:$0xff]
      %v1288 = vld [vmem:[#allocation2 + $0xde] sm:$0xff]
      %v1289 = vld [vmem:[#allocation2 + $0xe6] sm:$0xff]
      %v1290 = vld [vmem:[#allocation2 + $0xee] sm:$0xff]
      %v1291 = vld [vmem:[#allocation2 + $0xf6] sm:$0xff]
      %v1292 = vld [vmem:[#allocation2 + $0xfe] sm:$0xff]
      %v1293 = vld [vmem:[#allocation2 + $0x106] sm:$0xff]
      %v1294 = vld [vmem:[#allocation2 + $0x10e] sm:$0xff]
      %v1295 = vld [vmem:[#allocation2 + $0x116] sm:$0xff]
      %v1296 = vld [vmem:[#allocation2 + $0x11e] sm:$0xff]
      %v1297 = vld [vmem:[#allocation2 + $0x126] sm:$0xff]
      %v1298 = vld [vmem:[#allocation2 + $0x12e] sm:$0xff]
      %v1299 = vld [vmem:[#allocation2 + $0x136] sm:$0xff]
      %v1300 = vld [vmem:[#allocation2 + $0x13e] sm:$0xff]
      %v1301 = vld [vmem:[#allocation2 + $0x146] sm:$0xff]
      %s1302 = scalar_lea.vmem %s6, 128
      %v1303 = vld [vmem:[%s1302] sm:$0xff]
      %v1304 = vld [vmem:[%s1302 + $0x8] sm:$0xff]
      %v1305 = vld [vmem:[%s1302 + $0x10] sm:$0xff]
      %v1306 = vld [vmem:[%s1302 + $0x18] sm:$0xff]
      %v1307 = vld [vmem:[%s1302 + $0x20] sm:$0xff]
      %v1308 = vld [vmem:[%s1302 + $0x28] sm:$0xff]
      %v1309 = vld [vmem:[%s1302 + $0x30] sm:$0xff]
      %v1310 = vld [vmem:[%s1302 + $0x38] sm:$0xff]
      %v1311 = vld [vmem:[%s1302 + $0x40] sm:$0xff]
      %v1312 = vld [vmem:[%s1302 + $0x48] sm:$0xff]
      %v1313 = vld [vmem:[%s1302 + $0x50] sm:$0xff]
      %v1314 = vld [vmem:[%s1302 + $0x58] sm:$0xff]
      %v1315 = vld [vmem:[%s1302 + $0x60] sm:$0xff]
      %v1316 = vld [vmem:[%s1302 + $0x68] sm:$0xff]
      %v1317 = vld [vmem:[%s1302 + $0x70] sm:$0xff]
      %v1318 = vld [vmem:[%s1302 + $0x78] sm:$0xff]
      %1319 = vmatprep.subr.mxu0 0.0
      %1320 = vmatpush1.msra.mxu0 %v1303
      %1321 = vmatprep.subr.mxu0 0.0
      %1322 = vmatpush1.msra.mxu0 %v1304
      %1323 = vmatprep.subr.mxu0 0.0
      %1324 = vmatpush1.msra.mxu0 %v1305
      %1325 = vmatprep.subr.mxu0 0.0
      %1326 = vmatpush1.msra.mxu0 %v1306
      %1327 = vmatprep.subr.mxu0 0.0
      %1328 = vmatpush1.msra.mxu0 %v1307
      %1329 = vmatprep.subr.mxu0 0.0
      %1330 = vmatpush1.msra.mxu0 %v1308
      %1331 = vmatprep.subr.mxu0 0.0
      %1332 = vmatpush1.msra.mxu0 %v1309
      %1333 = vmatprep.subr.mxu0 0.0
      %1334 = vmatpush1.msra.mxu0 %v1310
      %1335 = vmatprep.subr.mxu0 0.0
      %1336 = vmatpush1.msra.mxu0 %v1311
      %1337 = vmatprep.subr.mxu0 0.0
      %1338 = vmatpush1.msra.mxu0 %v1312
      %1339 = vmatprep.subr.mxu0 0.0
      %1340 = vmatpush1.msra.mxu0 %v1313
      %1341 = vmatprep.subr.mxu0 0.0
      %1342 = vmatpush1.msra.mxu0 %v1314
      %1343 = vmatprep.subr.mxu0 0.0
      %1344 = vmatpush1.msra.mxu0 %v1315
      %1345 = vmatprep.subr.mxu0 0.0
      %1346 = vmatpush1.msra.mxu0 %v1316
      %1347 = vmatprep.subr.mxu0 0.0
      %1348 = vmatpush1.msra.mxu0 %v1317
      %1349 = vmatprep.subr.mxu0 0.0
      %1350 = vmatpush1.msra.mxu0 %v1318
      %1351 = vmatprep.subr.mxu0 0.0
      %1352 = vmatpush1.msra.mxu0 0.0
      %1353 = vmatprep.subr.mxu0 0.0
      %1354 = vmatpush1.msra.mxu0 0.0
      %1355 = vmatprep.subr.mxu0 0.0
      %1356 = vmatpush1.msra.mxu0 0.0
      %1357 = vmatprep.subr.mxu0 0.0
      %1358 = vmatpush1.msra.mxu0 0.0
      %1359 = vmatprep.subr.mxu0 0.0
      %1360 = vmatpush1.msra.mxu0 0.0
      %1361 = vmatprep.subr.mxu0 0.0
      %1362 = vmatpush1.msra.mxu0 0.0
      %1363 = vmatprep.subr.mxu0 0.0
      %1364 = vmatpush1.msra.mxu0 0.0
      %1365 = vmatprep.subr.mxu0 0.0
      %1366 = vmatpush1.msra.mxu0 0.0
      %1367 = vmatprep.subr.mxu0 0.0
      %1368 = vmatpush1.msra.mxu0 0.0
      %1369 = vmatprep.subr.mxu0 0.0
      %1370 = vmatpush1.msra.mxu0 0.0
      %1371 = vmatprep.subr.mxu0 0.0
      %1372 = vmatpush1.msra.mxu0 0.0
      %1373 = vmatprep.subr.mxu0 0.0
      %1374 = vmatpush1.msra.mxu0 0.0
      %1375 = vmatprep.subr.mxu0 0.0
      %1376 = vmatpush1.msra.mxu0 0.0
      %1377 = vmatprep.subr.mxu0 0.0
      %1378 = vmatpush1.msra.mxu0 0.0
      %1379 = vmatprep.subr.mxu0 0.0
      %1380 = vmatpush1.msra.mxu0 0.0
      %1381 = vmatprep.subr.mxu0 0.0
      %1382 = vmatpush1.msra.mxu0 0.0
      %1383 = vmatprep.mubr.f32.mxu0 0.0
      %1384 = vmatmul.mubr.f32.gmra.mrb[0].mxu0 %v1261
      %v1385 = vpop.f32.mrb[0].mxu0
      %v1386 = vadd.f32 0.0, %v1385
      %v1387 = vpop.f32.mrb[0].mxu0
      %1388 = vmatprep.mubr.f32.mxu0 0.0
      %1389 = vmatmul.mubr.f32.gmra.mrb[0].mxu0 %v1262
      %v1390 = vpop.f32.mrb[0].mxu0
      %v1391 = vadd.f32 0.0, %v1390
      %v1392 = vpop.f32.mrb[0].mxu0
      %1393 = vmatprep.mubr.f32.mxu0 0.0
      %1394 = vmatmul.mubr.f32.gmra.mrb[0].mxu0 %v1263
      %v1395 = vpop.f32.mrb[0].mxu0
      %v1396 = vadd.f32 0.0, %v1395
      %v1397 = vpop.f32.mrb[0].mxu0
      %1398 = vmatprep.mubr.f32.mxu0 0.0
      %1399 = vmatmul.mubr.f32.gmra.mrb[0].mxu0 %v1264
      %v1400 = vpop.f32.mrb[0].mxu0
      %v1401 = vadd.f32 0.0, %v1400
      %v1402 = vpop.f32.mrb[0].mxu0
      %1403 = vmatprep.mubr.f32.mxu0 0.0
      %1404 = vmatmul.mubr.f32.gmra.mrb[0].mxu0 %v1265
      %v1405 = vpop.f32.mrb[0].mxu0
      %v1406 = vadd.f32 0.0, %v1405
      %v1407 = vpop.f32.mrb[0].mxu0
      %1408 = vmatprep.mubr.f32.mxu0 0.0
      %1409 = vmatmul.mubr.f32.gmra.mrb[0].mxu0 %v1266
      %v1410 = vpop.f32.mrb[0].mxu0
      %v1411 = vadd.f32 0.0, %v1410
      %v1412 = vpop.f32.mrb[0].mxu0
      %1413 = vmatprep.mubr.f32.mxu0 0.0
      %1414 = vmatmul.mubr.f32.gmra.mrb[0].mxu0 %v1267
      %v1415 = vpop.f32.mrb[0].mxu0
      %v1416 = vadd.f32 0.0, %v1415
      %v1417 = vpop.f32.mrb[0].mxu0
      %1418 = vmatprep.mubr.f32.mxu0 0.0
      %1419 = vmatmul.mubr.f32.gmra.mrb[0].mxu0 %v1268
      %v1420 = vpop.f32.mrb[0].mxu0
      %v1421 = vadd.f32 0.0, %v1420
      %v1422 = vpop.f32.mrb[0].mxu0
      %1423 = vmatprep.mubr.f32.mxu0 0.0
      %1424 = vmatmul.mubr.f32.gmra.mrb[0].mxu0 %v1269
      %v1425 = vpop.f32.mrb[0].mxu0
      %v1426 = vadd.f32 0.0, %v1425
      %v1427 = vpop.f32.mrb[0].mxu0
      %1428 = vmatprep.mubr.f32.mxu0 0.0
      %1429 = vmatmul.mubr.f32.gmra.mrb[0].mxu0 %v1270
      %v1430 = vpop.f32.mrb[0].mxu0
      %v1431 = vadd.f32 0.0, %v1430
      %v1432 = vpop.f32.mrb[0].mxu0
      %1433 = vmatprep.mubr.f32.mxu0 0.0
      %1434 = vmatmul.mubr.f32.gmra.mrb[0].mxu0 %v1271
      %v1435 = vpop.f32.mrb[0].mxu0
      %v1436 = vadd.f32 0.0, %v1435
      %v1437 = vpop.f32.mrb[0].mxu0
      %1438 = vmatprep.mubr.f32.mxu0 0.0
      %1439 = vmatmul.mubr.f32.gmra.mrb[0].mxu0 %v1272
      %v1440 = vpop.f32.mrb[0].mxu0
      %v1441 = vadd.f32 0.0, %v1440
      %v1442 = vpop.f32.mrb[0].mxu0
      %1443 = vmatprep.mubr.f32.mxu0 0.0
      %1444 = vmatmul.mubr.f32.gmra.mrb[0].mxu0 %v1273
      %v1445 = vpop.f32.mrb[0].mxu0
      %v1446 = vadd.f32 0.0, %v1445
      %v1447 = vpop.f32.mrb[0].mxu0
      %1448 = vmatprep.mubr.f32.mxu0 0.0
      %1449 = vmatmul.mubr.f32.gmra.mrb[0].mxu0 %v1274
      %v1450 = vpop.f32.mrb[0].mxu0
      %v1451 = vadd.f32 0.0, %v1450
      %v1452 = vpop.f32.mrb[0].mxu0
      %1453 = vmatprep.mubr.f32.mxu0 0.0
      %1454 = vmatmul.mubr.f32.gmra.mrb[0].mxu0 %v1275
      %v1455 = vpop.f32.mrb[0].mxu0
      %v1456 = vadd.f32 0.0, %v1455
      %v1457 = vpop.f32.mrb[0].mxu0
      %1458 = vmatprep.mubr.f32.mxu0 0.0
      %1459 = vmatmul.mubr.f32.gmra.mrb[0].mxu0 %v1276
      %v1460 = vpop.f32.mrb[0].mxu0
      %v1461 = vadd.f32 0.0, %v1460
      %v1462 = vpop.f32.mrb[0].mxu0
      %1463 = vmatprep.mubr.f32.mxu0 0.0
      %1464 = vmatmul.mubr.f32.gmra.mrb[0].mxu0 %v1277
      %v1465 = vpop.f32.mrb[0].mxu0
      %v1466 = vadd.f32 0.0, %v1465
      %v1467 = vpop.f32.mrb[0].mxu0
      %1468 = vmatprep.mubr.f32.mxu0 0.0
      %1469 = vmatmul.mubr.f32.gmra.mrb[0].mxu0 %v1278
      %v1470 = vpop.f32.mrb[0].mxu0
      %v1471 = vadd.f32 0.0, %v1470
      %v1472 = vpop.f32.mrb[0].mxu0
      %1473 = vmatprep.mubr.f32.mxu0 0.0
      %1474 = vmatmul.mubr.f32.gmra.mrb[0].mxu0 %v1279
      %v1475 = vpop.f32.mrb[0].mxu0
      %v1476 = vadd.f32 0.0, %v1475
      %v1477 = vpop.f32.mrb[0].mxu0
      %1478 = vmatprep.mubr.f32.mxu0 0.0
      %1479 = vmatmul.mubr.f32.gmra.mrb[0].mxu0 %v1280
      %v1480 = vpop.f32.mrb[0].mxu0
      %v1481 = vadd.f32 0.0, %v1480
      %v1482 = vpop.f32.mrb[0].mxu0
      %1483 = vmatprep.mubr.f32.mxu0 0.0
      %1484 = vmatmul.mubr.f32.gmra.mrb[0].mxu0 %v1281
      %v1485 = vpop.f32.mrb[0].mxu0
      %v1486 = vadd.f32 0.0, %v1485
      %v1487 = vpop.f32.mrb[0].mxu0
      %1488 = vmatprep.mubr.f32.mxu0 0.0
      %1489 = vmatmul.mubr.f32.gmra.mrb[0].mxu0 %v1282
      %v1490 = vpop.f32.mrb[0].mxu0
      %v1491 = vadd.f32 0.0, %v1490
      %v1492 = vpop.f32.mrb[0].mxu0
      %1493 = vmatprep.mubr.f32.mxu0 0.0
      %1494 = vmatmul.mubr.f32.gmra.mrb[0].mxu0 %v1283
      %v1495 = vpop.f32.mrb[0].mxu0
      %v1496 = vadd.f32 0.0, %v1495
      %v1497 = vpop.f32.mrb[0].mxu0
      %1498 = vmatprep.mubr.f32.mxu0 0.0
      %1499 = vmatmul.mubr.f32.gmra.mrb[0].mxu0 %v1284
      %v1500 = vpop.f32.mrb[0].mxu0
      %v1501 = vadd.f32 0.0, %v1500
      %v1502 = vpop.f32.mrb[0].mxu0
      %1503 = vmatprep.mubr.f32.mxu0 0.0
      %1504 = vmatmul.mubr.f32.gmra.mrb[0].mxu0 %v1285
      %v1505 = vpop.f32.mrb[0].mxu0
      %v1506 = vadd.f32 0.0, %v1505
      %v1507 = vpop.f32.mrb[0].mxu0
      %1508 = vmatprep.mubr.f32.mxu0 0.0
      %1509 = vmatmul.mubr.f32.gmra.mrb[0].mxu0 %v1286
      %v1510 = vpop.f32.mrb[0].mxu0
      %v1511 = vadd.f32 0.0, %v1510
      %v1512 = vpop.f32.mrb[0].mxu0
      %1513 = vmatprep.mubr.f32.mxu0 0.0
      %1514 = vmatmul.mubr.f32.gmra.mrb[0].mxu0 %v1287
      %v1515 = vpop.f32.mrb[0].mxu0
      %v1516 = vadd.f32 0.0, %v1515
      %v1517 = vpop.f32.mrb[0].mxu0
      %1518 = vmatprep.mubr.f32.mxu0 0.0
      %1519 = vmatmul.mubr.f32.gmra.mrb[0].mxu0 %v1288
      %v1520 = vpop.f32.mrb[0].mxu0
      %v1521 = vadd.f32 0.0, %v1520
      %v1522 = vpop.f32.mrb[0].mxu0
      %1523 = vmatprep.mubr.f32.mxu0 0.0
      %1524 = vmatmul.mubr.f32.gmra.mrb[0].mxu0 %v1289
      %v1525 = vpop.f32.mrb[0].mxu0
      %v1526 = vadd.f32 0.0, %v1525
      %v1527 = vpop.f32.mrb[0].mxu0
      %1528 = vmatprep.mubr.f32.mxu0 0.0
      %1529 = vmatmul.mubr.f32.gmra.mrb[0].mxu0 %v1290
      %v1530 = vpop.f32.mrb[0].mxu0
      %v1531 = vadd.f32 0.0, %v1530
      %v1532 = vpop.f32.mrb[0].mxu0
      %1533 = vmatprep.mubr.f32.mxu0 0.0
      %1534 = vmatmul.mubr.f32.gmra.mrb[0].mxu0 %v1291
      %v1535 = vpop.f32.mrb[0].mxu0
      %v1536 = vadd.f32 0.0, %v1535
      %v1537 = vpop.f32.mrb[0].mxu0
      %1538 = vmatprep.mubr.f32.mxu0 0.0
      %1539 = vmatmul.mubr.f32.gmra.mrb[0].mxu0 %v1292
      %v1540 = vpop.f32.mrb[0].mxu0
      %v1541 = vadd.f32 0.0, %v1540
      %v1542 = vpop.f32.mrb[0].mxu0
      %1543 = vmatprep.mubr.f32.mxu0 0.0
      %1544 = vmatmul.mubr.f32.gmra.mrb[0].mxu0 %v1293
      %v1545 = vpop.f32.mrb[0].mxu0
      %v1546 = vadd.f32 0.0, %v1545
      %v1547 = vpop.f32.mrb[0].mxu0
      %1548 = vmatprep.mubr.f32.mxu0 0.0
      %1549 = vmatmul.mubr.f32.gmra.mrb[0].mxu0 %v1294
      %v1550 = vpop.f32.mrb[0].mxu0
      %v1551 = vadd.f32 0.0, %v1550
      %v1552 = vpop.f32.mrb[0].mxu0
      %1553 = vmatprep.mubr.f32.mxu0 0.0
      %1554 = vmatmul.mubr.f32.gmra.mrb[0].mxu0 %v1295
      %v1555 = vpop.f32.mrb[0].mxu0
      %v1556 = vadd.f32 0.0, %v1555
      %v1557 = vpop.f32.mrb[0].mxu0
      %1558 = vmatprep.mubr.f32.mxu0 0.0
      %1559 = vmatmul.mubr.f32.gmra.mrb[0].mxu0 %v1296
      %v1560 = vpop.f32.mrb[0].mxu0
      %v1561 = vadd.f32 0.0, %v1560
      %v1562 = vpop.f32.mrb[0].mxu0
      %1563 = vmatprep.mubr.f32.mxu0 0.0
      %1564 = vmatmul.mubr.f32.gmra.mrb[0].mxu0 %v1297
      %v1565 = vpop.f32.mrb[0].mxu0
      %v1566 = vadd.f32 0.0, %v1565
      %v1567 = vpop.f32.mrb[0].mxu0
      %1568 = vmatprep.mubr.f32.mxu0 0.0
      %1569 = vmatmul.mubr.f32.gmra.mrb[0].mxu0 %v1298
      %v1570 = vpop.f32.mrb[0].mxu0
      %v1571 = vadd.f32 0.0, %v1570
      %v1572 = vpop.f32.mrb[0].mxu0
      %1573 = vmatprep.mubr.f32.mxu0 0.0
      %1574 = vmatmul.mubr.f32.gmra.mrb[0].mxu0 %v1299
      %v1575 = vpop.f32.mrb[0].mxu0
      %v1576 = vadd.f32 0.0, %v1575
      %v1577 = vpop.f32.mrb[0].mxu0
      %1578 = vmatprep.mubr.f32.mxu0 0.0
      %1579 = vmatmul.mubr.f32.gmra.mrb[0].mxu0 %v1300
      %v1580 = vpop.f32.mrb[0].mxu0
      %v1581 = vadd.f32 0.0, %v1580
      %v1582 = vpop.f32.mrb[0].mxu0
      %1583 = vmatprep.mubr.f32.mxu0 0.0
      %1584 = vmatmul.mubr.f32.gmra.mrb[0].mxu0 %v1301
      %v1585 = vpop.f32.mrb[0].mxu0
      %v1586 = vadd.f32 0.0, %v1585
      %v1587 = vpop.f32.mrb[0].mxu0
      %1588 = vdwg.mxu0
      %1589 = vmatprep.subr.mxu0 0.0
      %1590 = vmatpush1.msra.mxu0 %v1245
      %1591 = vmatprep.subr.mxu0 0.0
      %1592 = vmatpush1.msra.mxu0 %v1246
      %1593 = vmatprep.subr.mxu0 0.0
      %1594 = vmatpush1.msra.mxu0 %v1247
      %1595 = vmatprep.subr.mxu0 0.0
      %1596 = vmatpush1.msra.mxu0 %v1248
      %1597 = vmatprep.subr.mxu0 0.0
      %1598 = vmatpush1.msra.mxu0 %v1249
      %1599 = vmatprep.subr.mxu0 0.0
      %1600 = vmatpush1.msra.mxu0 %v1250
      %1601 = vmatprep.subr.mxu0 0.0
      %1602 = vmatpush1.msra.mxu0 %v1251
      %1603 = vmatprep.subr.mxu0 0.0
      %1604 = vmatpush1.msra.mxu0 %v1252
      %1605 = vmatprep.subr.mxu0 0.0
      %1606 = vmatpush1.msra.mxu0 %v1253
      %1607 = vmatprep.subr.mxu0 0.0
      %1608 = vmatpush1.msra.mxu0 %v1254
      %1609 = vmatprep.subr.mxu0 0.0
      %1610 = vmatpush1.msra.mxu0 %v1255
      %1611 = vmatprep.subr.mxu0 0.0
      %1612 = vmatpush1.msra.mxu0 %v1256
      %1613 = vmatprep.subr.mxu0 0.0
      %1614 = vmatpush1.msra.mxu0 %v1257
      %1615 = vmatprep.subr.mxu0 0.0
      %1616 = vmatpush1.msra.mxu0 %v1258
      %1617 = vmatprep.subr.mxu0 0.0
      %1618 = vmatpush1.msra.mxu0 %v1259
      %1619 = vmatprep.subr.mxu0 0.0
      %1620 = vmatpush1.msra.mxu0 %v1260
      %1621 = vmatprep.subr.mxu0 0.0
      %1622 = vmatpush1.msra.mxu0 0.0
      %1623 = vmatprep.subr.mxu0 0.0
      %1624 = vmatpush1.msra.mxu0 0.0
      %1625 = vmatprep.subr.mxu0 0.0
      %1626 = vmatpush1.msra.mxu0 0.0
      %1627 = vmatprep.subr.mxu0 0.0
      %1628 = vmatpush1.msra.mxu0 0.0
      %1629 = vmatprep.subr.mxu0 0.0
      %1630 = vmatpush1.msra.mxu0 0.0
      %1631 = vmatprep.subr.mxu0 0.0
      %1632 = vmatpush1.msra.mxu0 0.0
      %1633 = vmatprep.subr.mxu0 0.0
      %1634 = vmatpush1.msra.mxu0 0.0
      %1635 = vmatprep.subr.mxu0 0.0
      %1636 = vmatpush1.msra.mxu0 0.0
      %1637 = vmatprep.subr.mxu0 0.0
      %1638 = vmatpush1.msra.mxu0 0.0
      %1639 = vmatprep.subr.mxu0 0.0
      %1640 = vmatpush1.msra.mxu0 0.0
      %1641 = vmatprep.subr.mxu0 0.0
      %1642 = vmatpush1.msra.mxu0 0.0
      %1643 = vmatprep.subr.mxu0 0.0
      %1644 = vmatpush1.msra.mxu0 0.0
      %1645 = vmatprep.subr.mxu0 0.0
      %1646 = vmatpush1.msra.mxu0 0.0
      %1647 = vmatprep.subr.mxu0 0.0
      %1648 = vmatpush1.msra.mxu0 0.0
      %1649 = vmatprep.subr.mxu0 0.0
      %1650 = vmatpush1.msra.mxu0 0.0
      %1651 = vmatprep.subr.mxu0 0.0
      %1652 = vmatpush1.msra.mxu0 0.0
      %1653 = vmatprep.mubr.f32.mxu0 0.0
      %1654 = vmatmul.mubr.f32.gmra.mrb[0].mxu0 %v1204
      %v1655 = vpop.f32.mrb[0].mxu0
      %v1656 = vadd.f32 %v1386, %v1655
      %v1657 = vpop.f32.mrb[0].mxu0
      %1658 = vmatprep.mubr.f32.mxu0 0.0
      %1659 = vmatmul.mubr.f32.gmra.mrb[0].mxu0 %v1205
      %v1660 = vpop.f32.mrb[0].mxu0
      %v1661 = vadd.f32 %v1391, %v1660
      %v1662 = vpop.f32.mrb[0].mxu0
      %1663 = vmatprep.mubr.f32.mxu0 0.0
      %1664 = vmatmul.mubr.f32.gmra.mrb[0].mxu0 %v1206
      %v1665 = vpop.f32.mrb[0].mxu0
      %v1666 = vadd.f32 %v1396, %v1665
      %v1667 = vpop.f32.mrb[0].mxu0
      %1668 = vmatprep.mubr.f32.mxu0 0.0
      %1669 = vmatmul.mubr.f32.gmra.mrb[0].mxu0 %v1207
      %v1670 = vpop.f32.mrb[0].mxu0
      %v1671 = vadd.f32 %v1401, %v1670
      %v1672 = vpop.f32.mrb[0].mxu0
      %1673 = vmatprep.mubr.f32.mxu0 0.0
      %1674 = vmatmul.mubr.f32.gmra.mrb[0].mxu0 %v1208
      %v1675 = vpop.f32.mrb[0].mxu0
      %v1676 = vadd.f32 %v1406, %v1675
      %v1677 = vpop.f32.mrb[0].mxu0
      %1678 = vmatprep.mubr.f32.mxu0 0.0
      %1679 = vmatmul.mubr.f32.gmra.mrb[0].mxu0 %v1209
      %v1680 = vpop.f32.mrb[0].mxu0
      %v1681 = vadd.f32 %v1411, %v1680
      %v1682 = vpop.f32.mrb[0].mxu0
      %1683 = vmatprep.mubr.f32.mxu0 0.0
      %1684 = vmatmul.mubr.f32.gmra.mrb[0].mxu0 %v1210
      %v1685 = vpop.f32.mrb[0].mxu0
      %v1686 = vadd.f32 %v1416, %v1685
      %v1687 = vpop.f32.mrb[0].mxu0
      %1688 = vmatprep.mubr.f32.mxu0 0.0
      %1689 = vmatmul.mubr.f32.gmra.mrb[0].mxu0 %v1211
      %v1690 = vpop.f32.mrb[0].mxu0
      %v1691 = vadd.f32 %v1421, %v1690
      %v1692 = vpop.f32.mrb[0].mxu0
      %1693 = vmatprep.mubr.f32.mxu0 0.0
      %1694 = vmatmul.mubr.f32.gmra.mrb[0].mxu0 %v1212
      %v1695 = vpop.f32.mrb[0].mxu0
      %v1696 = vadd.f32 %v1426, %v1695
      %v1697 = vpop.f32.mrb[0].mxu0
      %1698 = vmatprep.mubr.f32.mxu0 0.0
      %1699 = vmatmul.mubr.f32.gmra.mrb[0].mxu0 %v1213
      %v1700 = vpop.f32.mrb[0].mxu0
      %v1701 = vadd.f32 %v1431, %v1700
      %v1702 = vpop.f32.mrb[0].mxu0
      %1703 = vmatprep.mubr.f32.mxu0 0.0
      %1704 = vmatmul.mubr.f32.gmra.mrb[0].mxu0 %v1214
      %v1705 = vpop.f32.mrb[0].mxu0
      %v1706 = vadd.f32 %v1436, %v1705
      %v1707 = vpop.f32.mrb[0].mxu0
      %1708 = vmatprep.mubr.f32.mxu0 0.0
      %1709 = vmatmul.mubr.f32.gmra.mrb[0].mxu0 %v1215
      %v1710 = vpop.f32.mrb[0].mxu0
      %v1711 = vadd.f32 %v1441, %v1710
      %v1712 = vpop.f32.mrb[0].mxu0
      %1713 = vmatprep.mubr.f32.mxu0 0.0
      %1714 = vmatmul.mubr.f32.gmra.mrb[0].mxu0 %v1216
      %v1715 = vpop.f32.mrb[0].mxu0
      %v1716 = vadd.f32 %v1446, %v1715
      %v1717 = vpop.f32.mrb[0].mxu0
      %1718 = vmatprep.mubr.f32.mxu0 0.0
      %1719 = vmatmul.mubr.f32.gmra.mrb[0].mxu0 %v1217
      %v1720 = vpop.f32.mrb[0].mxu0
      %v1721 = vadd.f32 %v1451, %v1720
      %v1722 = vpop.f32.mrb[0].mxu0
      %1723 = vmatprep.mubr.f32.mxu0 0.0
      %1724 = vmatmul.mubr.f32.gmra.mrb[0].mxu0 %v1218
      %v1725 = vpop.f32.mrb[0].mxu0
      %v1726 = vadd.f32 %v1456, %v1725
      %v1727 = vpop.f32.mrb[0].mxu0
      %1728 = vmatprep.mubr.f32.mxu0 0.0
      %1729 = vmatmul.mubr.f32.gmra.mrb[0].mxu0 %v1219
      %v1730 = vpop.f32.mrb[0].mxu0
      %v1731 = vadd.f32 %v1461, %v1730
      %v1732 = vpop.f32.mrb[0].mxu0
      %1733 = vmatprep.mubr.f32.mxu0 0.0
      %1734 = vmatmul.mubr.f32.gmra.mrb[0].mxu0 %v1220
      %v1735 = vpop.f32.mrb[0].mxu0
      %v1736 = vadd.f32 %v1466, %v1735
      %v1737 = vpop.f32.mrb[0].mxu0
      %1738 = vmatprep.mubr.f32.mxu0 0.0
      %1739 = vmatmul.mubr.f32.gmra.mrb[0].mxu0 %v1221
      %v1740 = vpop.f32.mrb[0].mxu0
      %v1741 = vadd.f32 %v1471, %v1740
      %v1742 = vpop.f32.mrb[0].mxu0
      %1743 = vmatprep.mubr.f32.mxu0 0.0
      %1744 = vmatmul.mubr.f32.gmra.mrb[0].mxu0 %v1222
      %v1745 = vpop.f32.mrb[0].mxu0
      %v1746 = vadd.f32 %v1476, %v1745
      %v1747 = vpop.f32.mrb[0].mxu0
      %1748 = vmatprep.mubr.f32.mxu0 0.0
      %1749 = vmatmul.mubr.f32.gmra.mrb[0].mxu0 %v1223
      %v1750 = vpop.f32.mrb[0].mxu0
      %v1751 = vadd.f32 %v1481, %v1750
      %v1752 = vpop.f32.mrb[0].mxu0
      %1753 = vmatprep.mubr.f32.mxu0 0.0
      %1754 = vmatmul.mubr.f32.gmra.mrb[0].mxu0 %v1224
      %v1755 = vpop.f32.mrb[0].mxu0
      %v1756 = vadd.f32 %v1486, %v1755
      %v1757 = vpop.f32.mrb[0].mxu0
      %1758 = vmatprep.mubr.f32.mxu0 0.0
      %1759 = vmatmul.mubr.f32.gmra.mrb[0].mxu0 %v1225
      %v1760 = vpop.f32.mrb[0].mxu0
      %v1761 = vadd.f32 %v1491, %v1760
      %v1762 = vpop.f32.mrb[0].mxu0
      %1763 = vmatprep.mubr.f32.mxu0 0.0
      %1764 = vmatmul.mubr.f32.gmra.mrb[0].mxu0 %v1226
      %v1765 = vpop.f32.mrb[0].mxu0
      %v1766 = vadd.f32 %v1496, %v1765
      %v1767 = vpop.f32.mrb[0].mxu0
      %1768 = vmatprep.mubr.f32.mxu0 0.0
      %1769 = vmatmul.mubr.f32.gmra.mrb[0].mxu0 %v1227
      %v1770 = vpop.f32.mrb[0].mxu0
      %v1771 = vadd.f32 %v1501, %v1770
      %v1772 = vpop.f32.mrb[0].mxu0
      %1773 = vmatprep.mubr.f32.mxu0 0.0
      %1774 = vmatmul.mubr.f32.gmra.mrb[0].mxu0 %v1228
      %v1775 = vpop.f32.mrb[0].mxu0
      %v1776 = vadd.f32 %v1506, %v1775
      %v1777 = vpop.f32.mrb[0].mxu0
      %1778 = vmatprep.mubr.f32.mxu0 0.0
      %1779 = vmatmul.mubr.f32.gmra.mrb[0].mxu0 %v1229
      %v1780 = vpop.f32.mrb[0].mxu0
      %v1781 = vadd.f32 %v1511, %v1780
      %v1782 = vpop.f32.mrb[0].mxu0
      %1783 = vmatprep.mubr.f32.mxu0 0.0
      %1784 = vmatmul.mubr.f32.gmra.mrb[0].mxu0 %v1230
      %v1785 = vpop.f32.mrb[0].mxu0
      %v1786 = vadd.f32 %v1516, %v1785
      %v1787 = vpop.f32.mrb[0].mxu0
      %1788 = vmatprep.mubr.f32.mxu0 0.0
      %1789 = vmatmul.mubr.f32.gmra.mrb[0].mxu0 %v1231
      %v1790 = vpop.f32.mrb[0].mxu0
      %v1791 = vadd.f32 %v1521, %v1790
      %v1792 = vpop.f32.mrb[0].mxu0
      %1793 = vmatprep.mubr.f32.mxu0 0.0
      %1794 = vmatmul.mubr.f32.gmra.mrb[0].mxu0 %v1232
      %v1795 = vpop.f32.mrb[0].mxu0
      %v1796 = vadd.f32 %v1526, %v1795
      %v1797 = vpop.f32.mrb[0].mxu0
      %1798 = vmatprep.mubr.f32.mxu0 0.0
      %1799 = vmatmul.mubr.f32.gmra.mrb[0].mxu0 %v1233
      %v1800 = vpop.f32.mrb[0].mxu0
      %v1801 = vadd.f32 %v1531, %v1800
      %v1802 = vpop.f32.mrb[0].mxu0
      %1803 = vmatprep.mubr.f32.mxu0 0.0
      %1804 = vmatmul.mubr.f32.gmra.mrb[0].mxu0 %v1234
      %v1805 = vpop.f32.mrb[0].mxu0
      %v1806 = vadd.f32 %v1536, %v1805
      %v1807 = vpop.f32.mrb[0].mxu0
      %1808 = vmatprep.mubr.f32.mxu0 0.0
      %1809 = vmatmul.mubr.f32.gmra.mrb[0].mxu0 %v1235
      %v1810 = vpop.f32.mrb[0].mxu0
      %v1811 = vadd.f32 %v1541, %v1810
      %v1812 = vpop.f32.mrb[0].mxu0
      %1813 = vmatprep.mubr.f32.mxu0 0.0
      %1814 = vmatmul.mubr.f32.gmra.mrb[0].mxu0 %v1236
      %v1815 = vpop.f32.mrb[0].mxu0
      %v1816 = vadd.f32 %v1546, %v1815
      %v1817 = vpop.f32.mrb[0].mxu0
      %1818 = vmatprep.mubr.f32.mxu0 0.0
      %1819 = vmatmul.mubr.f32.gmra.mrb[0].mxu0 %v1237
      %v1820 = vpop.f32.mrb[0].mxu0
      %v1821 = vadd.f32 %v1551, %v1820
      %v1822 = vpop.f32.mrb[0].mxu0
      %1823 = vmatprep.mubr.f32.mxu0 0.0
      %1824 = vmatmul.mubr.f32.gmra.mrb[0].mxu0 %v1238
      %v1825 = vpop.f32.mrb[0].mxu0
      %v1826 = vadd.f32 %v1556, %v1825
      %v1827 = vpop.f32.mrb[0].mxu0
      %1828 = vmatprep.mubr.f32.mxu0 0.0
      %1829 = vmatmul.mubr.f32.gmra.mrb[0].mxu0 %v1239
      %v1830 = vpop.f32.mrb[0].mxu0
      %v1831 = vadd.f32 %v1561, %v1830
      %v1832 = vpop.f32.mrb[0].mxu0
      %1833 = vmatprep.mubr.f32.mxu0 0.0
      %1834 = vmatmul.mubr.f32.gmra.mrb[0].mxu0 %v1240
      %v1835 = vpop.f32.mrb[0].mxu0
      %v1836 = vadd.f32 %v1566, %v1835
      %v1837 = vpop.f32.mrb[0].mxu0
      %1838 = vmatprep.mubr.f32.mxu0 0.0
      %1839 = vmatmul.mubr.f32.gmra.mrb[0].mxu0 %v1241
      %v1840 = vpop.f32.mrb[0].mxu0
      %v1841 = vadd.f32 %v1571, %v1840
      %v1842 = vpop.f32.mrb[0].mxu0
      %1843 = vmatprep.mubr.f32.mxu0 0.0
      %1844 = vmatmul.mubr.f32.gmra.mrb[0].mxu0 %v1242
      %v1845 = vpop.f32.mrb[0].mxu0
      %v1846 = vadd.f32 %v1576, %v1845
      %v1847 = vpop.f32.mrb[0].mxu0
      %1848 = vmatprep.mubr.f32.mxu0 0.0
      %1849 = vmatmul.mubr.f32.gmra.mrb[0].mxu0 %v1243
      %v1850 = vpop.f32.mrb[0].mxu0
      %v1851 = vadd.f32 %v1581, %v1850
      %v1852 = vpop.f32.mrb[0].mxu0
      %1853 = vmatprep.mubr.f32.mxu0 0.0
      %1854 = vmatmul.mubr.f32.gmra.mrb[0].mxu0 %v1244
      %v1855 = vpop.f32.mrb[0].mxu0
      %v1856 = vadd.f32 %v1586, %v1855
      %v1857 = vpop.f32.mrb[0].mxu0
      %1858 = vdwg.mxu0
      %v1859 = vld [vmem:[#allocation2 + $0x7] sm:$0xff]
      %v1860 = vld [vmem:[#allocation2 + $0xf] sm:$0xff]
      %v1861 = vld [vmem:[#allocation2 + $0x17] sm:$0xff]
      %v1862 = vld [vmem:[#allocation2 + $0x1f] sm:$0xff]
      %v1863 = vld [vmem:[#allocation2 + $0x27] sm:$0xff]
      %v1864 = vld [vmem:[#allocation2 + $0x2f] sm:$0xff]
      %v1865 = vld [vmem:[#allocation2 + $0x37] sm:$0xff]
      %v1866 = vld [vmem:[#allocation2 + $0x3f] sm:$0xff]
      %v1867 = vld [vmem:[#allocation2 + $0x47] sm:$0xff]
      %v1868 = vld [vmem:[#allocation2 + $0x4f] sm:$0xff]
      %v1869 = vld [vmem:[#allocation2 + $0x57] sm:$0xff]
      %v1870 = vld [vmem:[#allocation2 + $0x5f] sm:$0xff]
      %v1871 = vld [vmem:[#allocation2 + $0x67] sm:$0xff]
      %v1872 = vld [vmem:[#allocation2 + $0x6f] sm:$0xff]
      %v1873 = vld [vmem:[#allocation2 + $0x77] sm:$0xff]
      %v1874 = vld [vmem:[#allocation2 + $0x7f] sm:$0xff]
      %v1875 = vld [vmem:[#allocation2 + $0x87] sm:$0xff]
      %v1876 = vld [vmem:[#allocation2 + $0x8f] sm:$0xff]
      %v1877 = vld [vmem:[#allocation2 + $0x97] sm:$0xff]
      %v1878 = vld [vmem:[#allocation2 + $0x9f] sm:$0xff]
      %v1879 = vld [vmem:[#allocation2 + $0xa7] sm:$0xff]
      %v1880 = vld [vmem:[#allocation2 + $0xaf] sm:$0xff]
      %v1881 = vld [vmem:[#allocation2 + $0xb7] sm:$0xff]
      %v1882 = vld [vmem:[#allocation2 + $0xbf] sm:$0xff]
      %v1883 = vld [vmem:[#allocation2 + $0xc7] sm:$0xff]
      %v1884 = vld [vmem:[#allocation2 + $0xcf] sm:$0xff]
      %v1885 = vld [vmem:[#allocation2 + $0xd7] sm:$0xff]
      %v1886 = vld [vmem:[#allocation2 + $0xdf] sm:$0xff]
      %v1887 = vld [vmem:[#allocation2 + $0xe7] sm:$0xff]
      %v1888 = vld [vmem:[#allocation2 + $0xef] sm:$0xff]
      %v1889 = vld [vmem:[#allocation2 + $0xf7] sm:$0xff]
      %v1890 = vld [vmem:[#allocation2 + $0xff] sm:$0xff]
      %v1891 = vld [vmem:[#allocation2 + $0x107] sm:$0xff]
      %v1892 = vld [vmem:[#allocation2 + $0x10f] sm:$0xff]
      %v1893 = vld [vmem:[#allocation2 + $0x117] sm:$0xff]
      %v1894 = vld [vmem:[#allocation2 + $0x11f] sm:$0xff]
      %v1895 = vld [vmem:[#allocation2 + $0x127] sm:$0xff]
      %v1896 = vld [vmem:[#allocation2 + $0x12f] sm:$0xff]
      %v1897 = vld [vmem:[#allocation2 + $0x137] sm:$0xff]
      %v1898 = vld [vmem:[#allocation2 + $0x13f] sm:$0xff]
      %v1899 = vld [vmem:[#allocation2 + $0x147] sm:$0xff]
      %s1900 = scalar_lea.vmem %s6, 256
      %v1901 = vld [vmem:[%s1900] sm:$0xff]
      %v1902 = vld [vmem:[%s1900 + $0x8] sm:$0xff]
      %v1903 = vld [vmem:[%s1900 + $0x10] sm:$0xff]
      %v1904 = vld [vmem:[%s1900 + $0x18] sm:$0xff]
      %v1905 = vld [vmem:[%s1900 + $0x20] sm:$0xff]
      %v1906 = vld [vmem:[%s1900 + $0x28] sm:$0xff]
      %v1907 = vld [vmem:[%s1900 + $0x30] sm:$0xff]
      %v1908 = vld [vmem:[%s1900 + $0x38] sm:$0xff]
      %v1909 = vld [vmem:[%s1900 + $0x40] sm:$0xff]
      %v1910 = vld [vmem:[%s1900 + $0x48] sm:$0xff]
      %v1911 = vld [vmem:[%s1900 + $0x50] sm:$0xff]
      %v1912 = vld [vmem:[%s1900 + $0x58] sm:$0xff]
      %v1913 = vld [vmem:[%s1900 + $0x60] sm:$0xff]
      %v1914 = vld [vmem:[%s1900 + $0x68] sm:$0xff]
      %v1915 = vld [vmem:[%s1900 + $0x70] sm:$0xff]
      %v1916 = vld [vmem:[%s1900 + $0x78] sm:$0xff]
      %1917 = vmatprep.subr.mxu0 0.0
      %1918 = vmatpush1.msra.mxu0 %v1901
      %1919 = vmatprep.subr.mxu0 0.0
      %1920 = vmatpush1.msra.mxu0 %v1902
      %1921 = vmatprep.subr.mxu0 0.0
      %1922 = vmatpush1.msra.mxu0 %v1903
      %1923 = vmatprep.subr.mxu0 0.0
      %1924 = vmatpush1.msra.mxu0 %v1904
      %1925 = vmatprep.subr.mxu0 0.0
      %1926 = vmatpush1.msra.mxu0 %v1905
      %1927 = vmatprep.subr.mxu0 0.0
      %1928 = vmatpush1.msra.mxu0 %v1906
      %1929 = vmatprep.subr.mxu0 0.0
      %1930 = vmatpush1.msra.mxu0 %v1907
      %1931 = vmatprep.subr.mxu0 0.0
      %1932 = vmatpush1.msra.mxu0 %v1908
      %1933 = vmatprep.subr.mxu0 0.0
      %1934 = vmatpush1.msra.mxu0 %v1909
      %1935 = vmatprep.subr.mxu0 0.0
      %1936 = vmatpush1.msra.mxu0 %v1910
      %1937 = vmatprep.subr.mxu0 0.0
      %1938 = vmatpush1.msra.mxu0 %v1911
      %1939 = vmatprep.subr.mxu0 0.0
      %1940 = vmatpush1.msra.mxu0 %v1912
      %1941 = vmatprep.subr.mxu0 0.0
      %1942 = vmatpush1.msra.mxu0 %v1913
      %1943 = vmatprep.subr.mxu0 0.0
      %1944 = vmatpush1.msra.mxu0 %v1914
      %1945 = vmatprep.subr.mxu0 0.0
      %1946 = vmatpush1.msra.mxu0 %v1915
      %1947 = vmatprep.subr.mxu0 0.0
      %1948 = vmatpush1.msra.mxu0 %v1916
      %1949 = vmatprep.subr.mxu0 0.0
      %1950 = vmatpush1.msra.mxu0 0.0
      %1951 = vmatprep.subr.mxu0 0.0
      %1952 = vmatpush1.msra.mxu0 0.0
      %1953 = vmatprep.subr.mxu0 0.0
      %1954 = vmatpush1.msra.mxu0 0.0
      %1955 = vmatprep.subr.mxu0 0.0
      %1956 = vmatpush1.msra.mxu0 0.0
      %1957 = vmatprep.subr.mxu0 0.0
      %1958 = vmatpush1.msra.mxu0 0.0
      %1959 = vmatprep.subr.mxu0 0.0
      %1960 = vmatpush1.msra.mxu0 0.0
      %1961 = vmatprep.subr.mxu0 0.0
      %1962 = vmatpush1.msra.mxu0 0.0
      %1963 = vmatprep.subr.mxu0 0.0
      %1964 = vmatpush1.msra.mxu0 0.0
      %1965 = vmatprep.subr.mxu0 0.0
      %1966 = vmatpush1.msra.mxu0 0.0
      %1967 = vmatprep.subr.mxu0 0.0
      %1968 = vmatpush1.msra.mxu0 0.0
      %1969 = vmatprep.subr.mxu0 0.0
      %1970 = vmatpush1.msra.mxu0 0.0
      %1971 = vmatprep.subr.mxu0 0.0
      %1972 = vmatpush1.msra.mxu0 0.0
      %1973 = vmatprep.subr.mxu0 0.0
      %1974 = vmatpush1.msra.mxu0 0.0
      %1975 = vmatprep.subr.mxu0 0.0
      %1976 = vmatpush1.msra.mxu0 0.0
      %1977 = vmatprep.subr.mxu0 0.0
      %1978 = vmatpush1.msra.mxu0 0.0
      %1979 = vmatprep.subr.mxu0 0.0
      %1980 = vmatpush1.msra.mxu0 0.0
      %1981 = vmatprep.mubr.f32.mxu0 0.0
      %1982 = vmatmul.mubr.f32.gmra.mrb[0].mxu0 %v1859
      %v1983 = vpop.f32.mrb[0].mxu0
      %v1984 = vadd.f32 0.0, %v1983
      %v1985 = vpop.f32.mrb[0].mxu0
      %1986 = vmatprep.mubr.f32.mxu0 0.0
      %1987 = vmatmul.mubr.f32.gmra.mrb[0].mxu0 %v1860
      %v1988 = vpop.f32.mrb[0].mxu0
      %v1989 = vadd.f32 0.0, %v1988
      %v1990 = vpop.f32.mrb[0].mxu0
      %1991 = vmatprep.mubr.f32.mxu0 0.0
      %1992 = vmatmul.mubr.f32.gmra.mrb[0].mxu0 %v1861
      %v1993 = vpop.f32.mrb[0].mxu0
      %v1994 = vadd.f32 0.0, %v1993
      %v1995 = vpop.f32.mrb[0].mxu0
      %1996 = vmatprep.mubr.f32.mxu0 0.0
      %1997 = vmatmul.mubr.f32.gmra.mrb[0].mxu0 %v1862
      %v1998 = vpop.f32.mrb[0].mxu0
      %v1999 = vadd.f32 0.0, %v1998
      %v2000 = vpop.f32.mrb[0].mxu0
      %2001 = vmatprep.mubr.f32.mxu0 0.0
      %2002 = vmatmul.mubr.f32.gmra.mrb[0].mxu0 %v1863
      %v2003 = vpop.f32.mrb[0].mxu0
      %v2004 = vadd.f32 0.0, %v2003
      %v2005 = vpop.f32.mrb[0].mxu0
      %2006 = vmatprep.mubr.f32.mxu0 0.0
      %2007 = vmatmul.mubr.f32.gmra.mrb[0].mxu0 %v1864
      %v2008 = vpop.f32.mrb[0].mxu0
      %v2009 = vadd.f32 0.0, %v2008
      %v2010 = vpop.f32.mrb[0].mxu0
      %2011 = vmatprep.mubr.f32.mxu0 0.0
      %2012 = vmatmul.mubr.f32.gmra.mrb[0].mxu0 %v1865
      %v2013 = vpop.f32.mrb[0].mxu0
      %v2014 = vadd.f32 0.0, %v2013
      %v2015 = vpop.f32.mrb[0].mxu0
      %2016 = vmatprep.mubr.f32.mxu0 0.0
      %2017 = vmatmul.mubr.f32.gmra.mrb[0].mxu0 %v1866
      %v2018 = vpop.f32.mrb[0].mxu0
      %v2019 = vadd.f32 0.0, %v2018
      %v2020 = vpop.f32.mrb[0].mxu0
      %2021 = vmatprep.mubr.f32.mxu0 0.0
      %2022 = vmatmul.mubr.f32.gmra.mrb[0].mxu0 %v1867
      %v2023 = vpop.f32.mrb[0].mxu0
      %v2024 = vadd.f32 0.0, %v2023
      %v2025 = vpop.f32.mrb[0].mxu0
      %2026 = vmatprep.mubr.f32.mxu0 0.0
      %2027 = vmatmul.mubr.f32.gmra.mrb[0].mxu0 %v1868
      %v2028 = vpop.f32.mrb[0].mxu0
      %v2029 = vadd.f32 0.0, %v2028
      %v2030 = vpop.f32.mrb[0].mxu0
      %2031 = vmatprep.mubr.f32.mxu0 0.0
      %2032 = vmatmul.mubr.f32.gmra.mrb[0].mxu0 %v1869
      %v2033 = vpop.f32.mrb[0].mxu0
      %v2034 = vadd.f32 0.0, %v2033
      %v2035 = vpop.f32.mrb[0].mxu0
      %2036 = vmatprep.mubr.f32.mxu0 0.0
      %2037 = vmatmul.mubr.f32.gmra.mrb[0].mxu0 %v1870
      %v2038 = vpop.f32.mrb[0].mxu0
      %v2039 = vadd.f32 0.0, %v2038
      %v2040 = vpop.f32.mrb[0].mxu0
      %2041 = vmatprep.mubr.f32.mxu0 0.0
      %2042 = vmatmul.mubr.f32.gmra.mrb[0].mxu0 %v1871
      %v2043 = vpop.f32.mrb[0].mxu0
      %v2044 = vadd.f32 0.0, %v2043
      %v2045 = vpop.f32.mrb[0].mxu0
      %2046 = vmatprep.mubr.f32.mxu0 0.0
      %2047 = vmatmul.mubr.f32.gmra.mrb[0].mxu0 %v1872
      %v2048 = vpop.f32.mrb[0].mxu0
      %v2049 = vadd.f32 0.0, %v2048
      %v2050 = vpop.f32.mrb[0].mxu0
      %2051 = vmatprep.mubr.f32.mxu0 0.0
      %2052 = vmatmul.mubr.f32.gmra.mrb[0].mxu0 %v1873
      %v2053 = vpop.f32.mrb[0].mxu0
      %v2054 = vadd.f32 0.0, %v2053
      %v2055 = vpop.f32.mrb[0].mxu0
      %2056 = vmatprep.mubr.f32.mxu0 0.0
      %2057 = vmatmul.mubr.f32.gmra.mrb[0].mxu0 %v1874
      %v2058 = vpop.f32.mrb[0].mxu0
      %v2059 = vadd.f32 0.0, %v2058
      %v2060 = vpop.f32.mrb[0].mxu0
      %2061 = vmatprep.mubr.f32.mxu0 0.0
      %2062 = vmatmul.mubr.f32.gmra.mrb[0].mxu0 %v1875
      %v2063 = vpop.f32.mrb[0].mxu0
      %v2064 = vadd.f32 0.0, %v2063
      %v2065 = vpop.f32.mrb[0].mxu0
      %2066 = vmatprep.mubr.f32.mxu0 0.0
      %2067 = vmatmul.mubr.f32.gmra.mrb[0].mxu0 %v1876
      %v2068 = vpop.f32.mrb[0].mxu0
      %v2069 = vadd.f32 0.0, %v2068
      %v2070 = vpop.f32.mrb[0].mxu0
      %2071 = vmatprep.mubr.f32.mxu0 0.0
      %2072 = vmatmul.mubr.f32.gmra.mrb[0].mxu0 %v1877
      %v2073 = vpop.f32.mrb[0].mxu0
      %v2074 = vadd.f32 0.0, %v2073
      %v2075 = vpop.f32.mrb[0].mxu0
      %2076 = vmatprep.mubr.f32.mxu0 0.0
      %2077 = vmatmul.mubr.f32.gmra.mrb[0].mxu0 %v1878
      %v2078 = vpop.f32.mrb[0].mxu0
      %v2079 = vadd.f32 0.0, %v2078
      %v2080 = vpop.f32.mrb[0].mxu0
      %2081 = vmatprep.mubr.f32.mxu0 0.0
      %2082 = vmatmul.mubr.f32.gmra.mrb[0].mxu0 %v1879
      %v2083 = vpop.f32.mrb[0].mxu0
      %v2084 = vadd.f32 0.0, %v2083
      %v2085 = vpop.f32.mrb[0].mxu0
      %2086 = vmatprep.mubr.f32.mxu0 0.0
      %2087 = vmatmul.mubr.f32.gmra.mrb[0].mxu0 %v1880
      %v2088 = vpop.f32.mrb[0].mxu0
      %v2089 = vadd.f32 0.0, %v2088
      %v2090 = vpop.f32.mrb[0].mxu0
      %2091 = vmatprep.mubr.f32.mxu0 0.0
      %2092 = vmatmul.mubr.f32.gmra.mrb[0].mxu0 %v1881
      %v2093 = vpop.f32.mrb[0].mxu0
      %v2094 = vadd.f32 0.0, %v2093
      %v2095 = vpop.f32.mrb[0].mxu0
      %2096 = vmatprep.mubr.f32.mxu0 0.0
      %2097 = vmatmul.mubr.f32.gmra.mrb[0].mxu0 %v1882
      %v2098 = vpop.f32.mrb[0].mxu0
      %v2099 = vadd.f32 0.0, %v2098
      %v2100 = vpop.f32.mrb[0].mxu0
      %2101 = vmatprep.mubr.f32.mxu0 0.0
      %2102 = vmatmul.mubr.f32.gmra.mrb[0].mxu0 %v1883
      %v2103 = vpop.f32.mrb[0].mxu0
      %v2104 = vadd.f32 0.0, %v2103
      %v2105 = vpop.f32.mrb[0].mxu0
      %2106 = vmatprep.mubr.f32.mxu0 0.0
      %2107 = vmatmul.mubr.f32.gmra.mrb[0].mxu0 %v1884
      %v2108 = vpop.f32.mrb[0].mxu0
      %v2109 = vadd.f32 0.0, %v2108
      %v2110 = vpop.f32.mrb[0].mxu0
      %2111 = vmatprep.mubr.f32.mxu0 0.0
      %2112 = vmatmul.mubr.f32.gmra.mrb[0].mxu0 %v1885
      %v2113 = vpop.f32.mrb[0].mxu0
      %v2114 = vadd.f32 0.0, %v2113
      %v2115 = vpop.f32.mrb[0].mxu0
      %2116 = vmatprep.mubr.f32.mxu0 0.0
      %2117 = vmatmul.mubr.f32.gmra.mrb[0].mxu0 %v1886
      %v2118 = vpop.f32.mrb[0].mxu0
      %v2119 = vadd.f32 0.0, %v2118
      %v2120 = vpop.f32.mrb[0].mxu0
      %2121 = vmatprep.mubr.f32.mxu0 0.0
      %2122 = vmatmul.mubr.f32.gmra.mrb[0].mxu0 %v1887
      %v2123 = vpop.f32.mrb[0].mxu0
      %v2124 = vadd.f32 0.0, %v2123
      %v2125 = vpop.f32.mrb[0].mxu0
      %2126 = vmatprep.mubr.f32.mxu0 0.0
      %2127 = vmatmul.mubr.f32.gmra.mrb[0].mxu0 %v1888
      %v2128 = vpop.f32.mrb[0].mxu0
      %v2129 = vadd.f32 0.0, %v2128
      %v2130 = vpop.f32.mrb[0].mxu0
      %2131 = vmatprep.mubr.f32.mxu0 0.0
      %2132 = vmatmul.mubr.f32.gmra.mrb[0].mxu0 %v1889
      %v2133 = vpop.f32.mrb[0].mxu0
      %v2134 = vadd.f32 0.0, %v2133
      %v2135 = vpop.f32.mrb[0].mxu0
      %2136 = vmatprep.mubr.f32.mxu0 0.0
      %2137 = vmatmul.mubr.f32.gmra.mrb[0].mxu0 %v1890
      %v2138 = vpop.f32.mrb[0].mxu0
      %v2139 = vadd.f32 0.0, %v2138
      %v2140 = vpop.f32.mrb[0].mxu0
      %2141 = vmatprep.mubr.f32.mxu0 0.0
      %2142 = vmatmul.mubr.f32.gmra.mrb[0].mxu0 %v1891
      %v2143 = vpop.f32.mrb[0].mxu0
      %v2144 = vadd.f32 0.0, %v2143
      %v2145 = vpop.f32.mrb[0].mxu0
      %2146 = vmatprep.mubr.f32.mxu0 0.0
      %2147 = vmatmul.mubr.f32.gmra.mrb[0].mxu0 %v1892
      %v2148 = vpop.f32.mrb[0].mxu0
      %v2149 = vadd.f32 0.0, %v2148
      %v2150 = vpop.f32.mrb[0].mxu0
      %2151 = vmatprep.mubr.f32.mxu0 0.0
      %2152 = vmatmul.mubr.f32.gmra.mrb[0].mxu0 %v1893
      %v2153 = vpop.f32.mrb[0].mxu0
      %v2154 = vadd.f32 0.0, %v2153
      %v2155 = vpop.f32.mrb[0].mxu0
      %2156 = vmatprep.mubr.f32.mxu0 0.0
      %2157 = vmatmul.mubr.f32.gmra.mrb[0].mxu0 %v1894
      %v2158 = vpop.f32.mrb[0].mxu0
      %v2159 = vadd.f32 0.0, %v2158
      %v2160 = vpop.f32.mrb[0].mxu0
      %2161 = vmatprep.mubr.f32.mxu0 0.0
      %2162 = vmatmul.mubr.f32.gmra.mrb[0].mxu0 %v1895
      %v2163 = vpop.f32.mrb[0].mxu0
      %v2164 = vadd.f32 0.0, %v2163
      %v2165 = vpop.f32.mrb[0].mxu0
      %2166 = vmatprep.mubr.f32.mxu0 0.0
      %2167 = vmatmul.mubr.f32.gmra.mrb[0].mxu0 %v1896
      %v2168 = vpop.f32.mrb[0].mxu0
      %v2169 = vadd.f32 0.0, %v2168
      %v2170 = vpop.f32.mrb[0].mxu0
      %2171 = vmatprep.mubr.f32.mxu0 0.0
      %2172 = vmatmul.mubr.f32.gmra.mrb[0].mxu0 %v1897
      %v2173 = vpop.f32.mrb[0].mxu0
      %v2174 = vadd.f32 0.0, %v2173
      %v2175 = vpop.f32.mrb[0].mxu0
      %2176 = vmatprep.mubr.f32.mxu0 0.0
      %2177 = vmatmul.mubr.f32.gmra.mrb[0].mxu0 %v1898
      %v2178 = vpop.f32.mrb[0].mxu0
      %v2179 = vadd.f32 0.0, %v2178
      %v2180 = vpop.f32.mrb[0].mxu0
      %2181 = vmatprep.mubr.f32.mxu0 0.0
      %2182 = vmatmul.mubr.f32.gmra.mrb[0].mxu0 %v1899
      %v2183 = vpop.f32.mrb[0].mxu0
      %v2184 = vadd.f32 0.0, %v2183
      %v2185 = vpop.f32.mrb[0].mxu0
      %2186 = vdwg.mxu0
      %v2187 = vadd.f32 %v1656, %v1984
      %v2188 = vadd.f32 %v1661, %v1989
      %v2189 = vadd.f32 %v1666, %v1994
      %v2190 = vadd.f32 %v1671, %v1999
      %v2191 = vadd.f32 %v1676, %v2004
      %v2192 = vadd.f32 %v1681, %v2009
      %v2193 = vadd.f32 %v1686, %v2014
      %v2194 = vadd.f32 %v1691, %v2019
      %v2195 = vadd.f32 %v1696, %v2024
      %v2196 = vadd.f32 %v1701, %v2029
      %v2197 = vadd.f32 %v1706, %v2034
      %v2198 = vadd.f32 %v1711, %v2039
      %v2199 = vadd.f32 %v1716, %v2044
      %v2200 = vadd.f32 %v1721, %v2049
      %v2201 = vadd.f32 %v1726, %v2054
      %v2202 = vadd.f32 %v1731, %v2059
      %v2203 = vadd.f32 %v1736, %v2064
      %v2204 = vadd.f32 %v1741, %v2069
      %v2205 = vadd.f32 %v1746, %v2074
      %v2206 = vadd.f32 %v1751, %v2079
      %v2207 = vadd.f32 %v1756, %v2084
      %v2208 = vadd.f32 %v1761, %v2089
      %v2209 = vadd.f32 %v1766, %v2094
      %v2210 = vadd.f32 %v1771, %v2099
      %v2211 = vadd.f32 %v1776, %v2104
      %v2212 = vadd.f32 %v1781, %v2109
      %v2213 = vadd.f32 %v1786, %v2114
      %v2214 = vadd.f32 %v1791, %v2119
      %v2215 = vadd.f32 %v1796, %v2124
      %v2216 = vadd.f32 %v1801, %v2129
      %v2217 = vadd.f32 %v1806, %v2134
      %v2218 = vadd.f32 %v1811, %v2139
      %v2219 = vadd.f32 %v1816, %v2144
      %v2220 = vadd.f32 %v1821, %v2149
      %v2221 = vadd.f32 %v1826, %v2154
      %v2222 = vadd.f32 %v1831, %v2159
      %v2223 = vadd.f32 %v1836, %v2164
      %v2224 = vadd.f32 %v1841, %v2169
      %v2225 = vadd.f32 %v1846, %v2174
      %v2226 = vadd.f32 %v1851, %v2179
      %v2227 = vadd.f32 %v1856, %v2184
      %v2228 = vld [vmem:[#allocation2 + $0x17] sm:$0xff]
      %v2229 = vld [vmem:[#allocation2 + $0x1f] sm:$0xff]
      %v2230 = vld [vmem:[#allocation2 + $0x27] sm:$0xff]
      %v2231 = vld [vmem:[#allocation2 + $0x2f] sm:$0xff]
      %v2232 = vld [vmem:[#allocation2 + $0x37] sm:$0xff]
      %v2233 = vld [vmem:[#allocation2 + $0x3f] sm:$0xff]
      %v2234 = vld [vmem:[#allocation2 + $0x47] sm:$0xff]
      %v2235 = vld [vmem:[#allocation2 + $0x4f] sm:$0xff]
      %v2236 = vld [vmem:[#allocation2 + $0x57] sm:$0xff]
      %v2237 = vld [vmem:[#allocation2 + $0x5f] sm:$0xff]
      %v2238 = vld [vmem:[#allocation2 + $0x67] sm:$0xff]
      %v2239 = vld [vmem:[#allocation2 + $0x6f] sm:$0xff]
      %v2240 = vld [vmem:[#allocation2 + $0x77] sm:$0xff]
      %v2241 = vld [vmem:[#allocation2 + $0x7f] sm:$0xff]
      %v2242 = vld [vmem:[#allocation2 + $0x87] sm:$0xff]
      %v2243 = vld [vmem:[#allocation2 + $0x8f] sm:$0xff]
      %v2244 = vld [vmem:[#allocation2 + $0x97] sm:$0xff]
      %v2245 = vld [vmem:[#allocation2 + $0x9f] sm:$0xff]
      %v2246 = vld [vmem:[#allocation2 + $0xa7] sm:$0xff]
      %v2247 = vld [vmem:[#allocation2 + $0xaf] sm:$0xff]
      %v2248 = vld [vmem:[#allocation2 + $0xb7] sm:$0xff]
      %v2249 = vld [vmem:[#allocation2 + $0xbf] sm:$0xff]
      %v2250 = vld [vmem:[#allocation2 + $0xc7] sm:$0xff]
      %v2251 = vld [vmem:[#allocation2 + $0xcf] sm:$0xff]
      %v2252 = vld [vmem:[#allocation2 + $0xd7] sm:$0xff]
      %v2253 = vld [vmem:[#allocation2 + $0xdf] sm:$0xff]
      %v2254 = vld [vmem:[#allocation2 + $0xe7] sm:$0xff]
      %v2255 = vld [vmem:[#allocation2 + $0xef] sm:$0xff]
      %v2256 = vld [vmem:[#allocation2 + $0xf7] sm:$0xff]
      %v2257 = vld [vmem:[#allocation2 + $0xff] sm:$0xff]
      %v2258 = vld [vmem:[#allocation2 + $0x107] sm:$0xff]
      %v2259 = vld [vmem:[#allocation2 + $0x10f] sm:$0xff]
      %v2260 = vld [vmem:[#allocation2 + $0x117] sm:$0xff]
      %v2261 = vld [vmem:[#allocation2 + $0x11f] sm:$0xff]
      %v2262 = vld [vmem:[#allocation2 + $0x127] sm:$0xff]
      %v2263 = vld [vmem:[#allocation2 + $0x12f] sm:$0xff]
      %v2264 = vld [vmem:[#allocation2 + $0x137] sm:$0xff]
      %v2265 = vld [vmem:[#allocation2 + $0x13f] sm:$0xff]
      %v2266 = vld [vmem:[#allocation2 + $0x147] sm:$0xff]
      %v2267 = vld [vmem:[#allocation2 + $0x14f] sm:$0xff]
      %v2268 = vld [vmem:[#allocation2 + $0x157] sm:$0xff]
      %s2269 = scalar_lea.vmem %s6, 384
      %v2270 = vld [vmem:[%s2269] sm:$0xff]
      %v2271 = vld [vmem:[%s2269 + $0x8] sm:$0xff]
      %v2272 = vld [vmem:[%s2269 + $0x10] sm:$0xff]
      %v2273 = vld [vmem:[%s2269 + $0x18] sm:$0xff]
      %v2274 = vld [vmem:[%s2269 + $0x20] sm:$0xff]
      %v2275 = vld [vmem:[%s2269 + $0x28] sm:$0xff]
      %v2276 = vld [vmem:[%s2269 + $0x30] sm:$0xff]
      %v2277 = vld [vmem:[%s2269 + $0x38] sm:$0xff]
      %v2278 = vld [vmem:[%s2269 + $0x40] sm:$0xff]
      %v2279 = vld [vmem:[%s2269 + $0x48] sm:$0xff]
      %v2280 = vld [vmem:[%s2269 + $0x50] sm:$0xff]
      %v2281 = vld [vmem:[%s2269 + $0x58] sm:$0xff]
      %v2282 = vld [vmem:[%s2269 + $0x60] sm:$0xff]
      %v2283 = vld [vmem:[%s2269 + $0x68] sm:$0xff]
      %v2284 = vld [vmem:[%s2269 + $0x70] sm:$0xff]
      %v2285 = vld [vmem:[%s2269 + $0x78] sm:$0xff]
      %2286 = vmatprep.subr.mxu0 0.0
      %2287 = vmatpush1.msra.mxu0 %v2270
      %2288 = vmatprep.subr.mxu0 0.0
      %2289 = vmatpush1.msra.mxu0 %v2271
      %2290 = vmatprep.subr.mxu0 0.0
      %2291 = vmatpush1.msra.mxu0 %v2272
      %2292 = vmatprep.subr.mxu0 0.0
      %2293 = vmatpush1.msra.mxu0 %v2273
      %2294 = vmatprep.subr.mxu0 0.0
      %2295 = vmatpush1.msra.mxu0 %v2274
      %2296 = vmatprep.subr.mxu0 0.0
      %2297 = vmatpush1.msra.mxu0 %v2275
      %2298 = vmatprep.subr.mxu0 0.0
      %2299 = vmatpush1.msra.mxu0 %v2276
      %2300 = vmatprep.subr.mxu0 0.0
      %2301 = vmatpush1.msra.mxu0 %v2277
      %2302 = vmatprep.subr.mxu0 0.0
      %2303 = vmatpush1.msra.mxu0 %v2278
      %2304 = vmatprep.subr.mxu0 0.0
      %2305 = vmatpush1.msra.mxu0 %v2279
      %2306 = vmatprep.subr.mxu0 0.0
      %2307 = vmatpush1.msra.mxu0 %v2280
      %2308 = vmatprep.subr.mxu0 0.0
      %2309 = vmatpush1.msra.mxu0 %v2281
      %2310 = vmatprep.subr.mxu0 0.0
      %2311 = vmatpush1.msra.mxu0 %v2282
      %2312 = vmatprep.subr.mxu0 0.0
      %2313 = vmatpush1.msra.mxu0 %v2283
      %2314 = vmatprep.subr.mxu0 0.0
      %2315 = vmatpush1.msra.mxu0 %v2284
      %2316 = vmatprep.subr.mxu0 0.0
      %2317 = vmatpush1.msra.mxu0 %v2285
      %2318 = vmatprep.subr.mxu0 0.0
      %2319 = vmatpush1.msra.mxu0 0.0
      %2320 = vmatprep.subr.mxu0 0.0
      %2321 = vmatpush1.msra.mxu0 0.0
      %2322 = vmatprep.subr.mxu0 0.0
      %2323 = vmatpush1.msra.mxu0 0.0
      %2324 = vmatprep.subr.mxu0 0.0
      %2325 = vmatpush1.msra.mxu0 0.0
      %2326 = vmatprep.subr.mxu0 0.0
      %2327 = vmatpush1.msra.mxu0 0.0
      %2328 = vmatprep.subr.mxu0 0.0
      %2329 = vmatpush1.msra.mxu0 0.0
      %2330 = vmatprep.subr.mxu0 0.0
      %2331 = vmatpush1.msra.mxu0 0.0
      %2332 = vmatprep.subr.mxu0 0.0
      %2333 = vmatpush1.msra.mxu0 0.0
      %2334 = vmatprep.subr.mxu0 0.0
      %2335 = vmatpush1.msra.mxu0 0.0
      %2336 = vmatprep.subr.mxu0 0.0
      %2337 = vmatpush1.msra.mxu0 0.0
      %2338 = vmatprep.subr.mxu0 0.0
      %2339 = vmatpush1.msra.mxu0 0.0
      %2340 = vmatprep.subr.mxu0 0.0
      %2341 = vmatpush1.msra.mxu0 0.0
      %2342 = vmatprep.subr.mxu0 0.0
      %2343 = vmatpush1.msra.mxu0 0.0
      %2344 = vmatprep.subr.mxu0 0.0
      %2345 = vmatpush1.msra.mxu0 0.0
      %2346 = vmatprep.subr.mxu0 0.0
      %2347 = vmatpush1.msra.mxu0 0.0
      %2348 = vmatprep.subr.mxu0 0.0
      %2349 = vmatpush1.msra.mxu0 0.0
      %2350 = vmatprep.mubr.f32.mxu0 0.0
      %2351 = vmatmul.mubr.f32.gmra.mrb[0].mxu0 %v2228
      %v2352 = vpop.f32.mrb[0].mxu0
      %v2353 = vadd.f32 0.0, %v2352
      %v2354 = vpop.f32.mrb[0].mxu0
      %2355 = vmatprep.mubr.f32.mxu0 0.0
      %2356 = vmatmul.mubr.f32.gmra.mrb[0].mxu0 %v2229
      %v2357 = vpop.f32.mrb[0].mxu0
      %v2358 = vadd.f32 0.0, %v2357
      %v2359 = vpop.f32.mrb[0].mxu0
      %2360 = vmatprep.mubr.f32.mxu0 0.0
      %2361 = vmatmul.mubr.f32.gmra.mrb[0].mxu0 %v2230
      %v2362 = vpop.f32.mrb[0].mxu0
      %v2363 = vadd.f32 0.0, %v2362
      %v2364 = vpop.f32.mrb[0].mxu0
      %2365 = vmatprep.mubr.f32.mxu0 0.0
      %2366 = vmatmul.mubr.f32.gmra.mrb[0].mxu0 %v2231
      %v2367 = vpop.f32.mrb[0].mxu0
      %v2368 = vadd.f32 0.0, %v2367
      %v2369 = vpop.f32.mrb[0].mxu0
      %2370 = vmatprep.mubr.f32.mxu0 0.0
      %2371 = vmatmul.mubr.f32.gmra.mrb[0].mxu0 %v2232
      %v2372 = vpop.f32.mrb[0].mxu0
      %v2373 = vadd.f32 0.0, %v2372
      %v2374 = vpop.f32.mrb[0].mxu0
      %2375 = vmatprep.mubr.f32.mxu0 0.0
      %2376 = vmatmul.mubr.f32.gmra.mrb[0].mxu0 %v2233
      %v2377 = vpop.f32.mrb[0].mxu0
      %v2378 = vadd.f32 0.0, %v2377
      %v2379 = vpop.f32.mrb[0].mxu0
      %2380 = vmatprep.mubr.f32.mxu0 0.0
      %2381 = vmatmul.mubr.f32.gmra.mrb[0].mxu0 %v2234
      %v2382 = vpop.f32.mrb[0].mxu0
      %v2383 = vadd.f32 0.0, %v2382
      %v2384 = vpop.f32.mrb[0].mxu0
      %2385 = vmatprep.mubr.f32.mxu0 0.0
      %2386 = vmatmul.mubr.f32.gmra.mrb[0].mxu0 %v2235
      %v2387 = vpop.f32.mrb[0].mxu0
      %v2388 = vadd.f32 0.0, %v2387
      %v2389 = vpop.f32.mrb[0].mxu0
      %2390 = vmatprep.mubr.f32.mxu0 0.0
      %2391 = vmatmul.mubr.f32.gmra.mrb[0].mxu0 %v2236
      %v2392 = vpop.f32.mrb[0].mxu0
      %v2393 = vadd.f32 0.0, %v2392
      %v2394 = vpop.f32.mrb[0].mxu0
      %2395 = vmatprep.mubr.f32.mxu0 0.0
      %2396 = vmatmul.mubr.f32.gmra.mrb[0].mxu0 %v2237
      %v2397 = vpop.f32.mrb[0].mxu0
      %v2398 = vadd.f32 0.0, %v2397
      %v2399 = vpop.f32.mrb[0].mxu0
      %2400 = vmatprep.mubr.f32.mxu0 0.0
      %2401 = vmatmul.mubr.f32.gmra.mrb[0].mxu0 %v2238
      %v2402 = vpop.f32.mrb[0].mxu0
      %v2403 = vadd.f32 0.0, %v2402
      %v2404 = vpop.f32.mrb[0].mxu0
      %2405 = vmatprep.mubr.f32.mxu0 0.0
      %2406 = vmatmul.mubr.f32.gmra.mrb[0].mxu0 %v2239
      %v2407 = vpop.f32.mrb[0].mxu0
      %v2408 = vadd.f32 0.0, %v2407
      %v2409 = vpop.f32.mrb[0].mxu0
      %2410 = vmatprep.mubr.f32.mxu0 0.0
      %2411 = vmatmul.mubr.f32.gmra.mrb[0].mxu0 %v2240
      %v2412 = vpop.f32.mrb[0].mxu0
      %v2413 = vadd.f32 0.0, %v2412
      %v2414 = vpop.f32.mrb[0].mxu0
      %2415 = vmatprep.mubr.f32.mxu0 0.0
      %2416 = vmatmul.mubr.f32.gmra.mrb[0].mxu0 %v2241
      %v2417 = vpop.f32.mrb[0].mxu0
      %v2418 = vadd.f32 0.0, %v2417
      %v2419 = vpop.f32.mrb[0].mxu0
      %2420 = vmatprep.mubr.f32.mxu0 0.0
      %2421 = vmatmul.mubr.f32.gmra.mrb[0].mxu0 %v2242
      %v2422 = vpop.f32.mrb[0].mxu0
      %v2423 = vadd.f32 0.0, %v2422
      %v2424 = vpop.f32.mrb[0].mxu0
      %2425 = vmatprep.mubr.f32.mxu0 0.0
      %2426 = vmatmul.mubr.f32.gmra.mrb[0].mxu0 %v2243
      %v2427 = vpop.f32.mrb[0].mxu0
      %v2428 = vadd.f32 0.0, %v2427
      %v2429 = vpop.f32.mrb[0].mxu0
      %2430 = vmatprep.mubr.f32.mxu0 0.0
      %2431 = vmatmul.mubr.f32.gmra.mrb[0].mxu0 %v2244
      %v2432 = vpop.f32.mrb[0].mxu0
      %v2433 = vadd.f32 0.0, %v2432
      %v2434 = vpop.f32.mrb[0].mxu0
      %2435 = vmatprep.mubr.f32.mxu0 0.0
      %2436 = vmatmul.mubr.f32.gmra.mrb[0].mxu0 %v2245
      %v2437 = vpop.f32.mrb[0].mxu0
      %v2438 = vadd.f32 0.0, %v2437
      %v2439 = vpop.f32.mrb[0].mxu0
      %2440 = vmatprep.mubr.f32.mxu0 0.0
      %2441 = vmatmul.mubr.f32.gmra.mrb[0].mxu0 %v2246
      %v2442 = vpop.f32.mrb[0].mxu0
      %v2443 = vadd.f32 0.0, %v2442
      %v2444 = vpop.f32.mrb[0].mxu0
      %2445 = vmatprep.mubr.f32.mxu0 0.0
      %2446 = vmatmul.mubr.f32.gmra.mrb[0].mxu0 %v2247
      %v2447 = vpop.f32.mrb[0].mxu0
      %v2448 = vadd.f32 0.0, %v2447
      %v2449 = vpop.f32.mrb[0].mxu0
      %2450 = vmatprep.mubr.f32.mxu0 0.0
      %2451 = vmatmul.mubr.f32.gmra.mrb[0].mxu0 %v2248
      %v2452 = vpop.f32.mrb[0].mxu0
      %v2453 = vadd.f32 0.0, %v2452
      %v2454 = vpop.f32.mrb[0].mxu0
      %2455 = vmatprep.mubr.f32.mxu0 0.0
      %2456 = vmatmul.mubr.f32.gmra.mrb[0].mxu0 %v2249
      %v2457 = vpop.f32.mrb[0].mxu0
      %v2458 = vadd.f32 0.0, %v2457
      %v2459 = vpop.f32.mrb[0].mxu0
      %2460 = vmatprep.mubr.f32.mxu0 0.0
      %2461 = vmatmul.mubr.f32.gmra.mrb[0].mxu0 %v2250
      %v2462 = vpop.f32.mrb[0].mxu0
      %v2463 = vadd.f32 0.0, %v2462
      %v2464 = vpop.f32.mrb[0].mxu0
      %2465 = vmatprep.mubr.f32.mxu0 0.0
      %2466 = vmatmul.mubr.f32.gmra.mrb[0].mxu0 %v2251
      %v2467 = vpop.f32.mrb[0].mxu0
      %v2468 = vadd.f32 0.0, %v2467
      %v2469 = vpop.f32.mrb[0].mxu0
      %2470 = vmatprep.mubr.f32.mxu0 0.0
      %2471 = vmatmul.mubr.f32.gmra.mrb[0].mxu0 %v2252
      %v2472 = vpop.f32.mrb[0].mxu0
      %v2473 = vadd.f32 0.0, %v2472
      %v2474 = vpop.f32.mrb[0].mxu0
      %2475 = vmatprep.mubr.f32.mxu0 0.0
      %2476 = vmatmul.mubr.f32.gmra.mrb[0].mxu0 %v2253
      %v2477 = vpop.f32.mrb[0].mxu0
      %v2478 = vadd.f32 0.0, %v2477
      %v2479 = vpop.f32.mrb[0].mxu0
      %2480 = vmatprep.mubr.f32.mxu0 0.0
      %2481 = vmatmul.mubr.f32.gmra.mrb[0].mxu0 %v2254
      %v2482 = vpop.f32.mrb[0].mxu0
      %v2483 = vadd.f32 0.0, %v2482
      %v2484 = vpop.f32.mrb[0].mxu0
      %2485 = vmatprep.mubr.f32.mxu0 0.0
      %2486 = vmatmul.mubr.f32.gmra.mrb[0].mxu0 %v2255
      %v2487 = vpop.f32.mrb[0].mxu0
      %v2488 = vadd.f32 0.0, %v2487
      %v2489 = vpop.f32.mrb[0].mxu0
      %2490 = vmatprep.mubr.f32.mxu0 0.0
      %2491 = vmatmul.mubr.f32.gmra.mrb[0].mxu0 %v2256
      %v2492 = vpop.f32.mrb[0].mxu0
      %v2493 = vadd.f32 0.0, %v2492
      %v2494 = vpop.f32.mrb[0].mxu0
      %2495 = vmatprep.mubr.f32.mxu0 0.0
      %2496 = vmatmul.mubr.f32.gmra.mrb[0].mxu0 %v2257
      %v2497 = vpop.f32.mrb[0].mxu0
      %v2498 = vadd.f32 0.0, %v2497
      %v2499 = vpop.f32.mrb[0].mxu0
      %2500 = vmatprep.mubr.f32.mxu0 0.0
      %2501 = vmatmul.mubr.f32.gmra.mrb[0].mxu0 %v2258
      %v2502 = vpop.f32.mrb[0].mxu0
      %v2503 = vadd.f32 0.0, %v2502
      %v2504 = vpop.f32.mrb[0].mxu0
      %2505 = vmatprep.mubr.f32.mxu0 0.0
      %2506 = vmatmul.mubr.f32.gmra.mrb[0].mxu0 %v2259
      %v2507 = vpop.f32.mrb[0].mxu0
      %v2508 = vadd.f32 0.0, %v2507
      %v2509 = vpop.f32.mrb[0].mxu0
      %2510 = vmatprep.mubr.f32.mxu0 0.0
      %2511 = vmatmul.mubr.f32.gmra.mrb[0].mxu0 %v2260
      %v2512 = vpop.f32.mrb[0].mxu0
      %v2513 = vadd.f32 0.0, %v2512
      %v2514 = vpop.f32.mrb[0].mxu0
      %2515 = vmatprep.mubr.f32.mxu0 0.0
      %2516 = vmatmul.mubr.f32.gmra.mrb[0].mxu0 %v2261
      %v2517 = vpop.f32.mrb[0].mxu0
      %v2518 = vadd.f32 0.0, %v2517
      %v2519 = vpop.f32.mrb[0].mxu0
      %2520 = vmatprep.mubr.f32.mxu0 0.0
      %2521 = vmatmul.mubr.f32.gmra.mrb[0].mxu0 %v2262
      %v2522 = vpop.f32.mrb[0].mxu0
      %v2523 = vadd.f32 0.0, %v2522
      %v2524 = vpop.f32.mrb[0].mxu0
      %2525 = vmatprep.mubr.f32.mxu0 0.0
      %2526 = vmatmul.mubr.f32.gmra.mrb[0].mxu0 %v2263
      %v2527 = vpop.f32.mrb[0].mxu0
      %v2528 = vadd.f32 0.0, %v2527
      %v2529 = vpop.f32.mrb[0].mxu0
      %2530 = vmatprep.mubr.f32.mxu0 0.0
      %2531 = vmatmul.mubr.f32.gmra.mrb[0].mxu0 %v2264
      %v2532 = vpop.f32.mrb[0].mxu0
      %v2533 = vadd.f32 0.0, %v2532
      %v2534 = vpop.f32.mrb[0].mxu0
      %2535 = vmatprep.mubr.f32.mxu0 0.0
      %2536 = vmatmul.mubr.f32.gmra.mrb[0].mxu0 %v2265
      %v2537 = vpop.f32.mrb[0].mxu0
      %v2538 = vadd.f32 0.0, %v2537
      %v2539 = vpop.f32.mrb[0].mxu0
      %2540 = vmatprep.mubr.f32.mxu0 0.0
      %2541 = vmatmul.mubr.f32.gmra.mrb[0].mxu0 %v2266
      %v2542 = vpop.f32.mrb[0].mxu0
      %v2543 = vadd.f32 0.0, %v2542
      %v2544 = vpop.f32.mrb[0].mxu0
      %2545 = vmatprep.mubr.f32.mxu0 0.0
      %2546 = vmatmul.mubr.f32.gmra.mrb[0].mxu0 %v2267
      %v2547 = vpop.f32.mrb[0].mxu0
      %v2548 = vadd.f32 0.0, %v2547
      %v2549 = vpop.f32.mrb[0].mxu0
      %2550 = vmatprep.mubr.f32.mxu0 0.0
      %2551 = vmatmul.mubr.f32.gmra.mrb[0].mxu0 %v2268
      %v2552 = vpop.f32.mrb[0].mxu0
      %v2553 = vadd.f32 0.0, %v2552
      %v2554 = vpop.f32.mrb[0].mxu0
      %2555 = vdwg.mxu0
      %v2556 = vadd.f32 %v2187, %v2353
      %v2557 = vadd.f32 %v2188, %v2358
      %v2558 = vadd.f32 %v2189, %v2363
      %v2559 = vadd.f32 %v2190, %v2368
      %v2560 = vadd.f32 %v2191, %v2373
      %v2561 = vadd.f32 %v2192, %v2378
      %v2562 = vadd.f32 %v2193, %v2383
      %v2563 = vadd.f32 %v2194, %v2388
      %v2564 = vadd.f32 %v2195, %v2393
      %v2565 = vadd.f32 %v2196, %v2398
      %v2566 = vadd.f32 %v2197, %v2403
      %v2567 = vadd.f32 %v2198, %v2408
      %v2568 = vadd.f32 %v2199, %v2413
      %v2569 = vadd.f32 %v2200, %v2418
      %v2570 = vadd.f32 %v2201, %v2423
      %v2571 = vadd.f32 %v2202, %v2428
      %v2572 = vadd.f32 %v2203, %v2433
      %v2573 = vadd.f32 %v2204, %v2438
      %v2574 = vadd.f32 %v2205, %v2443
      %v2575 = vadd.f32 %v2206, %v2448
      %v2576 = vadd.f32 %v2207, %v2453
      %v2577 = vadd.f32 %v2208, %v2458
      %v2578 = vadd.f32 %v2209, %v2463
      %v2579 = vadd.f32 %v2210, %v2468
      %v2580 = vadd.f32 %v2211, %v2473
      %v2581 = vadd.f32 %v2212, %v2478
      %v2582 = vadd.f32 %v2213, %v2483
      %v2583 = vadd.f32 %v2214, %v2488
      %v2584 = vadd.f32 %v2215, %v2493
      %v2585 = vadd.f32 %v2216, %v2498
      %v2586 = vadd.f32 %v2217, %v2503
      %v2587 = vadd.f32 %v2218, %v2508
      %v2588 = vadd.f32 %v2219, %v2513
      %v2589 = vadd.f32 %v2220, %v2518
      %v2590 = vadd.f32 %v2221, %v2523
      %v2591 = vadd.f32 %v2222, %v2528
      %v2592 = vadd.f32 %v2223, %v2533
      %v2593 = vadd.f32 %v2224, %v2538
      %v2594 = vadd.f32 %v2225, %v2543
      %v2595 = vadd.f32 %v2226, %v2548
      %v2596 = vadd.f32 %v2227, %v2553
      %v2597 = vld [vmem:[#allocation2 + $0x18] sm:$0xff]
      %v2598 = vld [vmem:[#allocation2 + $0x20] sm:$0xff]
      %v2599 = vld [vmem:[#allocation2 + $0x28] sm:$0xff]
      %v2600 = vld [vmem:[#allocation2 + $0x30] sm:$0xff]
      %v2601 = vld [vmem:[#allocation2 + $0x38] sm:$0xff]
      %v2602 = vld [vmem:[#allocation2 + $0x40] sm:$0xff]
      %v2603 = vld [vmem:[#allocation2 + $0x48] sm:$0xff]
      %v2604 = vld [vmem:[#allocation2 + $0x50] sm:$0xff]
      %v2605 = vld [vmem:[#allocation2 + $0x58] sm:$0xff]
      %v2606 = vld [vmem:[#allocation2 + $0x60] sm:$0xff]
      %v2607 = vld [vmem:[#allocation2 + $0x68] sm:$0xff]
      %v2608 = vld [vmem:[#allocation2 + $0x70] sm:$0xff]
      %v2609 = vld [vmem:[#allocation2 + $0x78] sm:$0xff]
      %v2610 = vld [vmem:[#allocation2 + $0x80] sm:$0xff]
      %v2611 = vld [vmem:[#allocation2 + $0x88] sm:$0xff]
      %v2612 = vld [vmem:[#allocation2 + $0x90] sm:$0xff]
      %v2613 = vld [vmem:[#allocation2 + $0x98] sm:$0xff]
      %v2614 = vld [vmem:[#allocation2 + $0xa0] sm:$0xff]
      %v2615 = vld [vmem:[#allocation2 + $0xa8] sm:$0xff]
      %v2616 = vld [vmem:[#allocation2 + $0xb0] sm:$0xff]
      %v2617 = vld [vmem:[#allocation2 + $0xb8] sm:$0xff]
      %v2618 = vld [vmem:[#allocation2 + $0xc0] sm:$0xff]
      %v2619 = vld [vmem:[#allocation2 + $0xc8] sm:$0xff]
      %v2620 = vld [vmem:[#allocation2 + $0xd0] sm:$0xff]
      %v2621 = vld [vmem:[#allocation2 + $0xd8] sm:$0xff]
      %v2622 = vld [vmem:[#allocation2 + $0xe0] sm:$0xff]
      %v2623 = vld [vmem:[#allocation2 + $0xe8] sm:$0xff]
      %v2624 = vld [vmem:[#allocation2 + $0xf0] sm:$0xff]
      %v2625 = vld [vmem:[#allocation2 + $0xf8] sm:$0xff]
      %v2626 = vld [vmem:[#allocation2 + $0x100] sm:$0xff]
      %v2627 = vld [vmem:[#allocation2 + $0x108] sm:$0xff]
      %v2628 = vld [vmem:[#allocation2 + $0x110] sm:$0xff]
      %v2629 = vld [vmem:[#allocation2 + $0x118] sm:$0xff]
      %v2630 = vld [vmem:[#allocation2 + $0x120] sm:$0xff]
      %v2631 = vld [vmem:[#allocation2 + $0x128] sm:$0xff]
      %v2632 = vld [vmem:[#allocation2 + $0x130] sm:$0xff]
      %v2633 = vld [vmem:[#allocation2 + $0x138] sm:$0xff]
      %v2634 = vld [vmem:[#allocation2 + $0x140] sm:$0xff]
      %v2635 = vld [vmem:[#allocation2 + $0x148] sm:$0xff]
      %v2636 = vld [vmem:[#allocation2 + $0x150] sm:$0xff]
      %v2637 = vld [vmem:[#allocation2 + $0x158] sm:$0xff]
      %s2638 = scalar_lea.vmem %s6, 512
      %v2639 = vld [vmem:[%s2638] sm:$0xff]
      %v2640 = vld [vmem:[%s2638 + $0x8] sm:$0xff]
      %v2641 = vld [vmem:[%s2638 + $0x10] sm:$0xff]
      %v2642 = vld [vmem:[%s2638 + $0x18] sm:$0xff]
      %v2643 = vld [vmem:[%s2638 + $0x20] sm:$0xff]
      %v2644 = vld [vmem:[%s2638 + $0x28] sm:$0xff]
      %v2645 = vld [vmem:[%s2638 + $0x30] sm:$0xff]
      %v2646 = vld [vmem:[%s2638 + $0x38] sm:$0xff]
      %v2647 = vld [vmem:[%s2638 + $0x40] sm:$0xff]
      %v2648 = vld [vmem:[%s2638 + $0x48] sm:$0xff]
      %v2649 = vld [vmem:[%s2638 + $0x50] sm:$0xff]
      %v2650 = vld [vmem:[%s2638 + $0x58] sm:$0xff]
      %v2651 = vld [vmem:[%s2638 + $0x60] sm:$0xff]
      %v2652 = vld [vmem:[%s2638 + $0x68] sm:$0xff]
      %v2653 = vld [vmem:[%s2638 + $0x70] sm:$0xff]
      %v2654 = vld [vmem:[%s2638 + $0x78] sm:$0xff]
      %2655 = vmatprep.subr.mxu0 0.0
      %2656 = vmatpush1.msra.mxu0 %v2639
      %2657 = vmatprep.subr.mxu0 0.0
      %2658 = vmatpush1.msra.mxu0 %v2640
      %2659 = vmatprep.subr.mxu0 0.0
      %2660 = vmatpush1.msra.mxu0 %v2641
      %2661 = vmatprep.subr.mxu0 0.0
      %2662 = vmatpush1.msra.mxu0 %v2642
      %2663 = vmatprep.subr.mxu0 0.0
      %2664 = vmatpush1.msra.mxu0 %v2643
      %2665 = vmatprep.subr.mxu0 0.0
      %2666 = vmatpush1.msra.mxu0 %v2644
      %2667 = vmatprep.subr.mxu0 0.0
      %2668 = vmatpush1.msra.mxu0 %v2645
      %2669 = vmatprep.subr.mxu0 0.0
      %2670 = vmatpush1.msra.mxu0 %v2646
      %2671 = vmatprep.subr.mxu0 0.0
      %2672 = vmatpush1.msra.mxu0 %v2647
      %2673 = vmatprep.subr.mxu0 0.0
      %2674 = vmatpush1.msra.mxu0 %v2648
      %2675 = vmatprep.subr.mxu0 0.0
      %2676 = vmatpush1.msra.mxu0 %v2649
      %2677 = vmatprep.subr.mxu0 0.0
      %2678 = vmatpush1.msra.mxu0 %v2650
      %2679 = vmatprep.subr.mxu0 0.0
      %2680 = vmatpush1.msra.mxu0 %v2651
      %2681 = vmatprep.subr.mxu0 0.0
      %2682 = vmatpush1.msra.mxu0 %v2652
      %2683 = vmatprep.subr.mxu0 0.0
      %2684 = vmatpush1.msra.mxu0 %v2653
      %2685 = vmatprep.subr.mxu0 0.0
      %2686 = vmatpush1.msra.mxu0 %v2654
      %2687 = vmatprep.subr.mxu0 0.0
      %2688 = vmatpush1.msra.mxu0 0.0
      %2689 = vmatprep.subr.mxu0 0.0
      %2690 = vmatpush1.msra.mxu0 0.0
      %2691 = vmatprep.subr.mxu0 0.0
      %2692 = vmatpush1.msra.mxu0 0.0
      %2693 = vmatprep.subr.mxu0 0.0
      %2694 = vmatpush1.msra.mxu0 0.0
      %2695 = vmatprep.subr.mxu0 0.0
      %2696 = vmatpush1.msra.mxu0 0.0
      %2697 = vmatprep.subr.mxu0 0.0
      %2698 = vmatpush1.msra.mxu0 0.0
      %2699 = vmatprep.subr.mxu0 0.0
      %2700 = vmatpush1.msra.mxu0 0.0
      %2701 = vmatprep.subr.mxu0 0.0
      %2702 = vmatpush1.msra.mxu0 0.0
      %2703 = vmatprep.subr.mxu0 0.0
      %2704 = vmatpush1.msra.mxu0 0.0
      %2705 = vmatprep.subr.mxu0 0.0
      %2706 = vmatpush1.msra.mxu0 0.0
      %2707 = vmatprep.subr.mxu0 0.0
      %2708 = vmatpush1.msra.mxu0 0.0
      %2709 = vmatprep.subr.mxu0 0.0
      %2710 = vmatpush1.msra.mxu0 0.0
      %2711 = vmatprep.subr.mxu0 0.0
      %2712 = vmatpush1.msra.mxu0 0.0
      %2713 = vmatprep.subr.mxu0 0.0
      %2714 = vmatpush1.msra.mxu0 0.0
      %2715 = vmatprep.subr.mxu0 0.0
      %2716 = vmatpush1.msra.mxu0 0.0
      %2717 = vmatprep.subr.mxu0 0.0
      %2718 = vmatpush1.msra.mxu0 0.0
      %2719 = vmatprep.mubr.f32.mxu0 0.0
      %2720 = vmatmul.mubr.f32.gmra.mrb[0].mxu0 %v2597
      %v2721 = vpop.f32.mrb[0].mxu0
      %v2722 = vadd.f32 0.0, %v2721
      %v2723 = vpop.f32.mrb[0].mxu0
      %2724 = vmatprep.mubr.f32.mxu0 0.0
      %2725 = vmatmul.mubr.f32.gmra.mrb[0].mxu0 %v2598
      %v2726 = vpop.f32.mrb[0].mxu0
      %v2727 = vadd.f32 0.0, %v2726
      %v2728 = vpop.f32.mrb[0].mxu0
      %2729 = vmatprep.mubr.f32.mxu0 0.0
      %2730 = vmatmul.mubr.f32.gmra.mrb[0].mxu0 %v2599
      %v2731 = vpop.f32.mrb[0].mxu0
      %v2732 = vadd.f32 0.0, %v2731
      %v2733 = vpop.f32.mrb[0].mxu0
      %2734 = vmatprep.mubr.f32.mxu0 0.0
      %2735 = vmatmul.mubr.f32.gmra.mrb[0].mxu0 %v2600
      %v2736 = vpop.f32.mrb[0].mxu0
      %v2737 = vadd.f32 0.0, %v2736
      %v2738 = vpop.f32.mrb[0].mxu0
      %2739 = vmatprep.mubr.f32.mxu0 0.0
      %2740 = vmatmul.mubr.f32.gmra.mrb[0].mxu0 %v2601
      %v2741 = vpop.f32.mrb[0].mxu0
      %v2742 = vadd.f32 0.0, %v2741
      %v2743 = vpop.f32.mrb[0].mxu0
      %2744 = vmatprep.mubr.f32.mxu0 0.0
      %2745 = vmatmul.mubr.f32.gmra.mrb[0].mxu0 %v2602
      %v2746 = vpop.f32.mrb[0].mxu0
      %v2747 = vadd.f32 0.0, %v2746
      %v2748 = vpop.f32.mrb[0].mxu0
      %2749 = vmatprep.mubr.f32.mxu0 0.0
      %2750 = vmatmul.mubr.f32.gmra.mrb[0].mxu0 %v2603
      %v2751 = vpop.f32.mrb[0].mxu0
      %v2752 = vadd.f32 0.0, %v2751
      %v2753 = vpop.f32.mrb[0].mxu0
      %2754 = vmatprep.mubr.f32.mxu0 0.0
      %2755 = vmatmul.mubr.f32.gmra.mrb[0].mxu0 %v2604
      %v2756 = vpop.f32.mrb[0].mxu0
      %v2757 = vadd.f32 0.0, %v2756
      %v2758 = vpop.f32.mrb[0].mxu0
      %2759 = vmatprep.mubr.f32.mxu0 0.0
      %2760 = vmatmul.mubr.f32.gmra.mrb[0].mxu0 %v2605
      %v2761 = vpop.f32.mrb[0].mxu0
      %v2762 = vadd.f32 0.0, %v2761
      %v2763 = vpop.f32.mrb[0].mxu0
      %2764 = vmatprep.mubr.f32.mxu0 0.0
      %2765 = vmatmul.mubr.f32.gmra.mrb[0].mxu0 %v2606
      %v2766 = vpop.f32.mrb[0].mxu0
      %v2767 = vadd.f32 0.0, %v2766
      %v2768 = vpop.f32.mrb[0].mxu0
      %2769 = vmatprep.mubr.f32.mxu0 0.0
      %2770 = vmatmul.mubr.f32.gmra.mrb[0].mxu0 %v2607
      %v2771 = vpop.f32.mrb[0].mxu0
      %v2772 = vadd.f32 0.0, %v2771
      %v2773 = vpop.f32.mrb[0].mxu0
      %2774 = vmatprep.mubr.f32.mxu0 0.0
      %2775 = vmatmul.mubr.f32.gmra.mrb[0].mxu0 %v2608
      %v2776 = vpop.f32.mrb[0].mxu0
      %v2777 = vadd.f32 0.0, %v2776
      %v2778 = vpop.f32.mrb[0].mxu0
      %2779 = vmatprep.mubr.f32.mxu0 0.0
      %2780 = vmatmul.mubr.f32.gmra.mrb[0].mxu0 %v2609
      %v2781 = vpop.f32.mrb[0].mxu0
      %v2782 = vadd.f32 0.0, %v2781
      %v2783 = vpop.f32.mrb[0].mxu0
      %2784 = vmatprep.mubr.f32.mxu0 0.0
      %2785 = vmatmul.mubr.f32.gmra.mrb[0].mxu0 %v2610
      %v2786 = vpop.f32.mrb[0].mxu0
      %v2787 = vadd.f32 0.0, %v2786
      %v2788 = vpop.f32.mrb[0].mxu0
      %2789 = vmatprep.mubr.f32.mxu0 0.0
      %2790 = vmatmul.mubr.f32.gmra.mrb[0].mxu0 %v2611
      %v2791 = vpop.f32.mrb[0].mxu0
      %v2792 = vadd.f32 0.0, %v2791
      %v2793 = vpop.f32.mrb[0].mxu0
      %2794 = vmatprep.mubr.f32.mxu0 0.0
      %2795 = vmatmul.mubr.f32.gmra.mrb[0].mxu0 %v2612
      %v2796 = vpop.f32.mrb[0].mxu0
      %v2797 = vadd.f32 0.0, %v2796
      %v2798 = vpop.f32.mrb[0].mxu0
      %2799 = vmatprep.mubr.f32.mxu0 0.0
      %2800 = vmatmul.mubr.f32.gmra.mrb[0].mxu0 %v2613
      %v2801 = vpop.f32.mrb[0].mxu0
      %v2802 = vadd.f32 0.0, %v2801
      %v2803 = vpop.f32.mrb[0].mxu0
      %2804 = vmatprep.mubr.f32.mxu0 0.0
      %2805 = vmatmul.mubr.f32.gmra.mrb[0].mxu0 %v2614
      %v2806 = vpop.f32.mrb[0].mxu0
      %v2807 = vadd.f32 0.0, %v2806
      %v2808 = vpop.f32.mrb[0].mxu0
      %2809 = vmatprep.mubr.f32.mxu0 0.0
      %2810 = vmatmul.mubr.f32.gmra.mrb[0].mxu0 %v2615
      %v2811 = vpop.f32.mrb[0].mxu0
      %v2812 = vadd.f32 0.0, %v2811
      %v2813 = vpop.f32.mrb[0].mxu0
      %2814 = vmatprep.mubr.f32.mxu0 0.0
      %2815 = vmatmul.mubr.f32.gmra.mrb[0].mxu0 %v2616
      %v2816 = vpop.f32.mrb[0].mxu0
      %v2817 = vadd.f32 0.0, %v2816
      %v2818 = vpop.f32.mrb[0].mxu0
      %2819 = vmatprep.mubr.f32.mxu0 0.0
      %2820 = vmatmul.mubr.f32.gmra.mrb[0].mxu0 %v2617
      %v2821 = vpop.f32.mrb[0].mxu0
      %v2822 = vadd.f32 0.0, %v2821
      %v2823 = vpop.f32.mrb[0].mxu0
      %2824 = vmatprep.mubr.f32.mxu0 0.0
      %2825 = vmatmul.mubr.f32.gmra.mrb[0].mxu0 %v2618
      %v2826 = vpop.f32.mrb[0].mxu0
      %v2827 = vadd.f32 0.0, %v2826
      %v2828 = vpop.f32.mrb[0].mxu0
      %2829 = vmatprep.mubr.f32.mxu0 0.0
      %2830 = vmatmul.mubr.f32.gmra.mrb[0].mxu0 %v2619
      %v2831 = vpop.f32.mrb[0].mxu0
      %v2832 = vadd.f32 0.0, %v2831
      %v2833 = vpop.f32.mrb[0].mxu0
      %2834 = vmatprep.mubr.f32.mxu0 0.0
      %2835 = vmatmul.mubr.f32.gmra.mrb[0].mxu0 %v2620
      %v2836 = vpop.f32.mrb[0].mxu0
      %v2837 = vadd.f32 0.0, %v2836
      %v2838 = vpop.f32.mrb[0].mxu0
      %2839 = vmatprep.mubr.f32.mxu0 0.0
      %2840 = vmatmul.mubr.f32.gmra.mrb[0].mxu0 %v2621
      %v2841 = vpop.f32.mrb[0].mxu0
      %v2842 = vadd.f32 0.0, %v2841
      %v2843 = vpop.f32.mrb[0].mxu0
      %2844 = vmatprep.mubr.f32.mxu0 0.0
      %2845 = vmatmul.mubr.f32.gmra.mrb[0].mxu0 %v2622
      %v2846 = vpop.f32.mrb[0].mxu0
      %v2847 = vadd.f32 0.0, %v2846
      %v2848 = vpop.f32.mrb[0].mxu0
      %2849 = vmatprep.mubr.f32.mxu0 0.0
      %2850 = vmatmul.mubr.f32.gmra.mrb[0].mxu0 %v2623
      %v2851 = vpop.f32.mrb[0].mxu0
      %v2852 = vadd.f32 0.0, %v2851
      %v2853 = vpop.f32.mrb[0].mxu0
      %2854 = vmatprep.mubr.f32.mxu0 0.0
      %2855 = vmatmul.mubr.f32.gmra.mrb[0].mxu0 %v2624
      %v2856 = vpop.f32.mrb[0].mxu0
      %v2857 = vadd.f32 0.0, %v2856
      %v2858 = vpop.f32.mrb[0].mxu0
      %2859 = vmatprep.mubr.f32.mxu0 0.0
      %2860 = vmatmul.mubr.f32.gmra.mrb[0].mxu0 %v2625
      %v2861 = vpop.f32.mrb[0].mxu0
      %v2862 = vadd.f32 0.0, %v2861
      %v2863 = vpop.f32.mrb[0].mxu0
      %2864 = vmatprep.mubr.f32.mxu0 0.0
      %2865 = vmatmul.mubr.f32.gmra.mrb[0].mxu0 %v2626
      %v2866 = vpop.f32.mrb[0].mxu0
      %v2867 = vadd.f32 0.0, %v2866
      %v2868 = vpop.f32.mrb[0].mxu0
      %2869 = vmatprep.mubr.f32.mxu0 0.0
      %2870 = vmatmul.mubr.f32.gmra.mrb[0].mxu0 %v2627
      %v2871 = vpop.f32.mrb[0].mxu0
      %v2872 = vadd.f32 0.0, %v2871
      %v2873 = vpop.f32.mrb[0].mxu0
      %2874 = vmatprep.mubr.f32.mxu0 0.0
      %2875 = vmatmul.mubr.f32.gmra.mrb[0].mxu0 %v2628
      %v2876 = vpop.f32.mrb[0].mxu0
      %v2877 = vadd.f32 0.0, %v2876
      %v2878 = vpop.f32.mrb[0].mxu0
      %2879 = vmatprep.mubr.f32.mxu0 0.0
      %2880 = vmatmul.mubr.f32.gmra.mrb[0].mxu0 %v2629
      %v2881 = vpop.f32.mrb[0].mxu0
      %v2882 = vadd.f32 0.0, %v2881
      %v2883 = vpop.f32.mrb[0].mxu0
      %2884 = vmatprep.mubr.f32.mxu0 0.0
      %2885 = vmatmul.mubr.f32.gmra.mrb[0].mxu0 %v2630
      %v2886 = vpop.f32.mrb[0].mxu0
      %v2887 = vadd.f32 0.0, %v2886
      %v2888 = vpop.f32.mrb[0].mxu0
      %2889 = vmatprep.mubr.f32.mxu0 0.0
      %2890 = vmatmul.mubr.f32.gmra.mrb[0].mxu0 %v2631
      %v2891 = vpop.f32.mrb[0].mxu0
      %v2892 = vadd.f32 0.0, %v2891
      %v2893 = vpop.f32.mrb[0].mxu0
      %2894 = vmatprep.mubr.f32.mxu0 0.0
      %2895 = vmatmul.mubr.f32.gmra.mrb[0].mxu0 %v2632
      %v2896 = vpop.f32.mrb[0].mxu0
      %v2897 = vadd.f32 0.0, %v2896
      %v2898 = vpop.f32.mrb[0].mxu0
      %2899 = vmatprep.mubr.f32.mxu0 0.0
      %2900 = vmatmul.mubr.f32.gmra.mrb[0].mxu0 %v2633
      %v2901 = vpop.f32.mrb[0].mxu0
      %v2902 = vadd.f32 0.0, %v2901
      %v2903 = vpop.f32.mrb[0].mxu0
      %2904 = vmatprep.mubr.f32.mxu0 0.0
      %2905 = vmatmul.mubr.f32.gmra.mrb[0].mxu0 %v2634
      %v2906 = vpop.f32.mrb[0].mxu0
      %v2907 = vadd.f32 0.0, %v2906
      %v2908 = vpop.f32.mrb[0].mxu0
      %2909 = vmatprep.mubr.f32.mxu0 0.0
      %2910 = vmatmul.mubr.f32.gmra.mrb[0].mxu0 %v2635
      %v2911 = vpop.f32.mrb[0].mxu0
      %v2912 = vadd.f32 0.0, %v2911
      %v2913 = vpop.f32.mrb[0].mxu0
      %2914 = vmatprep.mubr.f32.mxu0 0.0
      %2915 = vmatmul.mubr.f32.gmra.mrb[0].mxu0 %v2636
      %v2916 = vpop.f32.mrb[0].mxu0
      %v2917 = vadd.f32 0.0, %v2916
      %v2918 = vpop.f32.mrb[0].mxu0
      %2919 = vmatprep.mubr.f32.mxu0 0.0
      %2920 = vmatmul.mubr.f32.gmra.mrb[0].mxu0 %v2637
      %v2921 = vpop.f32.mrb[0].mxu0
      %v2922 = vadd.f32 0.0, %v2921
      %v2923 = vpop.f32.mrb[0].mxu0
      %2924 = vdwg.mxu0
      %v2925 = vadd.f32 %v2556, %v2722
      %v2926 = vadd.f32 %v2557, %v2727
      %v2927 = vadd.f32 %v2558, %v2732
      %v2928 = vadd.f32 %v2559, %v2737
      %v2929 = vadd.f32 %v2560, %v2742
      %v2930 = vadd.f32 %v2561, %v2747
      %v2931 = vadd.f32 %v2562, %v2752
      %v2932 = vadd.f32 %v2563, %v2757
      %v2933 = vadd.f32 %v2564, %v2762
      %v2934 = vadd.f32 %v2565, %v2767
      %v2935 = vadd.f32 %v2566, %v2772
      %v2936 = vadd.f32 %v2567, %v2777
      %v2937 = vadd.f32 %v2568, %v2782
      %v2938 = vadd.f32 %v2569, %v2787
      %v2939 = vadd.f32 %v2570, %v2792
      %v2940 = vadd.f32 %v2571, %v2797
      %v2941 = vadd.f32 %v2572, %v2802
      %v2942 = vadd.f32 %v2573, %v2807
      %v2943 = vadd.f32 %v2574, %v2812
      %v2944 = vadd.f32 %v2575, %v2817
      %v2945 = vadd.f32 %v2576, %v2822
      %v2946 = vadd.f32 %v2577, %v2827
      %v2947 = vadd.f32 %v2578, %v2832
      %v2948 = vadd.f32 %v2579, %v2837
      %v2949 = vadd.f32 %v2580, %v2842
      %v2950 = vadd.f32 %v2581, %v2847
      %v2951 = vadd.f32 %v2582, %v2852
      %v2952 = vadd.f32 %v2583, %v2857
      %v2953 = vadd.f32 %v2584, %v2862
      %v2954 = vadd.f32 %v2585, %v2867
      %v2955 = vadd.f32 %v2586, %v2872
      %v2956 = vadd.f32 %v2587, %v2877
      %v2957 = vadd.f32 %v2588, %v2882
      %v2958 = vadd.f32 %v2589, %v2887
      %v2959 = vadd.f32 %v2590, %v2892
      %v2960 = vadd.f32 %v2591, %v2897
      %v2961 = vadd.f32 %v2592, %v2902
      %v2962 = vadd.f32 %v2593, %v2907
      %v2963 = vadd.f32 %v2594, %v2912
      %v2964 = vadd.f32 %v2595, %v2917
      %v2965 = vadd.f32 %v2596, %v2922
      %v2966 = vld [vmem:[#allocation2 + $0x19] sm:$0xff]
      %v2967 = vld [vmem:[#allocation2 + $0x21] sm:$0xff]
      %v2968 = vld [vmem:[#allocation2 + $0x29] sm:$0xff]
      %v2969 = vld [vmem:[#allocation2 + $0x31] sm:$0xff]
      %v2970 = vld [vmem:[#allocation2 + $0x39] sm:$0xff]
      %v2971 = vld [vmem:[#allocation2 + $0x41] sm:$0xff]
      %v2972 = vld [vmem:[#allocation2 + $0x49] sm:$0xff]
      %v2973 = vld [vmem:[#allocation2 + $0x51] sm:$0xff]
      %v2974 = vld [vmem:[#allocation2 + $0x59] sm:$0xff]
      %v2975 = vld [vmem:[#allocation2 + $0x61] sm:$0xff]
      %v2976 = vld [vmem:[#allocation2 + $0x69] sm:$0xff]
      %v2977 = vld [vmem:[#allocation2 + $0x71] sm:$0xff]
      %v2978 = vld [vmem:[#allocation2 + $0x79] sm:$0xff]
      %v2979 = vld [vmem:[#allocation2 + $0x81] sm:$0xff]
      %v2980 = vld [vmem:[#allocation2 + $0x89] sm:$0xff]
      %v2981 = vld [vmem:[#allocation2 + $0x91] sm:$0xff]
      %v2982 = vld [vmem:[#allocation2 + $0x99] sm:$0xff]
      %v2983 = vld [vmem:[#allocation2 + $0xa1] sm:$0xff]
      %v2984 = vld [vmem:[#allocation2 + $0xa9] sm:$0xff]
      %v2985 = vld [vmem:[#allocation2 + $0xb1] sm:$0xff]
      %v2986 = vld [vmem:[#allocation2 + $0xb9] sm:$0xff]
      %v2987 = vld [vmem:[#allocation2 + $0xc1] sm:$0xff]
      %v2988 = vld [vmem:[#allocation2 + $0xc9] sm:$0xff]
      %v2989 = vld [vmem:[#allocation2 + $0xd1] sm:$0xff]
      %v2990 = vld [vmem:[#allocation2 + $0xd9] sm:$0xff]
      %v2991 = vld [vmem:[#allocation2 + $0xe1] sm:$0xff]
      %v2992 = vld [vmem:[#allocation2 + $0xe9] sm:$0xff]
      %v2993 = vld [vmem:[#allocation2 + $0xf1] sm:$0xff]
      %v2994 = vld [vmem:[#allocation2 + $0xf9] sm:$0xff]
      %v2995 = vld [vmem:[#allocation2 + $0x101] sm:$0xff]
      %v2996 = vld [vmem:[#allocation2 + $0x109] sm:$0xff]
      %v2997 = vld [vmem:[#allocation2 + $0x111] sm:$0xff]
      %v2998 = vld [vmem:[#allocation2 + $0x119] sm:$0xff]
      %v2999 = vld [vmem:[#allocation2 + $0x121] sm:$0xff]
      %v3000 = vld [vmem:[#allocation2 + $0x129] sm:$0xff]
      %v3001 = vld [vmem:[#allocation2 + $0x131] sm:$0xff]
      %v3002 = vld [vmem:[#allocation2 + $0x139] sm:$0xff]
      %v3003 = vld [vmem:[#allocation2 + $0x141] sm:$0xff]
      %v3004 = vld [vmem:[#allocation2 + $0x149] sm:$0xff]
      %v3005 = vld [vmem:[#allocation2 + $0x151] sm:$0xff]
      %v3006 = vld [vmem:[#allocation2 + $0x159] sm:$0xff]
      %s3007 = scalar_lea.vmem %s6, 640
      %v3008 = vld [vmem:[%s3007] sm:$0xff]
      %v3009 = vld [vmem:[%s3007 + $0x8] sm:$0xff]
      %v3010 = vld [vmem:[%s3007 + $0x10] sm:$0xff]
      %v3011 = vld [vmem:[%s3007 + $0x18] sm:$0xff]
      %v3012 = vld [vmem:[%s3007 + $0x20] sm:$0xff]
      %v3013 = vld [vmem:[%s3007 + $0x28] sm:$0xff]
      %v3014 = vld [vmem:[%s3007 + $0x30] sm:$0xff]
      %v3015 = vld [vmem:[%s3007 + $0x38] sm:$0xff]
      %v3016 = vld [vmem:[%s3007 + $0x40] sm:$0xff]
      %v3017 = vld [vmem:[%s3007 + $0x48] sm:$0xff]
      %v3018 = vld [vmem:[%s3007 + $0x50] sm:$0xff]
      %v3019 = vld [vmem:[%s3007 + $0x58] sm:$0xff]
      %v3020 = vld [vmem:[%s3007 + $0x60] sm:$0xff]
      %v3021 = vld [vmem:[%s3007 + $0x68] sm:$0xff]
      %v3022 = vld [vmem:[%s3007 + $0x70] sm:$0xff]
      %v3023 = vld [vmem:[%s3007 + $0x78] sm:$0xff]
      %3024 = vmatprep.subr.mxu0 0.0
      %3025 = vmatpush1.msra.mxu0 %v3008
      %3026 = vmatprep.subr.mxu0 0.0
      %3027 = vmatpush1.msra.mxu0 %v3009
      %3028 = vmatprep.subr.mxu0 0.0
      %3029 = vmatpush1.msra.mxu0 %v3010
      %3030 = vmatprep.subr.mxu0 0.0
      %3031 = vmatpush1.msra.mxu0 %v3011
      %3032 = vmatprep.subr.mxu0 0.0
      %3033 = vmatpush1.msra.mxu0 %v3012
      %3034 = vmatprep.subr.mxu0 0.0
      %3035 = vmatpush1.msra.mxu0 %v3013
      %3036 = vmatprep.subr.mxu0 0.0
      %3037 = vmatpush1.msra.mxu0 %v3014
      %3038 = vmatprep.subr.mxu0 0.0
      %3039 = vmatpush1.msra.mxu0 %v3015
      %3040 = vmatprep.subr.mxu0 0.0
      %3041 = vmatpush1.msra.mxu0 %v3016
      %3042 = vmatprep.subr.mxu0 0.0
      %3043 = vmatpush1.msra.mxu0 %v3017
      %3044 = vmatprep.subr.mxu0 0.0
      %3045 = vmatpush1.msra.mxu0 %v3018
      %3046 = vmatprep.subr.mxu0 0.0
      %3047 = vmatpush1.msra.mxu0 %v3019
      %3048 = vmatprep.subr.mxu0 0.0
      %3049 = vmatpush1.msra.mxu0 %v3020
      %3050 = vmatprep.subr.mxu0 0.0
      %3051 = vmatpush1.msra.mxu0 %v3021
      %3052 = vmatprep.subr.mxu0 0.0
      %3053 = vmatpush1.msra.mxu0 %v3022
      %3054 = vmatprep.subr.mxu0 0.0
      %3055 = vmatpush1.msra.mxu0 %v3023
      %3056 = vmatprep.subr.mxu0 0.0
      %3057 = vmatpush1.msra.mxu0 0.0
      %3058 = vmatprep.subr.mxu0 0.0
      %3059 = vmatpush1.msra.mxu0 0.0
      %3060 = vmatprep.subr.mxu0 0.0
      %3061 = vmatpush1.msra.mxu0 0.0
      %3062 = vmatprep.subr.mxu0 0.0
      %3063 = vmatpush1.msra.mxu0 0.0
      %3064 = vmatprep.subr.mxu0 0.0
      %3065 = vmatpush1.msra.mxu0 0.0
      %3066 = vmatprep.subr.mxu0 0.0
      %3067 = vmatpush1.msra.mxu0 0.0
      %3068 = vmatprep.subr.mxu0 0.0
      %3069 = vmatpush1.msra.mxu0 0.0
      %3070 = vmatprep.subr.mxu0 0.0
      %3071 = vmatpush1.msra.mxu0 0.0
      %3072 = vmatprep.subr.mxu0 0.0
      %3073 = vmatpush1.msra.mxu0 0.0
      %3074 = vmatprep.subr.mxu0 0.0
      %3075 = vmatpush1.msra.mxu0 0.0
      %3076 = vmatprep.subr.mxu0 0.0
      %3077 = vmatpush1.msra.mxu0 0.0
      %3078 = vmatprep.subr.mxu0 0.0
      %3079 = vmatpush1.msra.mxu0 0.0
      %3080 = vmatprep.subr.mxu0 0.0
      %3081 = vmatpush1.msra.mxu0 0.0
      %3082 = vmatprep.subr.mxu0 0.0
      %3083 = vmatpush1.msra.mxu0 0.0
      %3084 = vmatprep.subr.mxu0 0.0
      %3085 = vmatpush1.msra.mxu0 0.0
      %3086 = vmatprep.subr.mxu0 0.0
      %3087 = vmatpush1.msra.mxu0 0.0
      %3088 = vmatprep.mubr.f32.mxu0 0.0
      %3089 = vmatmul.mubr.f32.gmra.mrb[0].mxu0 %v2966
      %v3090 = vpop.f32.mrb[0].mxu0
      %v3091 = vadd.f32 0.0, %v3090
      %v3092 = vpop.f32.mrb[0].mxu0
      %3093 = vmatprep.mubr.f32.mxu0 0.0
      %3094 = vmatmul.mubr.f32.gmra.mrb[0].mxu0 %v2967
      %v3095 = vpop.f32.mrb[0].mxu0
      %v3096 = vadd.f32 0.0, %v3095
      %v3097 = vpop.f32.mrb[0].mxu0
      %3098 = vmatprep.mubr.f32.mxu0 0.0
      %3099 = vmatmul.mubr.f32.gmra.mrb[0].mxu0 %v2968
      %v3100 = vpop.f32.mrb[0].mxu0
      %v3101 = vadd.f32 0.0, %v3100
      %v3102 = vpop.f32.mrb[0].mxu0
      %3103 = vmatprep.mubr.f32.mxu0 0.0
      %3104 = vmatmul.mubr.f32.gmra.mrb[0].mxu0 %v2969
      %v3105 = vpop.f32.mrb[0].mxu0
      %v3106 = vadd.f32 0.0, %v3105
      %v3107 = vpop.f32.mrb[0].mxu0
      %3108 = vmatprep.mubr.f32.mxu0 0.0
      %3109 = vmatmul.mubr.f32.gmra.mrb[0].mxu0 %v2970
      %v3110 = vpop.f32.mrb[0].mxu0
      %v3111 = vadd.f32 0.0, %v3110
      %v3112 = vpop.f32.mrb[0].mxu0
      %3113 = vmatprep.mubr.f32.mxu0 0.0
      %3114 = vmatmul.mubr.f32.gmra.mrb[0].mxu0 %v2971
      %v3115 = vpop.f32.mrb[0].mxu0
      %v3116 = vadd.f32 0.0, %v3115
      %v3117 = vpop.f32.mrb[0].mxu0
      %3118 = vmatprep.mubr.f32.mxu0 0.0
      %3119 = vmatmul.mubr.f32.gmra.mrb[0].mxu0 %v2972
      %v3120 = vpop.f32.mrb[0].mxu0
      %v3121 = vadd.f32 0.0, %v3120
      %v3122 = vpop.f32.mrb[0].mxu0
      %3123 = vmatprep.mubr.f32.mxu0 0.0
      %3124 = vmatmul.mubr.f32.gmra.mrb[0].mxu0 %v2973
      %v3125 = vpop.f32.mrb[0].mxu0
      %v3126 = vadd.f32 0.0, %v3125
      %v3127 = vpop.f32.mrb[0].mxu0
      %3128 = vmatprep.mubr.f32.mxu0 0.0
      %3129 = vmatmul.mubr.f32.gmra.mrb[0].mxu0 %v2974
      %v3130 = vpop.f32.mrb[0].mxu0
      %v3131 = vadd.f32 0.0, %v3130
      %v3132 = vpop.f32.mrb[0].mxu0
      %3133 = vmatprep.mubr.f32.mxu0 0.0
      %3134 = vmatmul.mubr.f32.gmra.mrb[0].mxu0 %v2975
      %v3135 = vpop.f32.mrb[0].mxu0
      %v3136 = vadd.f32 0.0, %v3135
      %v3137 = vpop.f32.mrb[0].mxu0
      %3138 = vmatprep.mubr.f32.mxu0 0.0
      %3139 = vmatmul.mubr.f32.gmra.mrb[0].mxu0 %v2976
      %v3140 = vpop.f32.mrb[0].mxu0
      %v3141 = vadd.f32 0.0, %v3140
      %v3142 = vpop.f32.mrb[0].mxu0
      %3143 = vmatprep.mubr.f32.mxu0 0.0
      %3144 = vmatmul.mubr.f32.gmra.mrb[0].mxu0 %v2977
      %v3145 = vpop.f32.mrb[0].mxu0
      %v3146 = vadd.f32 0.0, %v3145
      %v3147 = vpop.f32.mrb[0].mxu0
      %3148 = vmatprep.mubr.f32.mxu0 0.0
      %3149 = vmatmul.mubr.f32.gmra.mrb[0].mxu0 %v2978
      %v3150 = vpop.f32.mrb[0].mxu0
      %v3151 = vadd.f32 0.0, %v3150
      %v3152 = vpop.f32.mrb[0].mxu0
      %3153 = vmatprep.mubr.f32.mxu0 0.0
      %3154 = vmatmul.mubr.f32.gmra.mrb[0].mxu0 %v2979
      %v3155 = vpop.f32.mrb[0].mxu0
      %v3156 = vadd.f32 0.0, %v3155
      %v3157 = vpop.f32.mrb[0].mxu0
      %3158 = vmatprep.mubr.f32.mxu0 0.0
      %3159 = vmatmul.mubr.f32.gmra.mrb[0].mxu0 %v2980
      %v3160 = vpop.f32.mrb[0].mxu0
      %v3161 = vadd.f32 0.0, %v3160
      %v3162 = vpop.f32.mrb[0].mxu0
      %3163 = vmatprep.mubr.f32.mxu0 0.0
      %3164 = vmatmul.mubr.f32.gmra.mrb[0].mxu0 %v2981
      %v3165 = vpop.f32.mrb[0].mxu0
      %v3166 = vadd.f32 0.0, %v3165
      %v3167 = vpop.f32.mrb[0].mxu0
      %3168 = vmatprep.mubr.f32.mxu0 0.0
      %3169 = vmatmul.mubr.f32.gmra.mrb[0].mxu0 %v2982
      %v3170 = vpop.f32.mrb[0].mxu0
      %v3171 = vadd.f32 0.0, %v3170
      %v3172 = vpop.f32.mrb[0].mxu0
      %3173 = vmatprep.mubr.f32.mxu0 0.0
      %3174 = vmatmul.mubr.f32.gmra.mrb[0].mxu0 %v2983
      %v3175 = vpop.f32.mrb[0].mxu0
      %v3176 = vadd.f32 0.0, %v3175
      %v3177 = vpop.f32.mrb[0].mxu0
      %3178 = vmatprep.mubr.f32.mxu0 0.0
      %3179 = vmatmul.mubr.f32.gmra.mrb[0].mxu0 %v2984
      %v3180 = vpop.f32.mrb[0].mxu0
      %v3181 = vadd.f32 0.0, %v3180
      %v3182 = vpop.f32.mrb[0].mxu0
      %3183 = vmatprep.mubr.f32.mxu0 0.0
      %3184 = vmatmul.mubr.f32.gmra.mrb[0].mxu0 %v2985
      %v3185 = vpop.f32.mrb[0].mxu0
      %v3186 = vadd.f32 0.0, %v3185
      %v3187 = vpop.f32.mrb[0].mxu0
      %3188 = vmatprep.mubr.f32.mxu0 0.0
      %3189 = vmatmul.mubr.f32.gmra.mrb[0].mxu0 %v2986
      %v3190 = vpop.f32.mrb[0].mxu0
      %v3191 = vadd.f32 0.0, %v3190
      %v3192 = vpop.f32.mrb[0].mxu0
      %3193 = vmatprep.mubr.f32.mxu0 0.0
      %3194 = vmatmul.mubr.f32.gmra.mrb[0].mxu0 %v2987
      %v3195 = vpop.f32.mrb[0].mxu0
      %v3196 = vadd.f32 0.0, %v3195
      %v3197 = vpop.f32.mrb[0].mxu0
      %3198 = vmatprep.mubr.f32.mxu0 0.0
      %3199 = vmatmul.mubr.f32.gmra.mrb[0].mxu0 %v2988
      %v3200 = vpop.f32.mrb[0].mxu0
      %v3201 = vadd.f32 0.0, %v3200
      %v3202 = vpop.f32.mrb[0].mxu0
      %3203 = vmatprep.mubr.f32.mxu0 0.0
      %3204 = vmatmul.mubr.f32.gmra.mrb[0].mxu0 %v2989
      %v3205 = vpop.f32.mrb[0].mxu0
      %v3206 = vadd.f32 0.0, %v3205
      %v3207 = vpop.f32.mrb[0].mxu0
      %3208 = vmatprep.mubr.f32.mxu0 0.0
      %3209 = vmatmul.mubr.f32.gmra.mrb[0].mxu0 %v2990
      %v3210 = vpop.f32.mrb[0].mxu0
      %v3211 = vadd.f32 0.0, %v3210
      %v3212 = vpop.f32.mrb[0].mxu0
      %3213 = vmatprep.mubr.f32.mxu0 0.0
      %3214 = vmatmul.mubr.f32.gmra.mrb[0].mxu0 %v2991
      %v3215 = vpop.f32.mrb[0].mxu0
      %v3216 = vadd.f32 0.0, %v3215
      %v3217 = vpop.f32.mrb[0].mxu0
      %3218 = vmatprep.mubr.f32.mxu0 0.0
      %3219 = vmatmul.mubr.f32.gmra.mrb[0].mxu0 %v2992
      %v3220 = vpop.f32.mrb[0].mxu0
      %v3221 = vadd.f32 0.0, %v3220
      %v3222 = vpop.f32.mrb[0].mxu0
      %3223 = vmatprep.mubr.f32.mxu0 0.0
      %3224 = vmatmul.mubr.f32.gmra.mrb[0].mxu0 %v2993
      %v3225 = vpop.f32.mrb[0].mxu0
      %v3226 = vadd.f32 0.0, %v3225
      %v3227 = vpop.f32.mrb[0].mxu0
      %3228 = vmatprep.mubr.f32.mxu0 0.0
      %3229 = vmatmul.mubr.f32.gmra.mrb[0].mxu0 %v2994
      %v3230 = vpop.f32.mrb[0].mxu0
      %v3231 = vadd.f32 0.0, %v3230
      %v3232 = vpop.f32.mrb[0].mxu0
      %3233 = vmatprep.mubr.f32.mxu0 0.0
      %3234 = vmatmul.mubr.f32.gmra.mrb[0].mxu0 %v2995
      %v3235 = vpop.f32.mrb[0].mxu0
      %v3236 = vadd.f32 0.0, %v3235
      %v3237 = vpop.f32.mrb[0].mxu0
      %3238 = vmatprep.mubr.f32.mxu0 0.0
      %3239 = vmatmul.mubr.f32.gmra.mrb[0].mxu0 %v2996
      %v3240 = vpop.f32.mrb[0].mxu0
      %v3241 = vadd.f32 0.0, %v3240
      %v3242 = vpop.f32.mrb[0].mxu0
      %3243 = vmatprep.mubr.f32.mxu0 0.0
      %3244 = vmatmul.mubr.f32.gmra.mrb[0].mxu0 %v2997
      %v3245 = vpop.f32.mrb[0].mxu0
      %v3246 = vadd.f32 0.0, %v3245
      %v3247 = vpop.f32.mrb[0].mxu0
      %3248 = vmatprep.mubr.f32.mxu0 0.0
      %3249 = vmatmul.mubr.f32.gmra.mrb[0].mxu0 %v2998
      %v3250 = vpop.f32.mrb[0].mxu0
      %v3251 = vadd.f32 0.0, %v3250
      %v3252 = vpop.f32.mrb[0].mxu0
      %3253 = vmatprep.mubr.f32.mxu0 0.0
      %3254 = vmatmul.mubr.f32.gmra.mrb[0].mxu0 %v2999
      %v3255 = vpop.f32.mrb[0].mxu0
      %v3256 = vadd.f32 0.0, %v3255
      %v3257 = vpop.f32.mrb[0].mxu0
      %3258 = vmatprep.mubr.f32.mxu0 0.0
      %3259 = vmatmul.mubr.f32.gmra.mrb[0].mxu0 %v3000
      %v3260 = vpop.f32.mrb[0].mxu0
      %v3261 = vadd.f32 0.0, %v3260
      %v3262 = vpop.f32.mrb[0].mxu0
      %3263 = vmatprep.mubr.f32.mxu0 0.0
      %3264 = vmatmul.mubr.f32.gmra.mrb[0].mxu0 %v3001
      %v3265 = vpop.f32.mrb[0].mxu0
      %v3266 = vadd.f32 0.0, %v3265
      %v3267 = vpop.f32.mrb[0].mxu0
      %3268 = vmatprep.mubr.f32.mxu0 0.0
      %3269 = vmatmul.mubr.f32.gmra.mrb[0].mxu0 %v3002
      %v3270 = vpop.f32.mrb[0].mxu0
      %v3271 = vadd.f32 0.0, %v3270
      %v3272 = vpop.f32.mrb[0].mxu0
      %3273 = vmatprep.mubr.f32.mxu0 0.0
      %3274 = vmatmul.mubr.f32.gmra.mrb[0].mxu0 %v3003
      %v3275 = vpop.f32.mrb[0].mxu0
      %v3276 = vadd.f32 0.0, %v3275
      %v3277 = vpop.f32.mrb[0].mxu0
      %3278 = vmatprep.mubr.f32.mxu0 0.0
      %3279 = vmatmul.mubr.f32.gmra.mrb[0].mxu0 %v3004
      %v3280 = vpop.f32.mrb[0].mxu0
      %v3281 = vadd.f32 0.0, %v3280
      %v3282 = vpop.f32.mrb[0].mxu0
      %3283 = vmatprep.mubr.f32.mxu0 0.0
      %3284 = vmatmul.mubr.f32.gmra.mrb[0].mxu0 %v3005
      %v3285 = vpop.f32.mrb[0].mxu0
      %v3286 = vadd.f32 0.0, %v3285
      %v3287 = vpop.f32.mrb[0].mxu0
      %3288 = vmatprep.mubr.f32.mxu0 0.0
      %3289 = vmatmul.mubr.f32.gmra.mrb[0].mxu0 %v3006
      %v3290 = vpop.f32.mrb[0].mxu0
      %v3291 = vadd.f32 0.0, %v3290
      %v3292 = vpop.f32.mrb[0].mxu0
      %3293 = vdwg.mxu0
      %v3294 = vadd.f32 %v2925, %v3091
      %v3295 = vadd.f32 %v2926, %v3096
      %v3296 = vadd.f32 %v2927, %v3101
      %v3297 = vadd.f32 %v2928, %v3106
      %v3298 = vadd.f32 %v2929, %v3111
      %v3299 = vadd.f32 %v2930, %v3116
      %v3300 = vadd.f32 %v2931, %v3121
      %v3301 = vadd.f32 %v2932, %v3126
      %v3302 = vadd.f32 %v2933, %v3131
      %v3303 = vadd.f32 %v2934, %v3136
      %v3304 = vadd.f32 %v2935, %v3141
      %v3305 = vadd.f32 %v2936, %v3146
      %v3306 = vadd.f32 %v2937, %v3151
      %v3307 = vadd.f32 %v2938, %v3156
      %v3308 = vadd.f32 %v2939, %v3161
      %v3309 = vadd.f32 %v2940, %v3166
      %v3310 = vadd.f32 %v2941, %v3171
      %v3311 = vadd.f32 %v2942, %v3176
      %v3312 = vadd.f32 %v2943, %v3181
      %v3313 = vadd.f32 %v2944, %v3186
      %v3314 = vadd.f32 %v2945, %v3191
      %v3315 = vadd.f32 %v2946, %v3196
      %v3316 = vadd.f32 %v2947, %v3201
      %v3317 = vadd.f32 %v2948, %v3206
      %v3318 = vadd.f32 %v2949, %v3211
      %v3319 = vadd.f32 %v2950, %v3216
      %v3320 = vadd.f32 %v2951, %v3221
      %v3321 = vadd.f32 %v2952, %v3226
      %v3322 = vadd.f32 %v2953, %v3231
      %v3323 = vadd.f32 %v2954, %v3236
      %v3324 = vadd.f32 %v2955, %v3241
      %v3325 = vadd.f32 %v2956, %v3246
      %v3326 = vadd.f32 %v2957, %v3251
      %v3327 = vadd.f32 %v2958, %v3256
      %v3328 = vadd.f32 %v2959, %v3261
      %v3329 = vadd.f32 %v2960, %v3266
      %v3330 = vadd.f32 %v2961, %v3271
      %v3331 = vadd.f32 %v2962, %v3276
      %v3332 = vadd.f32 %v2963, %v3281
      %v3333 = vadd.f32 %v2964, %v3286
      %v3334 = vadd.f32 %v2965, %v3291
      %v3335 = vld [vmem:[#allocation2 + $0x29] sm:$0xff]
      %v3336 = vld [vmem:[#allocation2 + $0x31] sm:$0xff]
      %v3337 = vld [vmem:[#allocation2 + $0x39] sm:$0xff]
      %v3338 = vld [vmem:[#allocation2 + $0x41] sm:$0xff]
      %v3339 = vld [vmem:[#allocation2 + $0x49] sm:$0xff]
      %v3340 = vld [vmem:[#allocation2 + $0x51] sm:$0xff]
      %v3341 = vld [vmem:[#allocation2 + $0x59] sm:$0xff]
      %v3342 = vld [vmem:[#allocation2 + $0x61] sm:$0xff]
      %v3343 = vld [vmem:[#allocation2 + $0x69] sm:$0xff]
      %v3344 = vld [vmem:[#allocation2 + $0x71] sm:$0xff]
      %v3345 = vld [vmem:[#allocation2 + $0x79] sm:$0xff]
      %v3346 = vld [vmem:[#allocation2 + $0x81] sm:$0xff]
      %v3347 = vld [vmem:[#allocation2 + $0x89] sm:$0xff]
      %v3348 = vld [vmem:[#allocation2 + $0x91] sm:$0xff]
      %v3349 = vld [vmem:[#allocation2 + $0x99] sm:$0xff]
      %v3350 = vld [vmem:[#allocation2 + $0xa1] sm:$0xff]
      %v3351 = vld [vmem:[#allocation2 + $0xa9] sm:$0xff]
      %v3352 = vld [vmem:[#allocation2 + $0xb1] sm:$0xff]
      %v3353 = vld [vmem:[#allocation2 + $0xb9] sm:$0xff]
      %v3354 = vld [vmem:[#allocation2 + $0xc1] sm:$0xff]
      %v3355 = vld [vmem:[#allocation2 + $0xc9] sm:$0xff]
      %v3356 = vld [vmem:[#allocation2 + $0xd1] sm:$0xff]
      %v3357 = vld [vmem:[#allocation2 + $0xd9] sm:$0xff]
      %v3358 = vld [vmem:[#allocation2 + $0xe1] sm:$0xff]
      %v3359 = vld [vmem:[#allocation2 + $0xe9] sm:$0xff]
      %v3360 = vld [vmem:[#allocation2 + $0xf1] sm:$0xff]
      %v3361 = vld [vmem:[#allocation2 + $0xf9] sm:$0xff]
      %v3362 = vld [vmem:[#allocation2 + $0x101] sm:$0xff]
      %v3363 = vld [vmem:[#allocation2 + $0x109] sm:$0xff]
      %v3364 = vld [vmem:[#allocation2 + $0x111] sm:$0xff]
      %v3365 = vld [vmem:[#allocation2 + $0x119] sm:$0xff]
      %v3366 = vld [vmem:[#allocation2 + $0x121] sm:$0xff]
      %v3367 = vld [vmem:[#allocation2 + $0x129] sm:$0xff]
      %v3368 = vld [vmem:[#allocation2 + $0x131] sm:$0xff]
      %v3369 = vld [vmem:[#allocation2 + $0x139] sm:$0xff]
      %v3370 = vld [vmem:[#allocation2 + $0x141] sm:$0xff]
      %v3371 = vld [vmem:[#allocation2 + $0x149] sm:$0xff]
      %v3372 = vld [vmem:[#allocation2 + $0x151] sm:$0xff]
      %v3373 = vld [vmem:[#allocation2 + $0x159] sm:$0xff]
      %v3374 = vld [vmem:[#allocation2 + $0x161] sm:$0xff]
      %v3375 = vld [vmem:[#allocation2 + $0x169] sm:$0xff]
      %s3376 = scalar_lea.vmem %s6, 768
      %v3377 = vld [vmem:[%s3376] sm:$0xff]
      %v3378 = vld [vmem:[%s3376 + $0x8] sm:$0xff]
      %v3379 = vld [vmem:[%s3376 + $0x10] sm:$0xff]
      %v3380 = vld [vmem:[%s3376 + $0x18] sm:$0xff]
      %v3381 = vld [vmem:[%s3376 + $0x20] sm:$0xff]
      %v3382 = vld [vmem:[%s3376 + $0x28] sm:$0xff]
      %v3383 = vld [vmem:[%s3376 + $0x30] sm:$0xff]
      %v3384 = vld [vmem:[%s3376 + $0x38] sm:$0xff]
      %v3385 = vld [vmem:[%s3376 + $0x40] sm:$0xff]
      %v3386 = vld [vmem:[%s3376 + $0x48] sm:$0xff]
      %v3387 = vld [vmem:[%s3376 + $0x50] sm:$0xff]
      %v3388 = vld [vmem:[%s3376 + $0x58] sm:$0xff]
      %v3389 = vld [vmem:[%s3376 + $0x60] sm:$0xff]
      %v3390 = vld [vmem:[%s3376 + $0x68] sm:$0xff]
      %v3391 = vld [vmem:[%s3376 + $0x70] sm:$0xff]
      %v3392 = vld [vmem:[%s3376 + $0x78] sm:$0xff]
      %3393 = vmatprep.subr.mxu0 0.0
      %3394 = vmatpush1.msra.mxu0 %v3377
      %3395 = vmatprep.subr.mxu0 0.0
      %3396 = vmatpush1.msra.mxu0 %v3378
      %3397 = vmatprep.subr.mxu0 0.0
      %3398 = vmatpush1.msra.mxu0 %v3379
      %3399 = vmatprep.subr.mxu0 0.0
      %3400 = vmatpush1.msra.mxu0 %v3380
      %3401 = vmatprep.subr.mxu0 0.0
      %3402 = vmatpush1.msra.mxu0 %v3381
      %3403 = vmatprep.subr.mxu0 0.0
      %3404 = vmatpush1.msra.mxu0 %v3382
      %3405 = vmatprep.subr.mxu0 0.0
      %3406 = vmatpush1.msra.mxu0 %v3383
      %3407 = vmatprep.subr.mxu0 0.0
      %3408 = vmatpush1.msra.mxu0 %v3384
      %3409 = vmatprep.subr.mxu0 0.0
      %3410 = vmatpush1.msra.mxu0 %v3385
      %3411 = vmatprep.subr.mxu0 0.0
      %3412 = vmatpush1.msra.mxu0 %v3386
      %3413 = vmatprep.subr.mxu0 0.0
      %3414 = vmatpush1.msra.mxu0 %v3387
      %3415 = vmatprep.subr.mxu0 0.0
      %3416 = vmatpush1.msra.mxu0 %v3388
      %3417 = vmatprep.subr.mxu0 0.0
      %3418 = vmatpush1.msra.mxu0 %v3389
      %3419 = vmatprep.subr.mxu0 0.0
      %3420 = vmatpush1.msra.mxu0 %v3390
      %3421 = vmatprep.subr.mxu0 0.0
      %3422 = vmatpush1.msra.mxu0 %v3391
      %3423 = vmatprep.subr.mxu0 0.0
      %3424 = vmatpush1.msra.mxu0 %v3392
      %3425 = vmatprep.subr.mxu0 0.0
      %3426 = vmatpush1.msra.mxu0 0.0
      %3427 = vmatprep.subr.mxu0 0.0
      %3428 = vmatpush1.msra.mxu0 0.0
      %3429 = vmatprep.subr.mxu0 0.0
      %3430 = vmatpush1.msra.mxu0 0.0
      %3431 = vmatprep.subr.mxu0 0.0
      %3432 = vmatpush1.msra.mxu0 0.0
      %3433 = vmatprep.subr.mxu0 0.0
      %3434 = vmatpush1.msra.mxu0 0.0
      %3435 = vmatprep.subr.mxu0 0.0
      %3436 = vmatpush1.msra.mxu0 0.0
      %3437 = vmatprep.subr.mxu0 0.0
      %3438 = vmatpush1.msra.mxu0 0.0
      %3439 = vmatprep.subr.mxu0 0.0
      %3440 = vmatpush1.msra.mxu0 0.0
      %3441 = vmatprep.subr.mxu0 0.0
      %3442 = vmatpush1.msra.mxu0 0.0
      %3443 = vmatprep.subr.mxu0 0.0
      %3444 = vmatpush1.msra.mxu0 0.0
      %3445 = vmatprep.subr.mxu0 0.0
      %3446 = vmatpush1.msra.mxu0 0.0
      %3447 = vmatprep.subr.mxu0 0.0
      %3448 = vmatpush1.msra.mxu0 0.0
      %3449 = vmatprep.subr.mxu0 0.0
      %3450 = vmatpush1.msra.mxu0 0.0
      %3451 = vmatprep.subr.mxu0 0.0
      %3452 = vmatpush1.msra.mxu0 0.0
      %3453 = vmatprep.subr.mxu0 0.0
      %3454 = vmatpush1.msra.mxu0 0.0
      %3455 = vmatprep.subr.mxu0 0.0
      %3456 = vmatpush1.msra.mxu0 0.0
      %3457 = vmatprep.mubr.f32.mxu0 0.0
      %3458 = vmatmul.mubr.f32.gmra.mrb[0].mxu0 %v3335
      %v3459 = vpop.f32.mrb[0].mxu0
      %v3460 = vadd.f32 0.0, %v3459
      %v3461 = vpop.f32.mrb[0].mxu0
      %3462 = vmatprep.mubr.f32.mxu0 0.0
      %3463 = vmatmul.mubr.f32.gmra.mrb[0].mxu0 %v3336
      %v3464 = vpop.f32.mrb[0].mxu0
      %v3465 = vadd.f32 0.0, %v3464
      %v3466 = vpop.f32.mrb[0].mxu0
      %3467 = vmatprep.mubr.f32.mxu0 0.0
      %3468 = vmatmul.mubr.f32.gmra.mrb[0].mxu0 %v3337
      %v3469 = vpop.f32.mrb[0].mxu0
      %v3470 = vadd.f32 0.0, %v3469
      %v3471 = vpop.f32.mrb[0].mxu0
      %3472 = vmatprep.mubr.f32.mxu0 0.0
      %3473 = vmatmul.mubr.f32.gmra.mrb[0].mxu0 %v3338
      %v3474 = vpop.f32.mrb[0].mxu0
      %v3475 = vadd.f32 0.0, %v3474
      %v3476 = vpop.f32.mrb[0].mxu0
      %3477 = vmatprep.mubr.f32.mxu0 0.0
      %3478 = vmatmul.mubr.f32.gmra.mrb[0].mxu0 %v3339
      %v3479 = vpop.f32.mrb[0].mxu0
      %v3480 = vadd.f32 0.0, %v3479
      %v3481 = vpop.f32.mrb[0].mxu0
      %3482 = vmatprep.mubr.f32.mxu0 0.0
      %3483 = vmatmul.mubr.f32.gmra.mrb[0].mxu0 %v3340
      %v3484 = vpop.f32.mrb[0].mxu0
      %v3485 = vadd.f32 0.0, %v3484
      %v3486 = vpop.f32.mrb[0].mxu0
      %3487 = vmatprep.mubr.f32.mxu0 0.0
      %3488 = vmatmul.mubr.f32.gmra.mrb[0].mxu0 %v3341
      %v3489 = vpop.f32.mrb[0].mxu0
      %v3490 = vadd.f32 0.0, %v3489
      %v3491 = vpop.f32.mrb[0].mxu0
      %3492 = vmatprep.mubr.f32.mxu0 0.0
      %3493 = vmatmul.mubr.f32.gmra.mrb[0].mxu0 %v3342
      %v3494 = vpop.f32.mrb[0].mxu0
      %v3495 = vadd.f32 0.0, %v3494
      %v3496 = vpop.f32.mrb[0].mxu0
      %3497 = vmatprep.mubr.f32.mxu0 0.0
      %3498 = vmatmul.mubr.f32.gmra.mrb[0].mxu0 %v3343
      %v3499 = vpop.f32.mrb[0].mxu0
      %v3500 = vadd.f32 0.0, %v3499
      %v3501 = vpop.f32.mrb[0].mxu0
      %3502 = vmatprep.mubr.f32.mxu0 0.0
      %3503 = vmatmul.mubr.f32.gmra.mrb[0].mxu0 %v3344
      %v3504 = vpop.f32.mrb[0].mxu0
      %v3505 = vadd.f32 0.0, %v3504
      %v3506 = vpop.f32.mrb[0].mxu0
      %3507 = vmatprep.mubr.f32.mxu0 0.0
      %3508 = vmatmul.mubr.f32.gmra.mrb[0].mxu0 %v3345
      %v3509 = vpop.f32.mrb[0].mxu0
      %v3510 = vadd.f32 0.0, %v3509
      %v3511 = vpop.f32.mrb[0].mxu0
      %3512 = vmatprep.mubr.f32.mxu0 0.0
      %3513 = vmatmul.mubr.f32.gmra.mrb[0].mxu0 %v3346
      %v3514 = vpop.f32.mrb[0].mxu0
      %v3515 = vadd.f32 0.0, %v3514
      %v3516 = vpop.f32.mrb[0].mxu0
      %3517 = vmatprep.mubr.f32.mxu0 0.0
      %3518 = vmatmul.mubr.f32.gmra.mrb[0].mxu0 %v3347
      %v3519 = vpop.f32.mrb[0].mxu0
      %v3520 = vadd.f32 0.0, %v3519
      %v3521 = vpop.f32.mrb[0].mxu0
      %3522 = vmatprep.mubr.f32.mxu0 0.0
      %3523 = vmatmul.mubr.f32.gmra.mrb[0].mxu0 %v3348
      %v3524 = vpop.f32.mrb[0].mxu0
      %v3525 = vadd.f32 0.0, %v3524
      %v3526 = vpop.f32.mrb[0].mxu0
      %3527 = vmatprep.mubr.f32.mxu0 0.0
      %3528 = vmatmul.mubr.f32.gmra.mrb[0].mxu0 %v3349
      %v3529 = vpop.f32.mrb[0].mxu0
      %v3530 = vadd.f32 0.0, %v3529
      %v3531 = vpop.f32.mrb[0].mxu0
      %3532 = vmatprep.mubr.f32.mxu0 0.0
      %3533 = vmatmul.mubr.f32.gmra.mrb[0].mxu0 %v3350
      %v3534 = vpop.f32.mrb[0].mxu0
      %v3535 = vadd.f32 0.0, %v3534
      %v3536 = vpop.f32.mrb[0].mxu0
      %3537 = vmatprep.mubr.f32.mxu0 0.0
      %3538 = vmatmul.mubr.f32.gmra.mrb[0].mxu0 %v3351
      %v3539 = vpop.f32.mrb[0].mxu0
      %v3540 = vadd.f32 0.0, %v3539
      %v3541 = vpop.f32.mrb[0].mxu0
      %3542 = vmatprep.mubr.f32.mxu0 0.0
      %3543 = vmatmul.mubr.f32.gmra.mrb[0].mxu0 %v3352
      %v3544 = vpop.f32.mrb[0].mxu0
      %v3545 = vadd.f32 0.0, %v3544
      %v3546 = vpop.f32.mrb[0].mxu0
      %3547 = vmatprep.mubr.f32.mxu0 0.0
      %3548 = vmatmul.mubr.f32.gmra.mrb[0].mxu0 %v3353
      %v3549 = vpop.f32.mrb[0].mxu0
      %v3550 = vadd.f32 0.0, %v3549
      %v3551 = vpop.f32.mrb[0].mxu0
      %3552 = vmatprep.mubr.f32.mxu0 0.0
      %3553 = vmatmul.mubr.f32.gmra.mrb[0].mxu0 %v3354
      %v3554 = vpop.f32.mrb[0].mxu0
      %v3555 = vadd.f32 0.0, %v3554
      %v3556 = vpop.f32.mrb[0].mxu0
      %3557 = vmatprep.mubr.f32.mxu0 0.0
      %3558 = vmatmul.mubr.f32.gmra.mrb[0].mxu0 %v3355
      %v3559 = vpop.f32.mrb[0].mxu0
      %v3560 = vadd.f32 0.0, %v3559
      %v3561 = vpop.f32.mrb[0].mxu0
      %3562 = vmatprep.mubr.f32.mxu0 0.0
      %3563 = vmatmul.mubr.f32.gmra.mrb[0].mxu0 %v3356
      %v3564 = vpop.f32.mrb[0].mxu0
      %v3565 = vadd.f32 0.0, %v3564
      %v3566 = vpop.f32.mrb[0].mxu0
      %3567 = vmatprep.mubr.f32.mxu0 0.0
      %3568 = vmatmul.mubr.f32.gmra.mrb[0].mxu0 %v3357
      %v3569 = vpop.f32.mrb[0].mxu0
      %v3570 = vadd.f32 0.0, %v3569
      %v3571 = vpop.f32.mrb[0].mxu0
      %3572 = vmatprep.mubr.f32.mxu0 0.0
      %3573 = vmatmul.mubr.f32.gmra.mrb[0].mxu0 %v3358
      %v3574 = vpop.f32.mrb[0].mxu0
      %v3575 = vadd.f32 0.0, %v3574
      %v3576 = vpop.f32.mrb[0].mxu0
      %3577 = vmatprep.mubr.f32.mxu0 0.0
      %3578 = vmatmul.mubr.f32.gmra.mrb[0].mxu0 %v3359
      %v3579 = vpop.f32.mrb[0].mxu0
      %v3580 = vadd.f32 0.0, %v3579
      %v3581 = vpop.f32.mrb[0].mxu0
      %3582 = vmatprep.mubr.f32.mxu0 0.0
      %3583 = vmatmul.mubr.f32.gmra.mrb[0].mxu0 %v3360
      %v3584 = vpop.f32.mrb[0].mxu0
      %v3585 = vadd.f32 0.0, %v3584
      %v3586 = vpop.f32.mrb[0].mxu0
      %3587 = vmatprep.mubr.f32.mxu0 0.0
      %3588 = vmatmul.mubr.f32.gmra.mrb[0].mxu0 %v3361
      %v3589 = vpop.f32.mrb[0].mxu0
      %v3590 = vadd.f32 0.0, %v3589
      %v3591 = vpop.f32.mrb[0].mxu0
      %3592 = vmatprep.mubr.f32.mxu0 0.0
      %3593 = vmatmul.mubr.f32.gmra.mrb[0].mxu0 %v3362
      %v3594 = vpop.f32.mrb[0].mxu0
      %v3595 = vadd.f32 0.0, %v3594
      %v3596 = vpop.f32.mrb[0].mxu0
      %3597 = vmatprep.mubr.f32.mxu0 0.0
      %3598 = vmatmul.mubr.f32.gmra.mrb[0].mxu0 %v3363
      %v3599 = vpop.f32.mrb[0].mxu0
      %v3600 = vadd.f32 0.0, %v3599
      %v3601 = vpop.f32.mrb[0].mxu0
      %3602 = vmatprep.mubr.f32.mxu0 0.0
      %3603 = vmatmul.mubr.f32.gmra.mrb[0].mxu0 %v3364
      %v3604 = vpop.f32.mrb[0].mxu0
      %v3605 = vadd.f32 0.0, %v3604
      %v3606 = vpop.f32.mrb[0].mxu0
      %3607 = vmatprep.mubr.f32.mxu0 0.0
      %3608 = vmatmul.mubr.f32.gmra.mrb[0].mxu0 %v3365
      %v3609 = vpop.f32.mrb[0].mxu0
      %v3610 = vadd.f32 0.0, %v3609
      %v3611 = vpop.f32.mrb[0].mxu0
      %3612 = vmatprep.mubr.f32.mxu0 0.0
      %3613 = vmatmul.mubr.f32.gmra.mrb[0].mxu0 %v3366
      %v3614 = vpop.f32.mrb[0].mxu0
      %v3615 = vadd.f32 0.0, %v3614
      %v3616 = vpop.f32.mrb[0].mxu0
      %3617 = vmatprep.mubr.f32.mxu0 0.0
      %3618 = vmatmul.mubr.f32.gmra.mrb[0].mxu0 %v3367
      %v3619 = vpop.f32.mrb[0].mxu0
      %v3620 = vadd.f32 0.0, %v3619
      %v3621 = vpop.f32.mrb[0].mxu0
      %3622 = vmatprep.mubr.f32.mxu0 0.0
      %3623 = vmatmul.mubr.f32.gmra.mrb[0].mxu0 %v3368
      %v3624 = vpop.f32.mrb[0].mxu0
      %v3625 = vadd.f32 0.0, %v3624
      %v3626 = vpop.f32.mrb[0].mxu0
      %3627 = vmatprep.mubr.f32.mxu0 0.0
      %3628 = vmatmul.mubr.f32.gmra.mrb[0].mxu0 %v3369
      %v3629 = vpop.f32.mrb[0].mxu0
      %v3630 = vadd.f32 0.0, %v3629
      %v3631 = vpop.f32.mrb[0].mxu0
      %3632 = vmatprep.mubr.f32.mxu0 0.0
      %3633 = vmatmul.mubr.f32.gmra.mrb[0].mxu0 %v3370
      %v3634 = vpop.f32.mrb[0].mxu0
      %v3635 = vadd.f32 0.0, %v3634
      %v3636 = vpop.f32.mrb[0].mxu0
      %3637 = vmatprep.mubr.f32.mxu0 0.0
      %3638 = vmatmul.mubr.f32.gmra.mrb[0].mxu0 %v3371
      %v3639 = vpop.f32.mrb[0].mxu0
      %v3640 = vadd.f32 0.0, %v3639
      %v3641 = vpop.f32.mrb[0].mxu0
      %3642 = vmatprep.mubr.f32.mxu0 0.0
      %3643 = vmatmul.mubr.f32.gmra.mrb[0].mxu0 %v3372
      %v3644 = vpop.f32.mrb[0].mxu0
      %v3645 = vadd.f32 0.0, %v3644
      %v3646 = vpop.f32.mrb[0].mxu0
      %3647 = vmatprep.mubr.f32.mxu0 0.0
      %3648 = vmatmul.mubr.f32.gmra.mrb[0].mxu0 %v3373
      %v3649 = vpop.f32.mrb[0].mxu0
      %v3650 = vadd.f32 0.0, %v3649
      %v3651 = vpop.f32.mrb[0].mxu0
      %3652 = vmatprep.mubr.f32.mxu0 0.0
      %3653 = vmatmul.mubr.f32.gmra.mrb[0].mxu0 %v3374
      %v3654 = vpop.f32.mrb[0].mxu0
      %v3655 = vadd.f32 0.0, %v3654
      %v3656 = vpop.f32.mrb[0].mxu0
      %3657 = vmatprep.mubr.f32.mxu0 0.0
      %3658 = vmatmul.mubr.f32.gmra.mrb[0].mxu0 %v3375
      %v3659 = vpop.f32.mrb[0].mxu0
      %v3660 = vadd.f32 0.0, %v3659
      %v3661 = vpop.f32.mrb[0].mxu0
      %3662 = vdwg.mxu0
      %v3663 = vadd.f32 %v3294, %v3460
      %v3664 = vadd.f32 %v3295, %v3465
      %v3665 = vadd.f32 %v3296, %v3470
      %v3666 = vadd.f32 %v3297, %v3475
      %v3667 = vadd.f32 %v3298, %v3480
      %v3668 = vadd.f32 %v3299, %v3485
      %v3669 = vadd.f32 %v3300, %v3490
      %v3670 = vadd.f32 %v3301, %v3495
      %v3671 = vadd.f32 %v3302, %v3500
      %v3672 = vadd.f32 %v3303, %v3505
      %v3673 = vadd.f32 %v3304, %v3510
      %v3674 = vadd.f32 %v3305, %v3515
      %v3675 = vadd.f32 %v3306, %v3520
      %v3676 = vadd.f32 %v3307, %v3525
      %v3677 = vadd.f32 %v3308, %v3530
      %v3678 = vadd.f32 %v3309, %v3535
      %v3679 = vadd.f32 %v3310, %v3540
      %v3680 = vadd.f32 %v3311, %v3545
      %v3681 = vadd.f32 %v3312, %v3550
      %v3682 = vadd.f32 %v3313, %v3555
      %v3683 = vadd.f32 %v3314, %v3560
      %v3684 = vadd.f32 %v3315, %v3565
      %v3685 = vadd.f32 %v3316, %v3570
      %v3686 = vadd.f32 %v3317, %v3575
      %v3687 = vadd.f32 %v3318, %v3580
      %v3688 = vadd.f32 %v3319, %v3585
      %v3689 = vadd.f32 %v3320, %v3590
      %v3690 = vadd.f32 %v3321, %v3595
      %v3691 = vadd.f32 %v3322, %v3600
      %v3692 = vadd.f32 %v3323, %v3605
      %v3693 = vadd.f32 %v3324, %v3610
      %v3694 = vadd.f32 %v3325, %v3615
      %v3695 = vadd.f32 %v3326, %v3620
      %v3696 = vadd.f32 %v3327, %v3625
      %v3697 = vadd.f32 %v3328, %v3630
      %v3698 = vadd.f32 %v3329, %v3635
      %v3699 = vadd.f32 %v3330, %v3640
      %v3700 = vadd.f32 %v3331, %v3645
      %v3701 = vadd.f32 %v3332, %v3650
      %v3702 = vadd.f32 %v3333, %v3655
      %v3703 = vadd.f32 %v3334, %v3660
      %v3704 = vld [vmem:[#allocation2 + $0x2a] sm:$0xff]
      %v3705 = vld [vmem:[#allocation2 + $0x32] sm:$0xff]
      %v3706 = vld [vmem:[#allocation2 + $0x3a] sm:$0xff]
      %v3707 = vld [vmem:[#allocation2 + $0x42] sm:$0xff]
      %v3708 = vld [vmem:[#allocation2 + $0x4a] sm:$0xff]
      %v3709 = vld [vmem:[#allocation2 + $0x52] sm:$0xff]
      %v3710 = vld [vmem:[#allocation2 + $0x5a] sm:$0xff]
      %v3711 = vld [vmem:[#allocation2 + $0x62] sm:$0xff]
      %v3712 = vld [vmem:[#allocation2 + $0x6a] sm:$0xff]
      %v3713 = vld [vmem:[#allocation2 + $0x72] sm:$0xff]
      %v3714 = vld [vmem:[#allocation2 + $0x7a] sm:$0xff]
      %v3715 = vld [vmem:[#allocation2 + $0x82] sm:$0xff]
      %v3716 = vld [vmem:[#allocation2 + $0x8a] sm:$0xff]
      %v3717 = vld [vmem:[#allocation2 + $0x92] sm:$0xff]
      %v3718 = vld [vmem:[#allocation2 + $0x9a] sm:$0xff]
      %v3719 = vld [vmem:[#allocation2 + $0xa2] sm:$0xff]
      %v3720 = vld [vmem:[#allocation2 + $0xaa] sm:$0xff]
      %v3721 = vld [vmem:[#allocation2 + $0xb2] sm:$0xff]
      %v3722 = vld [vmem:[#allocation2 + $0xba] sm:$0xff]
      %v3723 = vld [vmem:[#allocation2 + $0xc2] sm:$0xff]
      %v3724 = vld [vmem:[#allocation2 + $0xca] sm:$0xff]
      %v3725 = vld [vmem:[#allocation2 + $0xd2] sm:$0xff]
      %v3726 = vld [vmem:[#allocation2 + $0xda] sm:$0xff]
      %v3727 = vld [vmem:[#allocation2 + $0xe2] sm:$0xff]
      %v3728 = vld [vmem:[#allocation2 + $0xea] sm:$0xff]
      %v3729 = vld [vmem:[#allocation2 + $0xf2] sm:$0xff]
      %v3730 = vld [vmem:[#allocation2 + $0xfa] sm:$0xff]
      %v3731 = vld [vmem:[#allocation2 + $0x102] sm:$0xff]
      %v3732 = vld [vmem:[#allocation2 + $0x10a] sm:$0xff]
      %v3733 = vld [vmem:[#allocation2 + $0x112] sm:$0xff]
      %v3734 = vld [vmem:[#allocation2 + $0x11a] sm:$0xff]
      %v3735 = vld [vmem:[#allocation2 + $0x122] sm:$0xff]
      %v3736 = vld [vmem:[#allocation2 + $0x12a] sm:$0xff]
      %v3737 = vld [vmem:[#allocation2 + $0x132] sm:$0xff]
      %v3738 = vld [vmem:[#allocation2 + $0x13a] sm:$0xff]
      %v3739 = vld [vmem:[#allocation2 + $0x142] sm:$0xff]
      %v3740 = vld [vmem:[#allocation2 + $0x14a] sm:$0xff]
      %v3741 = vld [vmem:[#allocation2 + $0x152] sm:$0xff]
      %v3742 = vld [vmem:[#allocation2 + $0x15a] sm:$0xff]
      %v3743 = vld [vmem:[#allocation2 + $0x162] sm:$0xff]
      %v3744 = vld [vmem:[#allocation2 + $0x16a] sm:$0xff]
      %s3745 = scalar_lea.vmem %s6, 896
      %v3746 = vld [vmem:[%s3745] sm:$0xff]
      %v3747 = vld [vmem:[%s3745 + $0x8] sm:$0xff]
      %v3748 = vld [vmem:[%s3745 + $0x10] sm:$0xff]
      %v3749 = vld [vmem:[%s3745 + $0x18] sm:$0xff]
      %v3750 = vld [vmem:[%s3745 + $0x20] sm:$0xff]
      %v3751 = vld [vmem:[%s3745 + $0x28] sm:$0xff]
      %v3752 = vld [vmem:[%s3745 + $0x30] sm:$0xff]
      %v3753 = vld [vmem:[%s3745 + $0x38] sm:$0xff]
      %v3754 = vld [vmem:[%s3745 + $0x40] sm:$0xff]
      %v3755 = vld [vmem:[%s3745 + $0x48] sm:$0xff]
      %v3756 = vld [vmem:[%s3745 + $0x50] sm:$0xff]
      %v3757 = vld [vmem:[%s3745 + $0x58] sm:$0xff]
      %v3758 = vld [vmem:[%s3745 + $0x60] sm:$0xff]
      %v3759 = vld [vmem:[%s3745 + $0x68] sm:$0xff]
      %v3760 = vld [vmem:[%s3745 + $0x70] sm:$0xff]
      %v3761 = vld [vmem:[%s3745 + $0x78] sm:$0xff]
      %3762 = vmatprep.subr.mxu0 0.0
      %3763 = vmatpush1.msra.mxu0 %v3746
      %3764 = vmatprep.subr.mxu0 0.0
      %3765 = vmatpush1.msra.mxu0 %v3747
      %3766 = vmatprep.subr.mxu0 0.0
      %3767 = vmatpush1.msra.mxu0 %v3748
      %3768 = vmatprep.subr.mxu0 0.0
      %3769 = vmatpush1.msra.mxu0 %v3749
      %3770 = vmatprep.subr.mxu0 0.0
      %3771 = vmatpush1.msra.mxu0 %v3750
      %3772 = vmatprep.subr.mxu0 0.0
      %3773 = vmatpush1.msra.mxu0 %v3751
      %3774 = vmatprep.subr.mxu0 0.0
      %3775 = vmatpush1.msra.mxu0 %v3752
      %3776 = vmatprep.subr.mxu0 0.0
      %3777 = vmatpush1.msra.mxu0 %v3753
      %3778 = vmatprep.subr.mxu0 0.0
      %3779 = vmatpush1.msra.mxu0 %v3754
      %3780 = vmatprep.subr.mxu0 0.0
      %3781 = vmatpush1.msra.mxu0 %v3755
      %3782 = vmatprep.subr.mxu0 0.0
      %3783 = vmatpush1.msra.mxu0 %v3756
      %3784 = vmatprep.subr.mxu0 0.0
      %3785 = vmatpush1.msra.mxu0 %v3757
      %3786 = vmatprep.subr.mxu0 0.0
      %3787 = vmatpush1.msra.mxu0 %v3758
      %3788 = vmatprep.subr.mxu0 0.0
      %3789 = vmatpush1.msra.mxu0 %v3759
      %3790 = vmatprep.subr.mxu0 0.0
      %3791 = vmatpush1.msra.mxu0 %v3760
      %3792 = vmatprep.subr.mxu0 0.0
      %3793 = vmatpush1.msra.mxu0 %v3761
      %3794 = vmatprep.subr.mxu0 0.0
      %3795 = vmatpush1.msra.mxu0 0.0
      %3796 = vmatprep.subr.mxu0 0.0
      %3797 = vmatpush1.msra.mxu0 0.0
      %3798 = vmatprep.subr.mxu0 0.0
      %3799 = vmatpush1.msra.mxu0 0.0
      %3800 = vmatprep.subr.mxu0 0.0
      %3801 = vmatpush1.msra.mxu0 0.0
      %3802 = vmatprep.subr.mxu0 0.0
      %3803 = vmatpush1.msra.mxu0 0.0
      %3804 = vmatprep.subr.mxu0 0.0
      %3805 = vmatpush1.msra.mxu0 0.0
      %3806 = vmatprep.subr.mxu0 0.0
      %3807 = vmatpush1.msra.mxu0 0.0
      %3808 = vmatprep.subr.mxu0 0.0
      %3809 = vmatpush1.msra.mxu0 0.0
      %3810 = vmatprep.subr.mxu0 0.0
      %3811 = vmatpush1.msra.mxu0 0.0
      %3812 = vmatprep.subr.mxu0 0.0
      %3813 = vmatpush1.msra.mxu0 0.0
      %3814 = vmatprep.subr.mxu0 0.0
      %3815 = vmatpush1.msra.mxu0 0.0
      %3816 = vmatprep.subr.mxu0 0.0
      %3817 = vmatpush1.msra.mxu0 0.0
      %3818 = vmatprep.subr.mxu0 0.0
      %3819 = vmatpush1.msra.mxu0 0.0
      %3820 = vmatprep.subr.mxu0 0.0
      %3821 = vmatpush1.msra.mxu0 0.0
      %3822 = vmatprep.subr.mxu0 0.0
      %3823 = vmatpush1.msra.mxu0 0.0
      %3824 = vmatprep.subr.mxu0 0.0
      %3825 = vmatpush1.msra.mxu0 0.0
      %3826 = vmatprep.mubr.f32.mxu0 0.0
      %3827 = vmatmul.mubr.f32.gmra.mrb[0].mxu0 %v3704
      %v3828 = vpop.f32.mrb[0].mxu0
      %v3829 = vadd.f32 0.0, %v3828
      %v3830 = vpop.f32.mrb[0].mxu0
      %3831 = vmatprep.mubr.f32.mxu0 0.0
      %3832 = vmatmul.mubr.f32.gmra.mrb[0].mxu0 %v3705
      %v3833 = vpop.f32.mrb[0].mxu0
      %v3834 = vadd.f32 0.0, %v3833
      %v3835 = vpop.f32.mrb[0].mxu0
      %3836 = vmatprep.mubr.f32.mxu0 0.0
      %3837 = vmatmul.mubr.f32.gmra.mrb[0].mxu0 %v3706
      %v3838 = vpop.f32.mrb[0].mxu0
      %v3839 = vadd.f32 0.0, %v3838
      %v3840 = vpop.f32.mrb[0].mxu0
      %3841 = vmatprep.mubr.f32.mxu0 0.0
      %3842 = vmatmul.mubr.f32.gmra.mrb[0].mxu0 %v3707
      %v3843 = vpop.f32.mrb[0].mxu0
      %v3844 = vadd.f32 0.0, %v3843
      %v3845 = vpop.f32.mrb[0].mxu0
      %3846 = vmatprep.mubr.f32.mxu0 0.0
      %3847 = vmatmul.mubr.f32.gmra.mrb[0].mxu0 %v3708
      %v3848 = vpop.f32.mrb[0].mxu0
      %v3849 = vadd.f32 0.0, %v3848
      %v3850 = vpop.f32.mrb[0].mxu0
      %3851 = vmatprep.mubr.f32.mxu0 0.0
      %3852 = vmatmul.mubr.f32.gmra.mrb[0].mxu0 %v3709
      %v3853 = vpop.f32.mrb[0].mxu0
      %v3854 = vadd.f32 0.0, %v3853
      %v3855 = vpop.f32.mrb[0].mxu0
      %3856 = vmatprep.mubr.f32.mxu0 0.0
      %3857 = vmatmul.mubr.f32.gmra.mrb[0].mxu0 %v3710
      %v3858 = vpop.f32.mrb[0].mxu0
      %v3859 = vadd.f32 0.0, %v3858
      %v3860 = vpop.f32.mrb[0].mxu0
      %3861 = vmatprep.mubr.f32.mxu0 0.0
      %3862 = vmatmul.mubr.f32.gmra.mrb[0].mxu0 %v3711
      %v3863 = vpop.f32.mrb[0].mxu0
      %v3864 = vadd.f32 0.0, %v3863
      %v3865 = vpop.f32.mrb[0].mxu0
      %3866 = vmatprep.mubr.f32.mxu0 0.0
      %3867 = vmatmul.mubr.f32.gmra.mrb[0].mxu0 %v3712
      %v3868 = vpop.f32.mrb[0].mxu0
      %v3869 = vadd.f32 0.0, %v3868
      %v3870 = vpop.f32.mrb[0].mxu0
      %3871 = vmatprep.mubr.f32.mxu0 0.0
      %3872 = vmatmul.mubr.f32.gmra.mrb[0].mxu0 %v3713
      %v3873 = vpop.f32.mrb[0].mxu0
      %v3874 = vadd.f32 0.0, %v3873
      %v3875 = vpop.f32.mrb[0].mxu0
      %3876 = vmatprep.mubr.f32.mxu0 0.0
      %3877 = vmatmul.mubr.f32.gmra.mrb[0].mxu0 %v3714
      %v3878 = vpop.f32.mrb[0].mxu0
      %v3879 = vadd.f32 0.0, %v3878
      %v3880 = vpop.f32.mrb[0].mxu0
      %3881 = vmatprep.mubr.f32.mxu0 0.0
      %3882 = vmatmul.mubr.f32.gmra.mrb[0].mxu0 %v3715
      %v3883 = vpop.f32.mrb[0].mxu0
      %v3884 = vadd.f32 0.0, %v3883
      %v3885 = vpop.f32.mrb[0].mxu0
      %3886 = vmatprep.mubr.f32.mxu0 0.0
      %3887 = vmatmul.mubr.f32.gmra.mrb[0].mxu0 %v3716
      %v3888 = vpop.f32.mrb[0].mxu0
      %v3889 = vadd.f32 0.0, %v3888
      %v3890 = vpop.f32.mrb[0].mxu0
      %3891 = vmatprep.mubr.f32.mxu0 0.0
      %3892 = vmatmul.mubr.f32.gmra.mrb[0].mxu0 %v3717
      %v3893 = vpop.f32.mrb[0].mxu0
      %v3894 = vadd.f32 0.0, %v3893
      %v3895 = vpop.f32.mrb[0].mxu0
      %3896 = vmatprep.mubr.f32.mxu0 0.0
      %3897 = vmatmul.mubr.f32.gmra.mrb[0].mxu0 %v3718
      %v3898 = vpop.f32.mrb[0].mxu0
      %v3899 = vadd.f32 0.0, %v3898
      %v3900 = vpop.f32.mrb[0].mxu0
      %3901 = vmatprep.mubr.f32.mxu0 0.0
      %3902 = vmatmul.mubr.f32.gmra.mrb[0].mxu0 %v3719
      %v3903 = vpop.f32.mrb[0].mxu0
      %v3904 = vadd.f32 0.0, %v3903
      %v3905 = vpop.f32.mrb[0].mxu0
      %3906 = vmatprep.mubr.f32.mxu0 0.0
      %3907 = vmatmul.mubr.f32.gmra.mrb[0].mxu0 %v3720
      %v3908 = vpop.f32.mrb[0].mxu0
      %v3909 = vadd.f32 0.0, %v3908
      %v3910 = vpop.f32.mrb[0].mxu0
      %3911 = vmatprep.mubr.f32.mxu0 0.0
      %3912 = vmatmul.mubr.f32.gmra.mrb[0].mxu0 %v3721
      %v3913 = vpop.f32.mrb[0].mxu0
      %v3914 = vadd.f32 0.0, %v3913
      %v3915 = vpop.f32.mrb[0].mxu0
      %3916 = vmatprep.mubr.f32.mxu0 0.0
      %3917 = vmatmul.mubr.f32.gmra.mrb[0].mxu0 %v3722
      %v3918 = vpop.f32.mrb[0].mxu0
      %v3919 = vadd.f32 0.0, %v3918
      %v3920 = vpop.f32.mrb[0].mxu0
      %3921 = vmatprep.mubr.f32.mxu0 0.0
      %3922 = vmatmul.mubr.f32.gmra.mrb[0].mxu0 %v3723
      %v3923 = vpop.f32.mrb[0].mxu0
      %v3924 = vadd.f32 0.0, %v3923
      %v3925 = vpop.f32.mrb[0].mxu0
      %3926 = vmatprep.mubr.f32.mxu0 0.0
      %3927 = vmatmul.mubr.f32.gmra.mrb[0].mxu0 %v3724
      %v3928 = vpop.f32.mrb[0].mxu0
      %v3929 = vadd.f32 0.0, %v3928
      %v3930 = vpop.f32.mrb[0].mxu0
      %3931 = vmatprep.mubr.f32.mxu0 0.0
      %3932 = vmatmul.mubr.f32.gmra.mrb[0].mxu0 %v3725
      %v3933 = vpop.f32.mrb[0].mxu0
      %v3934 = vadd.f32 0.0, %v3933
      %v3935 = vpop.f32.mrb[0].mxu0
      %3936 = vmatprep.mubr.f32.mxu0 0.0
      %3937 = vmatmul.mubr.f32.gmra.mrb[0].mxu0 %v3726
      %v3938 = vpop.f32.mrb[0].mxu0
      %v3939 = vadd.f32 0.0, %v3938
      %v3940 = vpop.f32.mrb[0].mxu0
      %3941 = vmatprep.mubr.f32.mxu0 0.0
      %3942 = vmatmul.mubr.f32.gmra.mrb[0].mxu0 %v3727
      %v3943 = vpop.f32.mrb[0].mxu0
      %v3944 = vadd.f32 0.0, %v3943
      %v3945 = vpop.f32.mrb[0].mxu0
      %3946 = vmatprep.mubr.f32.mxu0 0.0
      %3947 = vmatmul.mubr.f32.gmra.mrb[0].mxu0 %v3728
      %v3948 = vpop.f32.mrb[0].mxu0
      %v3949 = vadd.f32 0.0, %v3948
      %v3950 = vpop.f32.mrb[0].mxu0
      %3951 = vmatprep.mubr.f32.mxu0 0.0
      %3952 = vmatmul.mubr.f32.gmra.mrb[0].mxu0 %v3729
      %v3953 = vpop.f32.mrb[0].mxu0
      %v3954 = vadd.f32 0.0, %v3953
      %v3955 = vpop.f32.mrb[0].mxu0
      %3956 = vmatprep.mubr.f32.mxu0 0.0
      %3957 = vmatmul.mubr.f32.gmra.mrb[0].mxu0 %v3730
      %v3958 = vpop.f32.mrb[0].mxu0
      %v3959 = vadd.f32 0.0, %v3958
      %v3960 = vpop.f32.mrb[0].mxu0
      %3961 = vmatprep.mubr.f32.mxu0 0.0
      %3962 = vmatmul.mubr.f32.gmra.mrb[0].mxu0 %v3731
      %v3963 = vpop.f32.mrb[0].mxu0
      %v3964 = vadd.f32 0.0, %v3963
      %v3965 = vpop.f32.mrb[0].mxu0
      %3966 = vmatprep.mubr.f32.mxu0 0.0
      %3967 = vmatmul.mubr.f32.gmra.mrb[0].mxu0 %v3732
      %v3968 = vpop.f32.mrb[0].mxu0
      %v3969 = vadd.f32 0.0, %v3968
      %v3970 = vpop.f32.mrb[0].mxu0
      %3971 = vmatprep.mubr.f32.mxu0 0.0
      %3972 = vmatmul.mubr.f32.gmra.mrb[0].mxu0 %v3733
      %v3973 = vpop.f32.mrb[0].mxu0
      %v3974 = vadd.f32 0.0, %v3973
      %v3975 = vpop.f32.mrb[0].mxu0
      %3976 = vmatprep.mubr.f32.mxu0 0.0
      %3977 = vmatmul.mubr.f32.gmra.mrb[0].mxu0 %v3734
      %v3978 = vpop.f32.mrb[0].mxu0
      %v3979 = vadd.f32 0.0, %v3978
      %v3980 = vpop.f32.mrb[0].mxu0
      %3981 = vmatprep.mubr.f32.mxu0 0.0
      %3982 = vmatmul.mubr.f32.gmra.mrb[0].mxu0 %v3735
      %v3983 = vpop.f32.mrb[0].mxu0
      %v3984 = vadd.f32 0.0, %v3983
      %v3985 = vpop.f32.mrb[0].mxu0
      %3986 = vmatprep.mubr.f32.mxu0 0.0
      %3987 = vmatmul.mubr.f32.gmra.mrb[0].mxu0 %v3736
      %v3988 = vpop.f32.mrb[0].mxu0
      %v3989 = vadd.f32 0.0, %v3988
      %v3990 = vpop.f32.mrb[0].mxu0
      %3991 = vmatprep.mubr.f32.mxu0 0.0
      %3992 = vmatmul.mubr.f32.gmra.mrb[0].mxu0 %v3737
      %v3993 = vpop.f32.mrb[0].mxu0
      %v3994 = vadd.f32 0.0, %v3993
      %v3995 = vpop.f32.mrb[0].mxu0
      %3996 = vmatprep.mubr.f32.mxu0 0.0
      %3997 = vmatmul.mubr.f32.gmra.mrb[0].mxu0 %v3738
      %v3998 = vpop.f32.mrb[0].mxu0
      %v3999 = vadd.f32 0.0, %v3998
      %v4000 = vpop.f32.mrb[0].mxu0
      %4001 = vmatprep.mubr.f32.mxu0 0.0
      %4002 = vmatmul.mubr.f32.gmra.mrb[0].mxu0 %v3739
      %v4003 = vpop.f32.mrb[0].mxu0
      %v4004 = vadd.f32 0.0, %v4003
      %v4005 = vpop.f32.mrb[0].mxu0
      %4006 = vmatprep.mubr.f32.mxu0 0.0
      %4007 = vmatmul.mubr.f32.gmra.mrb[0].mxu0 %v3740
      %v4008 = vpop.f32.mrb[0].mxu0
      %v4009 = vadd.f32 0.0, %v4008
      %v4010 = vpop.f32.mrb[0].mxu0
      %4011 = vmatprep.mubr.f32.mxu0 0.0
      %4012 = vmatmul.mubr.f32.gmra.mrb[0].mxu0 %v3741
      %v4013 = vpop.f32.mrb[0].mxu0
      %v4014 = vadd.f32 0.0, %v4013
      %v4015 = vpop.f32.mrb[0].mxu0
      %4016 = vmatprep.mubr.f32.mxu0 0.0
      %4017 = vmatmul.mubr.f32.gmra.mrb[0].mxu0 %v3742
      %v4018 = vpop.f32.mrb[0].mxu0
      %v4019 = vadd.f32 0.0, %v4018
      %v4020 = vpop.f32.mrb[0].mxu0
      %4021 = vmatprep.mubr.f32.mxu0 0.0
      %4022 = vmatmul.mubr.f32.gmra.mrb[0].mxu0 %v3743
      %v4023 = vpop.f32.mrb[0].mxu0
      %v4024 = vadd.f32 0.0, %v4023
      %v4025 = vpop.f32.mrb[0].mxu0
      %4026 = vmatprep.mubr.f32.mxu0 0.0
      %4027 = vmatmul.mubr.f32.gmra.mrb[0].mxu0 %v3744
      %v4028 = vpop.f32.mrb[0].mxu0
      %v4029 = vadd.f32 0.0, %v4028
      %v4030 = vpop.f32.mrb[0].mxu0
      %4031 = vdwg.mxu0
      %v4032 = vadd.f32 %v3663, %v3829
      %v4033 = vadd.f32 %v3664, %v3834
      %v4034 = vadd.f32 %v3665, %v3839
      %v4035 = vadd.f32 %v3666, %v3844
      %v4036 = vadd.f32 %v3667, %v3849
      %v4037 = vadd.f32 %v3668, %v3854
      %v4038 = vadd.f32 %v3669, %v3859
      %v4039 = vadd.f32 %v3670, %v3864
      %v4040 = vadd.f32 %v3671, %v3869
      %v4041 = vadd.f32 %v3672, %v3874
      %v4042 = vadd.f32 %v3673, %v3879
      %v4043 = vadd.f32 %v3674, %v3884
      %v4044 = vadd.f32 %v3675, %v3889
      %v4045 = vadd.f32 %v3676, %v3894
      %v4046 = vadd.f32 %v3677, %v3899
      %v4047 = vadd.f32 %v3678, %v3904
      %v4048 = vadd.f32 %v3679, %v3909
      %v4049 = vadd.f32 %v3680, %v3914
      %v4050 = vadd.f32 %v3681, %v3919
      %v4051 = vadd.f32 %v3682, %v3924
      %v4052 = vadd.f32 %v3683, %v3929
      %v4053 = vadd.f32 %v3684, %v3934
      %v4054 = vadd.f32 %v3685, %v3939
      %v4055 = vadd.f32 %v3686, %v3944
      %v4056 = vadd.f32 %v3687, %v3949
      %v4057 = vadd.f32 %v3688, %v3954
      %v4058 = vadd.f32 %v3689, %v3959
      %v4059 = vadd.f32 %v3690, %v3964
      %v4060 = vadd.f32 %v3691, %v3969
      %v4061 = vadd.f32 %v3692, %v3974
      %v4062 = vadd.f32 %v3693, %v3979
      %v4063 = vadd.f32 %v3694, %v3984
      %v4064 = vadd.f32 %v3695, %v3989
      %v4065 = vadd.f32 %v3696, %v3994
      %v4066 = vadd.f32 %v3697, %v3999
      %v4067 = vadd.f32 %v3698, %v4004
      %v4068 = vadd.f32 %v3699, %v4009
      %v4069 = vadd.f32 %v3700, %v4014
      %v4070 = vadd.f32 %v3701, %v4019
      %v4071 = vadd.f32 %v3702, %v4024
      %v4072 = vadd.f32 %v3703, %v4029
      %v4073 = vld [vmem:[#allocation2 + $0x2b] sm:$0xff]
      %v4074 = vld [vmem:[#allocation2 + $0x33] sm:$0xff]
      %v4075 = vld [vmem:[#allocation2 + $0x3b] sm:$0xff]
      %v4076 = vld [vmem:[#allocation2 + $0x43] sm:$0xff]
      %v4077 = vld [vmem:[#allocation2 + $0x4b] sm:$0xff]
      %v4078 = vld [vmem:[#allocation2 + $0x53] sm:$0xff]
      %v4079 = vld [vmem:[#allocation2 + $0x5b] sm:$0xff]
      %v4080 = vld [vmem:[#allocation2 + $0x63] sm:$0xff]
      %v4081 = vld [vmem:[#allocation2 + $0x6b] sm:$0xff]
      %v4082 = vld [vmem:[#allocation2 + $0x73] sm:$0xff]
      %v4083 = vld [vmem:[#allocation2 + $0x7b] sm:$0xff]
      %v4084 = vld [vmem:[#allocation2 + $0x83] sm:$0xff]
      %v4085 = vld [vmem:[#allocation2 + $0x8b] sm:$0xff]
      %v4086 = vld [vmem:[#allocation2 + $0x93] sm:$0xff]
      %v4087 = vld [vmem:[#allocation2 + $0x9b] sm:$0xff]
      %v4088 = vld [vmem:[#allocation2 + $0xa3] sm:$0xff]
      %v4089 = vld [vmem:[#allocation2 + $0xab] sm:$0xff]
      %v4090 = vld [vmem:[#allocation2 + $0xb3] sm:$0xff]
      %v4091 = vld [vmem:[#allocation2 + $0xbb] sm:$0xff]
      %v4092 = vld [vmem:[#allocation2 + $0xc3] sm:$0xff]
      %v4093 = vld [vmem:[#allocation2 + $0xcb] sm:$0xff]
      %v4094 = vld [vmem:[#allocation2 + $0xd3] sm:$0xff]
      %v4095 = vld [vmem:[#allocation2 + $0xdb] sm:$0xff]
      %v4096 = vld [vmem:[#allocation2 + $0xe3] sm:$0xff]
      %v4097 = vld [vmem:[#allocation2 + $0xeb] sm:$0xff]
      %v4098 = vld [vmem:[#allocation2 + $0xf3] sm:$0xff]
      %v4099 = vld [vmem:[#allocation2 + $0xfb] sm:$0xff]
      %v4100 = vld [vmem:[#allocation2 + $0x103] sm:$0xff]
      %v4101 = vld [vmem:[#allocation2 + $0x10b] sm:$0xff]
      %v4102 = vld [vmem:[#allocation2 + $0x113] sm:$0xff]
      %v4103 = vld [vmem:[#allocation2 + $0x11b] sm:$0xff]
      %v4104 = vld [vmem:[#allocation2 + $0x123] sm:$0xff]
      %v4105 = vld [vmem:[#allocation2 + $0x12b] sm:$0xff]
      %v4106 = vld [vmem:[#allocation2 + $0x133] sm:$0xff]
      %v4107 = vld [vmem:[#allocation2 + $0x13b] sm:$0xff]
      %v4108 = vld [vmem:[#allocation2 + $0x143] sm:$0xff]
      %v4109 = vld [vmem:[#allocation2 + $0x14b] sm:$0xff]
      %v4110 = vld [vmem:[#allocation2 + $0x153] sm:$0xff]
      %v4111 = vld [vmem:[#allocation2 + $0x15b] sm:$0xff]
      %v4112 = vld [vmem:[#allocation2 + $0x163] sm:$0xff]
      %v4113 = vld [vmem:[#allocation2 + $0x16b] sm:$0xff]
      %s4114 = scalar_lea.vmem %s6, 1024
      %v4115 = vld [vmem:[%s4114] sm:$0xff]
      %v4116 = vld [vmem:[%s4114 + $0x8] sm:$0xff]
      %v4117 = vld [vmem:[%s4114 + $0x10] sm:$0xff]
      %v4118 = vld [vmem:[%s4114 + $0x18] sm:$0xff]
      %v4119 = vld [vmem:[%s4114 + $0x20] sm:$0xff]
      %v4120 = vld [vmem:[%s4114 + $0x28] sm:$0xff]
      %v4121 = vld [vmem:[%s4114 + $0x30] sm:$0xff]
      %v4122 = vld [vmem:[%s4114 + $0x38] sm:$0xff]
      %v4123 = vld [vmem:[%s4114 + $0x40] sm:$0xff]
      %v4124 = vld [vmem:[%s4114 + $0x48] sm:$0xff]
      %v4125 = vld [vmem:[%s4114 + $0x50] sm:$0xff]
      %v4126 = vld [vmem:[%s4114 + $0x58] sm:$0xff]
      %v4127 = vld [vmem:[%s4114 + $0x60] sm:$0xff]
      %v4128 = vld [vmem:[%s4114 + $0x68] sm:$0xff]
      %v4129 = vld [vmem:[%s4114 + $0x70] sm:$0xff]
      %v4130 = vld [vmem:[%s4114 + $0x78] sm:$0xff]
      %4131 = vmatprep.subr.mxu0 0.0
      %4132 = vmatpush1.msra.mxu0 %v4115
      %4133 = vmatprep.subr.mxu0 0.0
      %4134 = vmatpush1.msra.mxu0 %v4116
      %4135 = vmatprep.subr.mxu0 0.0
      %4136 = vmatpush1.msra.mxu0 %v4117
      %4137 = vmatprep.subr.mxu0 0.0
      %4138 = vmatpush1.msra.mxu0 %v4118
      %4139 = vmatprep.subr.mxu0 0.0
      %4140 = vmatpush1.msra.mxu0 %v4119
      %4141 = vmatprep.subr.mxu0 0.0
      %4142 = vmatpush1.msra.mxu0 %v4120
      %4143 = vmatprep.subr.mxu0 0.0
      %4144 = vmatpush1.msra.mxu0 %v4121
      %4145 = vmatprep.subr.mxu0 0.0
      %4146 = vmatpush1.msra.mxu0 %v4122
      %4147 = vmatprep.subr.mxu0 0.0
      %4148 = vmatpush1.msra.mxu0 %v4123
      %4149 = vmatprep.subr.mxu0 0.0
      %4150 = vmatpush1.msra.mxu0 %v4124
      %4151 = vmatprep.subr.mxu0 0.0
      %4152 = vmatpush1.msra.mxu0 %v4125
      %4153 = vmatprep.subr.mxu0 0.0
      %4154 = vmatpush1.msra.mxu0 %v4126
      %4155 = vmatprep.subr.mxu0 0.0
      %4156 = vmatpush1.msra.mxu0 %v4127
      %4157 = vmatprep.subr.mxu0 0.0
      %4158 = vmatpush1.msra.mxu0 %v4128
      %4159 = vmatprep.subr.mxu0 0.0
      %4160 = vmatpush1.msra.mxu0 %v4129
      %4161 = vmatprep.subr.mxu0 0.0
      %4162 = vmatpush1.msra.mxu0 %v4130
      %4163 = vmatprep.subr.mxu0 0.0
      %4164 = vmatpush1.msra.mxu0 0.0
      %4165 = vmatprep.subr.mxu0 0.0
      %4166 = vmatpush1.msra.mxu0 0.0
      %4167 = vmatprep.subr.mxu0 0.0
      %4168 = vmatpush1.msra.mxu0 0.0
      %4169 = vmatprep.subr.mxu0 0.0
      %4170 = vmatpush1.msra.mxu0 0.0
      %4171 = vmatprep.subr.mxu0 0.0
      %4172 = vmatpush1.msra.mxu0 0.0
      %4173 = vmatprep.subr.mxu0 0.0
      %4174 = vmatpush1.msra.mxu0 0.0
      %4175 = vmatprep.subr.mxu0 0.0
      %4176 = vmatpush1.msra.mxu0 0.0
      %4177 = vmatprep.subr.mxu0 0.0
      %4178 = vmatpush1.msra.mxu0 0.0
      %4179 = vmatprep.subr.mxu0 0.0
      %4180 = vmatpush1.msra.mxu0 0.0
      %4181 = vmatprep.subr.mxu0 0.0
      %4182 = vmatpush1.msra.mxu0 0.0
      %4183 = vmatprep.subr.mxu0 0.0
      %4184 = vmatpush1.msra.mxu0 0.0
      %4185 = vmatprep.subr.mxu0 0.0
      %4186 = vmatpush1.msra.mxu0 0.0
      %4187 = vmatprep.subr.mxu0 0.0
      %4188 = vmatpush1.msra.mxu0 0.0
      %4189 = vmatprep.subr.mxu0 0.0
      %4190 = vmatpush1.msra.mxu0 0.0
      %4191 = vmatprep.subr.mxu0 0.0
      %4192 = vmatpush1.msra.mxu0 0.0
      %4193 = vmatprep.subr.mxu0 0.0
      %4194 = vmatpush1.msra.mxu0 0.0
      %4195 = vmatprep.mubr.f32.mxu0 0.0
      %4196 = vmatmul.mubr.f32.gmra.mrb[0].mxu0 %v4073
      %v4197 = vpop.f32.mrb[0].mxu0
      %v4198 = vadd.f32 0.0, %v4197
      %v4199 = vpop.f32.mrb[0].mxu0
      %4200 = vmatprep.mubr.f32.mxu0 0.0
      %4201 = vmatmul.mubr.f32.gmra.mrb[0].mxu0 %v4074
      %v4202 = vpop.f32.mrb[0].mxu0
      %v4203 = vadd.f32 0.0, %v4202
      %v4204 = vpop.f32.mrb[0].mxu0
      %4205 = vmatprep.mubr.f32.mxu0 0.0
      %4206 = vmatmul.mubr.f32.gmra.mrb[0].mxu0 %v4075
      %v4207 = vpop.f32.mrb[0].mxu0
      %v4208 = vadd.f32 0.0, %v4207
      %v4209 = vpop.f32.mrb[0].mxu0
      %4210 = vmatprep.mubr.f32.mxu0 0.0
      %4211 = vmatmul.mubr.f32.gmra.mrb[0].mxu0 %v4076
      %v4212 = vpop.f32.mrb[0].mxu0
      %v4213 = vadd.f32 0.0, %v4212
      %v4214 = vpop.f32.mrb[0].mxu0
      %4215 = vmatprep.mubr.f32.mxu0 0.0
      %4216 = vmatmul.mubr.f32.gmra.mrb[0].mxu0 %v4077
      %v4217 = vpop.f32.mrb[0].mxu0
      %v4218 = vadd.f32 0.0, %v4217
      %v4219 = vpop.f32.mrb[0].mxu0
      %4220 = vmatprep.mubr.f32.mxu0 0.0
      %4221 = vmatmul.mubr.f32.gmra.mrb[0].mxu0 %v4078
      %v4222 = vpop.f32.mrb[0].mxu0
      %v4223 = vadd.f32 0.0, %v4222
      %v4224 = vpop.f32.mrb[0].mxu0
      %4225 = vmatprep.mubr.f32.mxu0 0.0
      %4226 = vmatmul.mubr.f32.gmra.mrb[0].mxu0 %v4079
      %v4227 = vpop.f32.mrb[0].mxu0
      %v4228 = vadd.f32 0.0, %v4227
      %v4229 = vpop.f32.mrb[0].mxu0
      %4230 = vmatprep.mubr.f32.mxu0 0.0
      %4231 = vmatmul.mubr.f32.gmra.mrb[0].mxu0 %v4080
      %v4232 = vpop.f32.mrb[0].mxu0
      %v4233 = vadd.f32 0.0, %v4232
      %v4234 = vpop.f32.mrb[0].mxu0
      %4235 = vmatprep.mubr.f32.mxu0 0.0
      %4236 = vmatmul.mubr.f32.gmra.mrb[0].mxu0 %v4081
      %v4237 = vpop.f32.mrb[0].mxu0
      %v4238 = vadd.f32 0.0, %v4237
      %v4239 = vpop.f32.mrb[0].mxu0
      %4240 = vmatprep.mubr.f32.mxu0 0.0
      %4241 = vmatmul.mubr.f32.gmra.mrb[0].mxu0 %v4082
      %v4242 = vpop.f32.mrb[0].mxu0
      %v4243 = vadd.f32 0.0, %v4242
      %v4244 = vpop.f32.mrb[0].mxu0
      %4245 = vmatprep.mubr.f32.mxu0 0.0
      %4246 = vmatmul.mubr.f32.gmra.mrb[0].mxu0 %v4083
      %v4247 = vpop.f32.mrb[0].mxu0
      %v4248 = vadd.f32 0.0, %v4247
      %v4249 = vpop.f32.mrb[0].mxu0
      %4250 = vmatprep.mubr.f32.mxu0 0.0
      %4251 = vmatmul.mubr.f32.gmra.mrb[0].mxu0 %v4084
      %v4252 = vpop.f32.mrb[0].mxu0
      %v4253 = vadd.f32 0.0, %v4252
      %v4254 = vpop.f32.mrb[0].mxu0
      %4255 = vmatprep.mubr.f32.mxu0 0.0
      %4256 = vmatmul.mubr.f32.gmra.mrb[0].mxu0 %v4085
      %v4257 = vpop.f32.mrb[0].mxu0
      %v4258 = vadd.f32 0.0, %v4257
      %v4259 = vpop.f32.mrb[0].mxu0
      %4260 = vmatprep.mubr.f32.mxu0 0.0
      %4261 = vmatmul.mubr.f32.gmra.mrb[0].mxu0 %v4086
      %v4262 = vpop.f32.mrb[0].mxu0
      %v4263 = vadd.f32 0.0, %v4262
      %v4264 = vpop.f32.mrb[0].mxu0
      %4265 = vmatprep.mubr.f32.mxu0 0.0
      %4266 = vmatmul.mubr.f32.gmra.mrb[0].mxu0 %v4087
      %v4267 = vpop.f32.mrb[0].mxu0
      %v4268 = vadd.f32 0.0, %v4267
      %v4269 = vpop.f32.mrb[0].mxu0
      %4270 = vmatprep.mubr.f32.mxu0 0.0
      %4271 = vmatmul.mubr.f32.gmra.mrb[0].mxu0 %v4088
      %v4272 = vpop.f32.mrb[0].mxu0
      %v4273 = vadd.f32 0.0, %v4272
      %v4274 = vpop.f32.mrb[0].mxu0
      %4275 = vmatprep.mubr.f32.mxu0 0.0
      %4276 = vmatmul.mubr.f32.gmra.mrb[0].mxu0 %v4089
      %v4277 = vpop.f32.mrb[0].mxu0
      %v4278 = vadd.f32 0.0, %v4277
      %v4279 = vpop.f32.mrb[0].mxu0
      %4280 = vmatprep.mubr.f32.mxu0 0.0
      %4281 = vmatmul.mubr.f32.gmra.mrb[0].mxu0 %v4090
      %v4282 = vpop.f32.mrb[0].mxu0
      %v4283 = vadd.f32 0.0, %v4282
      %v4284 = vpop.f32.mrb[0].mxu0
      %4285 = vmatprep.mubr.f32.mxu0 0.0
      %4286 = vmatmul.mubr.f32.gmra.mrb[0].mxu0 %v4091
      %v4287 = vpop.f32.mrb[0].mxu0
      %v4288 = vadd.f32 0.0, %v4287
      %v4289 = vpop.f32.mrb[0].mxu0
      %4290 = vmatprep.mubr.f32.mxu0 0.0
      %4291 = vmatmul.mubr.f32.gmra.mrb[0].mxu0 %v4092
      %v4292 = vpop.f32.mrb[0].mxu0
      %v4293 = vadd.f32 0.0, %v4292
      %v4294 = vpop.f32.mrb[0].mxu0
      %4295 = vmatprep.mubr.f32.mxu0 0.0
      %4296 = vmatmul.mubr.f32.gmra.mrb[0].mxu0 %v4093
      %v4297 = vpop.f32.mrb[0].mxu0
      %v4298 = vadd.f32 0.0, %v4297
      %v4299 = vpop.f32.mrb[0].mxu0
      %4300 = vmatprep.mubr.f32.mxu0 0.0
      %4301 = vmatmul.mubr.f32.gmra.mrb[0].mxu0 %v4094
      %v4302 = vpop.f32.mrb[0].mxu0
      %v4303 = vadd.f32 0.0, %v4302
      %v4304 = vpop.f32.mrb[0].mxu0
      %4305 = vmatprep.mubr.f32.mxu0 0.0
      %4306 = vmatmul.mubr.f32.gmra.mrb[0].mxu0 %v4095
      %v4307 = vpop.f32.mrb[0].mxu0
      %v4308 = vadd.f32 0.0, %v4307
      %v4309 = vpop.f32.mrb[0].mxu0
      %4310 = vmatprep.mubr.f32.mxu0 0.0
      %4311 = vmatmul.mubr.f32.gmra.mrb[0].mxu0 %v4096
      %v4312 = vpop.f32.mrb[0].mxu0
      %v4313 = vadd.f32 0.0, %v4312
      %v4314 = vpop.f32.mrb[0].mxu0
      %4315 = vmatprep.mubr.f32.mxu0 0.0
      %4316 = vmatmul.mubr.f32.gmra.mrb[0].mxu0 %v4097
      %v4317 = vpop.f32.mrb[0].mxu0
      %v4318 = vadd.f32 0.0, %v4317
      %v4319 = vpop.f32.mrb[0].mxu0
      %4320 = vmatprep.mubr.f32.mxu0 0.0
      %4321 = vmatmul.mubr.f32.gmra.mrb[0].mxu0 %v4098
      %v4322 = vpop.f32.mrb[0].mxu0
      %v4323 = vadd.f32 0.0, %v4322
      %v4324 = vpop.f32.mrb[0].mxu0
      %4325 = vmatprep.mubr.f32.mxu0 0.0
      %4326 = vmatmul.mubr.f32.gmra.mrb[0].mxu0 %v4099
      %v4327 = vpop.f32.mrb[0].mxu0
      %v4328 = vadd.f32 0.0, %v4327
      %v4329 = vpop.f32.mrb[0].mxu0
      %4330 = vmatprep.mubr.f32.mxu0 0.0
      %4331 = vmatmul.mubr.f32.gmra.mrb[0].mxu0 %v4100
      %v4332 = vpop.f32.mrb[0].mxu0
      %v4333 = vadd.f32 0.0, %v4332
      %v4334 = vpop.f32.mrb[0].mxu0
      %4335 = vmatprep.mubr.f32.mxu0 0.0
      %4336 = vmatmul.mubr.f32.gmra.mrb[0].mxu0 %v4101
      %v4337 = vpop.f32.mrb[0].mxu0
      %v4338 = vadd.f32 0.0, %v4337
      %v4339 = vpop.f32.mrb[0].mxu0
      %4340 = vmatprep.mubr.f32.mxu0 0.0
      %4341 = vmatmul.mubr.f32.gmra.mrb[0].mxu0 %v4102
      %v4342 = vpop.f32.mrb[0].mxu0
      %v4343 = vadd.f32 0.0, %v4342
      %v4344 = vpop.f32.mrb[0].mxu0
      %4345 = vmatprep.mubr.f32.mxu0 0.0
      %4346 = vmatmul.mubr.f32.gmra.mrb[0].mxu0 %v4103
      %v4347 = vpop.f32.mrb[0].mxu0
      %v4348 = vadd.f32 0.0, %v4347
      %v4349 = vpop.f32.mrb[0].mxu0
      %4350 = vmatprep.mubr.f32.mxu0 0.0
      %4351 = vmatmul.mubr.f32.gmra.mrb[0].mxu0 %v4104
      %v4352 = vpop.f32.mrb[0].mxu0
      %v4353 = vadd.f32 0.0, %v4352
      %v4354 = vpop.f32.mrb[0].mxu0
      %4355 = vmatprep.mubr.f32.mxu0 0.0
      %4356 = vmatmul.mubr.f32.gmra.mrb[0].mxu0 %v4105
      %v4357 = vpop.f32.mrb[0].mxu0
      %v4358 = vadd.f32 0.0, %v4357
      %v4359 = vpop.f32.mrb[0].mxu0
      %4360 = vmatprep.mubr.f32.mxu0 0.0
      %4361 = vmatmul.mubr.f32.gmra.mrb[0].mxu0 %v4106
      %v4362 = vpop.f32.mrb[0].mxu0
      %v4363 = vadd.f32 0.0, %v4362
      %v4364 = vpop.f32.mrb[0].mxu0
      %4365 = vmatprep.mubr.f32.mxu0 0.0
      %4366 = vmatmul.mubr.f32.gmra.mrb[0].mxu0 %v4107
      %v4367 = vpop.f32.mrb[0].mxu0
      %v4368 = vadd.f32 0.0, %v4367
      %v4369 = vpop.f32.mrb[0].mxu0
      %4370 = vmatprep.mubr.f32.mxu0 0.0
      %4371 = vmatmul.mubr.f32.gmra.mrb[0].mxu0 %v4108
      %v4372 = vpop.f32.mrb[0].mxu0
      %v4373 = vadd.f32 0.0, %v4372
      %v4374 = vpop.f32.mrb[0].mxu0
      %4375 = vmatprep.mubr.f32.mxu0 0.0
      %4376 = vmatmul.mubr.f32.gmra.mrb[0].mxu0 %v4109
      %v4377 = vpop.f32.mrb[0].mxu0
      %v4378 = vadd.f32 0.0, %v4377
      %v4379 = vpop.f32.mrb[0].mxu0
      %4380 = vmatprep.mubr.f32.mxu0 0.0
      %4381 = vmatmul.mubr.f32.gmra.mrb[0].mxu0 %v4110
      %v4382 = vpop.f32.mrb[0].mxu0
      %v4383 = vadd.f32 0.0, %v4382
      %v4384 = vpop.f32.mrb[0].mxu0
      %4385 = vmatprep.mubr.f32.mxu0 0.0
      %4386 = vmatmul.mubr.f32.gmra.mrb[0].mxu0 %v4111
      %v4387 = vpop.f32.mrb[0].mxu0
      %v4388 = vadd.f32 0.0, %v4387
      %v4389 = vpop.f32.mrb[0].mxu0
      %4390 = vmatprep.mubr.f32.mxu0 0.0
      %4391 = vmatmul.mubr.f32.gmra.mrb[0].mxu0 %v4112
      %v4392 = vpop.f32.mrb[0].mxu0
      %v4393 = vadd.f32 0.0, %v4392
      %v4394 = vpop.f32.mrb[0].mxu0
      %4395 = vmatprep.mubr.f32.mxu0 0.0
      %4396 = vmatmul.mubr.f32.gmra.mrb[0].mxu0 %v4113
      %v4397 = vpop.f32.mrb[0].mxu0
      %v4398 = vadd.f32 0.0, %v4397
      %v4399 = vpop.f32.mrb[0].mxu0
      %4400 = vdwg.mxu0
      %v4401 = vadd.f32 %v4032, %v4198
      %v4402 = vadd.f32 %v4033, %v4203
      %v4403 = vadd.f32 %v4034, %v4208
      %v4404 = vadd.f32 %v4035, %v4213
      %v4405 = vadd.f32 %v4036, %v4218
      %v4406 = vadd.f32 %v4037, %v4223
      %v4407 = vadd.f32 %v4038, %v4228
      %v4408 = vadd.f32 %v4039, %v4233
      %v4409 = vadd.f32 %v4040, %v4238
      %v4410 = vadd.f32 %v4041, %v4243
      %v4411 = vadd.f32 %v4042, %v4248
      %v4412 = vadd.f32 %v4043, %v4253
      %v4413 = vadd.f32 %v4044, %v4258
      %v4414 = vadd.f32 %v4045, %v4263
      %v4415 = vadd.f32 %v4046, %v4268
      %v4416 = vadd.f32 %v4047, %v4273
      %v4417 = vadd.f32 %v4048, %v4278
      %v4418 = vadd.f32 %v4049, %v4283
      %v4419 = vadd.f32 %v4050, %v4288
      %v4420 = vadd.f32 %v4051, %v4293
      %v4421 = vadd.f32 %v4052, %v4298
      %v4422 = vadd.f32 %v4053, %v4303
      %v4423 = vadd.f32 %v4054, %v4308
      %v4424 = vadd.f32 %v4055, %v4313
      %v4425 = vadd.f32 %v4056, %v4318
      %v4426 = vadd.f32 %v4057, %v4323
      %v4427 = vadd.f32 %v4058, %v4328
      %v4428 = vadd.f32 %v4059, %v4333
      %v4429 = vadd.f32 %v4060, %v4338
      %v4430 = vadd.f32 %v4061, %v4343
      %v4431 = vadd.f32 %v4062, %v4348
      %v4432 = vadd.f32 %v4063, %v4353
      %v4433 = vadd.f32 %v4064, %v4358
      %v4434 = vadd.f32 %v4065, %v4363
      %v4435 = vadd.f32 %v4066, %v4368
      %v4436 = vadd.f32 %v4067, %v4373
      %v4437 = vadd.f32 %v4068, %v4378
      %v4438 = vadd.f32 %v4069, %v4383
      %v4439 = vadd.f32 %v4070, %v4388
      %v4440 = vadd.f32 %v4071, %v4393
      %v4441 = vadd.f32 %v4072, %v4398
      %v4442 = vadd.f32 %v610, %v4401
      %v4443 = vadd.f32 %v611, %v4402
      %v4444 = vadd.f32 %v612, %v4403
      %v4445 = vadd.f32 %v613, %v4404
      %v4446 = vadd.f32 %v614, %v4405
      %v4447 = vadd.f32 %v615, %v4406
      %v4448 = vadd.f32 %v616, %v4407
      %v4449 = vadd.f32 %v617, %v4408
      %v4450 = vadd.f32 %v618, %v4409
      %v4451 = vadd.f32 %v619, %v4410
      %v4452 = vadd.f32 %v620, %v4411
      %v4453 = vadd.f32 %v621, %v4412
      %v4454 = vadd.f32 %v622, %v4413
      %v4455 = vadd.f32 %v623, %v4414
      %v4456 = vadd.f32 %v624, %v4415
      %v4457 = vadd.f32 %v625, %v4416
      %v4458 = vadd.f32 %v626, %v4417
      %v4459 = vadd.f32 %v627, %v4418
      %v4460 = vadd.f32 %v628, %v4419
      %v4461 = vadd.f32 %v629, %v4420
      %v4462 = vadd.f32 %v630, %v4421
      %v4463 = vadd.f32 %v631, %v4422
      %v4464 = vadd.f32 %v632, %v4423
      %v4465 = vadd.f32 %v633, %v4424
      %v4466 = vadd.f32 %v634, %v4425
      %v4467 = vadd.f32 %v635, %v4426
      %v4468 = vadd.f32 %v636, %v4427
      %v4469 = vadd.f32 %v637, %v4428
      %v4470 = vadd.f32 %v638, %v4429
      %v4471 = vadd.f32 %v639, %v4430
      %v4472 = vadd.f32 %v640, %v4431
      %v4473 = vadd.f32 %v641, %v4432
      %v4474 = vadd.f32 %v642, %v4433
      %v4475 = vadd.f32 %v643, %v4434
      %v4476 = vadd.f32 %v644, %v4435
      %v4477 = vadd.f32 %v645, %v4436
      %v4478 = vadd.f32 %v646, %v4437
      %v4479 = vadd.f32 %v647, %v4438
      %v4480 = vadd.f32 %v648, %v4439
      %v4481 = vadd.f32 %v649, %v4440
      %v4482 = vadd.f32 %v650, %v4441
      %v4483 = vld [vmem:[%s7] sm:$0x1]
      %v4485 = vlaneseq
      %v4486 = vshrl.u32 %v4485, 7
      %v4487 = vsub.s32 0, %v4486
      %v4488 = vrot.slane %v4483, %v4487
      %v4490 = vadd.f32 %v4442, %v4488
      %v4491 = vadd.f32 %v4443, %v4488
      %v4492 = vadd.f32 %v4444, %v4488
      %v4493 = vadd.f32 %v4445, %v4488
      %v4494 = vadd.f32 %v4446, %v4488
      %v4495 = vadd.f32 %v4447, %v4488
      %v4496 = vadd.f32 %v4448, %v4488
      %v4497 = vadd.f32 %v4449, %v4488
      %v4498 = vadd.f32 %v4450, %v4488
      %v4499 = vadd.f32 %v4451, %v4488
      %v4500 = vadd.f32 %v4452, %v4488
      %v4501 = vadd.f32 %v4453, %v4488
      %v4502 = vadd.f32 %v4454, %v4488
      %v4503 = vadd.f32 %v4455, %v4488
      %v4504 = vadd.f32 %v4456, %v4488
      %v4505 = vadd.f32 %v4457, %v4488
      %v4506 = vadd.f32 %v4458, %v4488
      %v4507 = vadd.f32 %v4459, %v4488
      %v4508 = vadd.f32 %v4460, %v4488
      %v4509 = vadd.f32 %v4461, %v4488
      %v4510 = vadd.f32 %v4462, %v4488
      %v4511 = vadd.f32 %v4463, %v4488
      %v4512 = vadd.f32 %v4464, %v4488
      %v4513 = vadd.f32 %v4465, %v4488
      %v4514 = vadd.f32 %v4466, %v4488
      %v4515 = vadd.f32 %v4467, %v4488
      %v4516 = vadd.f32 %v4468, %v4488
      %v4517 = vadd.f32 %v4469, %v4488
      %v4518 = vadd.f32 %v4470, %v4488
      %v4519 = vadd.f32 %v4471, %v4488
      %v4520 = vadd.f32 %v4472, %v4488
      %v4521 = vadd.f32 %v4473, %v4488
      %v4522 = vadd.f32 %v4474, %v4488
      %v4523 = vadd.f32 %v4475, %v4488
      %v4524 = vadd.f32 %v4476, %v4488
      %v4525 = vadd.f32 %v4477, %v4488
      %v4526 = vadd.f32 %v4478, %v4488
      %v4527 = vadd.f32 %v4479, %v4488
      %v4528 = vadd.f32 %v4480, %v4488
      %v4529 = vadd.f32 %v4481, %v4488
      %v4530 = vadd.f32 %v4482, %v4488
      %v4531 = vld [vmem:[%s8] sm:$0x1]
      %v4533 = vlaneseq
      %v4534 = vshrl.u32 %v4533, 7
      %v4535 = vsub.s32 0, %v4534
      %v4536 = vrot.slane %v4531, %v4535
      %v4538 = vmul.f32 %v4490, %v4536
      %v4539 = vmul.f32 %v4491, %v4536
      %v4540 = vmul.f32 %v4492, %v4536
      %v4541 = vmul.f32 %v4493, %v4536
      %v4542 = vmul.f32 %v4494, %v4536
      %v4543 = vmul.f32 %v4495, %v4536
      %v4544 = vmul.f32 %v4496, %v4536
      %v4545 = vmul.f32 %v4497, %v4536
      %v4546 = vmul.f32 %v4498, %v4536
      %v4547 = vmul.f32 %v4499, %v4536
      %v4548 = vmul.f32 %v4500, %v4536
      %v4549 = vmul.f32 %v4501, %v4536
      %v4550 = vmul.f32 %v4502, %v4536
      %v4551 = vmul.f32 %v4503, %v4536
      %v4552 = vmul.f32 %v4504, %v4536
      %v4553 = vmul.f32 %v4505, %v4536
      %v4554 = vmul.f32 %v4506, %v4536
      %v4555 = vmul.f32 %v4507, %v4536
      %v4556 = vmul.f32 %v4508, %v4536
      %v4557 = vmul.f32 %v4509, %v4536
      %v4558 = vmul.f32 %v4510, %v4536
      %v4559 = vmul.f32 %v4511, %v4536
      %v4560 = vmul.f32 %v4512, %v4536
      %v4561 = vmul.f32 %v4513, %v4536
      %v4562 = vmul.f32 %v4514, %v4536
      %v4563 = vmul.f32 %v4515, %v4536
      %v4564 = vmul.f32 %v4516, %v4536
      %v4565 = vmul.f32 %v4517, %v4536
      %v4566 = vmul.f32 %v4518, %v4536
      %v4567 = vmul.f32 %v4519, %v4536
      %v4568 = vmul.f32 %v4520, %v4536
      %v4569 = vmul.f32 %v4521, %v4536
      %v4570 = vmul.f32 %v4522, %v4536
      %v4571 = vmul.f32 %v4523, %v4536
      %v4572 = vmul.f32 %v4524, %v4536
      %v4573 = vmul.f32 %v4525, %v4536
      %v4574 = vmul.f32 %v4526, %v4536
      %v4575 = vmul.f32 %v4527, %v4536
      %v4576 = vmul.f32 %v4528, %v4536
      %v4577 = vmul.f32 %v4529, %v4536
      %v4578 = vmul.f32 %v4530, %v4536
      %v4579 = vld [vmem:[%s9] sm:$0x1]
      %v4581 = vlaneseq
      %v4582 = vshrl.u32 %v4581, 7
      %v4583 = vsub.s32 0, %v4582
      %v4584 = vrot.slane %v4579, %v4583
      %v4586 = vadd.f32 %v4538, %v4584
      %v4587 = vadd.f32 %v4539, %v4584
      %v4588 = vadd.f32 %v4540, %v4584
      %v4589 = vadd.f32 %v4541, %v4584
      %v4590 = vadd.f32 %v4542, %v4584
      %v4591 = vadd.f32 %v4543, %v4584
      %v4592 = vadd.f32 %v4544, %v4584
      %v4593 = vadd.f32 %v4545, %v4584
      %v4594 = vadd.f32 %v4546, %v4584
      %v4595 = vadd.f32 %v4547, %v4584
      %v4596 = vadd.f32 %v4548, %v4584
      %v4597 = vadd.f32 %v4549, %v4584
      %v4598 = vadd.f32 %v4550, %v4584
      %v4599 = vadd.f32 %v4551, %v4584
      %v4600 = vadd.f32 %v4552, %v4584
      %v4601 = vadd.f32 %v4553, %v4584
      %v4602 = vadd.f32 %v4554, %v4584
      %v4603 = vadd.f32 %v4555, %v4584
      %v4604 = vadd.f32 %v4556, %v4584
      %v4605 = vadd.f32 %v4557, %v4584
      %v4606 = vadd.f32 %v4558, %v4584
      %v4607 = vadd.f32 %v4559, %v4584
      %v4608 = vadd.f32 %v4560, %v4584
      %v4609 = vadd.f32 %v4561, %v4584
      %v4610 = vadd.f32 %v4562, %v4584
      %v4611 = vadd.f32 %v4563, %v4584
      %v4612 = vadd.f32 %v4564, %v4584
      %v4613 = vadd.f32 %v4565, %v4584
      %v4614 = vadd.f32 %v4566, %v4584
      %v4615 = vadd.f32 %v4567, %v4584
      %v4616 = vadd.f32 %v4568, %v4584
      %v4617 = vadd.f32 %v4569, %v4584
      %v4618 = vadd.f32 %v4570, %v4584
      %v4619 = vadd.f32 %v4571, %v4584
      %v4620 = vadd.f32 %v4572, %v4584
      %v4621 = vadd.f32 %v4573, %v4584
      %v4622 = vadd.f32 %v4574, %v4584
      %v4623 = vadd.f32 %v4575, %v4584
      %v4624 = vadd.f32 %v4576, %v4584
      %v4625 = vadd.f32 %v4577, %v4584
      %v4626 = vadd.f32 %v4578, %v4584
      %v4627 = vmax.f32 %v4586, 0.0
      %v4628 = vmax.f32 %v4587, 0.0
      %v4629 = vmax.f32 %v4588, 0.0
      %v4630 = vmax.f32 %v4589, 0.0
      %v4631 = vmax.f32 %v4590, 0.0
      %v4632 = vmax.f32 %v4591, 0.0
      %v4633 = vmax.f32 %v4592, 0.0
      %v4634 = vmax.f32 %v4593, 0.0
      %v4635 = vmax.f32 %v4594, 0.0
      %v4636 = vmax.f32 %v4595, 0.0
      %v4637 = vmax.f32 %v4596, 0.0
      %v4638 = vmax.f32 %v4597, 0.0
      %v4639 = vmax.f32 %v4598, 0.0
      %v4640 = vmax.f32 %v4599, 0.0
      %v4641 = vmax.f32 %v4600, 0.0
      %v4642 = vmax.f32 %v4601, 0.0
      %v4643 = vmax.f32 %v4602, 0.0
      %v4644 = vmax.f32 %v4603, 0.0
      %v4645 = vmax.f32 %v4604, 0.0
      %v4646 = vmax.f32 %v4605, 0.0
      %v4647 = vmax.f32 %v4606, 0.0
      %v4648 = vmax.f32 %v4607, 0.0
      %v4649 = vmax.f32 %v4608, 0.0
      %v4650 = vmax.f32 %v4609, 0.0
      %v4651 = vmax.f32 %v4610, 0.0
      %v4652 = vmax.f32 %v4611, 0.0
      %v4653 = vmax.f32 %v4612, 0.0
      %v4654 = vmax.f32 %v4613, 0.0
      %v4655 = vmax.f32 %v4614, 0.0
      %v4656 = vmax.f32 %v4615, 0.0
      %v4657 = vmax.f32 %v4616, 0.0
      %v4658 = vmax.f32 %v4617, 0.0
      %v4659 = vmax.f32 %v4618, 0.0
      %v4660 = vmax.f32 %v4619, 0.0
      %v4661 = vmax.f32 %v4620, 0.0
      %v4662 = vmax.f32 %v4621, 0.0
      %v4663 = vmax.f32 %v4622, 0.0
      %v4664 = vmax.f32 %v4623, 0.0
      %v4665 = vmax.f32 %v4624, 0.0
      %v4666 = vmax.f32 %v4625, 0.0
      %v4667 = vmax.f32 %v4626, 0.0
      %v4668 = vld [vmem:[%s10] sm:$0xff]
      %v4669 = vld [vmem:[%s10 + $0x8] sm:$0xff]
      %v4670 = vld [vmem:[%s10 + $0x10] sm:$0xff]
      %v4671 = vld [vmem:[%s10 + $0x18] sm:$0xff]
      %v4672 = vld [vmem:[%s10 + $0x20] sm:$0xff]
      %v4673 = vld [vmem:[%s10 + $0x28] sm:$0xff]
      %v4674 = vld [vmem:[%s10 + $0x30] sm:$0xff]
      %v4675 = vld [vmem:[%s10 + $0x38] sm:$0xff]
      %v4676 = vld [vmem:[%s10 + $0x40] sm:$0xff]
      %v4677 = vld [vmem:[%s10 + $0x48] sm:$0xff]
      %v4678 = vld [vmem:[%s10 + $0x50] sm:$0xff]
      %v4679 = vld [vmem:[%s10 + $0x58] sm:$0xff]
      %v4680 = vld [vmem:[%s10 + $0x60] sm:$0xff]
      %v4681 = vld [vmem:[%s10 + $0x68] sm:$0xff]
      %v4682 = vld [vmem:[%s10 + $0x70] sm:$0xff]
      %v4683 = vld [vmem:[%s10 + $0x78] sm:$0xff]
      %v4684 = vld [vmem:[%s11] sm:$0x1]
      %v4686 = vlaneseq
      %v4687 = vshrl.u32 %v4686, 7
      %v4688 = vsub.s32 0, %v4687
      %v4689 = vrot.slane %v4684, %v4688
      %4691 = vmatprep.subr.mxu0 0.0
      %4692 = vmatpush1.msra.mxu0 %v4668
      %4693 = vmatprep.subr.mxu0 0.0
      %4694 = vmatpush1.msra.mxu0 %v4669
      %4695 = vmatprep.subr.mxu0 0.0
      %4696 = vmatpush1.msra.mxu0 %v4670
      %4697 = vmatprep.subr.mxu0 0.0
      %4698 = vmatpush1.msra.mxu0 %v4671
      %4699 = vmatprep.subr.mxu0 0.0
      %4700 = vmatpush1.msra.mxu0 %v4672
      %4701 = vmatprep.subr.mxu0 0.0
      %4702 = vmatpush1.msra.mxu0 %v4673
      %4703 = vmatprep.subr.mxu0 0.0
      %4704 = vmatpush1.msra.mxu0 %v4674
      %4705 = vmatprep.subr.mxu0 0.0
      %4706 = vmatpush1.msra.mxu0 %v4675
      %4707 = vmatprep.subr.mxu0 0.0
      %4708 = vmatpush1.msra.mxu0 %v4676
      %4709 = vmatprep.subr.mxu0 0.0
      %4710 = vmatpush1.msra.mxu0 %v4677
      %4711 = vmatprep.subr.mxu0 0.0
      %4712 = vmatpush1.msra.mxu0 %v4678
      %4713 = vmatprep.subr.mxu0 0.0
      %4714 = vmatpush1.msra.mxu0 %v4679
      %4715 = vmatprep.subr.mxu0 0.0
      %4716 = vmatpush1.msra.mxu0 %v4680
      %4717 = vmatprep.subr.mxu0 0.0
      %4718 = vmatpush1.msra.mxu0 %v4681
      %4719 = vmatprep.subr.mxu0 0.0
      %4720 = vmatpush1.msra.mxu0 %v4682
      %4721 = vmatprep.subr.mxu0 0.0
      %4722 = vmatpush1.msra.mxu0 %v4683
      %4723 = vmatprep.subr.mxu0 0.0
      %4724 = vmatpush1.msra.mxu0 0.0
      %4725 = vmatprep.subr.mxu0 0.0
      %4726 = vmatpush1.msra.mxu0 0.0
      %4727 = vmatprep.subr.mxu0 0.0
      %4728 = vmatpush1.msra.mxu0 0.0
      %4729 = vmatprep.subr.mxu0 0.0
      %4730 = vmatpush1.msra.mxu0 0.0
      %4731 = vmatprep.subr.mxu0 0.0
      %4732 = vmatpush1.msra.mxu0 0.0
      %4733 = vmatprep.subr.mxu0 0.0
      %4734 = vmatpush1.msra.mxu0 0.0
      %4735 = vmatprep.subr.mxu0 0.0
      %4736 = vmatpush1.msra.mxu0 0.0
      %4737 = vmatprep.subr.mxu0 0.0
      %4738 = vmatpush1.msra.mxu0 0.0
      %4739 = vmatprep.subr.mxu0 0.0
      %4740 = vmatpush1.msra.mxu0 0.0
      %4741 = vmatprep.subr.mxu0 0.0
      %4742 = vmatpush1.msra.mxu0 0.0
      %4743 = vmatprep.subr.mxu0 0.0
      %4744 = vmatpush1.msra.mxu0 0.0
      %4745 = vmatprep.subr.mxu0 0.0
      %4746 = vmatpush1.msra.mxu0 0.0
      %4747 = vmatprep.subr.mxu0 0.0
      %4748 = vmatpush1.msra.mxu0 0.0
      %4749 = vmatprep.subr.mxu0 0.0
      %4750 = vmatpush1.msra.mxu0 0.0
      %4751 = vmatprep.subr.mxu0 0.0
      %4752 = vmatpush1.msra.mxu0 0.0
      %4753 = vmatprep.subr.mxu0 0.0
      %4754 = vmatpush1.msra.mxu0 0.0
      %4755 = vmatprep.mubr.f32.mxu0 0.0
      %4756 = vmatmul.mubr.f32.gmra.mrb[0].mxu0 %v4627
      %v4757 = vpop.f32.mrb[0].mxu0
      %v4758 = vadd.f32 %v4689, %v4757
      %v4759 = vpop.f32.mrb[0].mxu0
      %4760 = vmatprep.mubr.f32.mxu0 0.0
      %4761 = vmatmul.mubr.f32.gmra.mrb[0].mxu0 %v4628
      %v4762 = vpop.f32.mrb[0].mxu0
      %v4763 = vadd.f32 %v4689, %v4762
      %v4764 = vpop.f32.mrb[0].mxu0
      %4765 = vmatprep.mubr.f32.mxu0 0.0
      %4766 = vmatmul.mubr.f32.gmra.mrb[0].mxu0 %v4629
      %v4767 = vpop.f32.mrb[0].mxu0
      %v4768 = vadd.f32 %v4689, %v4767
      %v4769 = vpop.f32.mrb[0].mxu0
      %4770 = vmatprep.mubr.f32.mxu0 0.0
      %4771 = vmatmul.mubr.f32.gmra.mrb[0].mxu0 %v4630
      %v4772 = vpop.f32.mrb[0].mxu0
      %v4773 = vadd.f32 %v4689, %v4772
      %v4774 = vpop.f32.mrb[0].mxu0
      %4775 = vmatprep.mubr.f32.mxu0 0.0
      %4776 = vmatmul.mubr.f32.gmra.mrb[0].mxu0 %v4631
      %v4777 = vpop.f32.mrb[0].mxu0
      %v4778 = vadd.f32 %v4689, %v4777
      %v4779 = vpop.f32.mrb[0].mxu0
      %4780 = vmatprep.mubr.f32.mxu0 0.0
      %4781 = vmatmul.mubr.f32.gmra.mrb[0].mxu0 %v4632
      %v4782 = vpop.f32.mrb[0].mxu0
      %v4783 = vadd.f32 %v4689, %v4782
      %v4784 = vpop.f32.mrb[0].mxu0
      %4785 = vmatprep.mubr.f32.mxu0 0.0
      %4786 = vmatmul.mubr.f32.gmra.mrb[0].mxu0 %v4633
      %v4787 = vpop.f32.mrb[0].mxu0
      %v4788 = vadd.f32 %v4689, %v4787
      %v4789 = vpop.f32.mrb[0].mxu0
      %4790 = vmatprep.mubr.f32.mxu0 0.0
      %4791 = vmatmul.mubr.f32.gmra.mrb[0].mxu0 %v4634
      %v4792 = vpop.f32.mrb[0].mxu0
      %v4793 = vadd.f32 %v4689, %v4792
      %v4794 = vpop.f32.mrb[0].mxu0
      %4795 = vmatprep.mubr.f32.mxu0 0.0
      %4796 = vmatmul.mubr.f32.gmra.mrb[0].mxu0 %v4635
      %v4797 = vpop.f32.mrb[0].mxu0
      %v4798 = vadd.f32 %v4689, %v4797
      %v4799 = vpop.f32.mrb[0].mxu0
      %4800 = vmatprep.mubr.f32.mxu0 0.0
      %4801 = vmatmul.mubr.f32.gmra.mrb[0].mxu0 %v4636
      %v4802 = vpop.f32.mrb[0].mxu0
      %v4803 = vadd.f32 %v4689, %v4802
      %v4804 = vpop.f32.mrb[0].mxu0
      %4805 = vmatprep.mubr.f32.mxu0 0.0
      %4806 = vmatmul.mubr.f32.gmra.mrb[0].mxu0 %v4637
      %v4807 = vpop.f32.mrb[0].mxu0
      %v4808 = vadd.f32 %v4689, %v4807
      %v4809 = vpop.f32.mrb[0].mxu0
      %4810 = vmatprep.mubr.f32.mxu0 0.0
      %4811 = vmatmul.mubr.f32.gmra.mrb[0].mxu0 %v4638
      %v4812 = vpop.f32.mrb[0].mxu0
      %v4813 = vadd.f32 %v4689, %v4812
      %v4814 = vpop.f32.mrb[0].mxu0
      %4815 = vmatprep.mubr.f32.mxu0 0.0
      %4816 = vmatmul.mubr.f32.gmra.mrb[0].mxu0 %v4639
      %v4817 = vpop.f32.mrb[0].mxu0
      %v4818 = vadd.f32 %v4689, %v4817
      %v4819 = vpop.f32.mrb[0].mxu0
      %4820 = vmatprep.mubr.f32.mxu0 0.0
      %4821 = vmatmul.mubr.f32.gmra.mrb[0].mxu0 %v4640
      %v4822 = vpop.f32.mrb[0].mxu0
      %v4823 = vadd.f32 %v4689, %v4822
      %v4824 = vpop.f32.mrb[0].mxu0
      %4825 = vmatprep.mubr.f32.mxu0 0.0
      %4826 = vmatmul.mubr.f32.gmra.mrb[0].mxu0 %v4641
      %v4827 = vpop.f32.mrb[0].mxu0
      %v4828 = vadd.f32 %v4689, %v4827
      %v4829 = vpop.f32.mrb[0].mxu0
      %4830 = vmatprep.mubr.f32.mxu0 0.0
      %4831 = vmatmul.mubr.f32.gmra.mrb[0].mxu0 %v4642
      %v4832 = vpop.f32.mrb[0].mxu0
      %v4833 = vadd.f32 %v4689, %v4832
      %v4834 = vpop.f32.mrb[0].mxu0
      %4835 = vmatprep.mubr.f32.mxu0 0.0
      %4836 = vmatmul.mubr.f32.gmra.mrb[0].mxu0 %v4643
      %v4837 = vpop.f32.mrb[0].mxu0
      %v4838 = vadd.f32 %v4689, %v4837
      %v4839 = vpop.f32.mrb[0].mxu0
      %4840 = vmatprep.mubr.f32.mxu0 0.0
      %4841 = vmatmul.mubr.f32.gmra.mrb[0].mxu0 %v4644
      %v4842 = vpop.f32.mrb[0].mxu0
      %v4843 = vadd.f32 %v4689, %v4842
      %v4844 = vpop.f32.mrb[0].mxu0
      %4845 = vmatprep.mubr.f32.mxu0 0.0
      %4846 = vmatmul.mubr.f32.gmra.mrb[0].mxu0 %v4645
      %v4847 = vpop.f32.mrb[0].mxu0
      %v4848 = vadd.f32 %v4689, %v4847
      %v4849 = vpop.f32.mrb[0].mxu0
      %4850 = vmatprep.mubr.f32.mxu0 0.0
      %4851 = vmatmul.mubr.f32.gmra.mrb[0].mxu0 %v4646
      %v4852 = vpop.f32.mrb[0].mxu0
      %v4853 = vadd.f32 %v4689, %v4852
      %v4854 = vpop.f32.mrb[0].mxu0
      %4855 = vmatprep.mubr.f32.mxu0 0.0
      %4856 = vmatmul.mubr.f32.gmra.mrb[0].mxu0 %v4647
      %v4857 = vpop.f32.mrb[0].mxu0
      %v4858 = vadd.f32 %v4689, %v4857
      %v4859 = vpop.f32.mrb[0].mxu0
      %4860 = vmatprep.mubr.f32.mxu0 0.0
      %4861 = vmatmul.mubr.f32.gmra.mrb[0].mxu0 %v4648
      %v4862 = vpop.f32.mrb[0].mxu0
      %v4863 = vadd.f32 %v4689, %v4862
      %v4864 = vpop.f32.mrb[0].mxu0
      %4865 = vmatprep.mubr.f32.mxu0 0.0
      %4866 = vmatmul.mubr.f32.gmra.mrb[0].mxu0 %v4649
      %v4867 = vpop.f32.mrb[0].mxu0
      %v4868 = vadd.f32 %v4689, %v4867
      %v4869 = vpop.f32.mrb[0].mxu0
      %4870 = vmatprep.mubr.f32.mxu0 0.0
      %4871 = vmatmul.mubr.f32.gmra.mrb[0].mxu0 %v4650
      %v4872 = vpop.f32.mrb[0].mxu0
      %v4873 = vadd.f32 %v4689, %v4872
      %v4874 = vpop.f32.mrb[0].mxu0
      %4875 = vmatprep.mubr.f32.mxu0 0.0
      %4876 = vmatmul.mubr.f32.gmra.mrb[0].mxu0 %v4651
      %v4877 = vpop.f32.mrb[0].mxu0
      %v4878 = vadd.f32 %v4689, %v4877
      %v4879 = vpop.f32.mrb[0].mxu0
      %4880 = vmatprep.mubr.f32.mxu0 0.0
      %4881 = vmatmul.mubr.f32.gmra.mrb[0].mxu0 %v4652
      %v4882 = vpop.f32.mrb[0].mxu0
      %v4883 = vadd.f32 %v4689, %v4882
      %v4884 = vpop.f32.mrb[0].mxu0
      %4885 = vmatprep.mubr.f32.mxu0 0.0
      %4886 = vmatmul.mubr.f32.gmra.mrb[0].mxu0 %v4653
      %v4887 = vpop.f32.mrb[0].mxu0
      %v4888 = vadd.f32 %v4689, %v4887
      %v4889 = vpop.f32.mrb[0].mxu0
      %4890 = vmatprep.mubr.f32.mxu0 0.0
      %4891 = vmatmul.mubr.f32.gmra.mrb[0].mxu0 %v4654
      %v4892 = vpop.f32.mrb[0].mxu0
      %v4893 = vadd.f32 %v4689, %v4892
      %v4894 = vpop.f32.mrb[0].mxu0
      %4895 = vmatprep.mubr.f32.mxu0 0.0
      %4896 = vmatmul.mubr.f32.gmra.mrb[0].mxu0 %v4655
      %v4897 = vpop.f32.mrb[0].mxu0
      %v4898 = vadd.f32 %v4689, %v4897
      %v4899 = vpop.f32.mrb[0].mxu0
      %4900 = vmatprep.mubr.f32.mxu0 0.0
      %4901 = vmatmul.mubr.f32.gmra.mrb[0].mxu0 %v4656
      %v4902 = vpop.f32.mrb[0].mxu0
      %v4903 = vadd.f32 %v4689, %v4902
      %v4904 = vpop.f32.mrb[0].mxu0
      %4905 = vmatprep.mubr.f32.mxu0 0.0
      %4906 = vmatmul.mubr.f32.gmra.mrb[0].mxu0 %v4657
      %v4907 = vpop.f32.mrb[0].mxu0
      %v4908 = vadd.f32 %v4689, %v4907
      %v4909 = vpop.f32.mrb[0].mxu0
      %4910 = vmatprep.mubr.f32.mxu0 0.0
      %4911 = vmatmul.mubr.f32.gmra.mrb[0].mxu0 %v4658
      %v4912 = vpop.f32.mrb[0].mxu0
      %v4913 = vadd.f32 %v4689, %v4912
      %v4914 = vpop.f32.mrb[0].mxu0
      %4915 = vmatprep.mubr.f32.mxu0 0.0
      %4916 = vmatmul.mubr.f32.gmra.mrb[0].mxu0 %v4659
      %v4917 = vpop.f32.mrb[0].mxu0
      %v4918 = vadd.f32 %v4689, %v4917
      %v4919 = vpop.f32.mrb[0].mxu0
      %4920 = vmatprep.mubr.f32.mxu0 0.0
      %4921 = vmatmul.mubr.f32.gmra.mrb[0].mxu0 %v4660
      %v4922 = vpop.f32.mrb[0].mxu0
      %v4923 = vadd.f32 %v4689, %v4922
      %v4924 = vpop.f32.mrb[0].mxu0
      %4925 = vmatprep.mubr.f32.mxu0 0.0
      %4926 = vmatmul.mubr.f32.gmra.mrb[0].mxu0 %v4661
      %v4927 = vpop.f32.mrb[0].mxu0
      %v4928 = vadd.f32 %v4689, %v4927
      %v4929 = vpop.f32.mrb[0].mxu0
      %4930 = vmatprep.mubr.f32.mxu0 0.0
      %4931 = vmatmul.mubr.f32.gmra.mrb[0].mxu0 %v4662
      %v4932 = vpop.f32.mrb[0].mxu0
      %v4933 = vadd.f32 %v4689, %v4932
      %v4934 = vpop.f32.mrb[0].mxu0
      %4935 = vmatprep.mubr.f32.mxu0 0.0
      %4936 = vmatmul.mubr.f32.gmra.mrb[0].mxu0 %v4663
      %v4937 = vpop.f32.mrb[0].mxu0
      %v4938 = vadd.f32 %v4689, %v4937
      %v4939 = vpop.f32.mrb[0].mxu0
      %4940 = vmatprep.mubr.f32.mxu0 0.0
      %4941 = vmatmul.mubr.f32.gmra.mrb[0].mxu0 %v4664
      %v4942 = vpop.f32.mrb[0].mxu0
      %v4943 = vadd.f32 %v4689, %v4942
      %v4944 = vpop.f32.mrb[0].mxu0
      %4945 = vmatprep.mubr.f32.mxu0 0.0
      %4946 = vmatmul.mubr.f32.gmra.mrb[0].mxu0 %v4665
      %v4947 = vpop.f32.mrb[0].mxu0
      %v4948 = vadd.f32 %v4689, %v4947
      %v4949 = vpop.f32.mrb[0].mxu0
      %4950 = vmatprep.mubr.f32.mxu0 0.0
      %4951 = vmatmul.mubr.f32.gmra.mrb[0].mxu0 %v4666
      %v4952 = vpop.f32.mrb[0].mxu0
      %v4953 = vadd.f32 %v4689, %v4952
      %v4954 = vpop.f32.mrb[0].mxu0
      %4955 = vmatprep.mubr.f32.mxu0 0.0
      %4956 = vmatmul.mubr.f32.gmra.mrb[0].mxu0 %v4667
      %v4957 = vpop.f32.mrb[0].mxu0
      %v4958 = vadd.f32 %v4689, %v4957
      %v4959 = vpop.f32.mrb[0].mxu0
      %4960 = vdwg.mxu0
      %v4961 = vmax.f32 %v4758, 0.0
      %v4962 = vmax.f32 %v4763, 0.0
      %v4963 = vmax.f32 %v4768, 0.0
      %v4964 = vmax.f32 %v4773, 0.0
      %v4965 = vmax.f32 %v4778, 0.0
      %v4966 = vmax.f32 %v4783, 0.0
      %v4967 = vmax.f32 %v4788, 0.0
      %v4968 = vmax.f32 %v4793, 0.0
      %v4969 = vmax.f32 %v4798, 0.0
      %v4970 = vmax.f32 %v4803, 0.0
      %v4971 = vmax.f32 %v4808, 0.0
      %v4972 = vmax.f32 %v4813, 0.0
      %v4973 = vmax.f32 %v4818, 0.0
      %v4974 = vmax.f32 %v4823, 0.0
      %v4975 = vmax.f32 %v4828, 0.0
      %v4976 = vmax.f32 %v4833, 0.0
      %v4977 = vmax.f32 %v4838, 0.0
      %v4978 = vmax.f32 %v4843, 0.0
      %v4979 = vmax.f32 %v4848, 0.0
      %v4980 = vmax.f32 %v4853, 0.0
      %v4981 = vmax.f32 %v4858, 0.0
      %v4982 = vmax.f32 %v4863, 0.0
      %v4983 = vmax.f32 %v4868, 0.0
      %v4984 = vmax.f32 %v4873, 0.0
      %v4985 = vmax.f32 %v4878, 0.0
      %v4986 = vmax.f32 %v4883, 0.0
      %v4987 = vmax.f32 %v4888, 0.0
      %v4988 = vmax.f32 %v4893, 0.0
      %v4989 = vmax.f32 %v4898, 0.0
      %v4990 = vmax.f32 %v4903, 0.0
      %v4991 = vmax.f32 %v4908, 0.0
      %v4992 = vmax.f32 %v4913, 0.0
      %v4993 = vmax.f32 %v4918, 0.0
      %v4994 = vmax.f32 %v4923, 0.0
      %v4995 = vmax.f32 %v4928, 0.0
      %v4996 = vmax.f32 %v4933, 0.0
      %v4997 = vmax.f32 %v4938, 0.0
      %v4998 = vmax.f32 %v4943, 0.0
      %v4999 = vmax.f32 %v4948, 0.0
      %v5000 = vmax.f32 %v4953, 0.0
      %v5001 = vmax.f32 %v4958, 0.0
      %v5002 = vmul.f32 %v4961, %v569
      %v5003 = vmul.f32 %v4962, %v570
      %v5004 = vmul.f32 %v4963, %v571
      %v5005 = vmul.f32 %v4964, %v572
      %v5006 = vmul.f32 %v4965, %v573
      %v5007 = vmul.f32 %v4966, %v574
      %v5008 = vmul.f32 %v4967, %v575
      %v5009 = vmul.f32 %v4968, %v576
      %v5010 = vmul.f32 %v4969, %v577
      %v5011 = vmul.f32 %v4970, %v578
      %v5012 = vmul.f32 %v4971, %v579
      %v5013 = vmul.f32 %v4972, %v580
      %v5014 = vmul.f32 %v4973, %v581
      %v5015 = vmul.f32 %v4974, %v582
      %v5016 = vmul.f32 %v4975, %v583
      %v5017 = vmul.f32 %v4976, %v584
      %v5018 = vmul.f32 %v4977, %v585
      %v5019 = vmul.f32 %v4978, %v586
      %v5020 = vmul.f32 %v4979, %v587
      %v5021 = vmul.f32 %v4980, %v588
      %v5022 = vmul.f32 %v4981, %v589
      %v5023 = vmul.f32 %v4982, %v590
      %v5024 = vmul.f32 %v4983, %v591
      %v5025 = vmul.f32 %v4984, %v592
      %v5026 = vmul.f32 %v4985, %v593
      %v5027 = vmul.f32 %v4986, %v594
      %v5028 = vmul.f32 %v4987, %v595
      %v5029 = vmul.f32 %v4988, %v596
      %v5030 = vmul.f32 %v4989, %v597
      %v5031 = vmul.f32 %v4990, %v598
      %v5032 = vmul.f32 %v4991, %v599
      %v5033 = vmul.f32 %v4992, %v600
      %v5034 = vmul.f32 %v4993, %v601
      %v5035 = vmul.f32 %v4994, %v602
      %v5036 = vmul.f32 %v4995, %v603
      %v5037 = vmul.f32 %v4996, %v604
      %v5038 = vmul.f32 %v4997, %v605
      %v5039 = vmul.f32 %v4998, %v606
      %v5040 = vmul.f32 %v4999, %v607
      %v5041 = vmul.f32 %v5000, %v608
      %v5042 = vmul.f32 %v5001, %v609
      %5043 = vst [vmem:[#allocation2 + $0x18] sm:$0xff] %v5002
      %5044 = vst [vmem:[#allocation2 + $0x20] sm:$0xff] %v5003
      %5045 = vst [vmem:[#allocation2 + $0x28] sm:$0xff] %v5004
      %5046 = vst [vmem:[#allocation2 + $0x30] sm:$0xff] %v5005
      %5047 = vst [vmem:[#allocation2 + $0x38] sm:$0xff] %v5006
      %5048 = vst [vmem:[#allocation2 + $0x40] sm:$0xff] %v5007
      %5049 = vst [vmem:[#allocation2 + $0x48] sm:$0xff] %v5008
      %5050 = vst [vmem:[#allocation2 + $0x50] sm:$0xff] %v5009
      %5051 = vst [vmem:[#allocation2 + $0x58] sm:$0xff] %v5010
      %5052 = vst [vmem:[#allocation2 + $0x60] sm:$0xff] %v5011
      %5053 = vst [vmem:[#allocation2 + $0x68] sm:$0xff] %v5012
      %5054 = vst [vmem:[#allocation2 + $0x70] sm:$0xff] %v5013
      %5055 = vst [vmem:[#allocation2 + $0x78] sm:$0xff] %v5014
      %5056 = vst [vmem:[#allocation2 + $0x80] sm:$0xff] %v5015
      %5057 = vst [vmem:[#allocation2 + $0x88] sm:$0xff] %v5016
      %5058 = vst [vmem:[#allocation2 + $0x90] sm:$0xff] %v5017
      %5059 = vst [vmem:[#allocation2 + $0x98] sm:$0xff] %v5018
      %5060 = vst [vmem:[#allocation2 + $0xa0] sm:$0xff] %v5019
      %5061 = vst [vmem:[#allocation2 + $0xa8] sm:$0xff] %v5020
      %5062 = vst [vmem:[#allocation2 + $0xb0] sm:$0xff] %v5021
      %5063 = vst [vmem:[#allocation2 + $0xb8] sm:$0xff] %v5022
      %5064 = vst [vmem:[#allocation2 + $0xc0] sm:$0xff] %v5023
      %5065 = vst [vmem:[#allocation2 + $0xc8] sm:$0xff] %v5024
      %5066 = vst [vmem:[#allocation2 + $0xd0] sm:$0xff] %v5025
      %5067 = vst [vmem:[#allocation2 + $0xd8] sm:$0xff] %v5026
      %5068 = vst [vmem:[#allocation2 + $0xe0] sm:$0xff] %v5027
      %5069 = vst [vmem:[#allocation2 + $0xe8] sm:$0xff] %v5028
      %5070 = vst [vmem:[#allocation2 + $0xf0] sm:$0xff] %v5029
      %5071 = vst [vmem:[#allocation2 + $0xf8] sm:$0xff] %v5030
      %5072 = vst [vmem:[#allocation2 + $0x100] sm:$0xff] %v5031
      %5073 = vst [vmem:[#allocation2 + $0x108] sm:$0xff] %v5032
      %5074 = vst [vmem:[#allocation2 + $0x110] sm:$0xff] %v5033
      %5075 = vst [vmem:[#allocation2 + $0x118] sm:$0xff] %v5034
      %5076 = vst [vmem:[#allocation2 + $0x120] sm:$0xff] %v5035
      %5077 = vst [vmem:[#allocation2 + $0x128] sm:$0xff] %v5036
      %5078 = vst [vmem:[#allocation2 + $0x130] sm:$0xff] %v5037
      %5079 = vst [vmem:[#allocation2 + $0x138] sm:$0xff] %v5038
      %5080 = vst [vmem:[#allocation2 + $0x140] sm:$0xff] %v5039
      %5081 = vst [vmem:[#allocation2 + $0x148] sm:$0xff] %v5040
      %5082 = vst [vmem:[#allocation2 + $0x150] sm:$0xff] %v5041
      %5083 = vst [vmem:[#allocation2 + $0x158] sm:$0xff] %v5042
      %v5084 = vld [vmem:[#allocation2 + $0x5] sm:$0xff]
      %v5085 = vld [vmem:[#allocation2 + $0xd] sm:$0xff]
      %v5086 = vld [vmem:[#allocation2 + $0x15] sm:$0xff]
      %v5087 = vld [vmem:[#allocation2 + $0x1d] sm:$0xff]
      %v5088 = vld [vmem:[#allocation2 + $0x25] sm:$0xff]
      %v5089 = vld [vmem:[#allocation2 + $0x2d] sm:$0xff]
      %v5090 = vld [vmem:[#allocation2 + $0x35] sm:$0xff]
      %v5091 = vld [vmem:[#allocation2 + $0x3d] sm:$0xff]
      %v5092 = vld [vmem:[#allocation2 + $0x45] sm:$0xff]
      %v5093 = vld [vmem:[#allocation2 + $0x4d] sm:$0xff]
      %v5094 = vld [vmem:[#allocation2 + $0x55] sm:$0xff]
      %v5095 = vld [vmem:[#allocation2 + $0x5d] sm:$0xff]
      %v5096 = vld [vmem:[#allocation2 + $0x65] sm:$0xff]
      %v5097 = vld [vmem:[#allocation2 + $0x6d] sm:$0xff]
      %v5098 = vld [vmem:[#allocation2 + $0x75] sm:$0xff]
      %v5099 = vld [vmem:[#allocation2 + $0x7d] sm:$0xff]
      %v5100 = vld [vmem:[#allocation2 + $0x85] sm:$0xff]
      %v5101 = vld [vmem:[#allocation2 + $0x8d] sm:$0xff]
      %v5102 = vld [vmem:[#allocation2 + $0x95] sm:$0xff]
      %v5103 = vld [vmem:[#allocation2 + $0x9d] sm:$0xff]
      %v5104 = vld [vmem:[#allocation2 + $0xa5] sm:$0xff]
      %v5105 = vld [vmem:[#allocation2 + $0xad] sm:$0xff]
      %v5106 = vld [vmem:[#allocation2 + $0xb5] sm:$0xff]
      %v5107 = vld [vmem:[#allocation2 + $0xbd] sm:$0xff]
      %v5108 = vld [vmem:[#allocation2 + $0xc5] sm:$0xff]
      %v5109 = vld [vmem:[#allocation2 + $0xcd] sm:$0xff]
      %v5110 = vld [vmem:[#allocation2 + $0xd5] sm:$0xff]
      %v5111 = vld [vmem:[#allocation2 + $0xdd] sm:$0xff]
      %v5112 = vld [vmem:[#allocation2 + $0xe5] sm:$0xff]
      %v5113 = vld [vmem:[#allocation2 + $0xed] sm:$0xff]
      %v5114 = vld [vmem:[#allocation2 + $0xf5] sm:$0xff]
      %v5115 = vld [vmem:[#allocation2 + $0xfd] sm:$0xff]
      %v5116 = vld [vmem:[#allocation2 + $0x105] sm:$0xff]
      %v5117 = vld [vmem:[#allocation2 + $0x10d] sm:$0xff]
      %v5118 = vld [vmem:[#allocation2 + $0x115] sm:$0xff]
      %v5119 = vld [vmem:[#allocation2 + $0x11d] sm:$0xff]
      %v5120 = vld [vmem:[#allocation2 + $0x125] sm:$0xff]
      %v5121 = vld [vmem:[#allocation2 + $0x12d] sm:$0xff]
      %v5122 = vld [vmem:[#allocation2 + $0x135] sm:$0xff]
      %v5123 = vld [vmem:[#allocation2 + $0x13d] sm:$0xff]
      %v5124 = vld [vmem:[#allocation2 + $0x145] sm:$0xff]
      %v5125 = vld [vmem:[%s12] sm:$0xff]
      %v5126 = vld [vmem:[%s12 + $0x8] sm:$0xff]
      %v5127 = vld [vmem:[%s12 + $0x10] sm:$0xff]
      %v5128 = vld [vmem:[%s12 + $0x18] sm:$0xff]
      %v5129 = vld [vmem:[%s12 + $0x20] sm:$0xff]
      %v5130 = vld [vmem:[%s12 + $0x28] sm:$0xff]
      %v5131 = vld [vmem:[%s12 + $0x30] sm:$0xff]
      %v5132 = vld [vmem:[%s12 + $0x38] sm:$0xff]
      %v5133 = vld [vmem:[%s12 + $0x40] sm:$0xff]
      %v5134 = vld [vmem:[%s12 + $0x48] sm:$0xff]
      %v5135 = vld [vmem:[%s12 + $0x50] sm:$0xff]
      %v5136 = vld [vmem:[%s12 + $0x58] sm:$0xff]
      %v5137 = vld [vmem:[%s12 + $0x60] sm:$0xff]
      %v5138 = vld [vmem:[%s12 + $0x68] sm:$0xff]
      %v5139 = vld [vmem:[%s12 + $0x70] sm:$0xff]
      %v5140 = vld [vmem:[%s12 + $0x78] sm:$0xff]
      %v5141 = vld [vmem:[#allocation2 + $0x6] sm:$0xff]
      %v5142 = vld [vmem:[#allocation2 + $0xe] sm:$0xff]
      %v5143 = vld [vmem:[#allocation2 + $0x16] sm:$0xff]
      %v5144 = vld [vmem:[#allocation2 + $0x1e] sm:$0xff]
      %v5145 = vld [vmem:[#allocation2 + $0x26] sm:$0xff]
      %v5146 = vld [vmem:[#allocation2 + $0x2e] sm:$0xff]
      %v5147 = vld [vmem:[#allocation2 + $0x36] sm:$0xff]
      %v5148 = vld [vmem:[#allocation2 + $0x3e] sm:$0xff]
      %v5149 = vld [vmem:[#allocation2 + $0x46] sm:$0xff]
      %v5150 = vld [vmem:[#allocation2 + $0x4e] sm:$0xff]
      %v5151 = vld [vmem:[#allocation2 + $0x56] sm:$0xff]
      %v5152 = vld [vmem:[#allocation2 + $0x5e] sm:$0xff]
      %v5153 = vld [vmem:[#allocation2 + $0x66] sm:$0xff]
      %v5154 = vld [vmem:[#allocation2 + $0x6e] sm:$0xff]
      %v5155 = vld [vmem:[#allocation2 + $0x76] sm:$0xff]
      %v5156 = vld [vmem:[#allocation2 + $0x7e] sm:$0xff]
      %v5157 = vld [vmem:[#allocation2 + $0x86] sm:$0xff]
      %v5158 = vld [vmem:[#allocation2 + $0x8e] sm:$0xff]
      %v5159 = vld [vmem:[#allocation2 + $0x96] sm:$0xff]
      %v5160 = vld [vmem:[#allocation2 + $0x9e] sm:$0xff]
      %v5161 = vld [vmem:[#allocation2 + $0xa6] sm:$0xff]
      %v5162 = vld [vmem:[#allocation2 + $0xae] sm:$0xff]
      %v5163 = vld [vmem:[#allocation2 + $0xb6] sm:$0xff]
      %v5164 = vld [vmem:[#allocation2 + $0xbe] sm:$0xff]
      %v5165 = vld [vmem:[#allocation2 + $0xc6] sm:$0xff]
      %v5166 = vld [vmem:[#allocation2 + $0xce] sm:$0xff]
      %v5167 = vld [vmem:[#allocation2 + $0xd6] sm:$0xff]
      %v5168 = vld [vmem:[#allocation2 + $0xde] sm:$0xff]
      %v5169 = vld [vmem:[#allocation2 + $0xe6] sm:$0xff]
      %v5170 = vld [vmem:[#allocation2 + $0xee] sm:$0xff]
      %v5171 = vld [vmem:[#allocation2 + $0xf6] sm:$0xff]
      %v5172 = vld [vmem:[#allocation2 + $0xfe] sm:$0xff]
      %v5173 = vld [vmem:[#allocation2 + $0x106] sm:$0xff]
      %v5174 = vld [vmem:[#allocation2 + $0x10e] sm:$0xff]
      %v5175 = vld [vmem:[#allocation2 + $0x116] sm:$0xff]
      %v5176 = vld [vmem:[#allocation2 + $0x11e] sm:$0xff]
      %v5177 = vld [vmem:[#allocation2 + $0x126] sm:$0xff]
      %v5178 = vld [vmem:[#allocation2 + $0x12e] sm:$0xff]
      %v5179 = vld [vmem:[#allocation2 + $0x136] sm:$0xff]
      %v5180 = vld [vmem:[#allocation2 + $0x13e] sm:$0xff]
      %v5181 = vld [vmem:[#allocation2 + $0x146] sm:$0xff]
      %s5182 = scalar_lea.vmem %s12, 128
      %v5183 = vld [vmem:[%s5182] sm:$0xff]
      %v5184 = vld [vmem:[%s5182 + $0x8] sm:$0xff]
      %v5185 = vld [vmem:[%s5182 + $0x10] sm:$0xff]
      %v5186 = vld [vmem:[%s5182 + $0x18] sm:$0xff]
      %v5187 = vld [vmem:[%s5182 + $0x20] sm:$0xff]
      %v5188 = vld [vmem:[%s5182 + $0x28] sm:$0xff]
      %v5189 = vld [vmem:[%s5182 + $0x30] sm:$0xff]
      %v5190 = vld [vmem:[%s5182 + $0x38] sm:$0xff]
      %v5191 = vld [vmem:[%s5182 + $0x40] sm:$0xff]
      %v5192 = vld [vmem:[%s5182 + $0x48] sm:$0xff]
      %v5193 = vld [vmem:[%s5182 + $0x50] sm:$0xff]
      %v5194 = vld [vmem:[%s5182 + $0x58] sm:$0xff]
      %v5195 = vld [vmem:[%s5182 + $0x60] sm:$0xff]
      %v5196 = vld [vmem:[%s5182 + $0x68] sm:$0xff]
      %v5197 = vld [vmem:[%s5182 + $0x70] sm:$0xff]
      %v5198 = vld [vmem:[%s5182 + $0x78] sm:$0xff]
      %5199 = vmatprep.subr.mxu0 0.0
      %5200 = vmatpush1.msra.mxu0 %v5183
      %5201 = vmatprep.subr.mxu0 0.0
      %5202 = vmatpush1.msra.mxu0 %v5184
      %5203 = vmatprep.subr.mxu0 0.0
      %5204 = vmatpush1.msra.mxu0 %v5185
      %5205 = vmatprep.subr.mxu0 0.0
      %5206 = vmatpush1.msra.mxu0 %v5186
      %5207 = vmatprep.subr.mxu0 0.0
      %5208 = vmatpush1.msra.mxu0 %v5187
      %5209 = vmatprep.subr.mxu0 0.0
      %5210 = vmatpush1.msra.mxu0 %v5188
      %5211 = vmatprep.subr.mxu0 0.0
      %5212 = vmatpush1.msra.mxu0 %v5189
      %5213 = vmatprep.subr.mxu0 0.0
      %5214 = vmatpush1.msra.mxu0 %v5190
      %5215 = vmatprep.subr.mxu0 0.0
      %5216 = vmatpush1.msra.mxu0 %v5191
      %5217 = vmatprep.subr.mxu0 0.0
      %5218 = vmatpush1.msra.mxu0 %v5192
      %5219 = vmatprep.subr.mxu0 0.0
      %5220 = vmatpush1.msra.mxu0 %v5193
      %5221 = vmatprep.subr.mxu0 0.0
      %5222 = vmatpush1.msra.mxu0 %v5194
      %5223 = vmatprep.subr.mxu0 0.0
      %5224 = vmatpush1.msra.mxu0 %v5195
      %5225 = vmatprep.subr.mxu0 0.0
      %5226 = vmatpush1.msra.mxu0 %v5196
      %5227 = vmatprep.subr.mxu0 0.0
      %5228 = vmatpush1.msra.mxu0 %v5197
      %5229 = vmatprep.subr.mxu0 0.0
      %5230 = vmatpush1.msra.mxu0 %v5198
      %5231 = vmatprep.subr.mxu0 0.0
      %5232 = vmatpush1.msra.mxu0 0.0
      %5233 = vmatprep.subr.mxu0 0.0
      %5234 = vmatpush1.msra.mxu0 0.0
      %5235 = vmatprep.subr.mxu0 0.0
      %5236 = vmatpush1.msra.mxu0 0.0
      %5237 = vmatprep.subr.mxu0 0.0
      %5238 = vmatpush1.msra.mxu0 0.0
      %5239 = vmatprep.subr.mxu0 0.0
      %5240 = vmatpush1.msra.mxu0 0.0
      %5241 = vmatprep.subr.mxu0 0.0
      %5242 = vmatpush1.msra.mxu0 0.0
      %5243 = vmatprep.subr.mxu0 0.0
      %5244 = vmatpush1.msra.mxu0 0.0
      %5245 = vmatprep.subr.mxu0 0.0
      %5246 = vmatpush1.msra.mxu0 0.0
      %5247 = vmatprep.subr.mxu0 0.0
      %5248 = vmatpush1.msra.mxu0 0.0
      %5249 = vmatprep.subr.mxu0 0.0
      %5250 = vmatpush1.msra.mxu0 0.0
      %5251 = vmatprep.subr.mxu0 0.0
      %5252 = vmatpush1.msra.mxu0 0.0
      %5253 = vmatprep.subr.mxu0 0.0
      %5254 = vmatpush1.msra.mxu0 0.0
      %5255 = vmatprep.subr.mxu0 0.0
      %5256 = vmatpush1.msra.mxu0 0.0
      %5257 = vmatprep.subr.mxu0 0.0
      %5258 = vmatpush1.msra.mxu0 0.0
      %5259 = vmatprep.subr.mxu0 0.0
      %5260 = vmatpush1.msra.mxu0 0.0
      %5261 = vmatprep.subr.mxu0 0.0
      %5262 = vmatpush1.msra.mxu0 0.0
      %5263 = vmatprep.mubr.f32.mxu0 0.0
      %5264 = vmatmul.mubr.f32.gmra.mrb[0].mxu0 %v5141
      %v5265 = vpop.f32.mrb[0].mxu0
      %v5266 = vadd.f32 0.0, %v5265
      %v5267 = vpop.f32.mrb[0].mxu0
      %5268 = vmatprep.mubr.f32.mxu0 0.0
      %5269 = vmatmul.mubr.f32.gmra.mrb[0].mxu0 %v5142
      %v5270 = vpop.f32.mrb[0].mxu0
      %v5271 = vadd.f32 0.0, %v5270
      %v5272 = vpop.f32.mrb[0].mxu0
      %5273 = vmatprep.mubr.f32.mxu0 0.0
      %5274 = vmatmul.mubr.f32.gmra.mrb[0].mxu0 %v5143
      %v5275 = vpop.f32.mrb[0].mxu0
      %v5276 = vadd.f32 0.0, %v5275
      %v5277 = vpop.f32.mrb[0].mxu0
      %5278 = vmatprep.mubr.f32.mxu0 0.0
      %5279 = vmatmul.mubr.f32.gmra.mrb[0].mxu0 %v5144
      %v5280 = vpop.f32.mrb[0].mxu0
      %v5281 = vadd.f32 0.0, %v5280
      %v5282 = vpop.f32.mrb[0].mxu0
      %5283 = vmatprep.mubr.f32.mxu0 0.0
      %5284 = vmatmul.mubr.f32.gmra.mrb[0].mxu0 %v5145
      %v5285 = vpop.f32.mrb[0].mxu0
      %v5286 = vadd.f32 0.0, %v5285
      %v5287 = vpop.f32.mrb[0].mxu0
      %5288 = vmatprep.mubr.f32.mxu0 0.0
      %5289 = vmatmul.mubr.f32.gmra.mrb[0].mxu0 %v5146
      %v5290 = vpop.f32.mrb[0].mxu0
      %v5291 = vadd.f32 0.0, %v5290
      %v5292 = vpop.f32.mrb[0].mxu0
      %5293 = vmatprep.mubr.f32.mxu0 0.0
      %5294 = vmatmul.mubr.f32.gmra.mrb[0].mxu0 %v5147
      %v5295 = vpop.f32.mrb[0].mxu0
      %v5296 = vadd.f32 0.0, %v5295
      %v5297 = vpop.f32.mrb[0].mxu0
      %5298 = vmatprep.mubr.f32.mxu0 0.0
      %5299 = vmatmul.mubr.f32.gmra.mrb[0].mxu0 %v5148
      %v5300 = vpop.f32.mrb[0].mxu0
      %v5301 = vadd.f32 0.0, %v5300
      %v5302 = vpop.f32.mrb[0].mxu0
      %5303 = vmatprep.mubr.f32.mxu0 0.0
      %5304 = vmatmul.mubr.f32.gmra.mrb[0].mxu0 %v5149
      %v5305 = vpop.f32.mrb[0].mxu0
      %v5306 = vadd.f32 0.0, %v5305
      %v5307 = vpop.f32.mrb[0].mxu0
      %5308 = vmatprep.mubr.f32.mxu0 0.0
      %5309 = vmatmul.mubr.f32.gmra.mrb[0].mxu0 %v5150
      %v5310 = vpop.f32.mrb[0].mxu0
      %v5311 = vadd.f32 0.0, %v5310
      %v5312 = vpop.f32.mrb[0].mxu0
      %5313 = vmatprep.mubr.f32.mxu0 0.0
      %5314 = vmatmul.mubr.f32.gmra.mrb[0].mxu0 %v5151
      %v5315 = vpop.f32.mrb[0].mxu0
      %v5316 = vadd.f32 0.0, %v5315
      %v5317 = vpop.f32.mrb[0].mxu0
      %5318 = vmatprep.mubr.f32.mxu0 0.0
      %5319 = vmatmul.mubr.f32.gmra.mrb[0].mxu0 %v5152
      %v5320 = vpop.f32.mrb[0].mxu0
      %v5321 = vadd.f32 0.0, %v5320
      %v5322 = vpop.f32.mrb[0].mxu0
      %5323 = vmatprep.mubr.f32.mxu0 0.0
      %5324 = vmatmul.mubr.f32.gmra.mrb[0].mxu0 %v5153
      %v5325 = vpop.f32.mrb[0].mxu0
      %v5326 = vadd.f32 0.0, %v5325
      %v5327 = vpop.f32.mrb[0].mxu0
      %5328 = vmatprep.mubr.f32.mxu0 0.0
      %5329 = vmatmul.mubr.f32.gmra.mrb[0].mxu0 %v5154
      %v5330 = vpop.f32.mrb[0].mxu0
      %v5331 = vadd.f32 0.0, %v5330
      %v5332 = vpop.f32.mrb[0].mxu0
      %5333 = vmatprep.mubr.f32.mxu0 0.0
      %5334 = vmatmul.mubr.f32.gmra.mrb[0].mxu0 %v5155
      %v5335 = vpop.f32.mrb[0].mxu0
      %v5336 = vadd.f32 0.0, %v5335
      %v5337 = vpop.f32.mrb[0].mxu0
      %5338 = vmatprep.mubr.f32.mxu0 0.0
      %5339 = vmatmul.mubr.f32.gmra.mrb[0].mxu0 %v5156
      %v5340 = vpop.f32.mrb[0].mxu0
      %v5341 = vadd.f32 0.0, %v5340
      %v5342 = vpop.f32.mrb[0].mxu0
      %5343 = vmatprep.mubr.f32.mxu0 0.0
      %5344 = vmatmul.mubr.f32.gmra.mrb[0].mxu0 %v5157
      %v5345 = vpop.f32.mrb[0].mxu0
      %v5346 = vadd.f32 0.0, %v5345
      %v5347 = vpop.f32.mrb[0].mxu0
      %5348 = vmatprep.mubr.f32.mxu0 0.0
      %5349 = vmatmul.mubr.f32.gmra.mrb[0].mxu0 %v5158
      %v5350 = vpop.f32.mrb[0].mxu0
      %v5351 = vadd.f32 0.0, %v5350
      %v5352 = vpop.f32.mrb[0].mxu0
      %5353 = vmatprep.mubr.f32.mxu0 0.0
      %5354 = vmatmul.mubr.f32.gmra.mrb[0].mxu0 %v5159
      %v5355 = vpop.f32.mrb[0].mxu0
      %v5356 = vadd.f32 0.0, %v5355
      %v5357 = vpop.f32.mrb[0].mxu0
      %5358 = vmatprep.mubr.f32.mxu0 0.0
      %5359 = vmatmul.mubr.f32.gmra.mrb[0].mxu0 %v5160
      %v5360 = vpop.f32.mrb[0].mxu0
      %v5361 = vadd.f32 0.0, %v5360
      %v5362 = vpop.f32.mrb[0].mxu0
      %5363 = vmatprep.mubr.f32.mxu0 0.0
      %5364 = vmatmul.mubr.f32.gmra.mrb[0].mxu0 %v5161
      %v5365 = vpop.f32.mrb[0].mxu0
      %v5366 = vadd.f32 0.0, %v5365
      %v5367 = vpop.f32.mrb[0].mxu0
      %5368 = vmatprep.mubr.f32.mxu0 0.0
      %5369 = vmatmul.mubr.f32.gmra.mrb[0].mxu0 %v5162
      %v5370 = vpop.f32.mrb[0].mxu0
      %v5371 = vadd.f32 0.0, %v5370
      %v5372 = vpop.f32.mrb[0].mxu0
      %5373 = vmatprep.mubr.f32.mxu0 0.0
      %5374 = vmatmul.mubr.f32.gmra.mrb[0].mxu0 %v5163
      %v5375 = vpop.f32.mrb[0].mxu0
      %v5376 = vadd.f32 0.0, %v5375
      %v5377 = vpop.f32.mrb[0].mxu0
      %5378 = vmatprep.mubr.f32.mxu0 0.0
      %5379 = vmatmul.mubr.f32.gmra.mrb[0].mxu0 %v5164
      %v5380 = vpop.f32.mrb[0].mxu0
      %v5381 = vadd.f32 0.0, %v5380
      %v5382 = vpop.f32.mrb[0].mxu0
      %5383 = vmatprep.mubr.f32.mxu0 0.0
      %5384 = vmatmul.mubr.f32.gmra.mrb[0].mxu0 %v5165
      %v5385 = vpop.f32.mrb[0].mxu0
      %v5386 = vadd.f32 0.0, %v5385
      %v5387 = vpop.f32.mrb[0].mxu0
      %5388 = vmatprep.mubr.f32.mxu0 0.0
      %5389 = vmatmul.mubr.f32.gmra.mrb[0].mxu0 %v5166
      %v5390 = vpop.f32.mrb[0].mxu0
      %v5391 = vadd.f32 0.0, %v5390
      %v5392 = vpop.f32.mrb[0].mxu0
      %5393 = vmatprep.mubr.f32.mxu0 0.0
      %5394 = vmatmul.mubr.f32.gmra.mrb[0].mxu0 %v5167
      %v5395 = vpop.f32.mrb[0].mxu0
      %v5396 = vadd.f32 0.0, %v5395
      %v5397 = vpop.f32.mrb[0].mxu0
      %5398 = vmatprep.mubr.f32.mxu0 0.0
      %5399 = vmatmul.mubr.f32.gmra.mrb[0].mxu0 %v5168
      %v5400 = vpop.f32.mrb[0].mxu0
      %v5401 = vadd.f32 0.0, %v5400
      %v5402 = vpop.f32.mrb[0].mxu0
      %5403 = vmatprep.mubr.f32.mxu0 0.0
      %5404 = vmatmul.mubr.f32.gmra.mrb[0].mxu0 %v5169
      %v5405 = vpop.f32.mrb[0].mxu0
      %v5406 = vadd.f32 0.0, %v5405
      %v5407 = vpop.f32.mrb[0].mxu0
      %5408 = vmatprep.mubr.f32.mxu0 0.0
      %5409 = vmatmul.mubr.f32.gmra.mrb[0].mxu0 %v5170
      %v5410 = vpop.f32.mrb[0].mxu0
      %v5411 = vadd.f32 0.0, %v5410
      %v5412 = vpop.f32.mrb[0].mxu0
      %5413 = vmatprep.mubr.f32.mxu0 0.0
      %5414 = vmatmul.mubr.f32.gmra.mrb[0].mxu0 %v5171
      %v5415 = vpop.f32.mrb[0].mxu0
      %v5416 = vadd.f32 0.0, %v5415
      %v5417 = vpop.f32.mrb[0].mxu0
      %5418 = vmatprep.mubr.f32.mxu0 0.0
      %5419 = vmatmul.mubr.f32.gmra.mrb[0].mxu0 %v5172
      %v5420 = vpop.f32.mrb[0].mxu0
      %v5421 = vadd.f32 0.0, %v5420
      %v5422 = vpop.f32.mrb[0].mxu0
      %5423 = vmatprep.mubr.f32.mxu0 0.0
      %5424 = vmatmul.mubr.f32.gmra.mrb[0].mxu0 %v5173
      %v5425 = vpop.f32.mrb[0].mxu0
      %v5426 = vadd.f32 0.0, %v5425
      %v5427 = vpop.f32.mrb[0].mxu0
      %5428 = vmatprep.mubr.f32.mxu0 0.0
      %5429 = vmatmul.mubr.f32.gmra.mrb[0].mxu0 %v5174
      %v5430 = vpop.f32.mrb[0].mxu0
      %v5431 = vadd.f32 0.0, %v5430
      %v5432 = vpop.f32.mrb[0].mxu0
      %5433 = vmatprep.mubr.f32.mxu0 0.0
      %5434 = vmatmul.mubr.f32.gmra.mrb[0].mxu0 %v5175
      %v5435 = vpop.f32.mrb[0].mxu0
      %v5436 = vadd.f32 0.0, %v5435
      %v5437 = vpop.f32.mrb[0].mxu0
      %5438 = vmatprep.mubr.f32.mxu0 0.0
      %5439 = vmatmul.mubr.f32.gmra.mrb[0].mxu0 %v5176
      %v5440 = vpop.f32.mrb[0].mxu0
      %v5441 = vadd.f32 0.0, %v5440
      %v5442 = vpop.f32.mrb[0].mxu0
      %5443 = vmatprep.mubr.f32.mxu0 0.0
      %5444 = vmatmul.mubr.f32.gmra.mrb[0].mxu0 %v5177
      %v5445 = vpop.f32.mrb[0].mxu0
      %v5446 = vadd.f32 0.0, %v5445
      %v5447 = vpop.f32.mrb[0].mxu0
      %5448 = vmatprep.mubr.f32.mxu0 0.0
      %5449 = vmatmul.mubr.f32.gmra.mrb[0].mxu0 %v5178
      %v5450 = vpop.f32.mrb[0].mxu0
      %v5451 = vadd.f32 0.0, %v5450
      %v5452 = vpop.f32.mrb[0].mxu0
      %5453 = vmatprep.mubr.f32.mxu0 0.0
      %5454 = vmatmul.mubr.f32.gmra.mrb[0].mxu0 %v5179
      %v5455 = vpop.f32.mrb[0].mxu0
      %v5456 = vadd.f32 0.0, %v5455
      %v5457 = vpop.f32.mrb[0].mxu0
      %5458 = vmatprep.mubr.f32.mxu0 0.0
      %5459 = vmatmul.mubr.f32.gmra.mrb[0].mxu0 %v5180
      %v5460 = vpop.f32.mrb[0].mxu0
      %v5461 = vadd.f32 0.0, %v5460
      %v5462 = vpop.f32.mrb[0].mxu0
      %5463 = vmatprep.mubr.f32.mxu0 0.0
      %5464 = vmatmul.mubr.f32.gmra.mrb[0].mxu0 %v5181
      %v5465 = vpop.f32.mrb[0].mxu0
      %v5466 = vadd.f32 0.0, %v5465
      %v5467 = vpop.f32.mrb[0].mxu0
      %5468 = vdwg.mxu0
      %5469 = vmatprep.subr.mxu0 0.0
      %5470 = vmatpush1.msra.mxu0 %v5125
      %5471 = vmatprep.subr.mxu0 0.0
      %5472 = vmatpush1.msra.mxu0 %v5126
      %5473 = vmatprep.subr.mxu0 0.0
      %5474 = vmatpush1.msra.mxu0 %v5127
      %5475 = vmatprep.subr.mxu0 0.0
      %5476 = vmatpush1.msra.mxu0 %v5128
      %5477 = vmatprep.subr.mxu0 0.0
      %5478 = vmatpush1.msra.mxu0 %v5129
      %5479 = vmatprep.subr.mxu0 0.0
      %5480 = vmatpush1.msra.mxu0 %v5130
      %5481 = vmatprep.subr.mxu0 0.0
      %5482 = vmatpush1.msra.mxu0 %v5131
      %5483 = vmatprep.subr.mxu0 0.0
      %5484 = vmatpush1.msra.mxu0 %v5132
      %5485 = vmatprep.subr.mxu0 0.0
      %5486 = vmatpush1.msra.mxu0 %v5133
      %5487 = vmatprep.subr.mxu0 0.0
      %5488 = vmatpush1.msra.mxu0 %v5134
      %5489 = vmatprep.subr.mxu0 0.0
      %5490 = vmatpush1.msra.mxu0 %v5135
      %5491 = vmatprep.subr.mxu0 0.0
      %5492 = vmatpush1.msra.mxu0 %v5136
      %5493 = vmatprep.subr.mxu0 0.0
      %5494 = vmatpush1.msra.mxu0 %v5137
      %5495 = vmatprep.subr.mxu0 0.0
      %5496 = vmatpush1.msra.mxu0 %v5138
      %5497 = vmatprep.subr.mxu0 0.0
      %5498 = vmatpush1.msra.mxu0 %v5139
      %5499 = vmatprep.subr.mxu0 0.0
      %5500 = vmatpush1.msra.mxu0 %v5140
      %5501 = vmatprep.subr.mxu0 0.0
      %5502 = vmatpush1.msra.mxu0 0.0
      %5503 = vmatprep.subr.mxu0 0.0
      %5504 = vmatpush1.msra.mxu0 0.0
      %5505 = vmatprep.subr.mxu0 0.0
      %5506 = vmatpush1.msra.mxu0 0.0
      %5507 = vmatprep.subr.mxu0 0.0
      %5508 = vmatpush1.msra.mxu0 0.0
      %5509 = vmatprep.subr.mxu0 0.0
      %5510 = vmatpush1.msra.mxu0 0.0
      %5511 = vmatprep.subr.mxu0 0.0
      %5512 = vmatpush1.msra.mxu0 0.0
      %5513 = vmatprep.subr.mxu0 0.0
      %5514 = vmatpush1.msra.mxu0 0.0
      %5515 = vmatprep.subr.mxu0 0.0
      %5516 = vmatpush1.msra.mxu0 0.0
      %5517 = vmatprep.subr.mxu0 0.0
      %5518 = vmatpush1.msra.mxu0 0.0
      %5519 = vmatprep.subr.mxu0 0.0
      %5520 = vmatpush1.msra.mxu0 0.0
      %5521 = vmatprep.subr.mxu0 0.0
      %5522 = vmatpush1.msra.mxu0 0.0
      %5523 = vmatprep.subr.mxu0 0.0
      %5524 = vmatpush1.msra.mxu0 0.0
      %5525 = vmatprep.subr.mxu0 0.0
      %5526 = vmatpush1.msra.mxu0 0.0
      %5527 = vmatprep.subr.mxu0 0.0
      %5528 = vmatpush1.msra.mxu0 0.0
      %5529 = vmatprep.subr.mxu0 0.0
      %5530 = vmatpush1.msra.mxu0 0.0
      %5531 = vmatprep.subr.mxu0 0.0
      %5532 = vmatpush1.msra.mxu0 0.0
      %5533 = vmatprep.mubr.f32.mxu0 0.0
      %5534 = vmatmul.mubr.f32.gmra.mrb[0].mxu0 %v5084
      %v5535 = vpop.f32.mrb[0].mxu0
      %v5536 = vadd.f32 %v5266, %v5535
      %v5537 = vpop.f32.mrb[0].mxu0
      %5538 = vmatprep.mubr.f32.mxu0 0.0
      %5539 = vmatmul.mubr.f32.gmra.mrb[0].mxu0 %v5085
      %v5540 = vpop.f32.mrb[0].mxu0
      %v5541 = vadd.f32 %v5271, %v5540
      %v5542 = vpop.f32.mrb[0].mxu0
      %5543 = vmatprep.mubr.f32.mxu0 0.0
      %5544 = vmatmul.mubr.f32.gmra.mrb[0].mxu0 %v5086
      %v5545 = vpop.f32.mrb[0].mxu0
      %v5546 = vadd.f32 %v5276, %v5545
      %v5547 = vpop.f32.mrb[0].mxu0
      %5548 = vmatprep.mubr.f32.mxu0 0.0
      %5549 = vmatmul.mubr.f32.gmra.mrb[0].mxu0 %v5087
      %v5550 = vpop.f32.mrb[0].mxu0
      %v5551 = vadd.f32 %v5281, %v5550
      %v5552 = vpop.f32.mrb[0].mxu0
      %5553 = vmatprep.mubr.f32.mxu0 0.0
      %5554 = vmatmul.mubr.f32.gmra.mrb[0].mxu0 %v5088
      %v5555 = vpop.f32.mrb[0].mxu0
      %v5556 = vadd.f32 %v5286, %v5555
      %v5557 = vpop.f32.mrb[0].mxu0
      %5558 = vmatprep.mubr.f32.mxu0 0.0
      %5559 = vmatmul.mubr.f32.gmra.mrb[0].mxu0 %v5089
      %v5560 = vpop.f32.mrb[0].mxu0
      %v5561 = vadd.f32 %v5291, %v5560
      %v5562 = vpop.f32.mrb[0].mxu0
      %5563 = vmatprep.mubr.f32.mxu0 0.0
      %5564 = vmatmul.mubr.f32.gmra.mrb[0].mxu0 %v5090
      %v5565 = vpop.f32.mrb[0].mxu0
      %v5566 = vadd.f32 %v5296, %v5565
      %v5567 = vpop.f32.mrb[0].mxu0
      %5568 = vmatprep.mubr.f32.mxu0 0.0
      %5569 = vmatmul.mubr.f32.gmra.mrb[0].mxu0 %v5091
      %v5570 = vpop.f32.mrb[0].mxu0
      %v5571 = vadd.f32 %v5301, %v5570
      %v5572 = vpop.f32.mrb[0].mxu0
      %5573 = vmatprep.mubr.f32.mxu0 0.0
      %5574 = vmatmul.mubr.f32.gmra.mrb[0].mxu0 %v5092
      %v5575 = vpop.f32.mrb[0].mxu0
      %v5576 = vadd.f32 %v5306, %v5575
      %v5577 = vpop.f32.mrb[0].mxu0
      %5578 = vmatprep.mubr.f32.mxu0 0.0
      %5579 = vmatmul.mubr.f32.gmra.mrb[0].mxu0 %v5093
      %v5580 = vpop.f32.mrb[0].mxu0
      %v5581 = vadd.f32 %v5311, %v5580
      %v5582 = vpop.f32.mrb[0].mxu0
      %5583 = vmatprep.mubr.f32.mxu0 0.0
      %5584 = vmatmul.mubr.f32.gmra.mrb[0].mxu0 %v5094
      %v5585 = vpop.f32.mrb[0].mxu0
      %v5586 = vadd.f32 %v5316, %v5585
      %v5587 = vpop.f32.mrb[0].mxu0
      %5588 = vmatprep.mubr.f32.mxu0 0.0
      %5589 = vmatmul.mubr.f32.gmra.mrb[0].mxu0 %v5095
      %v5590 = vpop.f32.mrb[0].mxu0
      %v5591 = vadd.f32 %v5321, %v5590
      %v5592 = vpop.f32.mrb[0].mxu0
      %5593 = vmatprep.mubr.f32.mxu0 0.0
      %5594 = vmatmul.mubr.f32.gmra.mrb[0].mxu0 %v5096
      %v5595 = vpop.f32.mrb[0].mxu0
      %v5596 = vadd.f32 %v5326, %v5595
      %v5597 = vpop.f32.mrb[0].mxu0
      %5598 = vmatprep.mubr.f32.mxu0 0.0
      %5599 = vmatmul.mubr.f32.gmra.mrb[0].mxu0 %v5097
      %v5600 = vpop.f32.mrb[0].mxu0
      %v5601 = vadd.f32 %v5331, %v5600
      %v5602 = vpop.f32.mrb[0].mxu0
      %5603 = vmatprep.mubr.f32.mxu0 0.0
      %5604 = vmatmul.mubr.f32.gmra.mrb[0].mxu0 %v5098
      %v5605 = vpop.f32.mrb[0].mxu0
      %v5606 = vadd.f32 %v5336, %v5605
      %v5607 = vpop.f32.mrb[0].mxu0
      %5608 = vmatprep.mubr.f32.mxu0 0.0
      %5609 = vmatmul.mubr.f32.gmra.mrb[0].mxu0 %v5099
      %v5610 = vpop.f32.mrb[0].mxu0
      %v5611 = vadd.f32 %v5341, %v5610
      %v5612 = vpop.f32.mrb[0].mxu0
      %5613 = vmatprep.mubr.f32.mxu0 0.0
      %5614 = vmatmul.mubr.f32.gmra.mrb[0].mxu0 %v5100
      %v5615 = vpop.f32.mrb[0].mxu0
      %v5616 = vadd.f32 %v5346, %v5615
      %v5617 = vpop.f32.mrb[0].mxu0
      %5618 = vmatprep.mubr.f32.mxu0 0.0
      %5619 = vmatmul.mubr.f32.gmra.mrb[0].mxu0 %v5101
      %v5620 = vpop.f32.mrb[0].mxu0
      %v5621 = vadd.f32 %v5351, %v5620
      %v5622 = vpop.f32.mrb[0].mxu0
      %5623 = vmatprep.mubr.f32.mxu0 0.0
      %5624 = vmatmul.mubr.f32.gmra.mrb[0].mxu0 %v5102
      %v5625 = vpop.f32.mrb[0].mxu0
      %v5626 = vadd.f32 %v5356, %v5625
      %v5627 = vpop.f32.mrb[0].mxu0
      %5628 = vmatprep.mubr.f32.mxu0 0.0
      %5629 = vmatmul.mubr.f32.gmra.mrb[0].mxu0 %v5103
      %v5630 = vpop.f32.mrb[0].mxu0
      %v5631 = vadd.f32 %v5361, %v5630
      %v5632 = vpop.f32.mrb[0].mxu0
      %5633 = vmatprep.mubr.f32.mxu0 0.0
      %5634 = vmatmul.mubr.f32.gmra.mrb[0].mxu0 %v5104
      %v5635 = vpop.f32.mrb[0].mxu0
      %v5636 = vadd.f32 %v5366, %v5635
      %v5637 = vpop.f32.mrb[0].mxu0
      %5638 = vmatprep.mubr.f32.mxu0 0.0
      %5639 = vmatmul.mubr.f32.gmra.mrb[0].mxu0 %v5105
      %v5640 = vpop.f32.mrb[0].mxu0
      %v5641 = vadd.f32 %v5371, %v5640
      %v5642 = vpop.f32.mrb[0].mxu0
      %5643 = vmatprep.mubr.f32.mxu0 0.0
      %5644 = vmatmul.mubr.f32.gmra.mrb[0].mxu0 %v5106
      %v5645 = vpop.f32.mrb[0].mxu0
      %v5646 = vadd.f32 %v5376, %v5645
      %v5647 = vpop.f32.mrb[0].mxu0
      %5648 = vmatprep.mubr.f32.mxu0 0.0
      %5649 = vmatmul.mubr.f32.gmra.mrb[0].mxu0 %v5107
      %v5650 = vpop.f32.mrb[0].mxu0
      %v5651 = vadd.f32 %v5381, %v5650
      %v5652 = vpop.f32.mrb[0].mxu0
      %5653 = vmatprep.mubr.f32.mxu0 0.0
      %5654 = vmatmul.mubr.f32.gmra.mrb[0].mxu0 %v5108
      %v5655 = vpop.f32.mrb[0].mxu0
      %v5656 = vadd.f32 %v5386, %v5655
      %v5657 = vpop.f32.mrb[0].mxu0
      %5658 = vmatprep.mubr.f32.mxu0 0.0
      %5659 = vmatmul.mubr.f32.gmra.mrb[0].mxu0 %v5109
      %v5660 = vpop.f32.mrb[0].mxu0
      %v5661 = vadd.f32 %v5391, %v5660
      %v5662 = vpop.f32.mrb[0].mxu0
      %5663 = vmatprep.mubr.f32.mxu0 0.0
      %5664 = vmatmul.mubr.f32.gmra.mrb[0].mxu0 %v5110
      %v5665 = vpop.f32.mrb[0].mxu0
      %v5666 = vadd.f32 %v5396, %v5665
      %v5667 = vpop.f32.mrb[0].mxu0
      %5668 = vmatprep.mubr.f32.mxu0 0.0
      %5669 = vmatmul.mubr.f32.gmra.mrb[0].mxu0 %v5111
      %v5670 = vpop.f32.mrb[0].mxu0
      %v5671 = vadd.f32 %v5401, %v5670
      %v5672 = vpop.f32.mrb[0].mxu0
      %5673 = vmatprep.mubr.f32.mxu0 0.0
      %5674 = vmatmul.mubr.f32.gmra.mrb[0].mxu0 %v5112
      %v5675 = vpop.f32.mrb[0].mxu0
      %v5676 = vadd.f32 %v5406, %v5675
      %v5677 = vpop.f32.mrb[0].mxu0
      %5678 = vmatprep.mubr.f32.mxu0 0.0
      %5679 = vmatmul.mubr.f32.gmra.mrb[0].mxu0 %v5113
      %v5680 = vpop.f32.mrb[0].mxu0
      %v5681 = vadd.f32 %v5411, %v5680
      %v5682 = vpop.f32.mrb[0].mxu0
      %5683 = vmatprep.mubr.f32.mxu0 0.0
      %5684 = vmatmul.mubr.f32.gmra.mrb[0].mxu0 %v5114
      %v5685 = vpop.f32.mrb[0].mxu0
      %v5686 = vadd.f32 %v5416, %v5685
      %v5687 = vpop.f32.mrb[0].mxu0
      %5688 = vmatprep.mubr.f32.mxu0 0.0
      %5689 = vmatmul.mubr.f32.gmra.mrb[0].mxu0 %v5115
      %v5690 = vpop.f32.mrb[0].mxu0
      %v5691 = vadd.f32 %v5421, %v5690
      %v5692 = vpop.f32.mrb[0].mxu0
      %5693 = vmatprep.mubr.f32.mxu0 0.0
      %5694 = vmatmul.mubr.f32.gmra.mrb[0].mxu0 %v5116
      %v5695 = vpop.f32.mrb[0].mxu0
      %v5696 = vadd.f32 %v5426, %v5695
      %v5697 = vpop.f32.mrb[0].mxu0
      %5698 = vmatprep.mubr.f32.mxu0 0.0
      %5699 = vmatmul.mubr.f32.gmra.mrb[0].mxu0 %v5117
      %v5700 = vpop.f32.mrb[0].mxu0
      %v5701 = vadd.f32 %v5431, %v5700
      %v5702 = vpop.f32.mrb[0].mxu0
      %5703 = vmatprep.mubr.f32.mxu0 0.0
      %5704 = vmatmul.mubr.f32.gmra.mrb[0].mxu0 %v5118
      %v5705 = vpop.f32.mrb[0].mxu0
      %v5706 = vadd.f32 %v5436, %v5705
      %v5707 = vpop.f32.mrb[0].mxu0
      %5708 = vmatprep.mubr.f32.mxu0 0.0
      %5709 = vmatmul.mubr.f32.gmra.mrb[0].mxu0 %v5119
      %v5710 = vpop.f32.mrb[0].mxu0
      %v5711 = vadd.f32 %v5441, %v5710
      %v5712 = vpop.f32.mrb[0].mxu0
      %5713 = vmatprep.mubr.f32.mxu0 0.0
      %5714 = vmatmul.mubr.f32.gmra.mrb[0].mxu0 %v5120
      %v5715 = vpop.f32.mrb[0].mxu0
      %v5716 = vadd.f32 %v5446, %v5715
      %v5717 = vpop.f32.mrb[0].mxu0
      %5718 = vmatprep.mubr.f32.mxu0 0.0
      %5719 = vmatmul.mubr.f32.gmra.mrb[0].mxu0 %v5121
      %v5720 = vpop.f32.mrb[0].mxu0
      %v5721 = vadd.f32 %v5451, %v5720
      %v5722 = vpop.f32.mrb[0].mxu0
      %5723 = vmatprep.mubr.f32.mxu0 0.0
      %5724 = vmatmul.mubr.f32.gmra.mrb[0].mxu0 %v5122
      %v5725 = vpop.f32.mrb[0].mxu0
      %v5726 = vadd.f32 %v5456, %v5725
      %v5727 = vpop.f32.mrb[0].mxu0
      %5728 = vmatprep.mubr.f32.mxu0 0.0
      %5729 = vmatmul.mubr.f32.gmra.mrb[0].mxu0 %v5123
      %v5730 = vpop.f32.mrb[0].mxu0
      %v5731 = vadd.f32 %v5461, %v5730
      %v5732 = vpop.f32.mrb[0].mxu0
      %5733 = vmatprep.mubr.f32.mxu0 0.0
      %5734 = vmatmul.mubr.f32.gmra.mrb[0].mxu0 %v5124
      %v5735 = vpop.f32.mrb[0].mxu0
      %v5736 = vadd.f32 %v5466, %v5735
      %v5737 = vpop.f32.mrb[0].mxu0
      %5738 = vdwg.mxu0
      %v5739 = vld [vmem:[#allocation2 + $0x7] sm:$0xff]
      %v5740 = vld [vmem:[#allocation2 + $0xf] sm:$0xff]
      %v5741 = vld [vmem:[#allocation2 + $0x17] sm:$0xff]
      %v5742 = vld [vmem:[#allocation2 + $0x1f] sm:$0xff]
      %v5743 = vld [vmem:[#allocation2 + $0x27] sm:$0xff]
      %v5744 = vld [vmem:[#allocation2 + $0x2f] sm:$0xff]
      %v5745 = vld [vmem:[#allocation2 + $0x37] sm:$0xff]
      %v5746 = vld [vmem:[#allocation2 + $0x3f] sm:$0xff]
      %v5747 = vld [vmem:[#allocation2 + $0x47] sm:$0xff]
      %v5748 = vld [vmem:[#allocation2 + $0x4f] sm:$0xff]
      %v5749 = vld [vmem:[#allocation2 + $0x57] sm:$0xff]
      %v5750 = vld [vmem:[#allocation2 + $0x5f] sm:$0xff]
      %v5751 = vld [vmem:[#allocation2 + $0x67] sm:$0xff]
      %v5752 = vld [vmem:[#allocation2 + $0x6f] sm:$0xff]
      %v5753 = vld [vmem:[#allocation2 + $0x77] sm:$0xff]
      %v5754 = vld [vmem:[#allocation2 + $0x7f] sm:$0xff]
      %v5755 = vld [vmem:[#allocation2 + $0x87] sm:$0xff]
      %v5756 = vld [vmem:[#allocation2 + $0x8f] sm:$0xff]
      %v5757 = vld [vmem:[#allocation2 + $0x97] sm:$0xff]
      %v5758 = vld [vmem:[#allocation2 + $0x9f] sm:$0xff]
      %v5759 = vld [vmem:[#allocation2 + $0xa7] sm:$0xff]
      %v5760 = vld [vmem:[#allocation2 + $0xaf] sm:$0xff]
      %v5761 = vld [vmem:[#allocation2 + $0xb7] sm:$0xff]
      %v5762 = vld [vmem:[#allocation2 + $0xbf] sm:$0xff]
      %v5763 = vld [vmem:[#allocation2 + $0xc7] sm:$0xff]
      %v5764 = vld [vmem:[#allocation2 + $0xcf] sm:$0xff]
      %v5765 = vld [vmem:[#allocation2 + $0xd7] sm:$0xff]
      %v5766 = vld [vmem:[#allocation2 + $0xdf] sm:$0xff]
      %v5767 = vld [vmem:[#allocation2 + $0xe7] sm:$0xff]
      %v5768 = vld [vmem:[#allocation2 + $0xef] sm:$0xff]
      %v5769 = vld [vmem:[#allocation2 + $0xf7] sm:$0xff]
      %v5770 = vld [vmem:[#allocation2 + $0xff] sm:$0xff]
      %v5771 = vld [vmem:[#allocation2 + $0x107] sm:$0xff]
      %v5772 = vld [vmem:[#allocation2 + $0x10f] sm:$0xff]
      %v5773 = vld [vmem:[#allocation2 + $0x117] sm:$0xff]
      %v5774 = vld [vmem:[#allocation2 + $0x11f] sm:$0xff]
      %v5775 = vld [vmem:[#allocation2 + $0x127] sm:$0xff]
      %v5776 = vld [vmem:[#allocation2 + $0x12f] sm:$0xff]
      %v5777 = vld [vmem:[#allocation2 + $0x137] sm:$0xff]
      %v5778 = vld [vmem:[#allocation2 + $0x13f] sm:$0xff]
      %v5779 = vld [vmem:[#allocation2 + $0x147] sm:$0xff]
      %s5780 = scalar_lea.vmem %s12, 256
      %v5781 = vld [vmem:[%s5780] sm:$0xff]
      %v5782 = vld [vmem:[%s5780 + $0x8] sm:$0xff]
      %v5783 = vld [vmem:[%s5780 + $0x10] sm:$0xff]
      %v5784 = vld [vmem:[%s5780 + $0x18] sm:$0xff]
      %v5785 = vld [vmem:[%s5780 + $0x20] sm:$0xff]
      %v5786 = vld [vmem:[%s5780 + $0x28] sm:$0xff]
      %v5787 = vld [vmem:[%s5780 + $0x30] sm:$0xff]
      %v5788 = vld [vmem:[%s5780 + $0x38] sm:$0xff]
      %v5789 = vld [vmem:[%s5780 + $0x40] sm:$0xff]
      %v5790 = vld [vmem:[%s5780 + $0x48] sm:$0xff]
      %v5791 = vld [vmem:[%s5780 + $0x50] sm:$0xff]
      %v5792 = vld [vmem:[%s5780 + $0x58] sm:$0xff]
      %v5793 = vld [vmem:[%s5780 + $0x60] sm:$0xff]
      %v5794 = vld [vmem:[%s5780 + $0x68] sm:$0xff]
      %v5795 = vld [vmem:[%s5780 + $0x70] sm:$0xff]
      %v5796 = vld [vmem:[%s5780 + $0x78] sm:$0xff]
      %5797 = vmatprep.subr.mxu0 0.0
      %5798 = vmatpush1.msra.mxu0 %v5781
      %5799 = vmatprep.subr.mxu0 0.0
      %5800 = vmatpush1.msra.mxu0 %v5782
      %5801 = vmatprep.subr.mxu0 0.0
      %5802 = vmatpush1.msra.mxu0 %v5783
      %5803 = vmatprep.subr.mxu0 0.0
      %5804 = vmatpush1.msra.mxu0 %v5784
      %5805 = vmatprep.subr.mxu0 0.0
      %5806 = vmatpush1.msra.mxu0 %v5785
      %5807 = vmatprep.subr.mxu0 0.0
      %5808 = vmatpush1.msra.mxu0 %v5786
      %5809 = vmatprep.subr.mxu0 0.0
      %5810 = vmatpush1.msra.mxu0 %v5787
      %5811 = vmatprep.subr.mxu0 0.0
      %5812 = vmatpush1.msra.mxu0 %v5788
      %5813 = vmatprep.subr.mxu0 0.0
      %5814 = vmatpush1.msra.mxu0 %v5789
      %5815 = vmatprep.subr.mxu0 0.0
      %5816 = vmatpush1.msra.mxu0 %v5790
      %5817 = vmatprep.subr.mxu0 0.0
      %5818 = vmatpush1.msra.mxu0 %v5791
      %5819 = vmatprep.subr.mxu0 0.0
      %5820 = vmatpush1.msra.mxu0 %v5792
      %5821 = vmatprep.subr.mxu0 0.0
      %5822 = vmatpush1.msra.mxu0 %v5793
      %5823 = vmatprep.subr.mxu0 0.0
      %5824 = vmatpush1.msra.mxu0 %v5794
      %5825 = vmatprep.subr.mxu0 0.0
      %5826 = vmatpush1.msra.mxu0 %v5795
      %5827 = vmatprep.subr.mxu0 0.0
      %5828 = vmatpush1.msra.mxu0 %v5796
      %5829 = vmatprep.subr.mxu0 0.0
      %5830 = vmatpush1.msra.mxu0 0.0
      %5831 = vmatprep.subr.mxu0 0.0
      %5832 = vmatpush1.msra.mxu0 0.0
      %5833 = vmatprep.subr.mxu0 0.0
      %5834 = vmatpush1.msra.mxu0 0.0
      %5835 = vmatprep.subr.mxu0 0.0
      %5836 = vmatpush1.msra.mxu0 0.0
      %5837 = vmatprep.subr.mxu0 0.0
      %5838 = vmatpush1.msra.mxu0 0.0
      %5839 = vmatprep.subr.mxu0 0.0
      %5840 = vmatpush1.msra.mxu0 0.0
      %5841 = vmatprep.subr.mxu0 0.0
      %5842 = vmatpush1.msra.mxu0 0.0
      %5843 = vmatprep.subr.mxu0 0.0
      %5844 = vmatpush1.msra.mxu0 0.0
      %5845 = vmatprep.subr.mxu0 0.0
      %5846 = vmatpush1.msra.mxu0 0.0
      %5847 = vmatprep.subr.mxu0 0.0
      %5848 = vmatpush1.msra.mxu0 0.0
      %5849 = vmatprep.subr.mxu0 0.0
      %5850 = vmatpush1.msra.mxu0 0.0
      %5851 = vmatprep.subr.mxu0 0.0
      %5852 = vmatpush1.msra.mxu0 0.0
      %5853 = vmatprep.subr.mxu0 0.0
      %5854 = vmatpush1.msra.mxu0 0.0
      %5855 = vmatprep.subr.mxu0 0.0
      %5856 = vmatpush1.msra.mxu0 0.0
      %5857 = vmatprep.subr.mxu0 0.0
      %5858 = vmatpush1.msra.mxu0 0.0
      %5859 = vmatprep.subr.mxu0 0.0
      %5860 = vmatpush1.msra.mxu0 0.0
      %5861 = vmatprep.mubr.f32.mxu0 0.0
      %5862 = vmatmul.mubr.f32.gmra.mrb[0].mxu0 %v5739
      %v5863 = vpop.f32.mrb[0].mxu0
      %v5864 = vadd.f32 0.0, %v5863
      %v5865 = vpop.f32.mrb[0].mxu0
      %5866 = vmatprep.mubr.f32.mxu0 0.0
      %5867 = vmatmul.mubr.f32.gmra.mrb[0].mxu0 %v5740
      %v5868 = vpop.f32.mrb[0].mxu0
      %v5869 = vadd.f32 0.0, %v5868
      %v5870 = vpop.f32.mrb[0].mxu0
      %5871 = vmatprep.mubr.f32.mxu0 0.0
      %5872 = vmatmul.mubr.f32.gmra.mrb[0].mxu0 %v5741
      %v5873 = vpop.f32.mrb[0].mxu0
      %v5874 = vadd.f32 0.0, %v5873
      %v5875 = vpop.f32.mrb[0].mxu0
      %5876 = vmatprep.mubr.f32.mxu0 0.0
      %5877 = vmatmul.mubr.f32.gmra.mrb[0].mxu0 %v5742
      %v5878 = vpop.f32.mrb[0].mxu0
      %v5879 = vadd.f32 0.0, %v5878
      %v5880 = vpop.f32.mrb[0].mxu0
      %5881 = vmatprep.mubr.f32.mxu0 0.0
      %5882 = vmatmul.mubr.f32.gmra.mrb[0].mxu0 %v5743
      %v5883 = vpop.f32.mrb[0].mxu0
      %v5884 = vadd.f32 0.0, %v5883
      %v5885 = vpop.f32.mrb[0].mxu0
      %5886 = vmatprep.mubr.f32.mxu0 0.0
      %5887 = vmatmul.mubr.f32.gmra.mrb[0].mxu0 %v5744
      %v5888 = vpop.f32.mrb[0].mxu0
      %v5889 = vadd.f32 0.0, %v5888
      %v5890 = vpop.f32.mrb[0].mxu0
      %5891 = vmatprep.mubr.f32.mxu0 0.0
      %5892 = vmatmul.mubr.f32.gmra.mrb[0].mxu0 %v5745
      %v5893 = vpop.f32.mrb[0].mxu0
      %v5894 = vadd.f32 0.0, %v5893
      %v5895 = vpop.f32.mrb[0].mxu0
      %5896 = vmatprep.mubr.f32.mxu0 0.0
      %5897 = vmatmul.mubr.f32.gmra.mrb[0].mxu0 %v5746
      %v5898 = vpop.f32.mrb[0].mxu0
      %v5899 = vadd.f32 0.0, %v5898
      %v5900 = vpop.f32.mrb[0].mxu0
      %5901 = vmatprep.mubr.f32.mxu0 0.0
      %5902 = vmatmul.mubr.f32.gmra.mrb[0].mxu0 %v5747
      %v5903 = vpop.f32.mrb[0].mxu0
      %v5904 = vadd.f32 0.0, %v5903
      %v5905 = vpop.f32.mrb[0].mxu0
      %5906 = vmatprep.mubr.f32.mxu0 0.0
      %5907 = vmatmul.mubr.f32.gmra.mrb[0].mxu0 %v5748
      %v5908 = vpop.f32.mrb[0].mxu0
      %v5909 = vadd.f32 0.0, %v5908
      %v5910 = vpop.f32.mrb[0].mxu0
      %5911 = vmatprep.mubr.f32.mxu0 0.0
      %5912 = vmatmul.mubr.f32.gmra.mrb[0].mxu0 %v5749
      %v5913 = vpop.f32.mrb[0].mxu0
      %v5914 = vadd.f32 0.0, %v5913
      %v5915 = vpop.f32.mrb[0].mxu0
      %5916 = vmatprep.mubr.f32.mxu0 0.0
      %5917 = vmatmul.mubr.f32.gmra.mrb[0].mxu0 %v5750
      %v5918 = vpop.f32.mrb[0].mxu0
      %v5919 = vadd.f32 0.0, %v5918
      %v5920 = vpop.f32.mrb[0].mxu0
      %5921 = vmatprep.mubr.f32.mxu0 0.0
      %5922 = vmatmul.mubr.f32.gmra.mrb[0].mxu0 %v5751
      %v5923 = vpop.f32.mrb[0].mxu0
      %v5924 = vadd.f32 0.0, %v5923
      %v5925 = vpop.f32.mrb[0].mxu0
      %5926 = vmatprep.mubr.f32.mxu0 0.0
      %5927 = vmatmul.mubr.f32.gmra.mrb[0].mxu0 %v5752
      %v5928 = vpop.f32.mrb[0].mxu0
      %v5929 = vadd.f32 0.0, %v5928
      %v5930 = vpop.f32.mrb[0].mxu0
      %5931 = vmatprep.mubr.f32.mxu0 0.0
      %5932 = vmatmul.mubr.f32.gmra.mrb[0].mxu0 %v5753
      %v5933 = vpop.f32.mrb[0].mxu0
      %v5934 = vadd.f32 0.0, %v5933
      %v5935 = vpop.f32.mrb[0].mxu0
      %5936 = vmatprep.mubr.f32.mxu0 0.0
      %5937 = vmatmul.mubr.f32.gmra.mrb[0].mxu0 %v5754
      %v5938 = vpop.f32.mrb[0].mxu0
      %v5939 = vadd.f32 0.0, %v5938
      %v5940 = vpop.f32.mrb[0].mxu0
      %5941 = vmatprep.mubr.f32.mxu0 0.0
      %5942 = vmatmul.mubr.f32.gmra.mrb[0].mxu0 %v5755
      %v5943 = vpop.f32.mrb[0].mxu0
      %v5944 = vadd.f32 0.0, %v5943
      %v5945 = vpop.f32.mrb[0].mxu0
      %5946 = vmatprep.mubr.f32.mxu0 0.0
      %5947 = vmatmul.mubr.f32.gmra.mrb[0].mxu0 %v5756
      %v5948 = vpop.f32.mrb[0].mxu0
      %v5949 = vadd.f32 0.0, %v5948
      %v5950 = vpop.f32.mrb[0].mxu0
      %5951 = vmatprep.mubr.f32.mxu0 0.0
      %5952 = vmatmul.mubr.f32.gmra.mrb[0].mxu0 %v5757
      %v5953 = vpop.f32.mrb[0].mxu0
      %v5954 = vadd.f32 0.0, %v5953
      %v5955 = vpop.f32.mrb[0].mxu0
      %5956 = vmatprep.mubr.f32.mxu0 0.0
      %5957 = vmatmul.mubr.f32.gmra.mrb[0].mxu0 %v5758
      %v5958 = vpop.f32.mrb[0].mxu0
      %v5959 = vadd.f32 0.0, %v5958
      %v5960 = vpop.f32.mrb[0].mxu0
      %5961 = vmatprep.mubr.f32.mxu0 0.0
      %5962 = vmatmul.mubr.f32.gmra.mrb[0].mxu0 %v5759
      %v5963 = vpop.f32.mrb[0].mxu0
      %v5964 = vadd.f32 0.0, %v5963
      %v5965 = vpop.f32.mrb[0].mxu0
      %5966 = vmatprep.mubr.f32.mxu0 0.0
      %5967 = vmatmul.mubr.f32.gmra.mrb[0].mxu0 %v5760
      %v5968 = vpop.f32.mrb[0].mxu0
      %v5969 = vadd.f32 0.0, %v5968
      %v5970 = vpop.f32.mrb[0].mxu0
      %5971 = vmatprep.mubr.f32.mxu0 0.0
      %5972 = vmatmul.mubr.f32.gmra.mrb[0].mxu0 %v5761
      %v5973 = vpop.f32.mrb[0].mxu0
      %v5974 = vadd.f32 0.0, %v5973
      %v5975 = vpop.f32.mrb[0].mxu0
      %5976 = vmatprep.mubr.f32.mxu0 0.0
      %5977 = vmatmul.mubr.f32.gmra.mrb[0].mxu0 %v5762
      %v5978 = vpop.f32.mrb[0].mxu0
      %v5979 = vadd.f32 0.0, %v5978
      %v5980 = vpop.f32.mrb[0].mxu0
      %5981 = vmatprep.mubr.f32.mxu0 0.0
      %5982 = vmatmul.mubr.f32.gmra.mrb[0].mxu0 %v5763
      %v5983 = vpop.f32.mrb[0].mxu0
      %v5984 = vadd.f32 0.0, %v5983
      %v5985 = vpop.f32.mrb[0].mxu0
      %5986 = vmatprep.mubr.f32.mxu0 0.0
      %5987 = vmatmul.mubr.f32.gmra.mrb[0].mxu0 %v5764
      %v5988 = vpop.f32.mrb[0].mxu0
      %v5989 = vadd.f32 0.0, %v5988
      %v5990 = vpop.f32.mrb[0].mxu0
      %5991 = vmatprep.mubr.f32.mxu0 0.0
      %5992 = vmatmul.mubr.f32.gmra.mrb[0].mxu0 %v5765
      %v5993 = vpop.f32.mrb[0].mxu0
      %v5994 = vadd.f32 0.0, %v5993
      %v5995 = vpop.f32.mrb[0].mxu0
      %5996 = vmatprep.mubr.f32.mxu0 0.0
      %5997 = vmatmul.mubr.f32.gmra.mrb[0].mxu0 %v5766
      %v5998 = vpop.f32.mrb[0].mxu0
      %v5999 = vadd.f32 0.0, %v5998
      %v6000 = vpop.f32.mrb[0].mxu0
      %6001 = vmatprep.mubr.f32.mxu0 0.0
      %6002 = vmatmul.mubr.f32.gmra.mrb[0].mxu0 %v5767
      %v6003 = vpop.f32.mrb[0].mxu0
      %v6004 = vadd.f32 0.0, %v6003
      %v6005 = vpop.f32.mrb[0].mxu0
      %6006 = vmatprep.mubr.f32.mxu0 0.0
      %6007 = vmatmul.mubr.f32.gmra.mrb[0].mxu0 %v5768
      %v6008 = vpop.f32.mrb[0].mxu0
      %v6009 = vadd.f32 0.0, %v6008
      %v6010 = vpop.f32.mrb[0].mxu0
      %6011 = vmatprep.mubr.f32.mxu0 0.0
      %6012 = vmatmul.mubr.f32.gmra.mrb[0].mxu0 %v5769
      %v6013 = vpop.f32.mrb[0].mxu0
      %v6014 = vadd.f32 0.0, %v6013
      %v6015 = vpop.f32.mrb[0].mxu0
      %6016 = vmatprep.mubr.f32.mxu0 0.0
      %6017 = vmatmul.mubr.f32.gmra.mrb[0].mxu0 %v5770
      %v6018 = vpop.f32.mrb[0].mxu0
      %v6019 = vadd.f32 0.0, %v6018
      %v6020 = vpop.f32.mrb[0].mxu0
      %6021 = vmatprep.mubr.f32.mxu0 0.0
      %6022 = vmatmul.mubr.f32.gmra.mrb[0].mxu0 %v5771
      %v6023 = vpop.f32.mrb[0].mxu0
      %v6024 = vadd.f32 0.0, %v6023
      %v6025 = vpop.f32.mrb[0].mxu0
      %6026 = vmatprep.mubr.f32.mxu0 0.0
      %6027 = vmatmul.mubr.f32.gmra.mrb[0].mxu0 %v5772
      %v6028 = vpop.f32.mrb[0].mxu0
      %v6029 = vadd.f32 0.0, %v6028
      %v6030 = vpop.f32.mrb[0].mxu0
      %6031 = vmatprep.mubr.f32.mxu0 0.0
      %6032 = vmatmul.mubr.f32.gmra.mrb[0].mxu0 %v5773
      %v6033 = vpop.f32.mrb[0].mxu0
      %v6034 = vadd.f32 0.0, %v6033
      %v6035 = vpop.f32.mrb[0].mxu0
      %6036 = vmatprep.mubr.f32.mxu0 0.0
      %6037 = vmatmul.mubr.f32.gmra.mrb[0].mxu0 %v5774
      %v6038 = vpop.f32.mrb[0].mxu0
      %v6039 = vadd.f32 0.0, %v6038
      %v6040 = vpop.f32.mrb[0].mxu0
      %6041 = vmatprep.mubr.f32.mxu0 0.0
      %6042 = vmatmul.mubr.f32.gmra.mrb[0].mxu0 %v5775
      %v6043 = vpop.f32.mrb[0].mxu0
      %v6044 = vadd.f32 0.0, %v6043
      %v6045 = vpop.f32.mrb[0].mxu0
      %6046 = vmatprep.mubr.f32.mxu0 0.0
      %6047 = vmatmul.mubr.f32.gmra.mrb[0].mxu0 %v5776
      %v6048 = vpop.f32.mrb[0].mxu0
      %v6049 = vadd.f32 0.0, %v6048
      %v6050 = vpop.f32.mrb[0].mxu0
      %6051 = vmatprep.mubr.f32.mxu0 0.0
      %6052 = vmatmul.mubr.f32.gmra.mrb[0].mxu0 %v5777
      %v6053 = vpop.f32.mrb[0].mxu0
      %v6054 = vadd.f32 0.0, %v6053
      %v6055 = vpop.f32.mrb[0].mxu0
      %6056 = vmatprep.mubr.f32.mxu0 0.0
      %6057 = vmatmul.mubr.f32.gmra.mrb[0].mxu0 %v5778
      %v6058 = vpop.f32.mrb[0].mxu0
      %v6059 = vadd.f32 0.0, %v6058
      %v6060 = vpop.f32.mrb[0].mxu0
      %6061 = vmatprep.mubr.f32.mxu0 0.0
      %6062 = vmatmul.mubr.f32.gmra.mrb[0].mxu0 %v5779
      %v6063 = vpop.f32.mrb[0].mxu0
      %v6064 = vadd.f32 0.0, %v6063
      %v6065 = vpop.f32.mrb[0].mxu0
      %6066 = vdwg.mxu0
      %v6067 = vadd.f32 %v5536, %v5864
      %v6068 = vadd.f32 %v5541, %v5869
      %v6069 = vadd.f32 %v5546, %v5874
      %v6070 = vadd.f32 %v5551, %v5879
      %v6071 = vadd.f32 %v5556, %v5884
      %v6072 = vadd.f32 %v5561, %v5889
      %v6073 = vadd.f32 %v5566, %v5894
      %v6074 = vadd.f32 %v5571, %v5899
      %v6075 = vadd.f32 %v5576, %v5904
      %v6076 = vadd.f32 %v5581, %v5909
      %v6077 = vadd.f32 %v5586, %v5914
      %v6078 = vadd.f32 %v5591, %v5919
      %v6079 = vadd.f32 %v5596, %v5924
      %v6080 = vadd.f32 %v5601, %v5929
      %v6081 = vadd.f32 %v5606, %v5934
      %v6082 = vadd.f32 %v5611, %v5939
      %v6083 = vadd.f32 %v5616, %v5944
      %v6084 = vadd.f32 %v5621, %v5949
      %v6085 = vadd.f32 %v5626, %v5954
      %v6086 = vadd.f32 %v5631, %v5959
      %v6087 = vadd.f32 %v5636, %v5964
      %v6088 = vadd.f32 %v5641, %v5969
      %v6089 = vadd.f32 %v5646, %v5974
      %v6090 = vadd.f32 %v5651, %v5979
      %v6091 = vadd.f32 %v5656, %v5984
      %v6092 = vadd.f32 %v5661, %v5989
      %v6093 = vadd.f32 %v5666, %v5994
      %v6094 = vadd.f32 %v5671, %v5999
      %v6095 = vadd.f32 %v5676, %v6004
      %v6096 = vadd.f32 %v5681, %v6009
      %v6097 = vadd.f32 %v5686, %v6014
      %v6098 = vadd.f32 %v5691, %v6019
      %v6099 = vadd.f32 %v5696, %v6024
      %v6100 = vadd.f32 %v5701, %v6029
      %v6101 = vadd.f32 %v5706, %v6034
      %v6102 = vadd.f32 %v5711, %v6039
      %v6103 = vadd.f32 %v5716, %v6044
      %v6104 = vadd.f32 %v5721, %v6049
      %v6105 = vadd.f32 %v5726, %v6054
      %v6106 = vadd.f32 %v5731, %v6059
      %v6107 = vadd.f32 %v5736, %v6064
      %v6108 = vld [vmem:[#allocation2 + $0x17] sm:$0xff]
      %v6109 = vld [vmem:[#allocation2 + $0x1f] sm:$0xff]
      %v6110 = vld [vmem:[#allocation2 + $0x27] sm:$0xff]
      %v6111 = vld [vmem:[#allocation2 + $0x2f] sm:$0xff]
      %v6112 = vld [vmem:[#allocation2 + $0x37] sm:$0xff]
      %v6113 = vld [vmem:[#allocation2 + $0x3f] sm:$0xff]
      %v6114 = vld [vmem:[#allocation2 + $0x47] sm:$0xff]
      %v6115 = vld [vmem:[#allocation2 + $0x4f] sm:$0xff]
      %v6116 = vld [vmem:[#allocation2 + $0x57] sm:$0xff]
      %v6117 = vld [vmem:[#allocation2 + $0x5f] sm:$0xff]
      %v6118 = vld [vmem:[#allocation2 + $0x67] sm:$0xff]
      %v6119 = vld [vmem:[#allocation2 + $0x6f] sm:$0xff]
      %v6120 = vld [vmem:[#allocation2 + $0x77] sm:$0xff]
      %v6121 = vld [vmem:[#allocation2 + $0x7f] sm:$0xff]
      %v6122 = vld [vmem:[#allocation2 + $0x87] sm:$0xff]
      %v6123 = vld [vmem:[#allocation2 + $0x8f] sm:$0xff]
      %v6124 = vld [vmem:[#allocation2 + $0x97] sm:$0xff]
      %v6125 = vld [vmem:[#allocation2 + $0x9f] sm:$0xff]
      %v6126 = vld [vmem:[#allocation2 + $0xa7] sm:$0xff]
      %v6127 = vld [vmem:[#allocation2 + $0xaf] sm:$0xff]
      %v6128 = vld [vmem:[#allocation2 + $0xb7] sm:$0xff]
      %v6129 = vld [vmem:[#allocation2 + $0xbf] sm:$0xff]
      %v6130 = vld [vmem:[#allocation2 + $0xc7] sm:$0xff]
      %v6131 = vld [vmem:[#allocation2 + $0xcf] sm:$0xff]
      %v6132 = vld [vmem:[#allocation2 + $0xd7] sm:$0xff]
      %v6133 = vld [vmem:[#allocation2 + $0xdf] sm:$0xff]
      %v6134 = vld [vmem:[#allocation2 + $0xe7] sm:$0xff]
      %v6135 = vld [vmem:[#allocation2 + $0xef] sm:$0xff]
      %v6136 = vld [vmem:[#allocation2 + $0xf7] sm:$0xff]
      %v6137 = vld [vmem:[#allocation2 + $0xff] sm:$0xff]
      %v6138 = vld [vmem:[#allocation2 + $0x107] sm:$0xff]
      %v6139 = vld [vmem:[#allocation2 + $0x10f] sm:$0xff]
      %v6140 = vld [vmem:[#allocation2 + $0x117] sm:$0xff]
      %v6141 = vld [vmem:[#allocation2 + $0x11f] sm:$0xff]
      %v6142 = vld [vmem:[#allocation2 + $0x127] sm:$0xff]
      %v6143 = vld [vmem:[#allocation2 + $0x12f] sm:$0xff]
      %v6144 = vld [vmem:[#allocation2 + $0x137] sm:$0xff]
      %v6145 = vld [vmem:[#allocation2 + $0x13f] sm:$0xff]
      %v6146 = vld [vmem:[#allocation2 + $0x147] sm:$0xff]
      %v6147 = vld [vmem:[#allocation2 + $0x14f] sm:$0xff]
      %v6148 = vld [vmem:[#allocation2 + $0x157] sm:$0xff]
      %s6149 = scalar_lea.vmem %s12, 384
      %v6150 = vld [vmem:[%s6149] sm:$0xff]
      %v6151 = vld [vmem:[%s6149 + $0x8] sm:$0xff]
      %v6152 = vld [vmem:[%s6149 + $0x10] sm:$0xff]
      %v6153 = vld [vmem:[%s6149 + $0x18] sm:$0xff]
      %v6154 = vld [vmem:[%s6149 + $0x20] sm:$0xff]
      %v6155 = vld [vmem:[%s6149 + $0x28] sm:$0xff]
      %v6156 = vld [vmem:[%s6149 + $0x30] sm:$0xff]
      %v6157 = vld [vmem:[%s6149 + $0x38] sm:$0xff]
      %v6158 = vld [vmem:[%s6149 + $0x40] sm:$0xff]
      %v6159 = vld [vmem:[%s6149 + $0x48] sm:$0xff]
      %v6160 = vld [vmem:[%s6149 + $0x50] sm:$0xff]
      %v6161 = vld [vmem:[%s6149 + $0x58] sm:$0xff]
      %v6162 = vld [vmem:[%s6149 + $0x60] sm:$0xff]
      %v6163 = vld [vmem:[%s6149 + $0x68] sm:$0xff]
      %v6164 = vld [vmem:[%s6149 + $0x70] sm:$0xff]
      %v6165 = vld [vmem:[%s6149 + $0x78] sm:$0xff]
      %6166 = vmatprep.subr.mxu0 0.0
      %6167 = vmatpush1.msra.mxu0 %v6150
      %6168 = vmatprep.subr.mxu0 0.0
      %6169 = vmatpush1.msra.mxu0 %v6151
      %6170 = vmatprep.subr.mxu0 0.0
      %6171 = vmatpush1.msra.mxu0 %v6152
      %6172 = vmatprep.subr.mxu0 0.0
      %6173 = vmatpush1.msra.mxu0 %v6153
      %6174 = vmatprep.subr.mxu0 0.0
      %6175 = vmatpush1.msra.mxu0 %v6154
      %6176 = vmatprep.subr.mxu0 0.0
      %6177 = vmatpush1.msra.mxu0 %v6155
      %6178 = vmatprep.subr.mxu0 0.0
      %6179 = vmatpush1.msra.mxu0 %v6156
      %6180 = vmatprep.subr.mxu0 0.0
      %6181 = vmatpush1.msra.mxu0 %v6157
      %6182 = vmatprep.subr.mxu0 0.0
      %6183 = vmatpush1.msra.mxu0 %v6158
      %6184 = vmatprep.subr.mxu0 0.0
      %6185 = vmatpush1.msra.mxu0 %v6159
      %6186 = vmatprep.subr.mxu0 0.0
      %6187 = vmatpush1.msra.mxu0 %v6160
      %6188 = vmatprep.subr.mxu0 0.0
      %6189 = vmatpush1.msra.mxu0 %v6161
      %6190 = vmatprep.subr.mxu0 0.0
      %6191 = vmatpush1.msra.mxu0 %v6162
      %6192 = vmatprep.subr.mxu0 0.0
      %6193 = vmatpush1.msra.mxu0 %v6163
      %6194 = vmatprep.subr.mxu0 0.0
      %6195 = vmatpush1.msra.mxu0 %v6164
      %6196 = vmatprep.subr.mxu0 0.0
      %6197 = vmatpush1.msra.mxu0 %v6165
      %6198 = vmatprep.subr.mxu0 0.0
      %6199 = vmatpush1.msra.mxu0 0.0
      %6200 = vmatprep.subr.mxu0 0.0
      %6201 = vmatpush1.msra.mxu0 0.0
      %6202 = vmatprep.subr.mxu0 0.0
      %6203 = vmatpush1.msra.mxu0 0.0
      %6204 = vmatprep.subr.mxu0 0.0
      %6205 = vmatpush1.msra.mxu0 0.0
      %6206 = vmatprep.subr.mxu0 0.0
      %6207 = vmatpush1.msra.mxu0 0.0
      %6208 = vmatprep.subr.mxu0 0.0
      %6209 = vmatpush1.msra.mxu0 0.0
      %6210 = vmatprep.subr.mxu0 0.0
      %6211 = vmatpush1.msra.mxu0 0.0
      %6212 = vmatprep.subr.mxu0 0.0
      %6213 = vmatpush1.msra.mxu0 0.0
      %6214 = vmatprep.subr.mxu0 0.0
      %6215 = vmatpush1.msra.mxu0 0.0
      %6216 = vmatprep.subr.mxu0 0.0
      %6217 = vmatpush1.msra.mxu0 0.0
      %6218 = vmatprep.subr.mxu0 0.0
      %6219 = vmatpush1.msra.mxu0 0.0
      %6220 = vmatprep.subr.mxu0 0.0
      %6221 = vmatpush1.msra.mxu0 0.0
      %6222 = vmatprep.subr.mxu0 0.0
      %6223 = vmatpush1.msra.mxu0 0.0
      %6224 = vmatprep.subr.mxu0 0.0
      %6225 = vmatpush1.msra.mxu0 0.0
      %6226 = vmatprep.subr.mxu0 0.0
      %6227 = vmatpush1.msra.mxu0 0.0
      %6228 = vmatprep.subr.mxu0 0.0
      %6229 = vmatpush1.msra.mxu0 0.0
      %6230 = vmatprep.mubr.f32.mxu0 0.0
      %6231 = vmatmul.mubr.f32.gmra.mrb[0].mxu0 %v6108
      %v6232 = vpop.f32.mrb[0].mxu0
      %v6233 = vadd.f32 0.0, %v6232
      %v6234 = vpop.f32.mrb[0].mxu0
      %6235 = vmatprep.mubr.f32.mxu0 0.0
      %6236 = vmatmul.mubr.f32.gmra.mrb[0].mxu0 %v6109
      %v6237 = vpop.f32.mrb[0].mxu0
      %v6238 = vadd.f32 0.0, %v6237
      %v6239 = vpop.f32.mrb[0].mxu0
      %6240 = vmatprep.mubr.f32.mxu0 0.0
      %6241 = vmatmul.mubr.f32.gmra.mrb[0].mxu0 %v6110
      %v6242 = vpop.f32.mrb[0].mxu0
      %v6243 = vadd.f32 0.0, %v6242
      %v6244 = vpop.f32.mrb[0].mxu0
      %6245 = vmatprep.mubr.f32.mxu0 0.0
      %6246 = vmatmul.mubr.f32.gmra.mrb[0].mxu0 %v6111
      %v6247 = vpop.f32.mrb[0].mxu0
      %v6248 = vadd.f32 0.0, %v6247
      %v6249 = vpop.f32.mrb[0].mxu0
      %6250 = vmatprep.mubr.f32.mxu0 0.0
      %6251 = vmatmul.mubr.f32.gmra.mrb[0].mxu0 %v6112
      %v6252 = vpop.f32.mrb[0].mxu0
      %v6253 = vadd.f32 0.0, %v6252
      %v6254 = vpop.f32.mrb[0].mxu0
      %6255 = vmatprep.mubr.f32.mxu0 0.0
      %6256 = vmatmul.mubr.f32.gmra.mrb[0].mxu0 %v6113
      %v6257 = vpop.f32.mrb[0].mxu0
      %v6258 = vadd.f32 0.0, %v6257
      %v6259 = vpop.f32.mrb[0].mxu0
      %6260 = vmatprep.mubr.f32.mxu0 0.0
      %6261 = vmatmul.mubr.f32.gmra.mrb[0].mxu0 %v6114
      %v6262 = vpop.f32.mrb[0].mxu0
      %v6263 = vadd.f32 0.0, %v6262
      %v6264 = vpop.f32.mrb[0].mxu0
      %6265 = vmatprep.mubr.f32.mxu0 0.0
      %6266 = vmatmul.mubr.f32.gmra.mrb[0].mxu0 %v6115
      %v6267 = vpop.f32.mrb[0].mxu0
      %v6268 = vadd.f32 0.0, %v6267
      %v6269 = vpop.f32.mrb[0].mxu0
      %6270 = vmatprep.mubr.f32.mxu0 0.0
      %6271 = vmatmul.mubr.f32.gmra.mrb[0].mxu0 %v6116
      %v6272 = vpop.f32.mrb[0].mxu0
      %v6273 = vadd.f32 0.0, %v6272
      %v6274 = vpop.f32.mrb[0].mxu0
      %6275 = vmatprep.mubr.f32.mxu0 0.0
      %6276 = vmatmul.mubr.f32.gmra.mrb[0].mxu0 %v6117
      %v6277 = vpop.f32.mrb[0].mxu0
      %v6278 = vadd.f32 0.0, %v6277
      %v6279 = vpop.f32.mrb[0].mxu0
      %6280 = vmatprep.mubr.f32.mxu0 0.0
      %6281 = vmatmul.mubr.f32.gmra.mrb[0].mxu0 %v6118
      %v6282 = vpop.f32.mrb[0].mxu0
      %v6283 = vadd.f32 0.0, %v6282
      %v6284 = vpop.f32.mrb[0].mxu0
      %6285 = vmatprep.mubr.f32.mxu0 0.0
      %6286 = vmatmul.mubr.f32.gmra.mrb[0].mxu0 %v6119
      %v6287 = vpop.f32.mrb[0].mxu0
      %v6288 = vadd.f32 0.0, %v6287
      %v6289 = vpop.f32.mrb[0].mxu0
      %6290 = vmatprep.mubr.f32.mxu0 0.0
      %6291 = vmatmul.mubr.f32.gmra.mrb[0].mxu0 %v6120
      %v6292 = vpop.f32.mrb[0].mxu0
      %v6293 = vadd.f32 0.0, %v6292
      %v6294 = vpop.f32.mrb[0].mxu0
      %6295 = vmatprep.mubr.f32.mxu0 0.0
      %6296 = vmatmul.mubr.f32.gmra.mrb[0].mxu0 %v6121
      %v6297 = vpop.f32.mrb[0].mxu0
      %v6298 = vadd.f32 0.0, %v6297
      %v6299 = vpop.f32.mrb[0].mxu0
      %6300 = vmatprep.mubr.f32.mxu0 0.0
      %6301 = vmatmul.mubr.f32.gmra.mrb[0].mxu0 %v6122
      %v6302 = vpop.f32.mrb[0].mxu0
      %v6303 = vadd.f32 0.0, %v6302
      %v6304 = vpop.f32.mrb[0].mxu0
      %6305 = vmatprep.mubr.f32.mxu0 0.0
      %6306 = vmatmul.mubr.f32.gmra.mrb[0].mxu0 %v6123
      %v6307 = vpop.f32.mrb[0].mxu0
      %v6308 = vadd.f32 0.0, %v6307
      %v6309 = vpop.f32.mrb[0].mxu0
      %6310 = vmatprep.mubr.f32.mxu0 0.0
      %6311 = vmatmul.mubr.f32.gmra.mrb[0].mxu0 %v6124
      %v6312 = vpop.f32.mrb[0].mxu0
      %v6313 = vadd.f32 0.0, %v6312
      %v6314 = vpop.f32.mrb[0].mxu0
      %6315 = vmatprep.mubr.f32.mxu0 0.0
      %6316 = vmatmul.mubr.f32.gmra.mrb[0].mxu0 %v6125
      %v6317 = vpop.f32.mrb[0].mxu0
      %v6318 = vadd.f32 0.0, %v6317
      %v6319 = vpop.f32.mrb[0].mxu0
      %6320 = vmatprep.mubr.f32.mxu0 0.0
      %6321 = vmatmul.mubr.f32.gmra.mrb[0].mxu0 %v6126
      %v6322 = vpop.f32.mrb[0].mxu0
      %v6323 = vadd.f32 0.0, %v6322
      %v6324 = vpop.f32.mrb[0].mxu0
      %6325 = vmatprep.mubr.f32.mxu0 0.0
      %6326 = vmatmul.mubr.f32.gmra.mrb[0].mxu0 %v6127
      %v6327 = vpop.f32.mrb[0].mxu0
      %v6328 = vadd.f32 0.0, %v6327
      %v6329 = vpop.f32.mrb[0].mxu0
      %6330 = vmatprep.mubr.f32.mxu0 0.0
      %6331 = vmatmul.mubr.f32.gmra.mrb[0].mxu0 %v6128
      %v6332 = vpop.f32.mrb[0].mxu0
      %v6333 = vadd.f32 0.0, %v6332
      %v6334 = vpop.f32.mrb[0].mxu0
      %6335 = vmatprep.mubr.f32.mxu0 0.0
      %6336 = vmatmul.mubr.f32.gmra.mrb[0].mxu0 %v6129
      %v6337 = vpop.f32.mrb[0].mxu0
      %v6338 = vadd.f32 0.0, %v6337
      %v6339 = vpop.f32.mrb[0].mxu0
      %6340 = vmatprep.mubr.f32.mxu0 0.0
      %6341 = vmatmul.mubr.f32.gmra.mrb[0].mxu0 %v6130
      %v6342 = vpop.f32.mrb[0].mxu0
      %v6343 = vadd.f32 0.0, %v6342
      %v6344 = vpop.f32.mrb[0].mxu0
      %6345 = vmatprep.mubr.f32.mxu0 0.0
      %6346 = vmatmul.mubr.f32.gmra.mrb[0].mxu0 %v6131
      %v6347 = vpop.f32.mrb[0].mxu0
      %v6348 = vadd.f32 0.0, %v6347
      %v6349 = vpop.f32.mrb[0].mxu0
      %6350 = vmatprep.mubr.f32.mxu0 0.0
      %6351 = vmatmul.mubr.f32.gmra.mrb[0].mxu0 %v6132
      %v6352 = vpop.f32.mrb[0].mxu0
      %v6353 = vadd.f32 0.0, %v6352
      %v6354 = vpop.f32.mrb[0].mxu0
      %6355 = vmatprep.mubr.f32.mxu0 0.0
      %6356 = vmatmul.mubr.f32.gmra.mrb[0].mxu0 %v6133
      %v6357 = vpop.f32.mrb[0].mxu0
      %v6358 = vadd.f32 0.0, %v6357
      %v6359 = vpop.f32.mrb[0].mxu0
      %6360 = vmatprep.mubr.f32.mxu0 0.0
      %6361 = vmatmul.mubr.f32.gmra.mrb[0].mxu0 %v6134
      %v6362 = vpop.f32.mrb[0].mxu0
      %v6363 = vadd.f32 0.0, %v6362
      %v6364 = vpop.f32.mrb[0].mxu0
      %6365 = vmatprep.mubr.f32.mxu0 0.0
      %6366 = vmatmul.mubr.f32.gmra.mrb[0].mxu0 %v6135
      %v6367 = vpop.f32.mrb[0].mxu0
      %v6368 = vadd.f32 0.0, %v6367
      %v6369 = vpop.f32.mrb[0].mxu0
      %6370 = vmatprep.mubr.f32.mxu0 0.0
      %6371 = vmatmul.mubr.f32.gmra.mrb[0].mxu0 %v6136
      %v6372 = vpop.f32.mrb[0].mxu0
      %v6373 = vadd.f32 0.0, %v6372
      %v6374 = vpop.f32.mrb[0].mxu0
      %6375 = vmatprep.mubr.f32.mxu0 0.0
      %6376 = vmatmul.mubr.f32.gmra.mrb[0].mxu0 %v6137
      %v6377 = vpop.f32.mrb[0].mxu0
      %v6378 = vadd.f32 0.0, %v6377
      %v6379 = vpop.f32.mrb[0].mxu0
      %6380 = vmatprep.mubr.f32.mxu0 0.0
      %6381 = vmatmul.mubr.f32.gmra.mrb[0].mxu0 %v6138
      %v6382 = vpop.f32.mrb[0].mxu0
      %v6383 = vadd.f32 0.0, %v6382
      %v6384 = vpop.f32.mrb[0].mxu0
      %6385 = vmatprep.mubr.f32.mxu0 0.0
      %6386 = vmatmul.mubr.f32.gmra.mrb[0].mxu0 %v6139
      %v6387 = vpop.f32.mrb[0].mxu0
      %v6388 = vadd.f32 0.0, %v6387
      %v6389 = vpop.f32.mrb[0].mxu0
      %6390 = vmatprep.mubr.f32.mxu0 0.0
      %6391 = vmatmul.mubr.f32.gmra.mrb[0].mxu0 %v6140
      %v6392 = vpop.f32.mrb[0].mxu0
      %v6393 = vadd.f32 0.0, %v6392
      %v6394 = vpop.f32.mrb[0].mxu0
      %6395 = vmatprep.mubr.f32.mxu0 0.0
      %6396 = vmatmul.mubr.f32.gmra.mrb[0].mxu0 %v6141
      %v6397 = vpop.f32.mrb[0].mxu0
      %v6398 = vadd.f32 0.0, %v6397
      %v6399 = vpop.f32.mrb[0].mxu0
      %6400 = vmatprep.mubr.f32.mxu0 0.0
      %6401 = vmatmul.mubr.f32.gmra.mrb[0].mxu0 %v6142
      %v6402 = vpop.f32.mrb[0].mxu0
      %v6403 = vadd.f32 0.0, %v6402
      %v6404 = vpop.f32.mrb[0].mxu0
      %6405 = vmatprep.mubr.f32.mxu0 0.0
      %6406 = vmatmul.mubr.f32.gmra.mrb[0].mxu0 %v6143
      %v6407 = vpop.f32.mrb[0].mxu0
      %v6408 = vadd.f32 0.0, %v6407
      %v6409 = vpop.f32.mrb[0].mxu0
      %6410 = vmatprep.mubr.f32.mxu0 0.0
      %6411 = vmatmul.mubr.f32.gmra.mrb[0].mxu0 %v6144
      %v6412 = vpop.f32.mrb[0].mxu0
      %v6413 = vadd.f32 0.0, %v6412
      %v6414 = vpop.f32.mrb[0].mxu0
      %6415 = vmatprep.mubr.f32.mxu0 0.0
      %6416 = vmatmul.mubr.f32.gmra.mrb[0].mxu0 %v6145
      %v6417 = vpop.f32.mrb[0].mxu0
      %v6418 = vadd.f32 0.0, %v6417
      %v6419 = vpop.f32.mrb[0].mxu0
      %6420 = vmatprep.mubr.f32.mxu0 0.0
      %6421 = vmatmul.mubr.f32.gmra.mrb[0].mxu0 %v6146
      %v6422 = vpop.f32.mrb[0].mxu0
      %v6423 = vadd.f32 0.0, %v6422
      %v6424 = vpop.f32.mrb[0].mxu0
      %6425 = vmatprep.mubr.f32.mxu0 0.0
      %6426 = vmatmul.mubr.f32.gmra.mrb[0].mxu0 %v6147
      %v6427 = vpop.f32.mrb[0].mxu0
      %v6428 = vadd.f32 0.0, %v6427
      %v6429 = vpop.f32.mrb[0].mxu0
      %6430 = vmatprep.mubr.f32.mxu0 0.0
      %6431 = vmatmul.mubr.f32.gmra.mrb[0].mxu0 %v6148
      %v6432 = vpop.f32.mrb[0].mxu0
      %v6433 = vadd.f32 0.0, %v6432
      %v6434 = vpop.f32.mrb[0].mxu0
      %6435 = vdwg.mxu0
      %v6436 = vadd.f32 %v6067, %v6233
      %v6437 = vadd.f32 %v6068, %v6238
      %v6438 = vadd.f32 %v6069, %v6243
      %v6439 = vadd.f32 %v6070, %v6248
      %v6440 = vadd.f32 %v6071, %v6253
      %v6441 = vadd.f32 %v6072, %v6258
      %v6442 = vadd.f32 %v6073, %v6263
      %v6443 = vadd.f32 %v6074, %v6268
      %v6444 = vadd.f32 %v6075, %v6273
      %v6445 = vadd.f32 %v6076, %v6278
      %v6446 = vadd.f32 %v6077, %v6283
      %v6447 = vadd.f32 %v6078, %v6288
      %v6448 = vadd.f32 %v6079, %v6293
      %v6449 = vadd.f32 %v6080, %v6298
      %v6450 = vadd.f32 %v6081, %v6303
      %v6451 = vadd.f32 %v6082, %v6308
      %v6452 = vadd.f32 %v6083, %v6313
      %v6453 = vadd.f32 %v6084, %v6318
      %v6454 = vadd.f32 %v6085, %v6323
      %v6455 = vadd.f32 %v6086, %v6328
      %v6456 = vadd.f32 %v6087, %v6333
      %v6457 = vadd.f32 %v6088, %v6338
      %v6458 = vadd.f32 %v6089, %v6343
      %v6459 = vadd.f32 %v6090, %v6348
      %v6460 = vadd.f32 %v6091, %v6353
      %v6461 = vadd.f32 %v6092, %v6358
      %v6462 = vadd.f32 %v6093, %v6363
      %v6463 = vadd.f32 %v6094, %v6368
      %v6464 = vadd.f32 %v6095, %v6373
      %v6465 = vadd.f32 %v6096, %v6378
      %v6466 = vadd.f32 %v6097, %v6383
      %v6467 = vadd.f32 %v6098, %v6388
      %v6468 = vadd.f32 %v6099, %v6393
      %v6469 = vadd.f32 %v6100, %v6398
      %v6470 = vadd.f32 %v6101, %v6403
      %v6471 = vadd.f32 %v6102, %v6408
      %v6472 = vadd.f32 %v6103, %v6413
      %v6473 = vadd.f32 %v6104, %v6418
      %v6474 = vadd.f32 %v6105, %v6423
      %v6475 = vadd.f32 %v6106, %v6428
      %v6476 = vadd.f32 %v6107, %v6433
      %v6477 = vld [vmem:[#allocation2 + $0x18] sm:$0xff]
      %v6478 = vld [vmem:[#allocation2 + $0x20] sm:$0xff]
      %v6479 = vld [vmem:[#allocation2 + $0x28] sm:$0xff]
      %v6480 = vld [vmem:[#allocation2 + $0x30] sm:$0xff]
      %v6481 = vld [vmem:[#allocation2 + $0x38] sm:$0xff]
      %v6482 = vld [vmem:[#allocation2 + $0x40] sm:$0xff]
      %v6483 = vld [vmem:[#allocation2 + $0x48] sm:$0xff]
      %v6484 = vld [vmem:[#allocation2 + $0x50] sm:$0xff]
      %v6485 = vld [vmem:[#allocation2 + $0x58] sm:$0xff]
      %v6486 = vld [vmem:[#allocation2 + $0x60] sm:$0xff]
      %v6487 = vld [vmem:[#allocation2 + $0x68] sm:$0xff]
      %v6488 = vld [vmem:[#allocation2 + $0x70] sm:$0xff]
      %v6489 = vld [vmem:[#allocation2 + $0x78] sm:$0xff]
      %v6490 = vld [vmem:[#allocation2 + $0x80] sm:$0xff]
      %v6491 = vld [vmem:[#allocation2 + $0x88] sm:$0xff]
      %v6492 = vld [vmem:[#allocation2 + $0x90] sm:$0xff]
      %v6493 = vld [vmem:[#allocation2 + $0x98] sm:$0xff]
      %v6494 = vld [vmem:[#allocation2 + $0xa0] sm:$0xff]
      %v6495 = vld [vmem:[#allocation2 + $0xa8] sm:$0xff]
      %v6496 = vld [vmem:[#allocation2 + $0xb0] sm:$0xff]
      %v6497 = vld [vmem:[#allocation2 + $0xb8] sm:$0xff]
      %v6498 = vld [vmem:[#allocation2 + $0xc0] sm:$0xff]
      %v6499 = vld [vmem:[#allocation2 + $0xc8] sm:$0xff]
      %v6500 = vld [vmem:[#allocation2 + $0xd0] sm:$0xff]
      %v6501 = vld [vmem:[#allocation2 + $0xd8] sm:$0xff]
      %v6502 = vld [vmem:[#allocation2 + $0xe0] sm:$0xff]
      %v6503 = vld [vmem:[#allocation2 + $0xe8] sm:$0xff]
      %v6504 = vld [vmem:[#allocation2 + $0xf0] sm:$0xff]
      %v6505 = vld [vmem:[#allocation2 + $0xf8] sm:$0xff]
      %v6506 = vld [vmem:[#allocation2 + $0x100] sm:$0xff]
      %v6507 = vld [vmem:[#allocation2 + $0x108] sm:$0xff]
      %v6508 = vld [vmem:[#allocation2 + $0x110] sm:$0xff]
      %v6509 = vld [vmem:[#allocation2 + $0x118] sm:$0xff]
      %v6510 = vld [vmem:[#allocation2 + $0x120] sm:$0xff]
      %v6511 = vld [vmem:[#allocation2 + $0x128] sm:$0xff]
      %v6512 = vld [vmem:[#allocation2 + $0x130] sm:$0xff]
      %v6513 = vld [vmem:[#allocation2 + $0x138] sm:$0xff]
      %v6514 = vld [vmem:[#allocation2 + $0x140] sm:$0xff]
      %v6515 = vld [vmem:[#allocation2 + $0x148] sm:$0xff]
      %v6516 = vld [vmem:[#allocation2 + $0x150] sm:$0xff]
      %v6517 = vld [vmem:[#allocation2 + $0x158] sm:$0xff]
      %s6518 = scalar_lea.vmem %s12, 512
      %v6519 = vld [vmem:[%s6518] sm:$0xff]
      %v6520 = vld [vmem:[%s6518 + $0x8] sm:$0xff]
      %v6521 = vld [vmem:[%s6518 + $0x10] sm:$0xff]
      %v6522 = vld [vmem:[%s6518 + $0x18] sm:$0xff]
      %v6523 = vld [vmem:[%s6518 + $0x20] sm:$0xff]
      %v6524 = vld [vmem:[%s6518 + $0x28] sm:$0xff]
      %v6525 = vld [vmem:[%s6518 + $0x30] sm:$0xff]
      %v6526 = vld [vmem:[%s6518 + $0x38] sm:$0xff]
      %v6527 = vld [vmem:[%s6518 + $0x40] sm:$0xff]
      %v6528 = vld [vmem:[%s6518 + $0x48] sm:$0xff]
      %v6529 = vld [vmem:[%s6518 + $0x50] sm:$0xff]
      %v6530 = vld [vmem:[%s6518 + $0x58] sm:$0xff]
      %v6531 = vld [vmem:[%s6518 + $0x60] sm:$0xff]
      %v6532 = vld [vmem:[%s6518 + $0x68] sm:$0xff]
      %v6533 = vld [vmem:[%s6518 + $0x70] sm:$0xff]
      %v6534 = vld [vmem:[%s6518 + $0x78] sm:$0xff]
      %6535 = vmatprep.subr.mxu0 0.0
      %6536 = vmatpush1.msra.mxu0 %v6519
      %6537 = vmatprep.subr.mxu0 0.0
      %6538 = vmatpush1.msra.mxu0 %v6520
      %6539 = vmatprep.subr.mxu0 0.0
      %6540 = vmatpush1.msra.mxu0 %v6521
      %6541 = vmatprep.subr.mxu0 0.0
      %6542 = vmatpush1.msra.mxu0 %v6522
      %6543 = vmatprep.subr.mxu0 0.0
      %6544 = vmatpush1.msra.mxu0 %v6523
      %6545 = vmatprep.subr.mxu0 0.0
      %6546 = vmatpush1.msra.mxu0 %v6524
      %6547 = vmatprep.subr.mxu0 0.0
      %6548 = vmatpush1.msra.mxu0 %v6525
      %6549 = vmatprep.subr.mxu0 0.0
      %6550 = vmatpush1.msra.mxu0 %v6526
      %6551 = vmatprep.subr.mxu0 0.0
      %6552 = vmatpush1.msra.mxu0 %v6527
      %6553 = vmatprep.subr.mxu0 0.0
      %6554 = vmatpush1.msra.mxu0 %v6528
      %6555 = vmatprep.subr.mxu0 0.0
      %6556 = vmatpush1.msra.mxu0 %v6529
      %6557 = vmatprep.subr.mxu0 0.0
      %6558 = vmatpush1.msra.mxu0 %v6530
      %6559 = vmatprep.subr.mxu0 0.0
      %6560 = vmatpush1.msra.mxu0 %v6531
      %6561 = vmatprep.subr.mxu0 0.0
      %6562 = vmatpush1.msra.mxu0 %v6532
      %6563 = vmatprep.subr.mxu0 0.0
      %6564 = vmatpush1.msra.mxu0 %v6533
      %6565 = vmatprep.subr.mxu0 0.0
      %6566 = vmatpush1.msra.mxu0 %v6534
      %6567 = vmatprep.subr.mxu0 0.0
      %6568 = vmatpush1.msra.mxu0 0.0
      %6569 = vmatprep.subr.mxu0 0.0
      %6570 = vmatpush1.msra.mxu0 0.0
      %6571 = vmatprep.subr.mxu0 0.0
      %6572 = vmatpush1.msra.mxu0 0.0
      %6573 = vmatprep.subr.mxu0 0.0
      %6574 = vmatpush1.msra.mxu0 0.0
      %6575 = vmatprep.subr.mxu0 0.0
      %6576 = vmatpush1.msra.mxu0 0.0
      %6577 = vmatprep.subr.mxu0 0.0
      %6578 = vmatpush1.msra.mxu0 0.0
      %6579 = vmatprep.subr.mxu0 0.0
      %6580 = vmatpush1.msra.mxu0 0.0
      %6581 = vmatprep.subr.mxu0 0.0
      %6582 = vmatpush1.msra.mxu0 0.0
      %6583 = vmatprep.subr.mxu0 0.0
      %6584 = vmatpush1.msra.mxu0 0.0
      %6585 = vmatprep.subr.mxu0 0.0
      %6586 = vmatpush1.msra.mxu0 0.0
      %6587 = vmatprep.subr.mxu0 0.0
      %6588 = vmatpush1.msra.mxu0 0.0
      %6589 = vmatprep.subr.mxu0 0.0
      %6590 = vmatpush1.msra.mxu0 0.0
      %6591 = vmatprep.subr.mxu0 0.0
      %6592 = vmatpush1.msra.mxu0 0.0
      %6593 = vmatprep.subr.mxu0 0.0
      %6594 = vmatpush1.msra.mxu0 0.0
      %6595 = vmatprep.subr.mxu0 0.0
      %6596 = vmatpush1.msra.mxu0 0.0
      %6597 = vmatprep.subr.mxu0 0.0
      %6598 = vmatpush1.msra.mxu0 0.0
      %6599 = vmatprep.mubr.f32.mxu0 0.0
      %6600 = vmatmul.mubr.f32.gmra.mrb[0].mxu0 %v6477
      %v6601 = vpop.f32.mrb[0].mxu0
      %v6602 = vadd.f32 0.0, %v6601
      %v6603 = vpop.f32.mrb[0].mxu0
      %6604 = vmatprep.mubr.f32.mxu0 0.0
      %6605 = vmatmul.mubr.f32.gmra.mrb[0].mxu0 %v6478
      %v6606 = vpop.f32.mrb[0].mxu0
      %v6607 = vadd.f32 0.0, %v6606
      %v6608 = vpop.f32.mrb[0].mxu0
      %6609 = vmatprep.mubr.f32.mxu0 0.0
      %6610 = vmatmul.mubr.f32.gmra.mrb[0].mxu0 %v6479
      %v6611 = vpop.f32.mrb[0].mxu0
      %v6612 = vadd.f32 0.0, %v6611
      %v6613 = vpop.f32.mrb[0].mxu0
      %6614 = vmatprep.mubr.f32.mxu0 0.0
      %6615 = vmatmul.mubr.f32.gmra.mrb[0].mxu0 %v6480
      %v6616 = vpop.f32.mrb[0].mxu0
      %v6617 = vadd.f32 0.0, %v6616
      %v6618 = vpop.f32.mrb[0].mxu0
      %6619 = vmatprep.mubr.f32.mxu0 0.0
      %6620 = vmatmul.mubr.f32.gmra.mrb[0].mxu0 %v6481
      %v6621 = vpop.f32.mrb[0].mxu0
      %v6622 = vadd.f32 0.0, %v6621
      %v6623 = vpop.f32.mrb[0].mxu0
      %6624 = vmatprep.mubr.f32.mxu0 0.0
      %6625 = vmatmul.mubr.f32.gmra.mrb[0].mxu0 %v6482
      %v6626 = vpop.f32.mrb[0].mxu0
      %v6627 = vadd.f32 0.0, %v6626
      %v6628 = vpop.f32.mrb[0].mxu0
      %6629 = vmatprep.mubr.f32.mxu0 0.0
      %6630 = vmatmul.mubr.f32.gmra.mrb[0].mxu0 %v6483
      %v6631 = vpop.f32.mrb[0].mxu0
      %v6632 = vadd.f32 0.0, %v6631
      %v6633 = vpop.f32.mrb[0].mxu0
      %6634 = vmatprep.mubr.f32.mxu0 0.0
      %6635 = vmatmul.mubr.f32.gmra.mrb[0].mxu0 %v6484
      %v6636 = vpop.f32.mrb[0].mxu0
      %v6637 = vadd.f32 0.0, %v6636
      %v6638 = vpop.f32.mrb[0].mxu0
      %6639 = vmatprep.mubr.f32.mxu0 0.0
      %6640 = vmatmul.mubr.f32.gmra.mrb[0].mxu0 %v6485
      %v6641 = vpop.f32.mrb[0].mxu0
      %v6642 = vadd.f32 0.0, %v6641
      %v6643 = vpop.f32.mrb[0].mxu0
      %6644 = vmatprep.mubr.f32.mxu0 0.0
      %6645 = vmatmul.mubr.f32.gmra.mrb[0].mxu0 %v6486
      %v6646 = vpop.f32.mrb[0].mxu0
      %v6647 = vadd.f32 0.0, %v6646
      %v6648 = vpop.f32.mrb[0].mxu0
      %6649 = vmatprep.mubr.f32.mxu0 0.0
      %6650 = vmatmul.mubr.f32.gmra.mrb[0].mxu0 %v6487
      %v6651 = vpop.f32.mrb[0].mxu0
      %v6652 = vadd.f32 0.0, %v6651
      %v6653 = vpop.f32.mrb[0].mxu0
      %6654 = vmatprep.mubr.f32.mxu0 0.0
      %6655 = vmatmul.mubr.f32.gmra.mrb[0].mxu0 %v6488
      %v6656 = vpop.f32.mrb[0].mxu0
      %v6657 = vadd.f32 0.0, %v6656
      %v6658 = vpop.f32.mrb[0].mxu0
      %6659 = vmatprep.mubr.f32.mxu0 0.0
      %6660 = vmatmul.mubr.f32.gmra.mrb[0].mxu0 %v6489
      %v6661 = vpop.f32.mrb[0].mxu0
      %v6662 = vadd.f32 0.0, %v6661
      %v6663 = vpop.f32.mrb[0].mxu0
      %6664 = vmatprep.mubr.f32.mxu0 0.0
      %6665 = vmatmul.mubr.f32.gmra.mrb[0].mxu0 %v6490
      %v6666 = vpop.f32.mrb[0].mxu0
      %v6667 = vadd.f32 0.0, %v6666
      %v6668 = vpop.f32.mrb[0].mxu0
      %6669 = vmatprep.mubr.f32.mxu0 0.0
      %6670 = vmatmul.mubr.f32.gmra.mrb[0].mxu0 %v6491
      %v6671 = vpop.f32.mrb[0].mxu0
      %v6672 = vadd.f32 0.0, %v6671
      %v6673 = vpop.f32.mrb[0].mxu0
      %6674 = vmatprep.mubr.f32.mxu0 0.0
      %6675 = vmatmul.mubr.f32.gmra.mrb[0].mxu0 %v6492
      %v6676 = vpop.f32.mrb[0].mxu0
      %v6677 = vadd.f32 0.0, %v6676
      %v6678 = vpop.f32.mrb[0].mxu0
      %6679 = vmatprep.mubr.f32.mxu0 0.0
      %6680 = vmatmul.mubr.f32.gmra.mrb[0].mxu0 %v6493
      %v6681 = vpop.f32.mrb[0].mxu0
      %v6682 = vadd.f32 0.0, %v6681
      %v6683 = vpop.f32.mrb[0].mxu0
      %6684 = vmatprep.mubr.f32.mxu0 0.0
      %6685 = vmatmul.mubr.f32.gmra.mrb[0].mxu0 %v6494
      %v6686 = vpop.f32.mrb[0].mxu0
      %v6687 = vadd.f32 0.0, %v6686
      %v6688 = vpop.f32.mrb[0].mxu0
      %6689 = vmatprep.mubr.f32.mxu0 0.0
      %6690 = vmatmul.mubr.f32.gmra.mrb[0].mxu0 %v6495
      %v6691 = vpop.f32.mrb[0].mxu0
      %v6692 = vadd.f32 0.0, %v6691
      %v6693 = vpop.f32.mrb[0].mxu0
      %6694 = vmatprep.mubr.f32.mxu0 0.0
      %6695 = vmatmul.mubr.f32.gmra.mrb[0].mxu0 %v6496
      %v6696 = vpop.f32.mrb[0].mxu0
      %v6697 = vadd.f32 0.0, %v6696
      %v6698 = vpop.f32.mrb[0].mxu0
      %6699 = vmatprep.mubr.f32.mxu0 0.0
      %6700 = vmatmul.mubr.f32.gmra.mrb[0].mxu0 %v6497
      %v6701 = vpop.f32.mrb[0].mxu0
      %v6702 = vadd.f32 0.0, %v6701
      %v6703 = vpop.f32.mrb[0].mxu0
      %6704 = vmatprep.mubr.f32.mxu0 0.0
      %6705 = vmatmul.mubr.f32.gmra.mrb[0].mxu0 %v6498
      %v6706 = vpop.f32.mrb[0].mxu0
      %v6707 = vadd.f32 0.0, %v6706
      %v6708 = vpop.f32.mrb[0].mxu0
      %6709 = vmatprep.mubr.f32.mxu0 0.0
      %6710 = vmatmul.mubr.f32.gmra.mrb[0].mxu0 %v6499
      %v6711 = vpop.f32.mrb[0].mxu0
      %v6712 = vadd.f32 0.0, %v6711
      %v6713 = vpop.f32.mrb[0].mxu0
      %6714 = vmatprep.mubr.f32.mxu0 0.0
      %6715 = vmatmul.mubr.f32.gmra.mrb[0].mxu0 %v6500
      %v6716 = vpop.f32.mrb[0].mxu0
      %v6717 = vadd.f32 0.0, %v6716
      %v6718 = vpop.f32.mrb[0].mxu0
      %6719 = vmatprep.mubr.f32.mxu0 0.0
      %6720 = vmatmul.mubr.f32.gmra.mrb[0].mxu0 %v6501
      %v6721 = vpop.f32.mrb[0].mxu0
      %v6722 = vadd.f32 0.0, %v6721
      %v6723 = vpop.f32.mrb[0].mxu0
      %6724 = vmatprep.mubr.f32.mxu0 0.0
      %6725 = vmatmul.mubr.f32.gmra.mrb[0].mxu0 %v6502
      %v6726 = vpop.f32.mrb[0].mxu0
      %v6727 = vadd.f32 0.0, %v6726
      %v6728 = vpop.f32.mrb[0].mxu0
      %6729 = vmatprep.mubr.f32.mxu0 0.0
      %6730 = vmatmul.mubr.f32.gmra.mrb[0].mxu0 %v6503
      %v6731 = vpop.f32.mrb[0].mxu0
      %v6732 = vadd.f32 0.0, %v6731
      %v6733 = vpop.f32.mrb[0].mxu0
      %6734 = vmatprep.mubr.f32.mxu0 0.0
      %6735 = vmatmul.mubr.f32.gmra.mrb[0].mxu0 %v6504
      %v6736 = vpop.f32.mrb[0].mxu0
      %v6737 = vadd.f32 0.0, %v6736
      %v6738 = vpop.f32.mrb[0].mxu0
      %6739 = vmatprep.mubr.f32.mxu0 0.0
      %6740 = vmatmul.mubr.f32.gmra.mrb[0].mxu0 %v6505
      %v6741 = vpop.f32.mrb[0].mxu0
      %v6742 = vadd.f32 0.0, %v6741
      %v6743 = vpop.f32.mrb[0].mxu0
      %6744 = vmatprep.mubr.f32.mxu0 0.0
      %6745 = vmatmul.mubr.f32.gmra.mrb[0].mxu0 %v6506
      %v6746 = vpop.f32.mrb[0].mxu0
      %v6747 = vadd.f32 0.0, %v6746
      %v6748 = vpop.f32.mrb[0].mxu0
      %6749 = vmatprep.mubr.f32.mxu0 0.0
      %6750 = vmatmul.mubr.f32.gmra.mrb[0].mxu0 %v6507
      %v6751 = vpop.f32.mrb[0].mxu0
      %v6752 = vadd.f32 0.0, %v6751
      %v6753 = vpop.f32.mrb[0].mxu0
      %6754 = vmatprep.mubr.f32.mxu0 0.0
      %6755 = vmatmul.mubr.f32.gmra.mrb[0].mxu0 %v6508
      %v6756 = vpop.f32.mrb[0].mxu0
      %v6757 = vadd.f32 0.0, %v6756
      %v6758 = vpop.f32.mrb[0].mxu0
      %6759 = vmatprep.mubr.f32.mxu0 0.0
      %6760 = vmatmul.mubr.f32.gmra.mrb[0].mxu0 %v6509
      %v6761 = vpop.f32.mrb[0].mxu0
      %v6762 = vadd.f32 0.0, %v6761
      %v6763 = vpop.f32.mrb[0].mxu0
      %6764 = vmatprep.mubr.f32.mxu0 0.0
      %6765 = vmatmul.mubr.f32.gmra.mrb[0].mxu0 %v6510
      %v6766 = vpop.f32.mrb[0].mxu0
      %v6767 = vadd.f32 0.0, %v6766
      %v6768 = vpop.f32.mrb[0].mxu0
      %6769 = vmatprep.mubr.f32.mxu0 0.0
      %6770 = vmatmul.mubr.f32.gmra.mrb[0].mxu0 %v6511
      %v6771 = vpop.f32.mrb[0].mxu0
      %v6772 = vadd.f32 0.0, %v6771
      %v6773 = vpop.f32.mrb[0].mxu0
      %6774 = vmatprep.mubr.f32.mxu0 0.0
      %6775 = vmatmul.mubr.f32.gmra.mrb[0].mxu0 %v6512
      %v6776 = vpop.f32.mrb[0].mxu0
      %v6777 = vadd.f32 0.0, %v6776
      %v6778 = vpop.f32.mrb[0].mxu0
      %6779 = vmatprep.mubr.f32.mxu0 0.0
      %6780 = vmatmul.mubr.f32.gmra.mrb[0].mxu0 %v6513
      %v6781 = vpop.f32.mrb[0].mxu0
      %v6782 = vadd.f32 0.0, %v6781
      %v6783 = vpop.f32.mrb[0].mxu0
      %6784 = vmatprep.mubr.f32.mxu0 0.0
      %6785 = vmatmul.mubr.f32.gmra.mrb[0].mxu0 %v6514
      %v6786 = vpop.f32.mrb[0].mxu0
      %v6787 = vadd.f32 0.0, %v6786
      %v6788 = vpop.f32.mrb[0].mxu0
      %6789 = vmatprep.mubr.f32.mxu0 0.0
      %6790 = vmatmul.mubr.f32.gmra.mrb[0].mxu0 %v6515
      %v6791 = vpop.f32.mrb[0].mxu0
      %v6792 = vadd.f32 0.0, %v6791
      %v6793 = vpop.f32.mrb[0].mxu0
      %6794 = vmatprep.mubr.f32.mxu0 0.0
      %6795 = vmatmul.mubr.f32.gmra.mrb[0].mxu0 %v6516
      %v6796 = vpop.f32.mrb[0].mxu0
      %v6797 = vadd.f32 0.0, %v6796
      %v6798 = vpop.f32.mrb[0].mxu0
      %6799 = vmatprep.mubr.f32.mxu0 0.0
      %6800 = vmatmul.mubr.f32.gmra.mrb[0].mxu0 %v6517
      %v6801 = vpop.f32.mrb[0].mxu0
      %v6802 = vadd.f32 0.0, %v6801
      %v6803 = vpop.f32.mrb[0].mxu0
      %6804 = vdwg.mxu0
      %v6805 = vadd.f32 %v6436, %v6602
      %v6806 = vadd.f32 %v6437, %v6607
      %v6807 = vadd.f32 %v6438, %v6612
      %v6808 = vadd.f32 %v6439, %v6617
      %v6809 = vadd.f32 %v6440, %v6622
      %v6810 = vadd.f32 %v6441, %v6627
      %v6811 = vadd.f32 %v6442, %v6632
      %v6812 = vadd.f32 %v6443, %v6637
      %v6813 = vadd.f32 %v6444, %v6642
      %v6814 = vadd.f32 %v6445, %v6647
      %v6815 = vadd.f32 %v6446, %v6652
      %v6816 = vadd.f32 %v6447, %v6657
      %v6817 = vadd.f32 %v6448, %v6662
      %v6818 = vadd.f32 %v6449, %v6667
      %v6819 = vadd.f32 %v6450, %v6672
      %v6820 = vadd.f32 %v6451, %v6677
      %v6821 = vadd.f32 %v6452, %v6682
      %v6822 = vadd.f32 %v6453, %v6687
      %v6823 = vadd.f32 %v6454, %v6692
      %v6824 = vadd.f32 %v6455, %v6697
      %v6825 = vadd.f32 %v6456, %v6702
      %v6826 = vadd.f32 %v6457, %v6707
      %v6827 = vadd.f32 %v6458, %v6712
      %v6828 = vadd.f32 %v6459, %v6717
      %v6829 = vadd.f32 %v6460, %v6722
      %v6830 = vadd.f32 %v6461, %v6727
      %v6831 = vadd.f32 %v6462, %v6732
      %v6832 = vadd.f32 %v6463, %v6737
      %v6833 = vadd.f32 %v6464, %v6742
      %v6834 = vadd.f32 %v6465, %v6747
      %v6835 = vadd.f32 %v6466, %v6752
      %v6836 = vadd.f32 %v6467, %v6757
      %v6837 = vadd.f32 %v6468, %v6762
      %v6838 = vadd.f32 %v6469, %v6767
      %v6839 = vadd.f32 %v6470, %v6772
      %v6840 = vadd.f32 %v6471, %v6777
      %v6841 = vadd.f32 %v6472, %v6782
      %v6842 = vadd.f32 %v6473, %v6787
      %v6843 = vadd.f32 %v6474, %v6792
      %v6844 = vadd.f32 %v6475, %v6797
      %v6845 = vadd.f32 %v6476, %v6802
      %v6846 = vld [vmem:[#allocation2 + $0x19] sm:$0xff]
      %v6847 = vld [vmem:[#allocation2 + $0x21] sm:$0xff]
      %v6848 = vld [vmem:[#allocation2 + $0x29] sm:$0xff]
      %v6849 = vld [vmem:[#allocation2 + $0x31] sm:$0xff]
      %v6850 = vld [vmem:[#allocation2 + $0x39] sm:$0xff]
      %v6851 = vld [vmem:[#allocation2 + $0x41] sm:$0xff]
      %v6852 = vld [vmem:[#allocation2 + $0x49] sm:$0xff]
      %v6853 = vld [vmem:[#allocation2 + $0x51] sm:$0xff]
      %v6854 = vld [vmem:[#allocation2 + $0x59] sm:$0xff]
      %v6855 = vld [vmem:[#allocation2 + $0x61] sm:$0xff]
      %v6856 = vld [vmem:[#allocation2 + $0x69] sm:$0xff]
      %v6857 = vld [vmem:[#allocation2 + $0x71] sm:$0xff]
      %v6858 = vld [vmem:[#allocation2 + $0x79] sm:$0xff]
      %v6859 = vld [vmem:[#allocation2 + $0x81] sm:$0xff]
      %v6860 = vld [vmem:[#allocation2 + $0x89] sm:$0xff]
      %v6861 = vld [vmem:[#allocation2 + $0x91] sm:$0xff]
      %v6862 = vld [vmem:[#allocation2 + $0x99] sm:$0xff]
      %v6863 = vld [vmem:[#allocation2 + $0xa1] sm:$0xff]
      %v6864 = vld [vmem:[#allocation2 + $0xa9] sm:$0xff]
      %v6865 = vld [vmem:[#allocation2 + $0xb1] sm:$0xff]
      %v6866 = vld [vmem:[#allocation2 + $0xb9] sm:$0xff]
      %v6867 = vld [vmem:[#allocation2 + $0xc1] sm:$0xff]
      %v6868 = vld [vmem:[#allocation2 + $0xc9] sm:$0xff]
      %v6869 = vld [vmem:[#allocation2 + $0xd1] sm:$0xff]
      %v6870 = vld [vmem:[#allocation2 + $0xd9] sm:$0xff]
      %v6871 = vld [vmem:[#allocation2 + $0xe1] sm:$0xff]
      %v6872 = vld [vmem:[#allocation2 + $0xe9] sm:$0xff]
      %v6873 = vld [vmem:[#allocation2 + $0xf1] sm:$0xff]
      %v6874 = vld [vmem:[#allocation2 + $0xf9] sm:$0xff]
      %v6875 = vld [vmem:[#allocation2 + $0x101] sm:$0xff]
      %v6876 = vld [vmem:[#allocation2 + $0x109] sm:$0xff]
      %v6877 = vld [vmem:[#allocation2 + $0x111] sm:$0xff]
      %v6878 = vld [vmem:[#allocation2 + $0x119] sm:$0xff]
      %v6879 = vld [vmem:[#allocation2 + $0x121] sm:$0xff]
      %v6880 = vld [vmem:[#allocation2 + $0x129] sm:$0xff]
      %v6881 = vld [vmem:[#allocation2 + $0x131] sm:$0xff]
      %v6882 = vld [vmem:[#allocation2 + $0x139] sm:$0xff]
      %v6883 = vld [vmem:[#allocation2 + $0x141] sm:$0xff]
      %v6884 = vld [vmem:[#allocation2 + $0x149] sm:$0xff]
      %v6885 = vld [vmem:[#allocation2 + $0x151] sm:$0xff]
      %v6886 = vld [vmem:[#allocation2 + $0x159] sm:$0xff]
      %s6887 = scalar_lea.vmem %s12, 640
      %v6888 = vld [vmem:[%s6887] sm:$0xff]
      %v6889 = vld [vmem:[%s6887 + $0x8] sm:$0xff]
      %v6890 = vld [vmem:[%s6887 + $0x10] sm:$0xff]
      %v6891 = vld [vmem:[%s6887 + $0x18] sm:$0xff]
      %v6892 = vld [vmem:[%s6887 + $0x20] sm:$0xff]
      %v6893 = vld [vmem:[%s6887 + $0x28] sm:$0xff]
      %v6894 = vld [vmem:[%s6887 + $0x30] sm:$0xff]
      %v6895 = vld [vmem:[%s6887 + $0x38] sm:$0xff]
      %v6896 = vld [vmem:[%s6887 + $0x40] sm:$0xff]
      %v6897 = vld [vmem:[%s6887 + $0x48] sm:$0xff]
      %v6898 = vld [vmem:[%s6887 + $0x50] sm:$0xff]
      %v6899 = vld [vmem:[%s6887 + $0x58] sm:$0xff]
      %v6900 = vld [vmem:[%s6887 + $0x60] sm:$0xff]
      %v6901 = vld [vmem:[%s6887 + $0x68] sm:$0xff]
      %v6902 = vld [vmem:[%s6887 + $0x70] sm:$0xff]
      %v6903 = vld [vmem:[%s6887 + $0x78] sm:$0xff]
      %6904 = vmatprep.subr.mxu0 0.0
      %6905 = vmatpush1.msra.mxu0 %v6888
      %6906 = vmatprep.subr.mxu0 0.0
      %6907 = vmatpush1.msra.mxu0 %v6889
      %6908 = vmatprep.subr.mxu0 0.0
      %6909 = vmatpush1.msra.mxu0 %v6890
      %6910 = vmatprep.subr.mxu0 0.0
      %6911 = vmatpush1.msra.mxu0 %v6891
      %6912 = vmatprep.subr.mxu0 0.0
      %6913 = vmatpush1.msra.mxu0 %v6892
      %6914 = vmatprep.subr.mxu0 0.0
      %6915 = vmatpush1.msra.mxu0 %v6893
      %6916 = vmatprep.subr.mxu0 0.0
      %6917 = vmatpush1.msra.mxu0 %v6894
      %6918 = vmatprep.subr.mxu0 0.0
      %6919 = vmatpush1.msra.mxu0 %v6895
      %6920 = vmatprep.subr.mxu0 0.0
      %6921 = vmatpush1.msra.mxu0 %v6896
      %6922 = vmatprep.subr.mxu0 0.0
      %6923 = vmatpush1.msra.mxu0 %v6897
      %6924 = vmatprep.subr.mxu0 0.0
      %6925 = vmatpush1.msra.mxu0 %v6898
      %6926 = vmatprep.subr.mxu0 0.0
      %6927 = vmatpush1.msra.mxu0 %v6899
      %6928 = vmatprep.subr.mxu0 0.0
      %6929 = vmatpush1.msra.mxu0 %v6900
      %6930 = vmatprep.subr.mxu0 0.0
      %6931 = vmatpush1.msra.mxu0 %v6901
      %6932 = vmatprep.subr.mxu0 0.0
      %6933 = vmatpush1.msra.mxu0 %v6902
      %6934 = vmatprep.subr.mxu0 0.0
      %6935 = vmatpush1.msra.mxu0 %v6903
      %6936 = vmatprep.subr.mxu0 0.0
      %6937 = vmatpush1.msra.mxu0 0.0
      %6938 = vmatprep.subr.mxu0 0.0
      %6939 = vmatpush1.msra.mxu0 0.0
      %6940 = vmatprep.subr.mxu0 0.0
      %6941 = vmatpush1.msra.mxu0 0.0
      %6942 = vmatprep.subr.mxu0 0.0
      %6943 = vmatpush1.msra.mxu0 0.0
      %6944 = vmatprep.subr.mxu0 0.0
      %6945 = vmatpush1.msra.mxu0 0.0
      %6946 = vmatprep.subr.mxu0 0.0
      %6947 = vmatpush1.msra.mxu0 0.0
      %6948 = vmatprep.subr.mxu0 0.0
      %6949 = vmatpush1.msra.mxu0 0.0
      %6950 = vmatprep.subr.mxu0 0.0
      %6951 = vmatpush1.msra.mxu0 0.0
      %6952 = vmatprep.subr.mxu0 0.0
      %6953 = vmatpush1.msra.mxu0 0.0
      %6954 = vmatprep.subr.mxu0 0.0
      %6955 = vmatpush1.msra.mxu0 0.0
      %6956 = vmatprep.subr.mxu0 0.0
      %6957 = vmatpush1.msra.mxu0 0.0
      %6958 = vmatprep.subr.mxu0 0.0
      %6959 = vmatpush1.msra.mxu0 0.0
      %6960 = vmatprep.subr.mxu0 0.0
      %6961 = vmatpush1.msra.mxu0 0.0
      %6962 = vmatprep.subr.mxu0 0.0
      %6963 = vmatpush1.msra.mxu0 0.0
      %6964 = vmatprep.subr.mxu0 0.0
      %6965 = vmatpush1.msra.mxu0 0.0
      %6966 = vmatprep.subr.mxu0 0.0
      %6967 = vmatpush1.msra.mxu0 0.0
      %6968 = vmatprep.mubr.f32.mxu0 0.0
      %6969 = vmatmul.mubr.f32.gmra.mrb[0].mxu0 %v6846
      %v6970 = vpop.f32.mrb[0].mxu0
      %v6971 = vadd.f32 0.0, %v6970
      %v6972 = vpop.f32.mrb[0].mxu0
      %6973 = vmatprep.mubr.f32.mxu0 0.0
      %6974 = vmatmul.mubr.f32.gmra.mrb[0].mxu0 %v6847
      %v6975 = vpop.f32.mrb[0].mxu0
      %v6976 = vadd.f32 0.0, %v6975
      %v6977 = vpop.f32.mrb[0].mxu0
      %6978 = vmatprep.mubr.f32.mxu0 0.0
      %6979 = vmatmul.mubr.f32.gmra.mrb[0].mxu0 %v6848
      %v6980 = vpop.f32.mrb[0].mxu0
      %v6981 = vadd.f32 0.0, %v6980
      %v6982 = vpop.f32.mrb[0].mxu0
      %6983 = vmatprep.mubr.f32.mxu0 0.0
      %6984 = vmatmul.mubr.f32.gmra.mrb[0].mxu0 %v6849
      %v6985 = vpop.f32.mrb[0].mxu0
      %v6986 = vadd.f32 0.0, %v6985
      %v6987 = vpop.f32.mrb[0].mxu0
      %6988 = vmatprep.mubr.f32.mxu0 0.0
      %6989 = vmatmul.mubr.f32.gmra.mrb[0].mxu0 %v6850
      %v6990 = vpop.f32.mrb[0].mxu0
      %v6991 = vadd.f32 0.0, %v6990
      %v6992 = vpop.f32.mrb[0].mxu0
      %6993 = vmatprep.mubr.f32.mxu0 0.0
      %6994 = vmatmul.mubr.f32.gmra.mrb[0].mxu0 %v6851
      %v6995 = vpop.f32.mrb[0].mxu0
      %v6996 = vadd.f32 0.0, %v6995
      %v6997 = vpop.f32.mrb[0].mxu0
      %6998 = vmatprep.mubr.f32.mxu0 0.0
      %6999 = vmatmul.mubr.f32.gmra.mrb[0].mxu0 %v6852
      %v7000 = vpop.f32.mrb[0].mxu0
      %v7001 = vadd.f32 0.0, %v7000
      %v7002 = vpop.f32.mrb[0].mxu0
      %7003 = vmatprep.mubr.f32.mxu0 0.0
      %7004 = vmatmul.mubr.f32.gmra.mrb[0].mxu0 %v6853
      %v7005 = vpop.f32.mrb[0].mxu0
      %v7006 = vadd.f32 0.0, %v7005
      %v7007 = vpop.f32.mrb[0].mxu0
      %7008 = vmatprep.mubr.f32.mxu0 0.0
      %7009 = vmatmul.mubr.f32.gmra.mrb[0].mxu0 %v6854
      %v7010 = vpop.f32.mrb[0].mxu0
      %v7011 = vadd.f32 0.0, %v7010
      %v7012 = vpop.f32.mrb[0].mxu0
      %7013 = vmatprep.mubr.f32.mxu0 0.0
      %7014 = vmatmul.mubr.f32.gmra.mrb[0].mxu0 %v6855
      %v7015 = vpop.f32.mrb[0].mxu0
      %v7016 = vadd.f32 0.0, %v7015
      %v7017 = vpop.f32.mrb[0].mxu0
      %7018 = vmatprep.mubr.f32.mxu0 0.0
      %7019 = vmatmul.mubr.f32.gmra.mrb[0].mxu0 %v6856
      %v7020 = vpop.f32.mrb[0].mxu0
      %v7021 = vadd.f32 0.0, %v7020
      %v7022 = vpop.f32.mrb[0].mxu0
      %7023 = vmatprep.mubr.f32.mxu0 0.0
      %7024 = vmatmul.mubr.f32.gmra.mrb[0].mxu0 %v6857
      %v7025 = vpop.f32.mrb[0].mxu0
      %v7026 = vadd.f32 0.0, %v7025
      %v7027 = vpop.f32.mrb[0].mxu0
      %7028 = vmatprep.mubr.f32.mxu0 0.0
      %7029 = vmatmul.mubr.f32.gmra.mrb[0].mxu0 %v6858
      %v7030 = vpop.f32.mrb[0].mxu0
      %v7031 = vadd.f32 0.0, %v7030
      %v7032 = vpop.f32.mrb[0].mxu0
      %7033 = vmatprep.mubr.f32.mxu0 0.0
      %7034 = vmatmul.mubr.f32.gmra.mrb[0].mxu0 %v6859
      %v7035 = vpop.f32.mrb[0].mxu0
      %v7036 = vadd.f32 0.0, %v7035
      %v7037 = vpop.f32.mrb[0].mxu0
      %7038 = vmatprep.mubr.f32.mxu0 0.0
      %7039 = vmatmul.mubr.f32.gmra.mrb[0].mxu0 %v6860
      %v7040 = vpop.f32.mrb[0].mxu0
      %v7041 = vadd.f32 0.0, %v7040
      %v7042 = vpop.f32.mrb[0].mxu0
      %7043 = vmatprep.mubr.f32.mxu0 0.0
      %7044 = vmatmul.mubr.f32.gmra.mrb[0].mxu0 %v6861
      %v7045 = vpop.f32.mrb[0].mxu0
      %v7046 = vadd.f32 0.0, %v7045
      %v7047 = vpop.f32.mrb[0].mxu0
      %7048 = vmatprep.mubr.f32.mxu0 0.0
      %7049 = vmatmul.mubr.f32.gmra.mrb[0].mxu0 %v6862
      %v7050 = vpop.f32.mrb[0].mxu0
      %v7051 = vadd.f32 0.0, %v7050
      %v7052 = vpop.f32.mrb[0].mxu0
      %7053 = vmatprep.mubr.f32.mxu0 0.0
      %7054 = vmatmul.mubr.f32.gmra.mrb[0].mxu0 %v6863
      %v7055 = vpop.f32.mrb[0].mxu0
      %v7056 = vadd.f32 0.0, %v7055
      %v7057 = vpop.f32.mrb[0].mxu0
      %7058 = vmatprep.mubr.f32.mxu0 0.0
      %7059 = vmatmul.mubr.f32.gmra.mrb[0].mxu0 %v6864
      %v7060 = vpop.f32.mrb[0].mxu0
      %v7061 = vadd.f32 0.0, %v7060
      %v7062 = vpop.f32.mrb[0].mxu0
      %7063 = vmatprep.mubr.f32.mxu0 0.0
      %7064 = vmatmul.mubr.f32.gmra.mrb[0].mxu0 %v6865
      %v7065 = vpop.f32.mrb[0].mxu0
      %v7066 = vadd.f32 0.0, %v7065
      %v7067 = vpop.f32.mrb[0].mxu0
      %7068 = vmatprep.mubr.f32.mxu0 0.0
      %7069 = vmatmul.mubr.f32.gmra.mrb[0].mxu0 %v6866
      %v7070 = vpop.f32.mrb[0].mxu0
      %v7071 = vadd.f32 0.0, %v7070
      %v7072 = vpop.f32.mrb[0].mxu0
      %7073 = vmatprep.mubr.f32.mxu0 0.0
      %7074 = vmatmul.mubr.f32.gmra.mrb[0].mxu0 %v6867
      %v7075 = vpop.f32.mrb[0].mxu0
      %v7076 = vadd.f32 0.0, %v7075
      %v7077 = vpop.f32.mrb[0].mxu0
      %7078 = vmatprep.mubr.f32.mxu0 0.0
      %7079 = vmatmul.mubr.f32.gmra.mrb[0].mxu0 %v6868
      %v7080 = vpop.f32.mrb[0].mxu0
      %v7081 = vadd.f32 0.0, %v7080
      %v7082 = vpop.f32.mrb[0].mxu0
      %7083 = vmatprep.mubr.f32.mxu0 0.0
      %7084 = vmatmul.mubr.f32.gmra.mrb[0].mxu0 %v6869
      %v7085 = vpop.f32.mrb[0].mxu0
      %v7086 = vadd.f32 0.0, %v7085
      %v7087 = vpop.f32.mrb[0].mxu0
      %7088 = vmatprep.mubr.f32.mxu0 0.0
      %7089 = vmatmul.mubr.f32.gmra.mrb[0].mxu0 %v6870
      %v7090 = vpop.f32.mrb[0].mxu0
      %v7091 = vadd.f32 0.0, %v7090
      %v7092 = vpop.f32.mrb[0].mxu0
      %7093 = vmatprep.mubr.f32.mxu0 0.0
      %7094 = vmatmul.mubr.f32.gmra.mrb[0].mxu0 %v6871
      %v7095 = vpop.f32.mrb[0].mxu0
      %v7096 = vadd.f32 0.0, %v7095
      %v7097 = vpop.f32.mrb[0].mxu0
      %7098 = vmatprep.mubr.f32.mxu0 0.0
      %7099 = vmatmul.mubr.f32.gmra.mrb[0].mxu0 %v6872
      %v7100 = vpop.f32.mrb[0].mxu0
      %v7101 = vadd.f32 0.0, %v7100
      %v7102 = vpop.f32.mrb[0].mxu0
      %7103 = vmatprep.mubr.f32.mxu0 0.0
      %7104 = vmatmul.mubr.f32.gmra.mrb[0].mxu0 %v6873
      %v7105 = vpop.f32.mrb[0].mxu0
      %v7106 = vadd.f32 0.0, %v7105
      %v7107 = vpop.f32.mrb[0].mxu0
      %7108 = vmatprep.mubr.f32.mxu0 0.0
      %7109 = vmatmul.mubr.f32.gmra.mrb[0].mxu0 %v6874
      %v7110 = vpop.f32.mrb[0].mxu0
      %v7111 = vadd.f32 0.0, %v7110
      %v7112 = vpop.f32.mrb[0].mxu0
      %7113 = vmatprep.mubr.f32.mxu0 0.0
      %7114 = vmatmul.mubr.f32.gmra.mrb[0].mxu0 %v6875
      %v7115 = vpop.f32.mrb[0].mxu0
      %v7116 = vadd.f32 0.0, %v7115
      %v7117 = vpop.f32.mrb[0].mxu0
      %7118 = vmatprep.mubr.f32.mxu0 0.0
      %7119 = vmatmul.mubr.f32.gmra.mrb[0].mxu0 %v6876
      %v7120 = vpop.f32.mrb[0].mxu0
      %v7121 = vadd.f32 0.0, %v7120
      %v7122 = vpop.f32.mrb[0].mxu0
      %7123 = vmatprep.mubr.f32.mxu0 0.0
      %7124 = vmatmul.mubr.f32.gmra.mrb[0].mxu0 %v6877
      %v7125 = vpop.f32.mrb[0].mxu0
      %v7126 = vadd.f32 0.0, %v7125
      %v7127 = vpop.f32.mrb[0].mxu0
      %7128 = vmatprep.mubr.f32.mxu0 0.0
      %7129 = vmatmul.mubr.f32.gmra.mrb[0].mxu0 %v6878
      %v7130 = vpop.f32.mrb[0].mxu0
      %v7131 = vadd.f32 0.0, %v7130
      %v7132 = vpop.f32.mrb[0].mxu0
      %7133 = vmatprep.mubr.f32.mxu0 0.0
      %7134 = vmatmul.mubr.f32.gmra.mrb[0].mxu0 %v6879
      %v7135 = vpop.f32.mrb[0].mxu0
      %v7136 = vadd.f32 0.0, %v7135
      %v7137 = vpop.f32.mrb[0].mxu0
      %7138 = vmatprep.mubr.f32.mxu0 0.0
      %7139 = vmatmul.mubr.f32.gmra.mrb[0].mxu0 %v6880
      %v7140 = vpop.f32.mrb[0].mxu0
      %v7141 = vadd.f32 0.0, %v7140
      %v7142 = vpop.f32.mrb[0].mxu0
      %7143 = vmatprep.mubr.f32.mxu0 0.0
      %7144 = vmatmul.mubr.f32.gmra.mrb[0].mxu0 %v6881
      %v7145 = vpop.f32.mrb[0].mxu0
      %v7146 = vadd.f32 0.0, %v7145
      %v7147 = vpop.f32.mrb[0].mxu0
      %7148 = vmatprep.mubr.f32.mxu0 0.0
      %7149 = vmatmul.mubr.f32.gmra.mrb[0].mxu0 %v6882
      %v7150 = vpop.f32.mrb[0].mxu0
      %v7151 = vadd.f32 0.0, %v7150
      %v7152 = vpop.f32.mrb[0].mxu0
      %7153 = vmatprep.mubr.f32.mxu0 0.0
      %7154 = vmatmul.mubr.f32.gmra.mrb[0].mxu0 %v6883
      %v7155 = vpop.f32.mrb[0].mxu0
      %v7156 = vadd.f32 0.0, %v7155
      %v7157 = vpop.f32.mrb[0].mxu0
      %7158 = vmatprep.mubr.f32.mxu0 0.0
      %7159 = vmatmul.mubr.f32.gmra.mrb[0].mxu0 %v6884
      %v7160 = vpop.f32.mrb[0].mxu0
      %v7161 = vadd.f32 0.0, %v7160
      %v7162 = vpop.f32.mrb[0].mxu0
      %7163 = vmatprep.mubr.f32.mxu0 0.0
      %7164 = vmatmul.mubr.f32.gmra.mrb[0].mxu0 %v6885
      %v7165 = vpop.f32.mrb[0].mxu0
      %v7166 = vadd.f32 0.0, %v7165
      %v7167 = vpop.f32.mrb[0].mxu0
      %7168 = vmatprep.mubr.f32.mxu0 0.0
      %7169 = vmatmul.mubr.f32.gmra.mrb[0].mxu0 %v6886
      %v7170 = vpop.f32.mrb[0].mxu0
      %v7171 = vadd.f32 0.0, %v7170
      %v7172 = vpop.f32.mrb[0].mxu0
      %7173 = vdwg.mxu0
      %v7174 = vadd.f32 %v6805, %v6971
      %v7175 = vadd.f32 %v6806, %v6976
      %v7176 = vadd.f32 %v6807, %v6981
      %v7177 = vadd.f32 %v6808, %v6986
      %v7178 = vadd.f32 %v6809, %v6991
      %v7179 = vadd.f32 %v6810, %v6996
      %v7180 = vadd.f32 %v6811, %v7001
      %v7181 = vadd.f32 %v6812, %v7006
      %v7182 = vadd.f32 %v6813, %v7011
      %v7183 = vadd.f32 %v6814, %v7016
      %v7184 = vadd.f32 %v6815, %v7021
      %v7185 = vadd.f32 %v6816, %v7026
      %v7186 = vadd.f32 %v6817, %v7031
      %v7187 = vadd.f32 %v6818, %v7036
      %v7188 = vadd.f32 %v6819, %v7041
      %v7189 = vadd.f32 %v6820, %v7046
      %v7190 = vadd.f32 %v6821, %v7051
      %v7191 = vadd.f32 %v6822, %v7056
      %v7192 = vadd.f32 %v6823, %v7061
      %v7193 = vadd.f32 %v6824, %v7066
      %v7194 = vadd.f32 %v6825, %v7071
      %v7195 = vadd.f32 %v6826, %v7076
      %v7196 = vadd.f32 %v6827, %v7081
      %v7197 = vadd.f32 %v6828, %v7086
      %v7198 = vadd.f32 %v6829, %v7091
      %v7199 = vadd.f32 %v6830, %v7096
      %v7200 = vadd.f32 %v6831, %v7101
      %v7201 = vadd.f32 %v6832, %v7106
      %v7202 = vadd.f32 %v6833, %v7111
      %v7203 = vadd.f32 %v6834, %v7116
      %v7204 = vadd.f32 %v6835, %v7121
      %v7205 = vadd.f32 %v6836, %v7126
      %v7206 = vadd.f32 %v6837, %v7131
      %v7207 = vadd.f32 %v6838, %v7136
      %v7208 = vadd.f32 %v6839, %v7141
      %v7209 = vadd.f32 %v6840, %v7146
      %v7210 = vadd.f32 %v6841, %v7151
      %v7211 = vadd.f32 %v6842, %v7156
      %v7212 = vadd.f32 %v6843, %v7161
      %v7213 = vadd.f32 %v6844, %v7166
      %v7214 = vadd.f32 %v6845, %v7171
      %v7215 = vld [vmem:[#allocation2 + $0x29] sm:$0xff]
      %v7216 = vld [vmem:[#allocation2 + $0x31] sm:$0xff]
      %v7217 = vld [vmem:[#allocation2 + $0x39] sm:$0xff]
      %v7218 = vld [vmem:[#allocation2 + $0x41] sm:$0xff]
      %v7219 = vld [vmem:[#allocation2 + $0x49] sm:$0xff]
      %v7220 = vld [vmem:[#allocation2 + $0x51] sm:$0xff]
      %v7221 = vld [vmem:[#allocation2 + $0x59] sm:$0xff]
      %v7222 = vld [vmem:[#allocation2 + $0x61] sm:$0xff]
      %v7223 = vld [vmem:[#allocation2 + $0x69] sm:$0xff]
      %v7224 = vld [vmem:[#allocation2 + $0x71] sm:$0xff]
      %v7225 = vld [vmem:[#allocation2 + $0x79] sm:$0xff]
      %v7226 = vld [vmem:[#allocation2 + $0x81] sm:$0xff]
      %v7227 = vld [vmem:[#allocation2 + $0x89] sm:$0xff]
      %v7228 = vld [vmem:[#allocation2 + $0x91] sm:$0xff]
      %v7229 = vld [vmem:[#allocation2 + $0x99] sm:$0xff]
      %v7230 = vld [vmem:[#allocation2 + $0xa1] sm:$0xff]
      %v7231 = vld [vmem:[#allocation2 + $0xa9] sm:$0xff]
      %v7232 = vld [vmem:[#allocation2 + $0xb1] sm:$0xff]
      %v7233 = vld [vmem:[#allocation2 + $0xb9] sm:$0xff]
      %v7234 = vld [vmem:[#allocation2 + $0xc1] sm:$0xff]
      %v7235 = vld [vmem:[#allocation2 + $0xc9] sm:$0xff]
      %v7236 = vld [vmem:[#allocation2 + $0xd1] sm:$0xff]
      %v7237 = vld [vmem:[#allocation2 + $0xd9] sm:$0xff]
      %v7238 = vld [vmem:[#allocation2 + $0xe1] sm:$0xff]
      %v7239 = vld [vmem:[#allocation2 + $0xe9] sm:$0xff]
      %v7240 = vld [vmem:[#allocation2 + $0xf1] sm:$0xff]
      %v7241 = vld [vmem:[#allocation2 + $0xf9] sm:$0xff]
      %v7242 = vld [vmem:[#allocation2 + $0x101] sm:$0xff]
      %v7243 = vld [vmem:[#allocation2 + $0x109] sm:$0xff]
      %v7244 = vld [vmem:[#allocation2 + $0x111] sm:$0xff]
      %v7245 = vld [vmem:[#allocation2 + $0x119] sm:$0xff]
      %v7246 = vld [vmem:[#allocation2 + $0x121] sm:$0xff]
      %v7247 = vld [vmem:[#allocation2 + $0x129] sm:$0xff]
      %v7248 = vld [vmem:[#allocation2 + $0x131] sm:$0xff]
      %v7249 = vld [vmem:[#allocation2 + $0x139] sm:$0xff]
      %v7250 = vld [vmem:[#allocation2 + $0x141] sm:$0xff]
      %v7251 = vld [vmem:[#allocation2 + $0x149] sm:$0xff]
      %v7252 = vld [vmem:[#allocation2 + $0x151] sm:$0xff]
      %v7253 = vld [vmem:[#allocation2 + $0x159] sm:$0xff]
      %v7254 = vld [vmem:[#allocation2 + $0x161] sm:$0xff]
      %v7255 = vld [vmem:[#allocation2 + $0x169] sm:$0xff]
      %s7256 = scalar_lea.vmem %s12, 768
      %v7257 = vld [vmem:[%s7256] sm:$0xff]
      %v7258 = vld [vmem:[%s7256 + $0x8] sm:$0xff]
      %v7259 = vld [vmem:[%s7256 + $0x10] sm:$0xff]
      %v7260 = vld [vmem:[%s7256 + $0x18] sm:$0xff]
      %v7261 = vld [vmem:[%s7256 + $0x20] sm:$0xff]
      %v7262 = vld [vmem:[%s7256 + $0x28] sm:$0xff]
      %v7263 = vld [vmem:[%s7256 + $0x30] sm:$0xff]
      %v7264 = vld [vmem:[%s7256 + $0x38] sm:$0xff]
      %v7265 = vld [vmem:[%s7256 + $0x40] sm:$0xff]
      %v7266 = vld [vmem:[%s7256 + $0x48] sm:$0xff]
      %v7267 = vld [vmem:[%s7256 + $0x50] sm:$0xff]
      %v7268 = vld [vmem:[%s7256 + $0x58] sm:$0xff]
      %v7269 = vld [vmem:[%s7256 + $0x60] sm:$0xff]
      %v7270 = vld [vmem:[%s7256 + $0x68] sm:$0xff]
      %v7271 = vld [vmem:[%s7256 + $0x70] sm:$0xff]
      %v7272 = vld [vmem:[%s7256 + $0x78] sm:$0xff]
      %7273 = vmatprep.subr.mxu0 0.0
      %7274 = vmatpush1.msra.mxu0 %v7257
      %7275 = vmatprep.subr.mxu0 0.0
      %7276 = vmatpush1.msra.mxu0 %v7258
      %7277 = vmatprep.subr.mxu0 0.0
      %7278 = vmatpush1.msra.mxu0 %v7259
      %7279 = vmatprep.subr.mxu0 0.0
      %7280 = vmatpush1.msra.mxu0 %v7260
      %7281 = vmatprep.subr.mxu0 0.0
      %7282 = vmatpush1.msra.mxu0 %v7261
      %7283 = vmatprep.subr.mxu0 0.0
      %7284 = vmatpush1.msra.mxu0 %v7262
      %7285 = vmatprep.subr.mxu0 0.0
      %7286 = vmatpush1.msra.mxu0 %v7263
      %7287 = vmatprep.subr.mxu0 0.0
      %7288 = vmatpush1.msra.mxu0 %v7264
      %7289 = vmatprep.subr.mxu0 0.0
      %7290 = vmatpush1.msra.mxu0 %v7265
      %7291 = vmatprep.subr.mxu0 0.0
      %7292 = vmatpush1.msra.mxu0 %v7266
      %7293 = vmatprep.subr.mxu0 0.0
      %7294 = vmatpush1.msra.mxu0 %v7267
      %7295 = vmatprep.subr.mxu0 0.0
      %7296 = vmatpush1.msra.mxu0 %v7268
      %7297 = vmatprep.subr.mxu0 0.0
      %7298 = vmatpush1.msra.mxu0 %v7269
      %7299 = vmatprep.subr.mxu0 0.0
      %7300 = vmatpush1.msra.mxu0 %v7270
      %7301 = vmatprep.subr.mxu0 0.0
      %7302 = vmatpush1.msra.mxu0 %v7271
      %7303 = vmatprep.subr.mxu0 0.0
      %7304 = vmatpush1.msra.mxu0 %v7272
      %7305 = vmatprep.subr.mxu0 0.0
      %7306 = vmatpush1.msra.mxu0 0.0
      %7307 = vmatprep.subr.mxu0 0.0
      %7308 = vmatpush1.msra.mxu0 0.0
      %7309 = vmatprep.subr.mxu0 0.0
      %7310 = vmatpush1.msra.mxu0 0.0
      %7311 = vmatprep.subr.mxu0 0.0
      %7312 = vmatpush1.msra.mxu0 0.0
      %7313 = vmatprep.subr.mxu0 0.0
      %7314 = vmatpush1.msra.mxu0 0.0
      %7315 = vmatprep.subr.mxu0 0.0
      %7316 = vmatpush1.msra.mxu0 0.0
      %7317 = vmatprep.subr.mxu0 0.0
      %7318 = vmatpush1.msra.mxu0 0.0
      %7319 = vmatprep.subr.mxu0 0.0
      %7320 = vmatpush1.msra.mxu0 0.0
      %7321 = vmatprep.subr.mxu0 0.0
      %7322 = vmatpush1.msra.mxu0 0.0
      %7323 = vmatprep.subr.mxu0 0.0
      %7324 = vmatpush1.msra.mxu0 0.0
      %7325 = vmatprep.subr.mxu0 0.0
      %7326 = vmatpush1.msra.mxu0 0.0
      %7327 = vmatprep.subr.mxu0 0.0
      %7328 = vmatpush1.msra.mxu0 0.0
      %7329 = vmatprep.subr.mxu0 0.0
      %7330 = vmatpush1.msra.mxu0 0.0
      %7331 = vmatprep.subr.mxu0 0.0
      %7332 = vmatpush1.msra.mxu0 0.0
      %7333 = vmatprep.subr.mxu0 0.0
      %7334 = vmatpush1.msra.mxu0 0.0
      %7335 = vmatprep.subr.mxu0 0.0
      %7336 = vmatpush1.msra.mxu0 0.0
      %7337 = vmatprep.mubr.f32.mxu0 0.0
      %7338 = vmatmul.mubr.f32.gmra.mrb[0].mxu0 %v7215
      %v7339 = vpop.f32.mrb[0].mxu0
      %v7340 = vadd.f32 0.0, %v7339
      %v7341 = vpop.f32.mrb[0].mxu0
      %7342 = vmatprep.mubr.f32.mxu0 0.0
      %7343 = vmatmul.mubr.f32.gmra.mrb[0].mxu0 %v7216
      %v7344 = vpop.f32.mrb[0].mxu0
      %v7345 = vadd.f32 0.0, %v7344
      %v7346 = vpop.f32.mrb[0].mxu0
      %7347 = vmatprep.mubr.f32.mxu0 0.0
      %7348 = vmatmul.mubr.f32.gmra.mrb[0].mxu0 %v7217
      %v7349 = vpop.f32.mrb[0].mxu0
      %v7350 = vadd.f32 0.0, %v7349
      %v7351 = vpop.f32.mrb[0].mxu0
      %7352 = vmatprep.mubr.f32.mxu0 0.0
      %7353 = vmatmul.mubr.f32.gmra.mrb[0].mxu0 %v7218
      %v7354 = vpop.f32.mrb[0].mxu0
      %v7355 = vadd.f32 0.0, %v7354
      %v7356 = vpop.f32.mrb[0].mxu0
      %7357 = vmatprep.mubr.f32.mxu0 0.0
      %7358 = vmatmul.mubr.f32.gmra.mrb[0].mxu0 %v7219
      %v7359 = vpop.f32.mrb[0].mxu0
      %v7360 = vadd.f32 0.0, %v7359
      %v7361 = vpop.f32.mrb[0].mxu0
      %7362 = vmatprep.mubr.f32.mxu0 0.0
      %7363 = vmatmul.mubr.f32.gmra.mrb[0].mxu0 %v7220
      %v7364 = vpop.f32.mrb[0].mxu0
      %v7365 = vadd.f32 0.0, %v7364
      %v7366 = vpop.f32.mrb[0].mxu0
      %7367 = vmatprep.mubr.f32.mxu0 0.0
      %7368 = vmatmul.mubr.f32.gmra.mrb[0].mxu0 %v7221
      %v7369 = vpop.f32.mrb[0].mxu0
      %v7370 = vadd.f32 0.0, %v7369
      %v7371 = vpop.f32.mrb[0].mxu0
      %7372 = vmatprep.mubr.f32.mxu0 0.0
      %7373 = vmatmul.mubr.f32.gmra.mrb[0].mxu0 %v7222
      %v7374 = vpop.f32.mrb[0].mxu0
      %v7375 = vadd.f32 0.0, %v7374
      %v7376 = vpop.f32.mrb[0].mxu0
      %7377 = vmatprep.mubr.f32.mxu0 0.0
      %7378 = vmatmul.mubr.f32.gmra.mrb[0].mxu0 %v7223
      %v7379 = vpop.f32.mrb[0].mxu0
      %v7380 = vadd.f32 0.0, %v7379
      %v7381 = vpop.f32.mrb[0].mxu0
      %7382 = vmatprep.mubr.f32.mxu0 0.0
      %7383 = vmatmul.mubr.f32.gmra.mrb[0].mxu0 %v7224
      %v7384 = vpop.f32.mrb[0].mxu0
      %v7385 = vadd.f32 0.0, %v7384
      %v7386 = vpop.f32.mrb[0].mxu0
      %7387 = vmatprep.mubr.f32.mxu0 0.0
      %7388 = vmatmul.mubr.f32.gmra.mrb[0].mxu0 %v7225
      %v7389 = vpop.f32.mrb[0].mxu0
      %v7390 = vadd.f32 0.0, %v7389
      %v7391 = vpop.f32.mrb[0].mxu0
      %7392 = vmatprep.mubr.f32.mxu0 0.0
      %7393 = vmatmul.mubr.f32.gmra.mrb[0].mxu0 %v7226
      %v7394 = vpop.f32.mrb[0].mxu0
      %v7395 = vadd.f32 0.0, %v7394
      %v7396 = vpop.f32.mrb[0].mxu0
      %7397 = vmatprep.mubr.f32.mxu0 0.0
      %7398 = vmatmul.mubr.f32.gmra.mrb[0].mxu0 %v7227
      %v7399 = vpop.f32.mrb[0].mxu0
      %v7400 = vadd.f32 0.0, %v7399
      %v7401 = vpop.f32.mrb[0].mxu0
      %7402 = vmatprep.mubr.f32.mxu0 0.0
      %7403 = vmatmul.mubr.f32.gmra.mrb[0].mxu0 %v7228
      %v7404 = vpop.f32.mrb[0].mxu0
      %v7405 = vadd.f32 0.0, %v7404
      %v7406 = vpop.f32.mrb[0].mxu0
      %7407 = vmatprep.mubr.f32.mxu0 0.0
      %7408 = vmatmul.mubr.f32.gmra.mrb[0].mxu0 %v7229
      %v7409 = vpop.f32.mrb[0].mxu0
      %v7410 = vadd.f32 0.0, %v7409
      %v7411 = vpop.f32.mrb[0].mxu0
      %7412 = vmatprep.mubr.f32.mxu0 0.0
      %7413 = vmatmul.mubr.f32.gmra.mrb[0].mxu0 %v7230
      %v7414 = vpop.f32.mrb[0].mxu0
      %v7415 = vadd.f32 0.0, %v7414
      %v7416 = vpop.f32.mrb[0].mxu0
      %7417 = vmatprep.mubr.f32.mxu0 0.0
      %7418 = vmatmul.mubr.f32.gmra.mrb[0].mxu0 %v7231
      %v7419 = vpop.f32.mrb[0].mxu0
      %v7420 = vadd.f32 0.0, %v7419
      %v7421 = vpop.f32.mrb[0].mxu0
      %7422 = vmatprep.mubr.f32.mxu0 0.0
      %7423 = vmatmul.mubr.f32.gmra.mrb[0].mxu0 %v7232
      %v7424 = vpop.f32.mrb[0].mxu0
      %v7425 = vadd.f32 0.0, %v7424
      %v7426 = vpop.f32.mrb[0].mxu0
      %7427 = vmatprep.mubr.f32.mxu0 0.0
      %7428 = vmatmul.mubr.f32.gmra.mrb[0].mxu0 %v7233
      %v7429 = vpop.f32.mrb[0].mxu0
      %v7430 = vadd.f32 0.0, %v7429
      %v7431 = vpop.f32.mrb[0].mxu0
      %7432 = vmatprep.mubr.f32.mxu0 0.0
      %7433 = vmatmul.mubr.f32.gmra.mrb[0].mxu0 %v7234
      %v7434 = vpop.f32.mrb[0].mxu0
      %v7435 = vadd.f32 0.0, %v7434
      %v7436 = vpop.f32.mrb[0].mxu0
      %7437 = vmatprep.mubr.f32.mxu0 0.0
      %7438 = vmatmul.mubr.f32.gmra.mrb[0].mxu0 %v7235
      %v7439 = vpop.f32.mrb[0].mxu0
      %v7440 = vadd.f32 0.0, %v7439
      %v7441 = vpop.f32.mrb[0].mxu0
      %7442 = vmatprep.mubr.f32.mxu0 0.0
      %7443 = vmatmul.mubr.f32.gmra.mrb[0].mxu0 %v7236
      %v7444 = vpop.f32.mrb[0].mxu0
      %v7445 = vadd.f32 0.0, %v7444
      %v7446 = vpop.f32.mrb[0].mxu0
      %7447 = vmatprep.mubr.f32.mxu0 0.0
      %7448 = vmatmul.mubr.f32.gmra.mrb[0].mxu0 %v7237
      %v7449 = vpop.f32.mrb[0].mxu0
      %v7450 = vadd.f32 0.0, %v7449
      %v7451 = vpop.f32.mrb[0].mxu0
      %7452 = vmatprep.mubr.f32.mxu0 0.0
      %7453 = vmatmul.mubr.f32.gmra.mrb[0].mxu0 %v7238
      %v7454 = vpop.f32.mrb[0].mxu0
      %v7455 = vadd.f32 0.0, %v7454
      %v7456 = vpop.f32.mrb[0].mxu0
      %7457 = vmatprep.mubr.f32.mxu0 0.0
      %7458 = vmatmul.mubr.f32.gmra.mrb[0].mxu0 %v7239
      %v7459 = vpop.f32.mrb[0].mxu0
      %v7460 = vadd.f32 0.0, %v7459
      %v7461 = vpop.f32.mrb[0].mxu0
      %7462 = vmatprep.mubr.f32.mxu0 0.0
      %7463 = vmatmul.mubr.f32.gmra.mrb[0].mxu0 %v7240
      %v7464 = vpop.f32.mrb[0].mxu0
      %v7465 = vadd.f32 0.0, %v7464
      %v7466 = vpop.f32.mrb[0].mxu0
      %7467 = vmatprep.mubr.f32.mxu0 0.0
      %7468 = vmatmul.mubr.f32.gmra.mrb[0].mxu0 %v7241
      %v7469 = vpop.f32.mrb[0].mxu0
      %v7470 = vadd.f32 0.0, %v7469
      %v7471 = vpop.f32.mrb[0].mxu0
      %7472 = vmatprep.mubr.f32.mxu0 0.0
      %7473 = vmatmul.mubr.f32.gmra.mrb[0].mxu0 %v7242
      %v7474 = vpop.f32.mrb[0].mxu0
      %v7475 = vadd.f32 0.0, %v7474
      %v7476 = vpop.f32.mrb[0].mxu0
      %7477 = vmatprep.mubr.f32.mxu0 0.0
      %7478 = vmatmul.mubr.f32.gmra.mrb[0].mxu0 %v7243
      %v7479 = vpop.f32.mrb[0].mxu0
      %v7480 = vadd.f32 0.0, %v7479
      %v7481 = vpop.f32.mrb[0].mxu0
      %7482 = vmatprep.mubr.f32.mxu0 0.0
      %7483 = vmatmul.mubr.f32.gmra.mrb[0].mxu0 %v7244
      %v7484 = vpop.f32.mrb[0].mxu0
      %v7485 = vadd.f32 0.0, %v7484
      %v7486 = vpop.f32.mrb[0].mxu0
      %7487 = vmatprep.mubr.f32.mxu0 0.0
      %7488 = vmatmul.mubr.f32.gmra.mrb[0].mxu0 %v7245
      %v7489 = vpop.f32.mrb[0].mxu0
      %v7490 = vadd.f32 0.0, %v7489
      %v7491 = vpop.f32.mrb[0].mxu0
      %7492 = vmatprep.mubr.f32.mxu0 0.0
      %7493 = vmatmul.mubr.f32.gmra.mrb[0].mxu0 %v7246
      %v7494 = vpop.f32.mrb[0].mxu0
      %v7495 = vadd.f32 0.0, %v7494
      %v7496 = vpop.f32.mrb[0].mxu0
      %7497 = vmatprep.mubr.f32.mxu0 0.0
      %7498 = vmatmul.mubr.f32.gmra.mrb[0].mxu0 %v7247
      %v7499 = vpop.f32.mrb[0].mxu0
      %v7500 = vadd.f32 0.0, %v7499
      %v7501 = vpop.f32.mrb[0].mxu0
      %7502 = vmatprep.mubr.f32.mxu0 0.0
      %7503 = vmatmul.mubr.f32.gmra.mrb[0].mxu0 %v7248
      %v7504 = vpop.f32.mrb[0].mxu0
      %v7505 = vadd.f32 0.0, %v7504
      %v7506 = vpop.f32.mrb[0].mxu0
      %7507 = vmatprep.mubr.f32.mxu0 0.0
      %7508 = vmatmul.mubr.f32.gmra.mrb[0].mxu0 %v7249
      %v7509 = vpop.f32.mrb[0].mxu0
      %v7510 = vadd.f32 0.0, %v7509
      %v7511 = vpop.f32.mrb[0].mxu0
      %7512 = vmatprep.mubr.f32.mxu0 0.0
      %7513 = vmatmul.mubr.f32.gmra.mrb[0].mxu0 %v7250
      %v7514 = vpop.f32.mrb[0].mxu0
      %v7515 = vadd.f32 0.0, %v7514
      %v7516 = vpop.f32.mrb[0].mxu0
      %7517 = vmatprep.mubr.f32.mxu0 0.0
      %7518 = vmatmul.mubr.f32.gmra.mrb[0].mxu0 %v7251
      %v7519 = vpop.f32.mrb[0].mxu0
      %v7520 = vadd.f32 0.0, %v7519
      %v7521 = vpop.f32.mrb[0].mxu0
      %7522 = vmatprep.mubr.f32.mxu0 0.0
      %7523 = vmatmul.mubr.f32.gmra.mrb[0].mxu0 %v7252
      %v7524 = vpop.f32.mrb[0].mxu0
      %v7525 = vadd.f32 0.0, %v7524
      %v7526 = vpop.f32.mrb[0].mxu0
      %7527 = vmatprep.mubr.f32.mxu0 0.0
      %7528 = vmatmul.mubr.f32.gmra.mrb[0].mxu0 %v7253
      %v7529 = vpop.f32.mrb[0].mxu0
      %v7530 = vadd.f32 0.0, %v7529
      %v7531 = vpop.f32.mrb[0].mxu0
      %7532 = vmatprep.mubr.f32.mxu0 0.0
      %7533 = vmatmul.mubr.f32.gmra.mrb[0].mxu0 %v7254
      %v7534 = vpop.f32.mrb[0].mxu0
      %v7535 = vadd.f32 0.0, %v7534
      %v7536 = vpop.f32.mrb[0].mxu0
      %7537 = vmatprep.mubr.f32.mxu0 0.0
      %7538 = vmatmul.mubr.f32.gmra.mrb[0].mxu0 %v7255
      %v7539 = vpop.f32.mrb[0].mxu0
      %v7540 = vadd.f32 0.0, %v7539
      %v7541 = vpop.f32.mrb[0].mxu0
      %7542 = vdwg.mxu0
      %v7543 = vadd.f32 %v7174, %v7340
      %v7544 = vadd.f32 %v7175, %v7345
      %v7545 = vadd.f32 %v7176, %v7350
      %v7546 = vadd.f32 %v7177, %v7355
      %v7547 = vadd.f32 %v7178, %v7360
      %v7548 = vadd.f32 %v7179, %v7365
      %v7549 = vadd.f32 %v7180, %v7370
      %v7550 = vadd.f32 %v7181, %v7375
      %v7551 = vadd.f32 %v7182, %v7380
      %v7552 = vadd.f32 %v7183, %v7385
      %v7553 = vadd.f32 %v7184, %v7390
      %v7554 = vadd.f32 %v7185, %v7395
      %v7555 = vadd.f32 %v7186, %v7400
      %v7556 = vadd.f32 %v7187, %v7405
      %v7557 = vadd.f32 %v7188, %v7410
      %v7558 = vadd.f32 %v7189, %v7415
      %v7559 = vadd.f32 %v7190, %v7420
      %v7560 = vadd.f32 %v7191, %v7425
      %v7561 = vadd.f32 %v7192, %v7430
      %v7562 = vadd.f32 %v7193, %v7435
      %v7563 = vadd.f32 %v7194, %v7440
      %v7564 = vadd.f32 %v7195, %v7445
      %v7565 = vadd.f32 %v7196, %v7450
      %v7566 = vadd.f32 %v7197, %v7455
      %v7567 = vadd.f32 %v7198, %v7460
      %v7568 = vadd.f32 %v7199, %v7465
      %v7569 = vadd.f32 %v7200, %v7470
      %v7570 = vadd.f32 %v7201, %v7475
      %v7571 = vadd.f32 %v7202, %v7480
      %v7572 = vadd.f32 %v7203, %v7485
      %v7573 = vadd.f32 %v7204, %v7490
      %v7574 = vadd.f32 %v7205, %v7495
      %v7575 = vadd.f32 %v7206, %v7500
      %v7576 = vadd.f32 %v7207, %v7505
      %v7577 = vadd.f32 %v7208, %v7510
      %v7578 = vadd.f32 %v7209, %v7515
      %v7579 = vadd.f32 %v7210, %v7520
      %v7580 = vadd.f32 %v7211, %v7525
      %v7581 = vadd.f32 %v7212, %v7530
      %v7582 = vadd.f32 %v7213, %v7535
      %v7583 = vadd.f32 %v7214, %v7540
      %v7584 = vld [vmem:[#allocation2 + $0x2a] sm:$0xff]
      %v7585 = vld [vmem:[#allocation2 + $0x32] sm:$0xff]
      %v7586 = vld [vmem:[#allocation2 + $0x3a] sm:$0xff]
      %v7587 = vld [vmem:[#allocation2 + $0x42] sm:$0xff]
      %v7588 = vld [vmem:[#allocation2 + $0x4a] sm:$0xff]
      %v7589 = vld [vmem:[#allocation2 + $0x52] sm:$0xff]
      %v7590 = vld [vmem:[#allocation2 + $0x5a] sm:$0xff]
      %v7591 = vld [vmem:[#allocation2 + $0x62] sm:$0xff]
      %v7592 = vld [vmem:[#allocation2 + $0x6a] sm:$0xff]
      %v7593 = vld [vmem:[#allocation2 + $0x72] sm:$0xff]
      %v7594 = vld [vmem:[#allocation2 + $0x7a] sm:$0xff]
      %v7595 = vld [vmem:[#allocation2 + $0x82] sm:$0xff]
      %v7596 = vld [vmem:[#allocation2 + $0x8a] sm:$0xff]
      %v7597 = vld [vmem:[#allocation2 + $0x92] sm:$0xff]
      %v7598 = vld [vmem:[#allocation2 + $0x9a] sm:$0xff]
      %v7599 = vld [vmem:[#allocation2 + $0xa2] sm:$0xff]
      %v7600 = vld [vmem:[#allocation2 + $0xaa] sm:$0xff]
      %v7601 = vld [vmem:[#allocation2 + $0xb2] sm:$0xff]
      %v7602 = vld [vmem:[#allocation2 + $0xba] sm:$0xff]
      %v7603 = vld [vmem:[#allocation2 + $0xc2] sm:$0xff]
      %v7604 = vld [vmem:[#allocation2 + $0xca] sm:$0xff]
      %v7605 = vld [vmem:[#allocation2 + $0xd2] sm:$0xff]
      %v7606 = vld [vmem:[#allocation2 + $0xda] sm:$0xff]
      %v7607 = vld [vmem:[#allocation2 + $0xe2] sm:$0xff]
      %v7608 = vld [vmem:[#allocation2 + $0xea] sm:$0xff]
      %v7609 = vld [vmem:[#allocation2 + $0xf2] sm:$0xff]
      %v7610 = vld [vmem:[#allocation2 + $0xfa] sm:$0xff]
      %v7611 = vld [vmem:[#allocation2 + $0x102] sm:$0xff]
      %v7612 = vld [vmem:[#allocation2 + $0x10a] sm:$0xff]
      %v7613 = vld [vmem:[#allocation2 + $0x112] sm:$0xff]
      %v7614 = vld [vmem:[#allocation2 + $0x11a] sm:$0xff]
      %v7615 = vld [vmem:[#allocation2 + $0x122] sm:$0xff]
      %v7616 = vld [vmem:[#allocation2 + $0x12a] sm:$0xff]
      %v7617 = vld [vmem:[#allocation2 + $0x132] sm:$0xff]
      %v7618 = vld [vmem:[#allocation2 + $0x13a] sm:$0xff]
      %v7619 = vld [vmem:[#allocation2 + $0x142] sm:$0xff]
      %v7620 = vld [vmem:[#allocation2 + $0x14a] sm:$0xff]
      %v7621 = vld [vmem:[#allocation2 + $0x152] sm:$0xff]
      %v7622 = vld [vmem:[#allocation2 + $0x15a] sm:$0xff]
      %v7623 = vld [vmem:[#allocation2 + $0x162] sm:$0xff]
      %v7624 = vld [vmem:[#allocation2 + $0x16a] sm:$0xff]
      %s7625 = scalar_lea.vmem %s12, 896
      %v7626 = vld [vmem:[%s7625] sm:$0xff]
      %v7627 = vld [vmem:[%s7625 + $0x8] sm:$0xff]
      %v7628 = vld [vmem:[%s7625 + $0x10] sm:$0xff]
      %v7629 = vld [vmem:[%s7625 + $0x18] sm:$0xff]
      %v7630 = vld [vmem:[%s7625 + $0x20] sm:$0xff]
      %v7631 = vld [vmem:[%s7625 + $0x28] sm:$0xff]
      %v7632 = vld [vmem:[%s7625 + $0x30] sm:$0xff]
      %v7633 = vld [vmem:[%s7625 + $0x38] sm:$0xff]
      %v7634 = vld [vmem:[%s7625 + $0x40] sm:$0xff]
      %v7635 = vld [vmem:[%s7625 + $0x48] sm:$0xff]
      %v7636 = vld [vmem:[%s7625 + $0x50] sm:$0xff]
      %v7637 = vld [vmem:[%s7625 + $0x58] sm:$0xff]
      %v7638 = vld [vmem:[%s7625 + $0x60] sm:$0xff]
      %v7639 = vld [vmem:[%s7625 + $0x68] sm:$0xff]
      %v7640 = vld [vmem:[%s7625 + $0x70] sm:$0xff]
      %v7641 = vld [vmem:[%s7625 + $0x78] sm:$0xff]
      %7642 = vmatprep.subr.mxu0 0.0
      %7643 = vmatpush1.msra.mxu0 %v7626
      %7644 = vmatprep.subr.mxu0 0.0
      %7645 = vmatpush1.msra.mxu0 %v7627
      %7646 = vmatprep.subr.mxu0 0.0
      %7647 = vmatpush1.msra.mxu0 %v7628
      %7648 = vmatprep.subr.mxu0 0.0
      %7649 = vmatpush1.msra.mxu0 %v7629
      %7650 = vmatprep.subr.mxu0 0.0
      %7651 = vmatpush1.msra.mxu0 %v7630
      %7652 = vmatprep.subr.mxu0 0.0
      %7653 = vmatpush1.msra.mxu0 %v7631
      %7654 = vmatprep.subr.mxu0 0.0
      %7655 = vmatpush1.msra.mxu0 %v7632
      %7656 = vmatprep.subr.mxu0 0.0
      %7657 = vmatpush1.msra.mxu0 %v7633
      %7658 = vmatprep.subr.mxu0 0.0
      %7659 = vmatpush1.msra.mxu0 %v7634
      %7660 = vmatprep.subr.mxu0 0.0
      %7661 = vmatpush1.msra.mxu0 %v7635
      %7662 = vmatprep.subr.mxu0 0.0
      %7663 = vmatpush1.msra.mxu0 %v7636
      %7664 = vmatprep.subr.mxu0 0.0
      %7665 = vmatpush1.msra.mxu0 %v7637
      %7666 = vmatprep.subr.mxu0 0.0
      %7667 = vmatpush1.msra.mxu0 %v7638
      %7668 = vmatprep.subr.mxu0 0.0
      %7669 = vmatpush1.msra.mxu0 %v7639
      %7670 = vmatprep.subr.mxu0 0.0
      %7671 = vmatpush1.msra.mxu0 %v7640
      %7672 = vmatprep.subr.mxu0 0.0
      %7673 = vmatpush1.msra.mxu0 %v7641
      %7674 = vmatprep.subr.mxu0 0.0
      %7675 = vmatpush1.msra.mxu0 0.0
      %7676 = vmatprep.subr.mxu0 0.0
      %7677 = vmatpush1.msra.mxu0 0.0
      %7678 = vmatprep.subr.mxu0 0.0
      %7679 = vmatpush1.msra.mxu0 0.0
      %7680 = vmatprep.subr.mxu0 0.0
      %7681 = vmatpush1.msra.mxu0 0.0
      %7682 = vmatprep.subr.mxu0 0.0
      %7683 = vmatpush1.msra.mxu0 0.0
      %7684 = vmatprep.subr.mxu0 0.0
      %7685 = vmatpush1.msra.mxu0 0.0
      %7686 = vmatprep.subr.mxu0 0.0
      %7687 = vmatpush1.msra.mxu0 0.0
      %7688 = vmatprep.subr.mxu0 0.0
      %7689 = vmatpush1.msra.mxu0 0.0
      %7690 = vmatprep.subr.mxu0 0.0
      %7691 = vmatpush1.msra.mxu0 0.0
      %7692 = vmatprep.subr.mxu0 0.0
      %7693 = vmatpush1.msra.mxu0 0.0
      %7694 = vmatprep.subr.mxu0 0.0
      %7695 = vmatpush1.msra.mxu0 0.0
      %7696 = vmatprep.subr.mxu0 0.0
      %7697 = vmatpush1.msra.mxu0 0.0
      %7698 = vmatprep.subr.mxu0 0.0
      %7699 = vmatpush1.msra.mxu0 0.0
      %7700 = vmatprep.subr.mxu0 0.0
      %7701 = vmatpush1.msra.mxu0 0.0
      %7702 = vmatprep.subr.mxu0 0.0
      %7703 = vmatpush1.msra.mxu0 0.0
      %7704 = vmatprep.subr.mxu0 0.0
      %7705 = vmatpush1.msra.mxu0 0.0
      %7706 = vmatprep.mubr.f32.mxu0 0.0
      %7707 = vmatmul.mubr.f32.gmra.mrb[0].mxu0 %v7584
      %v7708 = vpop.f32.mrb[0].mxu0
      %v7709 = vadd.f32 0.0, %v7708
      %v7710 = vpop.f32.mrb[0].mxu0
      %7711 = vmatprep.mubr.f32.mxu0 0.0
      %7712 = vmatmul.mubr.f32.gmra.mrb[0].mxu0 %v7585
      %v7713 = vpop.f32.mrb[0].mxu0
      %v7714 = vadd.f32 0.0, %v7713
      %v7715 = vpop.f32.mrb[0].mxu0
      %7716 = vmatprep.mubr.f32.mxu0 0.0
      %7717 = vmatmul.mubr.f32.gmra.mrb[0].mxu0 %v7586
      %v7718 = vpop.f32.mrb[0].mxu0
      %v7719 = vadd.f32 0.0, %v7718
      %v7720 = vpop.f32.mrb[0].mxu0
      %7721 = vmatprep.mubr.f32.mxu0 0.0
      %7722 = vmatmul.mubr.f32.gmra.mrb[0].mxu0 %v7587
      %v7723 = vpop.f32.mrb[0].mxu0
      %v7724 = vadd.f32 0.0, %v7723
      %v7725 = vpop.f32.mrb[0].mxu0
      %7726 = vmatprep.mubr.f32.mxu0 0.0
      %7727 = vmatmul.mubr.f32.gmra.mrb[0].mxu0 %v7588
      %v7728 = vpop.f32.mrb[0].mxu0
      %v7729 = vadd.f32 0.0, %v7728
      %v7730 = vpop.f32.mrb[0].mxu0
      %7731 = vmatprep.mubr.f32.mxu0 0.0
      %7732 = vmatmul.mubr.f32.gmra.mrb[0].mxu0 %v7589
      %v7733 = vpop.f32.mrb[0].mxu0
      %v7734 = vadd.f32 0.0, %v7733
      %v7735 = vpop.f32.mrb[0].mxu0
      %7736 = vmatprep.mubr.f32.mxu0 0.0
      %7737 = vmatmul.mubr.f32.gmra.mrb[0].mxu0 %v7590
      %v7738 = vpop.f32.mrb[0].mxu0
      %v7739 = vadd.f32 0.0, %v7738
      %v7740 = vpop.f32.mrb[0].mxu0
      %7741 = vmatprep.mubr.f32.mxu0 0.0
      %7742 = vmatmul.mubr.f32.gmra.mrb[0].mxu0 %v7591
      %v7743 = vpop.f32.mrb[0].mxu0
      %v7744 = vadd.f32 0.0, %v7743
      %v7745 = vpop.f32.mrb[0].mxu0
      %7746 = vmatprep.mubr.f32.mxu0 0.0
      %7747 = vmatmul.mubr.f32.gmra.mrb[0].mxu0 %v7592
      %v7748 = vpop.f32.mrb[0].mxu0
      %v7749 = vadd.f32 0.0, %v7748
      %v7750 = vpop.f32.mrb[0].mxu0
      %7751 = vmatprep.mubr.f32.mxu0 0.0
      %7752 = vmatmul.mubr.f32.gmra.mrb[0].mxu0 %v7593
      %v7753 = vpop.f32.mrb[0].mxu0
      %v7754 = vadd.f32 0.0, %v7753
      %v7755 = vpop.f32.mrb[0].mxu0
      %7756 = vmatprep.mubr.f32.mxu0 0.0
      %7757 = vmatmul.mubr.f32.gmra.mrb[0].mxu0 %v7594
      %v7758 = vpop.f32.mrb[0].mxu0
      %v7759 = vadd.f32 0.0, %v7758
      %v7760 = vpop.f32.mrb[0].mxu0
      %7761 = vmatprep.mubr.f32.mxu0 0.0
      %7762 = vmatmul.mubr.f32.gmra.mrb[0].mxu0 %v7595
      %v7763 = vpop.f32.mrb[0].mxu0
      %v7764 = vadd.f32 0.0, %v7763
      %v7765 = vpop.f32.mrb[0].mxu0
      %7766 = vmatprep.mubr.f32.mxu0 0.0
      %7767 = vmatmul.mubr.f32.gmra.mrb[0].mxu0 %v7596
      %v7768 = vpop.f32.mrb[0].mxu0
      %v7769 = vadd.f32 0.0, %v7768
      %v7770 = vpop.f32.mrb[0].mxu0
      %7771 = vmatprep.mubr.f32.mxu0 0.0
      %7772 = vmatmul.mubr.f32.gmra.mrb[0].mxu0 %v7597
      %v7773 = vpop.f32.mrb[0].mxu0
      %v7774 = vadd.f32 0.0, %v7773
      %v7775 = vpop.f32.mrb[0].mxu0
      %7776 = vmatprep.mubr.f32.mxu0 0.0
      %7777 = vmatmul.mubr.f32.gmra.mrb[0].mxu0 %v7598
      %v7778 = vpop.f32.mrb[0].mxu0
      %v7779 = vadd.f32 0.0, %v7778
      %v7780 = vpop.f32.mrb[0].mxu0
      %7781 = vmatprep.mubr.f32.mxu0 0.0
      %7782 = vmatmul.mubr.f32.gmra.mrb[0].mxu0 %v7599
      %v7783 = vpop.f32.mrb[0].mxu0
      %v7784 = vadd.f32 0.0, %v7783
      %v7785 = vpop.f32.mrb[0].mxu0
      %7786 = vmatprep.mubr.f32.mxu0 0.0
      %7787 = vmatmul.mubr.f32.gmra.mrb[0].mxu0 %v7600
      %v7788 = vpop.f32.mrb[0].mxu0
      %v7789 = vadd.f32 0.0, %v7788
      %v7790 = vpop.f32.mrb[0].mxu0
      %7791 = vmatprep.mubr.f32.mxu0 0.0
      %7792 = vmatmul.mubr.f32.gmra.mrb[0].mxu0 %v7601
      %v7793 = vpop.f32.mrb[0].mxu0
      %v7794 = vadd.f32 0.0, %v7793
      %v7795 = vpop.f32.mrb[0].mxu0
      %7796 = vmatprep.mubr.f32.mxu0 0.0
      %7797 = vmatmul.mubr.f32.gmra.mrb[0].mxu0 %v7602
      %v7798 = vpop.f32.mrb[0].mxu0
      %v7799 = vadd.f32 0.0, %v7798
      %v7800 = vpop.f32.mrb[0].mxu0
      %7801 = vmatprep.mubr.f32.mxu0 0.0
      %7802 = vmatmul.mubr.f32.gmra.mrb[0].mxu0 %v7603
      %v7803 = vpop.f32.mrb[0].mxu0
      %v7804 = vadd.f32 0.0, %v7803
      %v7805 = vpop.f32.mrb[0].mxu0
      %7806 = vmatprep.mubr.f32.mxu0 0.0
      %7807 = vmatmul.mubr.f32.gmra.mrb[0].mxu0 %v7604
      %v7808 = vpop.f32.mrb[0].mxu0
      %v7809 = vadd.f32 0.0, %v7808
      %v7810 = vpop.f32.mrb[0].mxu0
      %7811 = vmatprep.mubr.f32.mxu0 0.0
      %7812 = vmatmul.mubr.f32.gmra.mrb[0].mxu0 %v7605
      %v7813 = vpop.f32.mrb[0].mxu0
      %v7814 = vadd.f32 0.0, %v7813
      %v7815 = vpop.f32.mrb[0].mxu0
      %7816 = vmatprep.mubr.f32.mxu0 0.0
      %7817 = vmatmul.mubr.f32.gmra.mrb[0].mxu0 %v7606
      %v7818 = vpop.f32.mrb[0].mxu0
      %v7819 = vadd.f32 0.0, %v7818
      %v7820 = vpop.f32.mrb[0].mxu0
      %7821 = vmatprep.mubr.f32.mxu0 0.0
      %7822 = vmatmul.mubr.f32.gmra.mrb[0].mxu0 %v7607
      %v7823 = vpop.f32.mrb[0].mxu0
      %v7824 = vadd.f32 0.0, %v7823
      %v7825 = vpop.f32.mrb[0].mxu0
      %7826 = vmatprep.mubr.f32.mxu0 0.0
      %7827 = vmatmul.mubr.f32.gmra.mrb[0].mxu0 %v7608
      %v7828 = vpop.f32.mrb[0].mxu0
      %v7829 = vadd.f32 0.0, %v7828
      %v7830 = vpop.f32.mrb[0].mxu0
      %7831 = vmatprep.mubr.f32.mxu0 0.0
      %7832 = vmatmul.mubr.f32.gmra.mrb[0].mxu0 %v7609
      %v7833 = vpop.f32.mrb[0].mxu0
      %v7834 = vadd.f32 0.0, %v7833
      %v7835 = vpop.f32.mrb[0].mxu0
      %7836 = vmatprep.mubr.f32.mxu0 0.0
      %7837 = vmatmul.mubr.f32.gmra.mrb[0].mxu0 %v7610
      %v7838 = vpop.f32.mrb[0].mxu0
      %v7839 = vadd.f32 0.0, %v7838
      %v7840 = vpop.f32.mrb[0].mxu0
      %7841 = vmatprep.mubr.f32.mxu0 0.0
      %7842 = vmatmul.mubr.f32.gmra.mrb[0].mxu0 %v7611
      %v7843 = vpop.f32.mrb[0].mxu0
      %v7844 = vadd.f32 0.0, %v7843
      %v7845 = vpop.f32.mrb[0].mxu0
      %7846 = vmatprep.mubr.f32.mxu0 0.0
      %7847 = vmatmul.mubr.f32.gmra.mrb[0].mxu0 %v7612
      %v7848 = vpop.f32.mrb[0].mxu0
      %v7849 = vadd.f32 0.0, %v7848
      %v7850 = vpop.f32.mrb[0].mxu0
      %7851 = vmatprep.mubr.f32.mxu0 0.0
      %7852 = vmatmul.mubr.f32.gmra.mrb[0].mxu0 %v7613
      %v7853 = vpop.f32.mrb[0].mxu0
      %v7854 = vadd.f32 0.0, %v7853
      %v7855 = vpop.f32.mrb[0].mxu0
      %7856 = vmatprep.mubr.f32.mxu0 0.0
      %7857 = vmatmul.mubr.f32.gmra.mrb[0].mxu0 %v7614
      %v7858 = vpop.f32.mrb[0].mxu0
      %v7859 = vadd.f32 0.0, %v7858
      %v7860 = vpop.f32.mrb[0].mxu0
      %7861 = vmatprep.mubr.f32.mxu0 0.0
      %7862 = vmatmul.mubr.f32.gmra.mrb[0].mxu0 %v7615
      %v7863 = vpop.f32.mrb[0].mxu0
      %v7864 = vadd.f32 0.0, %v7863
      %v7865 = vpop.f32.mrb[0].mxu0
      %7866 = vmatprep.mubr.f32.mxu0 0.0
      %7867 = vmatmul.mubr.f32.gmra.mrb[0].mxu0 %v7616
      %v7868 = vpop.f32.mrb[0].mxu0
      %v7869 = vadd.f32 0.0, %v7868
      %v7870 = vpop.f32.mrb[0].mxu0
      %7871 = vmatprep.mubr.f32.mxu0 0.0
      %7872 = vmatmul.mubr.f32.gmra.mrb[0].mxu0 %v7617
      %v7873 = vpop.f32.mrb[0].mxu0
      %v7874 = vadd.f32 0.0, %v7873
      %v7875 = vpop.f32.mrb[0].mxu0
      %7876 = vmatprep.mubr.f32.mxu0 0.0
      %7877 = vmatmul.mubr.f32.gmra.mrb[0].mxu0 %v7618
      %v7878 = vpop.f32.mrb[0].mxu0
      %v7879 = vadd.f32 0.0, %v7878
      %v7880 = vpop.f32.mrb[0].mxu0
      %7881 = vmatprep.mubr.f32.mxu0 0.0
      %7882 = vmatmul.mubr.f32.gmra.mrb[0].mxu0 %v7619
      %v7883 = vpop.f32.mrb[0].mxu0
      %v7884 = vadd.f32 0.0, %v7883
      %v7885 = vpop.f32.mrb[0].mxu0
      %7886 = vmatprep.mubr.f32.mxu0 0.0
      %7887 = vmatmul.mubr.f32.gmra.mrb[0].mxu0 %v7620
      %v7888 = vpop.f32.mrb[0].mxu0
      %v7889 = vadd.f32 0.0, %v7888
      %v7890 = vpop.f32.mrb[0].mxu0
      %7891 = vmatprep.mubr.f32.mxu0 0.0
      %7892 = vmatmul.mubr.f32.gmra.mrb[0].mxu0 %v7621
      %v7893 = vpop.f32.mrb[0].mxu0
      %v7894 = vadd.f32 0.0, %v7893
      %v7895 = vpop.f32.mrb[0].mxu0
      %7896 = vmatprep.mubr.f32.mxu0 0.0
      %7897 = vmatmul.mubr.f32.gmra.mrb[0].mxu0 %v7622
      %v7898 = vpop.f32.mrb[0].mxu0
      %v7899 = vadd.f32 0.0, %v7898
      %v7900 = vpop.f32.mrb[0].mxu0
      %7901 = vmatprep.mubr.f32.mxu0 0.0
      %7902 = vmatmul.mubr.f32.gmra.mrb[0].mxu0 %v7623
      %v7903 = vpop.f32.mrb[0].mxu0
      %v7904 = vadd.f32 0.0, %v7903
      %v7905 = vpop.f32.mrb[0].mxu0
      %7906 = vmatprep.mubr.f32.mxu0 0.0
      %7907 = vmatmul.mubr.f32.gmra.mrb[0].mxu0 %v7624
      %v7908 = vpop.f32.mrb[0].mxu0
      %v7909 = vadd.f32 0.0, %v7908
      %v7910 = vpop.f32.mrb[0].mxu0
      %7911 = vdwg.mxu0
      %v7912 = vadd.f32 %v7543, %v7709
      %v7913 = vadd.f32 %v7544, %v7714
      %v7914 = vadd.f32 %v7545, %v7719
      %v7915 = vadd.f32 %v7546, %v7724
      %v7916 = vadd.f32 %v7547, %v7729
      %v7917 = vadd.f32 %v7548, %v7734
      %v7918 = vadd.f32 %v7549, %v7739
      %v7919 = vadd.f32 %v7550, %v7744
      %v7920 = vadd.f32 %v7551, %v7749
      %v7921 = vadd.f32 %v7552, %v7754
      %v7922 = vadd.f32 %v7553, %v7759
      %v7923 = vadd.f32 %v7554, %v7764
      %v7924 = vadd.f32 %v7555, %v7769
      %v7925 = vadd.f32 %v7556, %v7774
      %v7926 = vadd.f32 %v7557, %v7779
      %v7927 = vadd.f32 %v7558, %v7784
      %v7928 = vadd.f32 %v7559, %v7789
      %v7929 = vadd.f32 %v7560, %v7794
      %v7930 = vadd.f32 %v7561, %v7799
      %v7931 = vadd.f32 %v7562, %v7804
      %v7932 = vadd.f32 %v7563, %v7809
      %v7933 = vadd.f32 %v7564, %v7814
      %v7934 = vadd.f32 %v7565, %v7819
      %v7935 = vadd.f32 %v7566, %v7824
      %v7936 = vadd.f32 %v7567, %v7829
      %v7937 = vadd.f32 %v7568, %v7834
      %v7938 = vadd.f32 %v7569, %v7839
      %v7939 = vadd.f32 %v7570, %v7844
      %v7940 = vadd.f32 %v7571, %v7849
      %v7941 = vadd.f32 %v7572, %v7854
      %v7942 = vadd.f32 %v7573, %v7859
      %v7943 = vadd.f32 %v7574, %v7864
      %v7944 = vadd.f32 %v7575, %v7869
      %v7945 = vadd.f32 %v7576, %v7874
      %v7946 = vadd.f32 %v7577, %v7879
      %v7947 = vadd.f32 %v7578, %v7884
      %v7948 = vadd.f32 %v7579, %v7889
      %v7949 = vadd.f32 %v7580, %v7894
      %v7950 = vadd.f32 %v7581, %v7899
      %v7951 = vadd.f32 %v7582, %v7904
      %v7952 = vadd.f32 %v7583, %v7909
      %v7953 = vld [vmem:[#allocation2 + $0x2b] sm:$0xff]
      %v7954 = vld [vmem:[#allocation2 + $0x33] sm:$0xff]
      %v7955 = vld [vmem:[#allocation2 + $0x3b] sm:$0xff]
      %v7956 = vld [vmem:[#allocation2 + $0x43] sm:$0xff]
      %v7957 = vld [vmem:[#allocation2 + $0x4b] sm:$0xff]
      %v7958 = vld [vmem:[#allocation2 + $0x53] sm:$0xff]
      %v7959 = vld [vmem:[#allocation2 + $0x5b] sm:$0xff]
      %v7960 = vld [vmem:[#allocation2 + $0x63] sm:$0xff]
      %v7961 = vld [vmem:[#allocation2 + $0x6b] sm:$0xff]
      %v7962 = vld [vmem:[#allocation2 + $0x73] sm:$0xff]
      %v7963 = vld [vmem:[#allocation2 + $0x7b] sm:$0xff]
      %v7964 = vld [vmem:[#allocation2 + $0x83] sm:$0xff]
      %v7965 = vld [vmem:[#allocation2 + $0x8b] sm:$0xff]
      %v7966 = vld [vmem:[#allocation2 + $0x93] sm:$0xff]
      %v7967 = vld [vmem:[#allocation2 + $0x9b] sm:$0xff]
      %v7968 = vld [vmem:[#allocation2 + $0xa3] sm:$0xff]
      %v7969 = vld [vmem:[#allocation2 + $0xab] sm:$0xff]
      %v7970 = vld [vmem:[#allocation2 + $0xb3] sm:$0xff]
      %v7971 = vld [vmem:[#allocation2 + $0xbb] sm:$0xff]
      %v7972 = vld [vmem:[#allocation2 + $0xc3] sm:$0xff]
      %v7973 = vld [vmem:[#allocation2 + $0xcb] sm:$0xff]
      %v7974 = vld [vmem:[#allocation2 + $0xd3] sm:$0xff]
      %v7975 = vld [vmem:[#allocation2 + $0xdb] sm:$0xff]
      %v7976 = vld [vmem:[#allocation2 + $0xe3] sm:$0xff]
      %v7977 = vld [vmem:[#allocation2 + $0xeb] sm:$0xff]
      %v7978 = vld [vmem:[#allocation2 + $0xf3] sm:$0xff]
      %v7979 = vld [vmem:[#allocation2 + $0xfb] sm:$0xff]
      %v7980 = vld [vmem:[#allocation2 + $0x103] sm:$0xff]
      %v7981 = vld [vmem:[#allocation2 + $0x10b] sm:$0xff]
      %v7982 = vld [vmem:[#allocation2 + $0x113] sm:$0xff]
      %v7983 = vld [vmem:[#allocation2 + $0x11b] sm:$0xff]
      %v7984 = vld [vmem:[#allocation2 + $0x123] sm:$0xff]
      %v7985 = vld [vmem:[#allocation2 + $0x12b] sm:$0xff]
      %v7986 = vld [vmem:[#allocation2 + $0x133] sm:$0xff]
      %v7987 = vld [vmem:[#allocation2 + $0x13b] sm:$0xff]
      %v7988 = vld [vmem:[#allocation2 + $0x143] sm:$0xff]
      %v7989 = vld [vmem:[#allocation2 + $0x14b] sm:$0xff]
      %v7990 = vld [vmem:[#allocation2 + $0x153] sm:$0xff]
      %v7991 = vld [vmem:[#allocation2 + $0x15b] sm:$0xff]
      %v7992 = vld [vmem:[#allocation2 + $0x163] sm:$0xff]
      %v7993 = vld [vmem:[#allocation2 + $0x16b] sm:$0xff]
      %s7994 = scalar_lea.vmem %s12, 1024
      %v7995 = vld [vmem:[%s7994] sm:$0xff]
      %v7996 = vld [vmem:[%s7994 + $0x8] sm:$0xff]
      %v7997 = vld [vmem:[%s7994 + $0x10] sm:$0xff]
      %v7998 = vld [vmem:[%s7994 + $0x18] sm:$0xff]
      %v7999 = vld [vmem:[%s7994 + $0x20] sm:$0xff]
      %v8000 = vld [vmem:[%s7994 + $0x28] sm:$0xff]
      %v8001 = vld [vmem:[%s7994 + $0x30] sm:$0xff]
      %v8002 = vld [vmem:[%s7994 + $0x38] sm:$0xff]
      %v8003 = vld [vmem:[%s7994 + $0x40] sm:$0xff]
      %v8004 = vld [vmem:[%s7994 + $0x48] sm:$0xff]
      %v8005 = vld [vmem:[%s7994 + $0x50] sm:$0xff]
      %v8006 = vld [vmem:[%s7994 + $0x58] sm:$0xff]
      %v8007 = vld [vmem:[%s7994 + $0x60] sm:$0xff]
      %v8008 = vld [vmem:[%s7994 + $0x68] sm:$0xff]
      %v8009 = vld [vmem:[%s7994 + $0x70] sm:$0xff]
      %v8010 = vld [vmem:[%s7994 + $0x78] sm:$0xff]
      %8011 = vmatprep.subr.mxu0 0.0
      %8012 = vmatpush1.msra.mxu0 %v7995
      %8013 = vmatprep.subr.mxu0 0.0
      %8014 = vmatpush1.msra.mxu0 %v7996
      %8015 = vmatprep.subr.mxu0 0.0
      %8016 = vmatpush1.msra.mxu0 %v7997
      %8017 = vmatprep.subr.mxu0 0.0
      %8018 = vmatpush1.msra.mxu0 %v7998
      %8019 = vmatprep.subr.mxu0 0.0
      %8020 = vmatpush1.msra.mxu0 %v7999
      %8021 = vmatprep.subr.mxu0 0.0
      %8022 = vmatpush1.msra.mxu0 %v8000
      %8023 = vmatprep.subr.mxu0 0.0
      %8024 = vmatpush1.msra.mxu0 %v8001
      %8025 = vmatprep.subr.mxu0 0.0
      %8026 = vmatpush1.msra.mxu0 %v8002
      %8027 = vmatprep.subr.mxu0 0.0
      %8028 = vmatpush1.msra.mxu0 %v8003
      %8029 = vmatprep.subr.mxu0 0.0
      %8030 = vmatpush1.msra.mxu0 %v8004
      %8031 = vmatprep.subr.mxu0 0.0
      %8032 = vmatpush1.msra.mxu0 %v8005
      %8033 = vmatprep.subr.mxu0 0.0
      %8034 = vmatpush1.msra.mxu0 %v8006
      %8035 = vmatprep.subr.mxu0 0.0
      %8036 = vmatpush1.msra.mxu0 %v8007
      %8037 = vmatprep.subr.mxu0 0.0
      %8038 = vmatpush1.msra.mxu0 %v8008
      %8039 = vmatprep.subr.mxu0 0.0
      %8040 = vmatpush1.msra.mxu0 %v8009
      %8041 = vmatprep.subr.mxu0 0.0
      %8042 = vmatpush1.msra.mxu0 %v8010
      %8043 = vmatprep.subr.mxu0 0.0
      %8044 = vmatpush1.msra.mxu0 0.0
      %8045 = vmatprep.subr.mxu0 0.0
      %8046 = vmatpush1.msra.mxu0 0.0
      %8047 = vmatprep.subr.mxu0 0.0
      %8048 = vmatpush1.msra.mxu0 0.0
      %8049 = vmatprep.subr.mxu0 0.0
      %8050 = vmatpush1.msra.mxu0 0.0
      %8051 = vmatprep.subr.mxu0 0.0
      %8052 = vmatpush1.msra.mxu0 0.0
      %8053 = vmatprep.subr.mxu0 0.0
      %8054 = vmatpush1.msra.mxu0 0.0
      %8055 = vmatprep.subr.mxu0 0.0
      %8056 = vmatpush1.msra.mxu0 0.0
      %8057 = vmatprep.subr.mxu0 0.0
      %8058 = vmatpush1.msra.mxu0 0.0
      %8059 = vmatprep.subr.mxu0 0.0
      %8060 = vmatpush1.msra.mxu0 0.0
      %8061 = vmatprep.subr.mxu0 0.0
      %8062 = vmatpush1.msra.mxu0 0.0
      %8063 = vmatprep.subr.mxu0 0.0
      %8064 = vmatpush1.msra.mxu0 0.0
      %8065 = vmatprep.subr.mxu0 0.0
      %8066 = vmatpush1.msra.mxu0 0.0
      %8067 = vmatprep.subr.mxu0 0.0
      %8068 = vmatpush1.msra.mxu0 0.0
      %8069 = vmatprep.subr.mxu0 0.0
      %8070 = vmatpush1.msra.mxu0 0.0
      %8071 = vmatprep.subr.mxu0 0.0
      %8072 = vmatpush1.msra.mxu0 0.0
      %8073 = vmatprep.subr.mxu0 0.0
      %8074 = vmatpush1.msra.mxu0 0.0
      %8075 = vmatprep.mubr.f32.mxu0 0.0
      %8076 = vmatmul.mubr.f32.gmra.mrb[0].mxu0 %v7953
      %v8077 = vpop.f32.mrb[0].mxu0
      %v8078 = vadd.f32 0.0, %v8077
      %v8079 = vpop.f32.mrb[0].mxu0
      %8080 = vmatprep.mubr.f32.mxu0 0.0
      %8081 = vmatmul.mubr.f32.gmra.mrb[0].mxu0 %v7954
      %v8082 = vpop.f32.mrb[0].mxu0
      %v8083 = vadd.f32 0.0, %v8082
      %v8084 = vpop.f32.mrb[0].mxu0
      %8085 = vmatprep.mubr.f32.mxu0 0.0
      %8086 = vmatmul.mubr.f32.gmra.mrb[0].mxu0 %v7955
      %v8087 = vpop.f32.mrb[0].mxu0
      %v8088 = vadd.f32 0.0, %v8087
      %v8089 = vpop.f32.mrb[0].mxu0
      %8090 = vmatprep.mubr.f32.mxu0 0.0
      %8091 = vmatmul.mubr.f32.gmra.mrb[0].mxu0 %v7956
      %v8092 = vpop.f32.mrb[0].mxu0
      %v8093 = vadd.f32 0.0, %v8092
      %v8094 = vpop.f32.mrb[0].mxu0
      %8095 = vmatprep.mubr.f32.mxu0 0.0
      %8096 = vmatmul.mubr.f32.gmra.mrb[0].mxu0 %v7957
      %v8097 = vpop.f32.mrb[0].mxu0
      %v8098 = vadd.f32 0.0, %v8097
      %v8099 = vpop.f32.mrb[0].mxu0
      %8100 = vmatprep.mubr.f32.mxu0 0.0
      %8101 = vmatmul.mubr.f32.gmra.mrb[0].mxu0 %v7958
      %v8102 = vpop.f32.mrb[0].mxu0
      %v8103 = vadd.f32 0.0, %v8102
      %v8104 = vpop.f32.mrb[0].mxu0
      %8105 = vmatprep.mubr.f32.mxu0 0.0
      %8106 = vmatmul.mubr.f32.gmra.mrb[0].mxu0 %v7959
      %v8107 = vpop.f32.mrb[0].mxu0
      %v8108 = vadd.f32 0.0, %v8107
      %v8109 = vpop.f32.mrb[0].mxu0
      %8110 = vmatprep.mubr.f32.mxu0 0.0
      %8111 = vmatmul.mubr.f32.gmra.mrb[0].mxu0 %v7960
      %v8112 = vpop.f32.mrb[0].mxu0
      %v8113 = vadd.f32 0.0, %v8112
      %v8114 = vpop.f32.mrb[0].mxu0
      %8115 = vmatprep.mubr.f32.mxu0 0.0
      %8116 = vmatmul.mubr.f32.gmra.mrb[0].mxu0 %v7961
      %v8117 = vpop.f32.mrb[0].mxu0
      %v8118 = vadd.f32 0.0, %v8117
      %v8119 = vpop.f32.mrb[0].mxu0
      %8120 = vmatprep.mubr.f32.mxu0 0.0
      %8121 = vmatmul.mubr.f32.gmra.mrb[0].mxu0 %v7962
      %v8122 = vpop.f32.mrb[0].mxu0
      %v8123 = vadd.f32 0.0, %v8122
      %v8124 = vpop.f32.mrb[0].mxu0
      %8125 = vmatprep.mubr.f32.mxu0 0.0
      %8126 = vmatmul.mubr.f32.gmra.mrb[0].mxu0 %v7963
      %v8127 = vpop.f32.mrb[0].mxu0
      %v8128 = vadd.f32 0.0, %v8127
      %v8129 = vpop.f32.mrb[0].mxu0
      %8130 = vmatprep.mubr.f32.mxu0 0.0
      %8131 = vmatmul.mubr.f32.gmra.mrb[0].mxu0 %v7964
      %v8132 = vpop.f32.mrb[0].mxu0
      %v8133 = vadd.f32 0.0, %v8132
      %v8134 = vpop.f32.mrb[0].mxu0
      %8135 = vmatprep.mubr.f32.mxu0 0.0
      %8136 = vmatmul.mubr.f32.gmra.mrb[0].mxu0 %v7965
      %v8137 = vpop.f32.mrb[0].mxu0
      %v8138 = vadd.f32 0.0, %v8137
      %v8139 = vpop.f32.mrb[0].mxu0
      %8140 = vmatprep.mubr.f32.mxu0 0.0
      %8141 = vmatmul.mubr.f32.gmra.mrb[0].mxu0 %v7966
      %v8142 = vpop.f32.mrb[0].mxu0
      %v8143 = vadd.f32 0.0, %v8142
      %v8144 = vpop.f32.mrb[0].mxu0
      %8145 = vmatprep.mubr.f32.mxu0 0.0
      %8146 = vmatmul.mubr.f32.gmra.mrb[0].mxu0 %v7967
      %v8147 = vpop.f32.mrb[0].mxu0
      %v8148 = vadd.f32 0.0, %v8147
      %v8149 = vpop.f32.mrb[0].mxu0
      %8150 = vmatprep.mubr.f32.mxu0 0.0
      %8151 = vmatmul.mubr.f32.gmra.mrb[0].mxu0 %v7968
      %v8152 = vpop.f32.mrb[0].mxu0
      %v8153 = vadd.f32 0.0, %v8152
      %v8154 = vpop.f32.mrb[0].mxu0
      %8155 = vmatprep.mubr.f32.mxu0 0.0
      %8156 = vmatmul.mubr.f32.gmra.mrb[0].mxu0 %v7969
      %v8157 = vpop.f32.mrb[0].mxu0
      %v8158 = vadd.f32 0.0, %v8157
      %v8159 = vpop.f32.mrb[0].mxu0
      %8160 = vmatprep.mubr.f32.mxu0 0.0
      %8161 = vmatmul.mubr.f32.gmra.mrb[0].mxu0 %v7970
      %v8162 = vpop.f32.mrb[0].mxu0
      %v8163 = vadd.f32 0.0, %v8162
      %v8164 = vpop.f32.mrb[0].mxu0
      %8165 = vmatprep.mubr.f32.mxu0 0.0
      %8166 = vmatmul.mubr.f32.gmra.mrb[0].mxu0 %v7971
      %v8167 = vpop.f32.mrb[0].mxu0
      %v8168 = vadd.f32 0.0, %v8167
      %v8169 = vpop.f32.mrb[0].mxu0
      %8170 = vmatprep.mubr.f32.mxu0 0.0
      %8171 = vmatmul.mubr.f32.gmra.mrb[0].mxu0 %v7972
      %v8172 = vpop.f32.mrb[0].mxu0
      %v8173 = vadd.f32 0.0, %v8172
      %v8174 = vpop.f32.mrb[0].mxu0
      %8175 = vmatprep.mubr.f32.mxu0 0.0
      %8176 = vmatmul.mubr.f32.gmra.mrb[0].mxu0 %v7973
      %v8177 = vpop.f32.mrb[0].mxu0
      %v8178 = vadd.f32 0.0, %v8177
      %v8179 = vpop.f32.mrb[0].mxu0
      %8180 = vmatprep.mubr.f32.mxu0 0.0
      %8181 = vmatmul.mubr.f32.gmra.mrb[0].mxu0 %v7974
      %v8182 = vpop.f32.mrb[0].mxu0
      %v8183 = vadd.f32 0.0, %v8182
      %v8184 = vpop.f32.mrb[0].mxu0
      %8185 = vmatprep.mubr.f32.mxu0 0.0
      %8186 = vmatmul.mubr.f32.gmra.mrb[0].mxu0 %v7975
      %v8187 = vpop.f32.mrb[0].mxu0
      %v8188 = vadd.f32 0.0, %v8187
      %v8189 = vpop.f32.mrb[0].mxu0
      %8190 = vmatprep.mubr.f32.mxu0 0.0
      %8191 = vmatmul.mubr.f32.gmra.mrb[0].mxu0 %v7976
      %v8192 = vpop.f32.mrb[0].mxu0
      %v8193 = vadd.f32 0.0, %v8192
      %v8194 = vpop.f32.mrb[0].mxu0
      %8195 = vmatprep.mubr.f32.mxu0 0.0
      %8196 = vmatmul.mubr.f32.gmra.mrb[0].mxu0 %v7977
      %v8197 = vpop.f32.mrb[0].mxu0
      %v8198 = vadd.f32 0.0, %v8197
      %v8199 = vpop.f32.mrb[0].mxu0
      %8200 = vmatprep.mubr.f32.mxu0 0.0
      %8201 = vmatmul.mubr.f32.gmra.mrb[0].mxu0 %v7978
      %v8202 = vpop.f32.mrb[0].mxu0
      %v8203 = vadd.f32 0.0, %v8202
      %v8204 = vpop.f32.mrb[0].mxu0
      %8205 = vmatprep.mubr.f32.mxu0 0.0
      %8206 = vmatmul.mubr.f32.gmra.mrb[0].mxu0 %v7979
      %v8207 = vpop.f32.mrb[0].mxu0
      %v8208 = vadd.f32 0.0, %v8207
      %v8209 = vpop.f32.mrb[0].mxu0
      %8210 = vmatprep.mubr.f32.mxu0 0.0
      %8211 = vmatmul.mubr.f32.gmra.mrb[0].mxu0 %v7980
      %v8212 = vpop.f32.mrb[0].mxu0
      %v8213 = vadd.f32 0.0, %v8212
      %v8214 = vpop.f32.mrb[0].mxu0
      %8215 = vmatprep.mubr.f32.mxu0 0.0
      %8216 = vmatmul.mubr.f32.gmra.mrb[0].mxu0 %v7981
      %v8217 = vpop.f32.mrb[0].mxu0
      %v8218 = vadd.f32 0.0, %v8217
      %v8219 = vpop.f32.mrb[0].mxu0
      %8220 = vmatprep.mubr.f32.mxu0 0.0
      %8221 = vmatmul.mubr.f32.gmra.mrb[0].mxu0 %v7982
      %v8222 = vpop.f32.mrb[0].mxu0
      %v8223 = vadd.f32 0.0, %v8222
      %v8224 = vpop.f32.mrb[0].mxu0
      %8225 = vmatprep.mubr.f32.mxu0 0.0
      %8226 = vmatmul.mubr.f32.gmra.mrb[0].mxu0 %v7983
      %v8227 = vpop.f32.mrb[0].mxu0
      %v8228 = vadd.f32 0.0, %v8227
      %v8229 = vpop.f32.mrb[0].mxu0
      %8230 = vmatprep.mubr.f32.mxu0 0.0
      %8231 = vmatmul.mubr.f32.gmra.mrb[0].mxu0 %v7984
      %v8232 = vpop.f32.mrb[0].mxu0
      %v8233 = vadd.f32 0.0, %v8232
      %v8234 = vpop.f32.mrb[0].mxu0
      %8235 = vmatprep.mubr.f32.mxu0 0.0
      %8236 = vmatmul.mubr.f32.gmra.mrb[0].mxu0 %v7985
      %v8237 = vpop.f32.mrb[0].mxu0
      %v8238 = vadd.f32 0.0, %v8237
      %v8239 = vpop.f32.mrb[0].mxu0
      %8240 = vmatprep.mubr.f32.mxu0 0.0
      %8241 = vmatmul.mubr.f32.gmra.mrb[0].mxu0 %v7986
      %v8242 = vpop.f32.mrb[0].mxu0
      %v8243 = vadd.f32 0.0, %v8242
      %v8244 = vpop.f32.mrb[0].mxu0
      %8245 = vmatprep.mubr.f32.mxu0 0.0
      %8246 = vmatmul.mubr.f32.gmra.mrb[0].mxu0 %v7987
      %v8247 = vpop.f32.mrb[0].mxu0
      %v8248 = vadd.f32 0.0, %v8247
      %v8249 = vpop.f32.mrb[0].mxu0
      %8250 = vmatprep.mubr.f32.mxu0 0.0
      %8251 = vmatmul.mubr.f32.gmra.mrb[0].mxu0 %v7988
      %v8252 = vpop.f32.mrb[0].mxu0
      %v8253 = vadd.f32 0.0, %v8252
      %v8254 = vpop.f32.mrb[0].mxu0
      %8255 = vmatprep.mubr.f32.mxu0 0.0
      %8256 = vmatmul.mubr.f32.gmra.mrb[0].mxu0 %v7989
      %v8257 = vpop.f32.mrb[0].mxu0
      %v8258 = vadd.f32 0.0, %v8257
      %v8259 = vpop.f32.mrb[0].mxu0
      %8260 = vmatprep.mubr.f32.mxu0 0.0
      %8261 = vmatmul.mubr.f32.gmra.mrb[0].mxu0 %v7990
      %v8262 = vpop.f32.mrb[0].mxu0
      %v8263 = vadd.f32 0.0, %v8262
      %v8264 = vpop.f32.mrb[0].mxu0
      %8265 = vmatprep.mubr.f32.mxu0 0.0
      %8266 = vmatmul.mubr.f32.gmra.mrb[0].mxu0 %v7991
      %v8267 = vpop.f32.mrb[0].mxu0
      %v8268 = vadd.f32 0.0, %v8267
      %v8269 = vpop.f32.mrb[0].mxu0
      %8270 = vmatprep.mubr.f32.mxu0 0.0
      %8271 = vmatmul.mubr.f32.gmra.mrb[0].mxu0 %v7992
      %v8272 = vpop.f32.mrb[0].mxu0
      %v8273 = vadd.f32 0.0, %v8272
      %v8274 = vpop.f32.mrb[0].mxu0
      %8275 = vmatprep.mubr.f32.mxu0 0.0
      %8276 = vmatmul.mubr.f32.gmra.mrb[0].mxu0 %v7993
      %v8277 = vpop.f32.mrb[0].mxu0
      %v8278 = vadd.f32 0.0, %v8277
      %v8279 = vpop.f32.mrb[0].mxu0
      %8280 = vdwg.mxu0
      %v8281 = vadd.f32 %v7912, %v8078
      %v8282 = vadd.f32 %v7913, %v8083
      %v8283 = vadd.f32 %v7914, %v8088
      %v8284 = vadd.f32 %v7915, %v8093
      %v8285 = vadd.f32 %v7916, %v8098
      %v8286 = vadd.f32 %v7917, %v8103
      %v8287 = vadd.f32 %v7918, %v8108
      %v8288 = vadd.f32 %v7919, %v8113
      %v8289 = vadd.f32 %v7920, %v8118
      %v8290 = vadd.f32 %v7921, %v8123
      %v8291 = vadd.f32 %v7922, %v8128
      %v8292 = vadd.f32 %v7923, %v8133
      %v8293 = vadd.f32 %v7924, %v8138
      %v8294 = vadd.f32 %v7925, %v8143
      %v8295 = vadd.f32 %v7926, %v8148
      %v8296 = vadd.f32 %v7927, %v8153
      %v8297 = vadd.f32 %v7928, %v8158
      %v8298 = vadd.f32 %v7929, %v8163
      %v8299 = vadd.f32 %v7930, %v8168
      %v8300 = vadd.f32 %v7931, %v8173
      %v8301 = vadd.f32 %v7932, %v8178
      %v8302 = vadd.f32 %v7933, %v8183
      %v8303 = vadd.f32 %v7934, %v8188
      %v8304 = vadd.f32 %v7935, %v8193
      %v8305 = vadd.f32 %v7936, %v8198
      %v8306 = vadd.f32 %v7937, %v8203
      %v8307 = vadd.f32 %v7938, %v8208
      %v8308 = vadd.f32 %v7939, %v8213
      %v8309 = vadd.f32 %v7940, %v8218
      %v8310 = vadd.f32 %v7941, %v8223
      %v8311 = vadd.f32 %v7942, %v8228
      %v8312 = vadd.f32 %v7943, %v8233
      %v8313 = vadd.f32 %v7944, %v8238
      %v8314 = vadd.f32 %v7945, %v8243
      %v8315 = vadd.f32 %v7946, %v8248
      %v8316 = vadd.f32 %v7947, %v8253
      %v8317 = vadd.f32 %v7948, %v8258
      %v8318 = vadd.f32 %v7949, %v8263
      %v8319 = vadd.f32 %v7950, %v8268
      %v8320 = vadd.f32 %v7951, %v8273
      %v8321 = vadd.f32 %v7952, %v8278
      %v8322 = vadd.f32 %v4490, %v8281
      %v8323 = vadd.f32 %v4491, %v8282
      %v8324 = vadd.f32 %v4492, %v8283
      %v8325 = vadd.f32 %v4493, %v8284
      %v8326 = vadd.f32 %v4494, %v8285
      %v8327 = vadd.f32 %v4495, %v8286
      %v8328 = vadd.f32 %v4496, %v8287
      %v8329 = vadd.f32 %v4497, %v8288
      %v8330 = vadd.f32 %v4498, %v8289
      %v8331 = vadd.f32 %v4499, %v8290
      %v8332 = vadd.f32 %v4500, %v8291
      %v8333 = vadd.f32 %v4501, %v8292
      %v8334 = vadd.f32 %v4502, %v8293
      %v8335 = vadd.f32 %v4503, %v8294
      %v8336 = vadd.f32 %v4504, %v8295
      %v8337 = vadd.f32 %v4505, %v8296
      %v8338 = vadd.f32 %v4506, %v8297
      %v8339 = vadd.f32 %v4507, %v8298
      %v8340 = vadd.f32 %v4508, %v8299
      %v8341 = vadd.f32 %v4509, %v8300
      %v8342 = vadd.f32 %v4510, %v8301
      %v8343 = vadd.f32 %v4511, %v8302
      %v8344 = vadd.f32 %v4512, %v8303
      %v8345 = vadd.f32 %v4513, %v8304
      %v8346 = vadd.f32 %v4514, %v8305
      %v8347 = vadd.f32 %v4515, %v8306
      %v8348 = vadd.f32 %v4516, %v8307
      %v8349 = vadd.f32 %v4517, %v8308
      %v8350 = vadd.f32 %v4518, %v8309
      %v8351 = vadd.f32 %v4519, %v8310
      %v8352 = vadd.f32 %v4520, %v8311
      %v8353 = vadd.f32 %v4521, %v8312
      %v8354 = vadd.f32 %v4522, %v8313
      %v8355 = vadd.f32 %v4523, %v8314
      %v8356 = vadd.f32 %v4524, %v8315
      %v8357 = vadd.f32 %v4525, %v8316
      %v8358 = vadd.f32 %v4526, %v8317
      %v8359 = vadd.f32 %v4527, %v8318
      %v8360 = vadd.f32 %v4528, %v8319
      %v8361 = vadd.f32 %v4529, %v8320
      %v8362 = vadd.f32 %v4530, %v8321
      %v8363 = vld [vmem:[%s13] sm:$0x1]
      %v8365 = vlaneseq
      %v8366 = vshrl.u32 %v8365, 7
      %v8367 = vsub.s32 0, %v8366
      %v8368 = vrot.slane %v8363, %v8367
      %v8370 = vadd.f32 %v8322, %v8368
      %v8371 = vadd.f32 %v8323, %v8368
      %v8372 = vadd.f32 %v8324, %v8368
      %v8373 = vadd.f32 %v8325, %v8368
      %v8374 = vadd.f32 %v8326, %v8368
      %v8375 = vadd.f32 %v8327, %v8368
      %v8376 = vadd.f32 %v8328, %v8368
      %v8377 = vadd.f32 %v8329, %v8368
      %v8378 = vadd.f32 %v8330, %v8368
      %v8379 = vadd.f32 %v8331, %v8368
      %v8380 = vadd.f32 %v8332, %v8368
      %v8381 = vadd.f32 %v8333, %v8368
      %v8382 = vadd.f32 %v8334, %v8368
      %v8383 = vadd.f32 %v8335, %v8368
      %v8384 = vadd.f32 %v8336, %v8368
      %v8385 = vadd.f32 %v8337, %v8368
      %v8386 = vadd.f32 %v8338, %v8368
      %v8387 = vadd.f32 %v8339, %v8368
      %v8388 = vadd.f32 %v8340, %v8368
      %v8389 = vadd.f32 %v8341, %v8368
      %v8390 = vadd.f32 %v8342, %v8368
      %v8391 = vadd.f32 %v8343, %v8368
      %v8392 = vadd.f32 %v8344, %v8368
      %v8393 = vadd.f32 %v8345, %v8368
      %v8394 = vadd.f32 %v8346, %v8368
      %v8395 = vadd.f32 %v8347, %v8368
      %v8396 = vadd.f32 %v8348, %v8368
      %v8397 = vadd.f32 %v8349, %v8368
      %v8398 = vadd.f32 %v8350, %v8368
      %v8399 = vadd.f32 %v8351, %v8368
      %v8400 = vadd.f32 %v8352, %v8368
      %v8401 = vadd.f32 %v8353, %v8368
      %v8402 = vadd.f32 %v8354, %v8368
      %v8403 = vadd.f32 %v8355, %v8368
      %v8404 = vadd.f32 %v8356, %v8368
      %v8405 = vadd.f32 %v8357, %v8368
      %v8406 = vadd.f32 %v8358, %v8368
      %v8407 = vadd.f32 %v8359, %v8368
      %v8408 = vadd.f32 %v8360, %v8368
      %v8409 = vadd.f32 %v8361, %v8368
      %v8410 = vadd.f32 %v8362, %v8368
      %v8411 = vld [vmem:[%s14] sm:$0xff]
      %v8412 = vld [vmem:[%s14 + $0x8] sm:$0xff]
      %v8413 = vld [vmem:[%s14 + $0x10] sm:$0xff]
      %v8414 = vld [vmem:[%s14 + $0x18] sm:$0xff]
      %v8415 = vld [vmem:[%s14 + $0x20] sm:$0xff]
      %v8416 = vld [vmem:[%s14 + $0x28] sm:$0xff]
      %v8417 = vld [vmem:[%s14 + $0x30] sm:$0xff]
      %v8418 = vld [vmem:[%s14 + $0x38] sm:$0xff]
      %v8419 = vld [vmem:[%s14 + $0x40] sm:$0xff]
      %v8420 = vld [vmem:[%s14 + $0x48] sm:$0xff]
      %v8421 = vld [vmem:[%s14 + $0x50] sm:$0xff]
      %v8422 = vld [vmem:[%s14 + $0x58] sm:$0xff]
      %v8423 = vld [vmem:[%s14 + $0x60] sm:$0xff]
      %v8424 = vld [vmem:[%s14 + $0x68] sm:$0xff]
      %v8425 = vld [vmem:[%s14 + $0x70] sm:$0xff]
      %v8426 = vld [vmem:[%s14 + $0x78] sm:$0xff]
      %v8427 = vld [vmem:[%s15] sm:$0x1]
      %v8429 = vlaneseq
      %v8430 = vshrl.u32 %v8429, 7
      %v8431 = vsub.s32 0, %v8430
      %v8432 = vrot.slane %v8427, %v8431
      %8434 = vmatprep.subr.mxu0 0.0
      %8435 = vmatpush1.msra.mxu0 %v8411
      %8436 = vmatprep.subr.mxu0 0.0
      %8437 = vmatpush1.msra.mxu0 %v8412
      %8438 = vmatprep.subr.mxu0 0.0
      %8439 = vmatpush1.msra.mxu0 %v8413
      %8440 = vmatprep.subr.mxu0 0.0
      %8441 = vmatpush1.msra.mxu0 %v8414
      %8442 = vmatprep.subr.mxu0 0.0
      %8443 = vmatpush1.msra.mxu0 %v8415
      %8444 = vmatprep.subr.mxu0 0.0
      %8445 = vmatpush1.msra.mxu0 %v8416
      %8446 = vmatprep.subr.mxu0 0.0
      %8447 = vmatpush1.msra.mxu0 %v8417
      %8448 = vmatprep.subr.mxu0 0.0
      %8449 = vmatpush1.msra.mxu0 %v8418
      %8450 = vmatprep.subr.mxu0 0.0
      %8451 = vmatpush1.msra.mxu0 %v8419
      %8452 = vmatprep.subr.mxu0 0.0
      %8453 = vmatpush1.msra.mxu0 %v8420
      %8454 = vmatprep.subr.mxu0 0.0
      %8455 = vmatpush1.msra.mxu0 %v8421
      %8456 = vmatprep.subr.mxu0 0.0
      %8457 = vmatpush1.msra.mxu0 %v8422
      %8458 = vmatprep.subr.mxu0 0.0
      %8459 = vmatpush1.msra.mxu0 %v8423
      %8460 = vmatprep.subr.mxu0 0.0
      %8461 = vmatpush1.msra.mxu0 %v8424
      %8462 = vmatprep.subr.mxu0 0.0
      %8463 = vmatpush1.msra.mxu0 %v8425
      %8464 = vmatprep.subr.mxu0 0.0
      %8465 = vmatpush1.msra.mxu0 %v8426
      %8466 = vmatprep.subr.mxu0 0.0
      %8467 = vmatpush1.msra.mxu0 0.0
      %8468 = vmatprep.subr.mxu0 0.0
      %8469 = vmatpush1.msra.mxu0 0.0
      %8470 = vmatprep.subr.mxu0 0.0
      %8471 = vmatpush1.msra.mxu0 0.0
      %8472 = vmatprep.subr.mxu0 0.0
      %8473 = vmatpush1.msra.mxu0 0.0
      %8474 = vmatprep.subr.mxu0 0.0
      %8475 = vmatpush1.msra.mxu0 0.0
      %8476 = vmatprep.subr.mxu0 0.0
      %8477 = vmatpush1.msra.mxu0 0.0
      %8478 = vmatprep.subr.mxu0 0.0
      %8479 = vmatpush1.msra.mxu0 0.0
      %8480 = vmatprep.subr.mxu0 0.0
      %8481 = vmatpush1.msra.mxu0 0.0
      %8482 = vmatprep.subr.mxu0 0.0
      %8483 = vmatpush1.msra.mxu0 0.0
      %8484 = vmatprep.subr.mxu0 0.0
      %8485 = vmatpush1.msra.mxu0 0.0
      %8486 = vmatprep.subr.mxu0 0.0
      %8487 = vmatpush1.msra.mxu0 0.0
      %8488 = vmatprep.subr.mxu0 0.0
      %8489 = vmatpush1.msra.mxu0 0.0
      %8490 = vmatprep.subr.mxu0 0.0
      %8491 = vmatpush1.msra.mxu0 0.0
      %8492 = vmatprep.subr.mxu0 0.0
      %8493 = vmatpush1.msra.mxu0 0.0
      %8494 = vmatprep.subr.mxu0 0.0
      %8495 = vmatpush1.msra.mxu0 0.0
      %8496 = vmatprep.subr.mxu0 0.0
      %8497 = vmatpush1.msra.mxu0 0.0
      %8498 = vmatprep.mubr.f32.mxu0 0.0
      %8499 = vmatmul.mubr.f32.gmra.mrb[0].mxu0 %v8370
      %v8500 = vpop.f32.mrb[0].mxu0
      %v8501 = vadd.f32 %v8432, %v8500
      %v8502 = vpop.f32.mrb[0].mxu0
      %8503 = vmatprep.mubr.f32.mxu0 0.0
      %8504 = vmatmul.mubr.f32.gmra.mrb[0].mxu0 %v8371
      %v8505 = vpop.f32.mrb[0].mxu0
      %v8506 = vadd.f32 %v8432, %v8505
      %v8507 = vpop.f32.mrb[0].mxu0
      %8508 = vmatprep.mubr.f32.mxu0 0.0
      %8509 = vmatmul.mubr.f32.gmra.mrb[0].mxu0 %v8372
      %v8510 = vpop.f32.mrb[0].mxu0
      %v8511 = vadd.f32 %v8432, %v8510
      %v8512 = vpop.f32.mrb[0].mxu0
      %8513 = vmatprep.mubr.f32.mxu0 0.0
      %8514 = vmatmul.mubr.f32.gmra.mrb[0].mxu0 %v8373
      %v8515 = vpop.f32.mrb[0].mxu0
      %v8516 = vadd.f32 %v8432, %v8515
      %v8517 = vpop.f32.mrb[0].mxu0
      %8518 = vmatprep.mubr.f32.mxu0 0.0
      %8519 = vmatmul.mubr.f32.gmra.mrb[0].mxu0 %v8374
      %v8520 = vpop.f32.mrb[0].mxu0
      %v8521 = vadd.f32 %v8432, %v8520
      %v8522 = vpop.f32.mrb[0].mxu0
      %8523 = vmatprep.mubr.f32.mxu0 0.0
      %8524 = vmatmul.mubr.f32.gmra.mrb[0].mxu0 %v8375
      %v8525 = vpop.f32.mrb[0].mxu0
      %v8526 = vadd.f32 %v8432, %v8525
      %v8527 = vpop.f32.mrb[0].mxu0
      %8528 = vmatprep.mubr.f32.mxu0 0.0
      %8529 = vmatmul.mubr.f32.gmra.mrb[0].mxu0 %v8376
      %v8530 = vpop.f32.mrb[0].mxu0
      %v8531 = vadd.f32 %v8432, %v8530
      %v8532 = vpop.f32.mrb[0].mxu0
      %8533 = vmatprep.mubr.f32.mxu0 0.0
      %8534 = vmatmul.mubr.f32.gmra.mrb[0].mxu0 %v8377
      %v8535 = vpop.f32.mrb[0].mxu0
      %v8536 = vadd.f32 %v8432, %v8535
      %v8537 = vpop.f32.mrb[0].mxu0
      %8538 = vmatprep.mubr.f32.mxu0 0.0
      %8539 = vmatmul.mubr.f32.gmra.mrb[0].mxu0 %v8378
      %v8540 = vpop.f32.mrb[0].mxu0
      %v8541 = vadd.f32 %v8432, %v8540
      %v8542 = vpop.f32.mrb[0].mxu0
      %8543 = vmatprep.mubr.f32.mxu0 0.0
      %8544 = vmatmul.mubr.f32.gmra.mrb[0].mxu0 %v8379
      %v8545 = vpop.f32.mrb[0].mxu0
      %v8546 = vadd.f32 %v8432, %v8545
      %v8547 = vpop.f32.mrb[0].mxu0
      %8548 = vmatprep.mubr.f32.mxu0 0.0
      %8549 = vmatmul.mubr.f32.gmra.mrb[0].mxu0 %v8380
      %v8550 = vpop.f32.mrb[0].mxu0
      %v8551 = vadd.f32 %v8432, %v8550
      %v8552 = vpop.f32.mrb[0].mxu0
      %8553 = vmatprep.mubr.f32.mxu0 0.0
      %8554 = vmatmul.mubr.f32.gmra.mrb[0].mxu0 %v8381
      %v8555 = vpop.f32.mrb[0].mxu0
      %v8556 = vadd.f32 %v8432, %v8555
      %v8557 = vpop.f32.mrb[0].mxu0
      %8558 = vmatprep.mubr.f32.mxu0 0.0
      %8559 = vmatmul.mubr.f32.gmra.mrb[0].mxu0 %v8382
      %v8560 = vpop.f32.mrb[0].mxu0
      %v8561 = vadd.f32 %v8432, %v8560
      %v8562 = vpop.f32.mrb[0].mxu0
      %8563 = vmatprep.mubr.f32.mxu0 0.0
      %8564 = vmatmul.mubr.f32.gmra.mrb[0].mxu0 %v8383
      %v8565 = vpop.f32.mrb[0].mxu0
      %v8566 = vadd.f32 %v8432, %v8565
      %v8567 = vpop.f32.mrb[0].mxu0
      %8568 = vmatprep.mubr.f32.mxu0 0.0
      %8569 = vmatmul.mubr.f32.gmra.mrb[0].mxu0 %v8384
      %v8570 = vpop.f32.mrb[0].mxu0
      %v8571 = vadd.f32 %v8432, %v8570
      %v8572 = vpop.f32.mrb[0].mxu0
      %8573 = vmatprep.mubr.f32.mxu0 0.0
      %8574 = vmatmul.mubr.f32.gmra.mrb[0].mxu0 %v8385
      %v8575 = vpop.f32.mrb[0].mxu0
      %v8576 = vadd.f32 %v8432, %v8575
      %v8577 = vpop.f32.mrb[0].mxu0
      %8578 = vmatprep.mubr.f32.mxu0 0.0
      %8579 = vmatmul.mubr.f32.gmra.mrb[0].mxu0 %v8386
      %v8580 = vpop.f32.mrb[0].mxu0
      %v8581 = vadd.f32 %v8432, %v8580
      %v8582 = vpop.f32.mrb[0].mxu0
      %8583 = vmatprep.mubr.f32.mxu0 0.0
      %8584 = vmatmul.mubr.f32.gmra.mrb[0].mxu0 %v8387
      %v8585 = vpop.f32.mrb[0].mxu0
      %v8586 = vadd.f32 %v8432, %v8585
      %v8587 = vpop.f32.mrb[0].mxu0
      %8588 = vmatprep.mubr.f32.mxu0 0.0
      %8589 = vmatmul.mubr.f32.gmra.mrb[0].mxu0 %v8388
      %v8590 = vpop.f32.mrb[0].mxu0
      %v8591 = vadd.f32 %v8432, %v8590
      %v8592 = vpop.f32.mrb[0].mxu0
      %8593 = vmatprep.mubr.f32.mxu0 0.0
      %8594 = vmatmul.mubr.f32.gmra.mrb[0].mxu0 %v8389
      %v8595 = vpop.f32.mrb[0].mxu0
      %v8596 = vadd.f32 %v8432, %v8595
      %v8597 = vpop.f32.mrb[0].mxu0
      %8598 = vmatprep.mubr.f32.mxu0 0.0
      %8599 = vmatmul.mubr.f32.gmra.mrb[0].mxu0 %v8390
      %v8600 = vpop.f32.mrb[0].mxu0
      %v8601 = vadd.f32 %v8432, %v8600
      %v8602 = vpop.f32.mrb[0].mxu0
      %8603 = vmatprep.mubr.f32.mxu0 0.0
      %8604 = vmatmul.mubr.f32.gmra.mrb[0].mxu0 %v8391
      %v8605 = vpop.f32.mrb[0].mxu0
      %v8606 = vadd.f32 %v8432, %v8605
      %v8607 = vpop.f32.mrb[0].mxu0
      %8608 = vmatprep.mubr.f32.mxu0 0.0
      %8609 = vmatmul.mubr.f32.gmra.mrb[0].mxu0 %v8392
      %v8610 = vpop.f32.mrb[0].mxu0
      %v8611 = vadd.f32 %v8432, %v8610
      %v8612 = vpop.f32.mrb[0].mxu0
      %8613 = vmatprep.mubr.f32.mxu0 0.0
      %8614 = vmatmul.mubr.f32.gmra.mrb[0].mxu0 %v8393
      %v8615 = vpop.f32.mrb[0].mxu0
      %v8616 = vadd.f32 %v8432, %v8615
      %v8617 = vpop.f32.mrb[0].mxu0
      %8618 = vmatprep.mubr.f32.mxu0 0.0
      %8619 = vmatmul.mubr.f32.gmra.mrb[0].mxu0 %v8394
      %v8620 = vpop.f32.mrb[0].mxu0
      %v8621 = vadd.f32 %v8432, %v8620
      %v8622 = vpop.f32.mrb[0].mxu0
      %8623 = vmatprep.mubr.f32.mxu0 0.0
      %8624 = vmatmul.mubr.f32.gmra.mrb[0].mxu0 %v8395
      %v8625 = vpop.f32.mrb[0].mxu0
      %v8626 = vadd.f32 %v8432, %v8625
      %v8627 = vpop.f32.mrb[0].mxu0
      %8628 = vmatprep.mubr.f32.mxu0 0.0
      %8629 = vmatmul.mubr.f32.gmra.mrb[0].mxu0 %v8396
      %v8630 = vpop.f32.mrb[0].mxu0
      %v8631 = vadd.f32 %v8432, %v8630
      %v8632 = vpop.f32.mrb[0].mxu0
      %8633 = vmatprep.mubr.f32.mxu0 0.0
      %8634 = vmatmul.mubr.f32.gmra.mrb[0].mxu0 %v8397
      %v8635 = vpop.f32.mrb[0].mxu0
      %v8636 = vadd.f32 %v8432, %v8635
      %v8637 = vpop.f32.mrb[0].mxu0
      %8638 = vmatprep.mubr.f32.mxu0 0.0
      %8639 = vmatmul.mubr.f32.gmra.mrb[0].mxu0 %v8398
      %v8640 = vpop.f32.mrb[0].mxu0
      %v8641 = vadd.f32 %v8432, %v8640
      %v8642 = vpop.f32.mrb[0].mxu0
      %8643 = vmatprep.mubr.f32.mxu0 0.0
      %8644 = vmatmul.mubr.f32.gmra.mrb[0].mxu0 %v8399
      %v8645 = vpop.f32.mrb[0].mxu0
      %v8646 = vadd.f32 %v8432, %v8645
      %v8647 = vpop.f32.mrb[0].mxu0
      %8648 = vmatprep.mubr.f32.mxu0 0.0
      %8649 = vmatmul.mubr.f32.gmra.mrb[0].mxu0 %v8400
      %v8650 = vpop.f32.mrb[0].mxu0
      %v8651 = vadd.f32 %v8432, %v8650
      %v8652 = vpop.f32.mrb[0].mxu0
      %8653 = vmatprep.mubr.f32.mxu0 0.0
      %8654 = vmatmul.mubr.f32.gmra.mrb[0].mxu0 %v8401
      %v8655 = vpop.f32.mrb[0].mxu0
      %v8656 = vadd.f32 %v8432, %v8655
      %v8657 = vpop.f32.mrb[0].mxu0
      %8658 = vmatprep.mubr.f32.mxu0 0.0
      %8659 = vmatmul.mubr.f32.gmra.mrb[0].mxu0 %v8402
      %v8660 = vpop.f32.mrb[0].mxu0
      %v8661 = vadd.f32 %v8432, %v8660
      %v8662 = vpop.f32.mrb[0].mxu0
      %8663 = vmatprep.mubr.f32.mxu0 0.0
      %8664 = vmatmul.mubr.f32.gmra.mrb[0].mxu0 %v8403
      %v8665 = vpop.f32.mrb[0].mxu0
      %v8666 = vadd.f32 %v8432, %v8665
      %v8667 = vpop.f32.mrb[0].mxu0
      %8668 = vmatprep.mubr.f32.mxu0 0.0
      %8669 = vmatmul.mubr.f32.gmra.mrb[0].mxu0 %v8404
      %v8670 = vpop.f32.mrb[0].mxu0
      %v8671 = vadd.f32 %v8432, %v8670
      %v8672 = vpop.f32.mrb[0].mxu0
      %8673 = vmatprep.mubr.f32.mxu0 0.0
      %8674 = vmatmul.mubr.f32.gmra.mrb[0].mxu0 %v8405
      %v8675 = vpop.f32.mrb[0].mxu0
      %v8676 = vadd.f32 %v8432, %v8675
      %v8677 = vpop.f32.mrb[0].mxu0
      %8678 = vmatprep.mubr.f32.mxu0 0.0
      %8679 = vmatmul.mubr.f32.gmra.mrb[0].mxu0 %v8406
      %v8680 = vpop.f32.mrb[0].mxu0
      %v8681 = vadd.f32 %v8432, %v8680
      %v8682 = vpop.f32.mrb[0].mxu0
      %8683 = vmatprep.mubr.f32.mxu0 0.0
      %8684 = vmatmul.mubr.f32.gmra.mrb[0].mxu0 %v8407
      %v8685 = vpop.f32.mrb[0].mxu0
      %v8686 = vadd.f32 %v8432, %v8685
      %v8687 = vpop.f32.mrb[0].mxu0
      %8688 = vmatprep.mubr.f32.mxu0 0.0
      %8689 = vmatmul.mubr.f32.gmra.mrb[0].mxu0 %v8408
      %v8690 = vpop.f32.mrb[0].mxu0
      %v8691 = vadd.f32 %v8432, %v8690
      %v8692 = vpop.f32.mrb[0].mxu0
      %8693 = vmatprep.mubr.f32.mxu0 0.0
      %8694 = vmatmul.mubr.f32.gmra.mrb[0].mxu0 %v8409
      %v8695 = vpop.f32.mrb[0].mxu0
      %v8696 = vadd.f32 %v8432, %v8695
      %v8697 = vpop.f32.mrb[0].mxu0
      %8698 = vmatprep.mubr.f32.mxu0 0.0
      %8699 = vmatmul.mubr.f32.gmra.mrb[0].mxu0 %v8410
      %v8700 = vpop.f32.mrb[0].mxu0
      %v8701 = vadd.f32 %v8432, %v8700
      %v8702 = vpop.f32.mrb[0].mxu0
      %8703 = vdwg.mxu0
      %v8704 = vmax.f32 %v8501, 0.0
      %v8705 = vmax.f32 %v8506, 0.0
      %v8706 = vmax.f32 %v8511, 0.0
      %v8707 = vmax.f32 %v8516, 0.0
      %v8708 = vmax.f32 %v8521, 0.0
      %v8709 = vmax.f32 %v8526, 0.0
      %v8710 = vmax.f32 %v8531, 0.0
      %v8711 = vmax.f32 %v8536, 0.0
      %v8712 = vmax.f32 %v8541, 0.0
      %v8713 = vmax.f32 %v8546, 0.0
      %v8714 = vmax.f32 %v8551, 0.0
      %v8715 = vmax.f32 %v8556, 0.0
      %v8716 = vmax.f32 %v8561, 0.0
      %v8717 = vmax.f32 %v8566, 0.0
      %v8718 = vmax.f32 %v8571, 0.0
      %v8719 = vmax.f32 %v8576, 0.0
      %v8720 = vmax.f32 %v8581, 0.0
      %v8721 = vmax.f32 %v8586, 0.0
      %v8722 = vmax.f32 %v8591, 0.0
      %v8723 = vmax.f32 %v8596, 0.0
      %v8724 = vmax.f32 %v8601, 0.0
      %v8725 = vmax.f32 %v8606, 0.0
      %v8726 = vmax.f32 %v8611, 0.0
      %v8727 = vmax.f32 %v8616, 0.0
      %v8728 = vmax.f32 %v8621, 0.0
      %v8729 = vmax.f32 %v8626, 0.0
      %v8730 = vmax.f32 %v8631, 0.0
      %v8731 = vmax.f32 %v8636, 0.0
      %v8732 = vmax.f32 %v8641, 0.0
      %v8733 = vmax.f32 %v8646, 0.0
      %v8734 = vmax.f32 %v8651, 0.0
      %v8735 = vmax.f32 %v8656, 0.0
      %v8736 = vmax.f32 %v8661, 0.0
      %v8737 = vmax.f32 %v8666, 0.0
      %v8738 = vmax.f32 %v8671, 0.0
      %v8739 = vmax.f32 %v8676, 0.0
      %v8740 = vmax.f32 %v8681, 0.0
      %v8741 = vmax.f32 %v8686, 0.0
      %v8742 = vmax.f32 %v8691, 0.0
      %v8743 = vmax.f32 %v8696, 0.0
      %v8744 = vmax.f32 %v8701, 0.0
      %8745 = vst [vmem:[%s521] sm:$0xff] %v8704
      %8746 = vst [vmem:[%s521 + $0x8] sm:$0xff] %v8705
      %8747 = vst [vmem:[%s521 + $0x10] sm:$0xff] %v8706
      %8748 = vst [vmem:[%s521 + $0x18] sm:$0xff] %v8707
      %8749 = vst [vmem:[%s521 + $0x20] sm:$0xff] %v8708
      %8750 = vst [vmem:[%s521 + $0x28] sm:$0xff] %v8709
      %8751 = vst [vmem:[%s521 + $0x30] sm:$0xff] %v8710
      %8752 = vst [vmem:[%s521 + $0x38] sm:$0xff] %v8711
      %8753 = vst [vmem:[%s521 + $0x40] sm:$0xff] %v8712
      %8754 = vst [vmem:[%s521 + $0x48] sm:$0xff] %v8713
      %8755 = vst [vmem:[%s521 + $0x50] sm:$0xff] %v8714
      %8756 = vst [vmem:[%s521 + $0x58] sm:$0xff] %v8715
      %8757 = vst [vmem:[%s521 + $0x60] sm:$0xff] %v8716
      %8758 = vst [vmem:[%s521 + $0x68] sm:$0xff] %v8717
      %8759 = vst [vmem:[%s521 + $0x70] sm:$0xff] %v8718
      %8760 = vst [vmem:[%s521 + $0x78] sm:$0xff] %v8719
      %8761 = vst [vmem:[%s521 + $0x80] sm:$0xff] %v8720
      %8762 = vst [vmem:[%s521 + $0x88] sm:$0xff] %v8721
      %8763 = vst [vmem:[%s521 + $0x90] sm:$0xff] %v8722
      %8764 = vst [vmem:[%s521 + $0x98] sm:$0xff] %v8723
      %8765 = vst [vmem:[%s521 + $0xa0] sm:$0xff] %v8724
      %8766 = vst [vmem:[%s521 + $0xa8] sm:$0xff] %v8725
      %8767 = vst [vmem:[%s521 + $0xb0] sm:$0xff] %v8726
      %8768 = vst [vmem:[%s521 + $0xb8] sm:$0xff] %v8727
      %8769 = vst [vmem:[%s521 + $0xc0] sm:$0xff] %v8728
      %8770 = vst [vmem:[%s521 + $0xc8] sm:$0xff] %v8729
      %8771 = vst [vmem:[%s521 + $0xd0] sm:$0xff] %v8730
      %8772 = vst [vmem:[%s521 + $0xd8] sm:$0xff] %v8731
      %8773 = vst [vmem:[%s521 + $0xe0] sm:$0xff] %v8732
      %8774 = vst [vmem:[%s521 + $0xe8] sm:$0xff] %v8733
      %8775 = vst [vmem:[%s521 + $0xf0] sm:$0xff] %v8734
      %8776 = vst [vmem:[%s521 + $0xf8] sm:$0xff] %v8735
      %8777 = vst [vmem:[%s521 + $0x100] sm:$0xff] %v8736
      %8778 = vst [vmem:[%s521 + $0x108] sm:$0xff] %v8737
      %8779 = vst [vmem:[%s521 + $0x110] sm:$0xff] %v8738
      %8780 = vst [vmem:[%s521 + $0x118] sm:$0xff] %v8739
      %8781 = vst [vmem:[%s521 + $0x120] sm:$0xff] %v8740
      %8782 = vst [vmem:[%s521 + $0x128] sm:$0xff] %v8741
      %8783 = vst [vmem:[%s521 + $0x130] sm:$0xff] %v8742
      %8784 = vst [vmem:[%s521 + $0x138] sm:$0xff] %v8743
      %8785 = vst [vmem:[%s521 + $0x140] sm:$0xff] %v8744
      %p8786 = scmp.lt.s32.totalorder %s27, 1
      %s8787 = scalar_select %p8786, %s27, 1
      %s8788 = smul.addr %s8787, 41
      %s8789 = smul.addr %s8788, 8
      %s8790 = scalar_lea.vmem %s16, %s8789
      // Predicated region
      $region85: #{dense_block_forward.1} parent=83 // pred_check
        %p8791 = pneg %p386
      $region86: #{dense_block_forward.1} parent=83 // pred_check_branch
        %8793 = sbr.rel (%p8791) target = $region88
      $region87: #{dense_block_forward.1} parent=83 // pred_region
        _
      $region88: #{dense_block_forward.1} parent=83 // pred_fallthru
        _
    $region84: #{dense_block_forward.1} parent=5 // pred_fallthru
      _
    %p8794 = scmp.le.s32.totalorder 2, %s22
    // Predicated region
    $region89: #{dense_block_forward.1} parent=5 // pred_check
      %p8795 = pneg %p8794
    $region90: #{dense_block_forward.1} parent=5 // pred_check_branch
      %8797 = sbr.rel (%p8795) target = $region92
    $region91: #{dense_block_forward.1} parent=5 // pred_region
      %s8798 = ssub.s32 %s22, 2
      // Predicated region
      $region93: #{dense_block_forward.1} parent=91 // pred_check
        %p8799 = pneg %p392
      $region94: #{dense_block_forward.1} parent=91 // pred_check_branch
        %8801 = sbr.rel (%p8799) target = $region96
      $region95: #{dense_block_forward.1} parent=91 // pred_region
        %p8802 = scmp.lt.s32.totalorder %s28, 1
        %s8803 = scalar_select %p8802, %s28, 1
        %s8804 = smul.addr %s8803, 41
        %s8805 = smul.addr %s8804, 8
        %s8806 = scalar_lea.vmem %s16, %s8805
      $region96: #{dense_block_forward.1} parent=91 // pred_fallthru
        _
    $region92: #{dense_block_forward.1} parent=5 // pred_fallthru
      _
  $region6: #{dense_block_forward.1} parent=0 // loop_footer
    %s26 = sadd.s32 1, %s22
  $region7: #{dense_block_forward.1} parent=0 // loop_footer_branch
    %21 = sbr.rel target = $region3
  $region8: #{dense_block_forward.1} parent=0 // loop_exit
    _

</llo_original>
